<compile_context>
chip_gen: v5e
topology: v5e:2x2
jax: 0.10.0
libtpu: 0.0.40
codegen_flags: <defaults>
</compile_context>

<pallas_src>
import jax
import jax.numpy as jnp
from jax.experimental import pallas as pl
from jax.experimental.pallas import tpu as pltpu


def _round_up(x, m):
    return (x + m - 1) // m * m


# ----------------------------------------------------------------------------
# Fused ResBlock kernel (factory over static shapes / dimup flag)
# ----------------------------------------------------------------------------
def _make_resblock_kernel(H, W, Cip, Cop, dimup):
    def conv3x3(plane_ref, w_ref, acc_ref, cin):
        """acc <- 3x3 'same' conv of the zero-padded plane (H+2, W+2, cin)
        with weights w_ref (3, 3*cin, Cop); 3 bf16 MXU matmuls, f32 accum."""
        acc_ref[...] = jnp.zeros_like(acc_ref)
        for kh in range(3):
            rows = plane_ref[kh:kh + H, :, :]                 # (H, W+2, cin)
            # Fold the 3 kw taps into the contraction: K = 3*cin per dot.
            lhs = jnp.concatenate(
                [rows[:, 0:W, :], rows[:, 1:W + 1, :], rows[:, 2:W + 2, :]],
                axis=2)                                        # (H, W, 3*cin)
            lhs = lhs.reshape(H * W, 3 * cin).astype(jnp.bfloat16)
            acc_ref[...] += jnp.dot(lhs, w_ref[kh],
                                    preferred_element_type=jnp.float32)

    def kernel(*refs):
        if dimup:
            (x_ref, w1_ref, s1_ref, b1_ref, w2_ref, s2_ref, b2_ref,
             wsc_ref, s3_ref, b3_ref,
             o_ref, xp_sc, hp_sc, acc_sc, res_sc) = refs
        else:
            (x_ref, w1_ref, s1_ref, b1_ref, w2_ref, s2_ref, b2_ref,
             o_ref, xp_sc, hp_sc, acc_sc) = refs

        # Zero-padded input plane built in VMEM (halo handled in-kernel, no
        # padded HBM copy).
        xp_sc[...] = jnp.zeros_like(xp_sc)
        xp_sc[1:H + 1, 1:W + 1, :] = x_ref[0]

        # conv1 + bn1 + relu -> re-padded plane hp_sc (stays in VMEM)
        conv3x3(xp_sc, w1_ref, acc_sc, Cip)
        h = jnp.maximum(acc_sc[...] * s1_ref[...] + b1_ref[...], 0.0)
        hp_sc[...] = jnp.zeros_like(hp_sc)
        hp_sc[1:H + 1, 1:W + 1, :] = h.reshape(H, W, Cop)

        # shortcut conv + bn3 (only when in_channel != out_channel)
        if dimup:
            conv3x3(xp_sc, wsc_ref, res_sc, Cip)
            res_sc[...] = res_sc[...] * s3_ref[...] + b3_ref[...]

        # conv2 + bn2 + residual add + relu
        conv3x3(hp_sc, w2_ref, acc_sc, Cop)
        out = acc_sc[...] * s2_ref[...] + b2_ref[...]
        if dimup:
            out = out + res_sc[...]
        out = out.reshape(H, W, Cop)
        if not dimup:
            out = out + x_ref[0]          # identity residual (Cin == Cout)
        o_ref[0] = jnp.maximum(out, 0.0)

    return kernel


# ----------------------------------------------------------------------------
# Parameter prep: fold BN + conv bias, pad channels to 128 lanes, bf16 weights
# ----------------------------------------------------------------------------
def _fold_conv_bn(w_hwio, bias, gamma, beta, mean, var, cin_p, cout_p,
                  eps=1e-5):
    ci, co = w_hwio.shape[2], w_hwio.shape[3]
    w = jnp.zeros((3, 3, cin_p, cout_p), jnp.float32)
    w = w.at[:, :, :ci, :co].set(w_hwio.astype(jnp.float32))
    # (3, 3, cin_p, cout_p) -> (3, 3*cin_p, cout_p): rows ordered kw-major, ci.
    w = w.reshape(3, 3 * cin_p, cout_p).astype(jnp.bfloat16)

    scale = gamma / jnp.sqrt(var + eps)
    shift = beta - mean * scale + bias * scale
    scale_p = jnp.zeros((1, cout_p), jnp.float32).at[0, :co].set(scale)
    shift_p = jnp.zeros((1, cout_p), jnp.float32).at[0, :co].set(shift)
    return w, scale_p, shift_p


def init_resblock_params(key, in_channel, out_channel):
    ks = jax.random.split(key, 12)
    p = {}

    def conv_params(kw, kb, cin, cout):
        # PyTorch layout (Cout, Cin, 3, 3) -> HWIO (3, 3, Cin, Cout)
        w_oihw = jax.random.normal(kw, (cout, cin, 3, 3), jnp.float32) * 0.1
        b = jax.random.normal(kb, (cout,), jnp.float32) * 0.1
        return jnp.transpose(w_oihw, (2, 3, 1, 0)), b

    def bn_params(kg, kb, c):
        gamma = 1.0 + 0.1 * jax.random.normal(kg, (c,), jnp.float32)
        beta = 0.1 * jax.random.normal(kb, (c,), jnp.float32)
        mean = jnp.zeros((c,), jnp.float32)   # fresh running stats
        var = jnp.ones((c,), jnp.float32)
        return gamma, beta, mean, var

    p["w1"], p["b1"] = conv_params(ks[0], ks[1], in_channel, out_channel)
    p["w2"], p["b2"] = conv_params(ks[2], ks[3], out_channel, out_channel)
    p["wsc"], p["bsc"] = conv_params(ks[4], ks[5], in_channel, out_channel)
    p["bn1"] = bn_params(ks[6], ks[7], out_channel)
    p["bn2"] = bn_params(ks[8], ks[9], out_channel)
    p["bn3"] = bn_params(ks[10], ks[11], out_channel)
    p["dimup"] = (in_channel != out_channel)
    return p


# ----------------------------------------------------------------------------
# ResBlock forward (Pallas) and pure-JAX reference
# ----------------------------------------------------------------------------
def resblock_forward_pallas(x_nchw, p):
    N, Cin, H, W = x_nchw.shape
    Cout = p["w1"].shape[-1]
    Cip = _round_up(Cin, 128)      # lane-dense channel padding
    Cop = _round_up(Cout, 128)
    Hp, Wp = H + 2, W + 2
    dimup = p["dimup"]

    # NCHW -> NHWC, pad channels to the lane width (stripped after the kernel).
    x = jnp.transpose(x_nchw, (0, 2, 3, 1)).astype(jnp.float32)
    x = jnp.pad(x, ((0, 0), (0, 0), (0, 0), (0, Cip - Cin)))

    w1, s1, b1 = _fold_conv_bn(p["w1"], p["b1"], *p["bn1"], Cip, Cop)
    w2, s2, b2 = _fold_conv_bn(p["w2"], p["b2"], *p["bn2"], Cop, Cop)

    args = [x, w1, s1, b1, w2, s2, b2]
    in_specs = [
        pl.BlockSpec((1, H, W, Cip), lambda n: (n, 0, 0, 0)),
        pl.BlockSpec((3, 3 * Cip, Cop), lambda n: (0, 0, 0)),
        pl.BlockSpec((1, Cop), lambda n: (0, 0)),
        pl.BlockSpec((1, Cop), lambda n: (0, 0)),
        pl.BlockSpec((3, 3 * Cop, Cop), lambda n: (0, 0, 0)),
        pl.BlockSpec((1, Cop), lambda n: (0, 0)),
        pl.BlockSpec((1, Cop), lambda n: (0, 0)),
    ]
    scratch_shapes = [
        pltpu.VMEM((Hp, Wp, Cip), jnp.float32),   # padded input plane
        pltpu.VMEM((Hp, Wp, Cop), jnp.float32),   # padded conv1-output plane
        pltpu.VMEM((H * W, Cop), jnp.float32),    # f32 conv accumulator
    ]
    if dimup:
        wsc, s3, b3 = _fold_conv_bn(p["wsc"], p["bsc"], *p["bn3"], Cip, Cop)
        args += [wsc, s3, b3]
        in_specs += [
            pl.BlockSpec((3, 3 * Cip, Cop), lambda n: (0, 0, 0)),
            pl.BlockSpec((1, Cop), lambda n: (0, 0)),
            pl.BlockSpec((1, Cop), lambda n: (0, 0)),
        ]
        scratch_shapes.append(pltpu.VMEM((H * W, Cop), jnp.float32))  # residual

    kernel = _make_resblock_kernel(H, W, Cip, Cop, dimup)

    out = pl.pallas_call(
        kernel,
        out_shape=jax.ShapeDtypeStruct((N, H, W, Cop), jnp.float32),
        grid=(N,),
        in_specs=in_specs,
        out_specs=pl.BlockSpec((1, H, W, Cop), lambda n: (n, 0, 0, 0)),
        scratch_shapes=scratch_shapes,
        compiler_params=pltpu.CompilerParams(
            dimension_semantics=("parallel",),      # megacore on v7x
            vmem_limit_bytes=32 * 1024 * 1024),
    )(*args)

    out = out[:, :, :, :Cout]                        # strip lane padding
    return jnp.transpose(out, (0, 3, 1, 2))          # -> NCHW


def _conv_ref(x_nhwc, w_hwio, b):
    y = jax.lax.conv_general_dilated(
        x_nhwc, w_hwio, (1, 1), "SAME",
        dimension_numbers=("NHWC", "HWIO", "NHWC"))
    return y + b


def _bn_ref(x, gamma, beta, mean, var, eps=1e-5):
    return (x - mean) / jnp.sqrt(var + eps) * gamma + beta


def resblock_forward_ref(x_nchw, p):
    x = jnp.transpose(x_nchw, (0, 2, 3, 1)).astype(jnp.float32)
    out = jax.nn.relu(_bn_ref(_conv_ref(x, p["w1"], p["b1"]), *p["bn1"]))
    out = _bn_ref(_conv_ref(out, p["w2"], p["b2"]), *p["bn2"])
    if p["dimup"]:
        res = _bn_ref(_conv_ref(x, p["wsc"], p["bsc"]), *p["bn3"])
    else:
        res = x
    out = jax.nn.relu(out + res)
    return jnp.transpose(out, (0, 3, 1, 2))


# ----------------------------------------------------------------------------
if __name__ == "__main__":
    key = jax.random.PRNGKey(0)
    k_x, k_p1, k_p2 = jax.random.split(key, 3)

    # Case 1: in_channel != out_channel (dimup path: shortcut conv + bn3)
    N, Cin, Cout, H, W = 2, 4, 8, 16, 16
    x = jax.random.normal(k_x, (N, Cin, H, W), jnp.float32)
    params = init_resblock_params(k_p1, Cin, Cout)

    out = jax.block_until_ready(resblock_forward_pallas(x, params))
    ref = jax.block_until_ready(resblock_forward_ref(x, params))
    assert out.shape == (N, Cout, H, W)
    # bf16 MXU operands (f32 accumulation) -> slightly looser tolerance vs f32 ref
    assert jnp.allclose(out, ref, atol=5e-2, rtol=5e-2), "dimup mismatch"

    # Case 2: in_channel == out_channel (identity shortcut)
    params_eq = init_resblock_params(k_p2, Cout, Cout)
    x2 = jax.random.normal(k_x, (N, Cout, H, W), jnp.float32)
    out2 = jax.block_until_ready(resblock_forward_pallas(x2, params_eq))
    ref2 = jax.block_until_ready(resblock_forward_ref(x2, params_eq))
    assert jnp.allclose(out2, ref2, atol=5e-2, rtol=5e-2), "identity mismatch"

    print("KERNEL_OK")
</pallas_src>

<mosaic_0001>
module attributes {stable_mosaic.version = 11 : i64} {
  func.func @kernel(%arg0: i32, %arg1: memref<1x16x16x128xf32, #tpu.memory_space<vmem>>, %arg2: memref<3x384x128xbf16, #tpu.memory_space<vmem>>, %arg3: memref<1x128xf32, #tpu.memory_space<vmem>>, %arg4: memref<1x128xf32, #tpu.memory_space<vmem>>, %arg5: memref<3x384x128xbf16, #tpu.memory_space<vmem>>, %arg6: memref<1x128xf32, #tpu.memory_space<vmem>>, %arg7: memref<1x128xf32, #tpu.memory_space<vmem>>, %arg8: memref<3x384x128xbf16, #tpu.memory_space<vmem>>, %arg9: memref<1x128xf32, #tpu.memory_space<vmem>>, %arg10: memref<1x128xf32, #tpu.memory_space<vmem>>, %arg11: memref<1x16x16x128xf32, #tpu.memory_space<vmem>>, %arg12: memref<18x18x128xf32, #tpu.memory_space<vmem>>, %arg13: memref<18x18x128xf32, #tpu.memory_space<vmem>>, %arg14: memref<256x128xf32, #tpu.memory_space<vmem>>, %arg15: memref<256x128xf32, #tpu.memory_space<vmem>>) attributes {dimension_semantics = [#tpu.dimension_semantics<parallel>], iteration_bounds = array<i64: 2>, scalar_prefetch = 0 : i64, scratch_operands = 4 : i64, tpu.core_type = #tpu.core_type<tc>, window_params = [{transform_indices = @transform_0, window_bounds = array<i64: 1, 16, 16, 128>}, {pipeline_mode = #tpu.pipeline_mode<synchronous>, transform_indices = @transform_1, window_bounds = array<i64: 3, 384, 128>}, {pipeline_mode = #tpu.pipeline_mode<synchronous>, transform_indices = @transform_2, window_bounds = array<i64: 1, 128>}, {pipeline_mode = #tpu.pipeline_mode<synchronous>, transform_indices = @transform_3, window_bounds = array<i64: 1, 128>}, {pipeline_mode = #tpu.pipeline_mode<synchronous>, transform_indices = @transform_4, window_bounds = array<i64: 3, 384, 128>}, {pipeline_mode = #tpu.pipeline_mode<synchronous>, transform_indices = @transform_5, window_bounds = array<i64: 1, 128>}, {pipeline_mode = #tpu.pipeline_mode<synchronous>, transform_indices = @transform_6, window_bounds = array<i64: 1, 128>}, {pipeline_mode = #tpu.pipeline_mode<synchronous>, transform_indices = @transform_7, window_bounds = array<i64: 3, 384, 128>}, {pipeline_mode = #tpu.pipeline_mode<synchronous>, transform_indices = @transform_8, window_bounds = array<i64: 1, 128>}, {pipeline_mode = #tpu.pipeline_mode<synchronous>, transform_indices = @transform_9, window_bounds = array<i64: 1, 128>}, {transform_indices = @transform_10, window_bounds = array<i64: 1, 16, 16, 128>}]} {
    %cst = arith.constant 0.000000e+00 : f32
    %0 = vector.broadcast %cst : f32 to vector<18x18x128xf32>
    %c0 = arith.constant 0 : index
    %c0_0 = arith.constant 0 : index
    %c0_1 = arith.constant 0 : index
    %1 = vector.load %arg12[%c0, %c0_0, %c0_1] : memref<18x18x128xf32, #tpu.memory_space<vmem>>, vector<18x18x128xf32>
    tpu.vector_store %arg12[%c0, %c0_0, %c0_1], %0 {strides = array<i32>} : memref<18x18x128xf32, #tpu.memory_space<vmem>>, vector<18x18x128xf32>,
    %c0_2 = arith.constant 0 : index
    %c0_3 = arith.constant 0 : index
    %c0_4 = arith.constant 0 : index
    %c0_5 = arith.constant 0 : index
    %2 = vector.load %arg1[%c0_2, %c0_3, %c0_4, %c0_5] : memref<1x16x16x128xf32, #tpu.memory_space<vmem>>, vector<1x16x16x128xf32>
    %3 = vector.shape_cast %2 : vector<1x16x16x128xf32> to vector<16x16x128xf32>
    %c1 = arith.constant 1 : index
    %c1_6 = arith.constant 1 : index
    %c0_7 = arith.constant 0 : index
    %4 = vector.load %arg12[%c1, %c1_6, %c0_7] : memref<18x18x128xf32, #tpu.memory_space<vmem>>, vector<16x16x128xf32>
    tpu.vector_store %arg12[%c1, %c1_6, %c0_7], %3 {strides = array<i32>} : memref<18x18x128xf32, #tpu.memory_space<vmem>>, vector<16x16x128xf32>,
    %cst_8 = arith.constant 0.000000e+00 : f32
    %5 = vector.broadcast %cst_8 : f32 to vector<256x128xf32>
    %c0_9 = arith.constant 0 : index
    %c0_10 = arith.constant 0 : index
    %6 = vector.load %arg14[%c0_9, %c0_10] : memref<256x128xf32, #tpu.memory_space<vmem>>, vector<256x128xf32>
    tpu.vector_store %arg14[%c0_9, %c0_10], %5 {strides = array<i32>} : memref<256x128xf32, #tpu.memory_space<vmem>>, vector<256x128xf32>,
    %c0_11 = arith.constant 0 : index
    %c0_12 = arith.constant 0 : index
    %c0_13 = arith.constant 0 : index
    %7 = vector.load %arg12[%c0_11, %c0_12, %c0_13] : memref<18x18x128xf32, #tpu.memory_space<vmem>>, vector<16x18x128xf32>
    %8 = vector.extract_strided_slice %7 {offsets = [0, 0, 0], sizes = [16, 16, 128], strides = [1, 1, 1]} : vector<16x18x128xf32> to vector<16x16x128xf32>
    %9 = vector.extract_strided_slice %7 {offsets = [0, 1, 0], sizes = [16, 16, 128], strides = [1, 1, 1]} : vector<16x18x128xf32> to vector<16x16x128xf32>
    %10 = vector.extract_strided_slice %7 {offsets = [0, 2, 0], sizes = [16, 16, 128], strides = [1, 1, 1]} : vector<16x18x128xf32> to vector<16x16x128xf32>
    %11 = tpu.concatenate %8, %9, %10 in 2 : vector<16x16x128xf32>, vector<16x16x128xf32>, vector<16x16x128xf32> -> vector<16x16x384xf32>
    %12 = vector.shape_cast %11 : vector<16x16x384xf32> to vector<256x384xf32>
    %13 = arith.truncf %12 : vector<256x384xf32> to vector<256x384xbf16>
    %c0_14 = arith.constant 0 : index
    %c0_15 = arith.constant 0 : index
    %14 = vector.load %arg14[%c0_14, %c0_15] : memref<256x128xf32, #tpu.memory_space<vmem>>, vector<256x128xf32>
    %c0_16 = arith.constant 0 : index
    %c0_17 = arith.constant 0 : index
    %c0_18 = arith.constant 0 : index
    %15 = vector.load %arg2[%c0_16, %c0_17, %c0_18] : memref<3x384x128xbf16, #tpu.memory_space<vmem>>, vector<1x384x128xbf16>
    %16 = vector.shape_cast %15 : vector<1x384x128xbf16> to vector<384x128xbf16>
    %cst_19 = arith.constant dense<0.000000e+00> : vector<256x128xf32>
    %17 = tpu.matmul %13, %16, %cst_19 {dimension_numbers = #tpu.dot_dimension_numbers<[1], [0], [0], [1], [0, 0, 1, 1], [], []>} : vector<256x384xbf16>, vector<384x128xbf16>, vector<256x128xf32> -> vector<256x128xf32>
    %18 = arith.addf %14, %17 : vector<256x128xf32>
    %c0_20 = arith.constant 0 : index
    %c0_21 = arith.constant 0 : index
    %19 = vector.load %arg14[%c0_20, %c0_21] : memref<256x128xf32, #tpu.memory_space<vmem>>, vector<256x128xf32>
    tpu.vector_store %arg14[%c0_20, %c0_21], %18 {strides = array<i32>} : memref<256x128xf32, #tpu.memory_space<vmem>>, vector<256x128xf32>,
    %c1_22 = arith.constant 1 : index
    %c0_23 = arith.constant 0 : index
    %c0_24 = arith.constant 0 : index
    %20 = vector.load %arg12[%c1_22, %c0_23, %c0_24] : memref<18x18x128xf32, #tpu.memory_space<vmem>>, vector<16x18x128xf32>
    %21 = vector.extract_strided_slice %20 {offsets = [0, 0, 0], sizes = [16, 16, 128], strides = [1, 1, 1]} : vector<16x18x128xf32> to vector<16x16x128xf32>
    %22 = vector.extract_strided_slice %20 {offsets = [0, 1, 0], sizes = [16, 16, 128], strides = [1, 1, 1]} : vector<16x18x128xf32> to vector<16x16x128xf32>
    %23 = vector.extract_strided_slice %20 {offsets = [0, 2, 0], sizes = [16, 16, 128], strides = [1, 1, 1]} : vector<16x18x128xf32> to vector<16x16x128xf32>
    %24 = tpu.concatenate %21, %22, %23 in 2 : vector<16x16x128xf32>, vector<16x16x128xf32>, vector<16x16x128xf32> -> vector<16x16x384xf32>
    %25 = vector.shape_cast %24 : vector<16x16x384xf32> to vector<256x384xf32>
    %26 = arith.truncf %25 : vector<256x384xf32> to vector<256x384xbf16>
    %c0_25 = arith.constant 0 : index
    %c0_26 = arith.constant 0 : index
    %27 = vector.load %arg14[%c0_25, %c0_26] : memref<256x128xf32, #tpu.memory_space<vmem>>, vector<256x128xf32>
    %c1_27 = arith.constant 1 : index
    %c0_28 = arith.constant 0 : index
    %c0_29 = arith.constant 0 : index
    %28 = vector.load %arg2[%c1_27, %c0_28, %c0_29] : memref<3x384x128xbf16, #tpu.memory_space<vmem>>, vector<1x384x128xbf16>
    %29 = vector.shape_cast %28 : vector<1x384x128xbf16> to vector<384x128xbf16>
    %cst_30 = arith.constant dense<0.000000e+00> : vector<256x128xf32>
    %30 = tpu.matmul %26, %29, %cst_30 {dimension_numbers = #tpu.dot_dimension_numbers<[1], [0], [0], [1], [0, 0, 1, 1], [], []>} : vector<256x384xbf16>, vector<384x128xbf16>, vector<256x128xf32> -> vector<256x128xf32>
    %31 = arith.addf %27, %30 : vector<256x128xf32>
    %c0_31 = arith.constant 0 : index
    %c0_32 = arith.constant 0 : index
    %32 = vector.load %arg14[%c0_31, %c0_32] : memref<256x128xf32, #tpu.memory_space<vmem>>, vector<256x128xf32>
    tpu.vector_store %arg14[%c0_31, %c0_32], %31 {strides = array<i32>} : memref<256x128xf32, #tpu.memory_space<vmem>>, vector<256x128xf32>,
    %c2 = arith.constant 2 : index
    %c0_33 = arith.constant 0 : index
    %c0_34 = arith.constant 0 : index
    %33 = vector.load %arg12[%c2, %c0_33, %c0_34] : memref<18x18x128xf32, #tpu.memory_space<vmem>>, vector<16x18x128xf32>
    %34 = vector.extract_strided_slice %33 {offsets = [0, 0, 0], sizes = [16, 16, 128], strides = [1, 1, 1]} : vector<16x18x128xf32> to vector<16x16x128xf32>
    %35 = vector.extract_strided_slice %33 {offsets = [0, 1, 0], sizes = [16, 16, 128], strides = [1, 1, 1]} : vector<16x18x128xf32> to vector<16x16x128xf32>
    %36 = vector.extract_strided_slice %33 {offsets = [0, 2, 0], sizes = [16, 16, 128], strides = [1, 1, 1]} : vector<16x18x128xf32> to vector<16x16x128xf32>
    %37 = tpu.concatenate %34, %35, %36 in 2 : vector<16x16x128xf32>, vector<16x16x128xf32>, vector<16x16x128xf32> -> vector<16x16x384xf32>
    %38 = vector.shape_cast %37 : vector<16x16x384xf32> to vector<256x384xf32>
    %39 = arith.truncf %38 : vector<256x384xf32> to vector<256x384xbf16>
    %c0_35 = arith.constant 0 : index
    %c0_36 = arith.constant 0 : index
    %40 = vector.load %arg14[%c0_35, %c0_36] : memref<256x128xf32, #tpu.memory_space<vmem>>, vector<256x128xf32>
    %c2_37 = arith.constant 2 : index
    %c0_38 = arith.constant 0 : index
    %c0_39 = arith.constant 0 : index
    %41 = vector.load %arg2[%c2_37, %c0_38, %c0_39] : memref<3x384x128xbf16, #tpu.memory_space<vmem>>, vector<1x384x128xbf16>
    %42 = vector.shape_cast %41 : vector<1x384x128xbf16> to vector<384x128xbf16>
    %cst_40 = arith.constant dense<0.000000e+00> : vector<256x128xf32>
    %43 = tpu.matmul %39, %42, %cst_40 {dimension_numbers = #tpu.dot_dimension_numbers<[1], [0], [0], [1], [0, 0, 1, 1], [], []>} : vector<256x384xbf16>, vector<384x128xbf16>, vector<256x128xf32> -> vector<256x128xf32>
    %44 = arith.addf %40, %43 : vector<256x128xf32>
    %c0_41 = arith.constant 0 : index
    %c0_42 = arith.constant 0 : index
    %45 = vector.load %arg14[%c0_41, %c0_42] : memref<256x128xf32, #tpu.memory_space<vmem>>, vector<256x128xf32>
    tpu.vector_store %arg14[%c0_41, %c0_42], %44 {strides = array<i32>} : memref<256x128xf32, #tpu.memory_space<vmem>>, vector<256x128xf32>,
    %c0_43 = arith.constant 0 : index
    %c0_44 = arith.constant 0 : index
    %46 = vector.load %arg14[%c0_43, %c0_44] : memref<256x128xf32, #tpu.memory_space<vmem>>, vector<256x128xf32>
    %c0_45 = arith.constant 0 : index
    %c0_46 = arith.constant 0 : index
    %47 = vector.load %arg3[%c0_45, %c0_46] : memref<1x128xf32, #tpu.memory_space<vmem>>, vector<1x128xf32>
    %48 = vector.broadcast %47 : vector<1x128xf32> to vector<256x128xf32>
    %49 = arith.mulf %46, %48 : vector<256x128xf32>
    %c0_47 = arith.constant 0 : index
    %c0_48 = arith.constant 0 : index
    %50 = vector.load %arg4[%c0_47, %c0_48] : memref<1x128xf32, #tpu.memory_space<vmem>>, vector<1x128xf32>
    %51 = vector.broadcast %50 : vector<1x128xf32> to vector<256x128xf32>
    %52 = arith.addf %49, %51 : vector<256x128xf32>
    %cst_49 = arith.constant 0.000000e+00 : f32
    %53 = vector.broadcast %cst_49 : f32 to vector<256x128xf32>
    %54 = arith.maximumf %52, %53 : vector<256x128xf32>
    %cst_50 = arith.constant 0.000000e+00 : f32
    %55 = vector.broadcast %cst_50 : f32 to vector<18x18x128xf32>
    %c0_51 = arith.constant 0 : index
    %c0_52 = arith.constant 0 : index
    %c0_53 = arith.constant 0 : index
    %56 = vector.load %arg13[%c0_51, %c0_52, %c0_53] : memref<18x18x128xf32, #tpu.memory_space<vmem>>, vector<18x18x128xf32>
    tpu.vector_store %arg13[%c0_51, %c0_52, %c0_53], %55 {strides = array<i32>} : memref<18x18x128xf32, #tpu.memory_space<vmem>>, vector<18x18x128xf32>,
    %57 = vector.shape_cast %54 : vector<256x128xf32> to vector<16x16x128xf32>
    %c1_54 = arith.constant 1 : index
    %c1_55 = arith.constant 1 : index
    %c0_56 = arith.constant 0 : index
    %58 = vector.load %arg13[%c1_54, %c1_55, %c0_56] : memref<18x18x128xf32, #tpu.memory_space<vmem>>, vector<16x16x128xf32>
    tpu.vector_store %arg13[%c1_54, %c1_55, %c0_56], %57 {strides = array<i32>} : memref<18x18x128xf32, #tpu.memory_space<vmem>>, vector<16x16x128xf32>,
    %cst_57 = arith.constant 0.000000e+00 : f32
    %59 = vector.broadcast %cst_57 : f32 to vector<256x128xf32>
    %c0_58 = arith.constant 0 : index
    %c0_59 = arith.constant 0 : index
    %60 = vector.load %arg15[%c0_58, %c0_59] : memref<256x128xf32, #tpu.memory_space<vmem>>, vector<256x128xf32>
    tpu.vector_store %arg15[%c0_58, %c0_59], %59 {strides = array<i32>} : memref<256x128xf32, #tpu.memory_space<vmem>>, vector<256x128xf32>,
    %c0_60 = arith.constant 0 : index
    %c0_61 = arith.constant 0 : index
    %c0_62 = arith.constant 0 : index
    %61 = vector.load %arg12[%c0_60, %c0_61, %c0_62] : memref<18x18x128xf32, #tpu.memory_space<vmem>>, vector<16x18x128xf32>
    %62 = vector.extract_strided_slice %61 {offsets = [0, 0, 0], sizes = [16, 16, 128], strides = [1, 1, 1]} : vector<16x18x128xf32> to vector<16x16x128xf32>
    %63 = vector.extract_strided_slice %61 {offsets = [0, 1, 0], sizes = [16, 16, 128], strides = [1, 1, 1]} : vector<16x18x128xf32> to vector<16x16x128xf32>
    %64 = vector.extract_strided_slice %61 {offsets = [0, 2, 0], sizes = [16, 16, 128], strides = [1, 1, 1]} : vector<16x18x128xf32> to vector<16x16x128xf32>
    %65 = tpu.concatenate %62, %63, %64 in 2 : vector<16x16x128xf32>, vector<16x16x128xf32>, vector<16x16x128xf32> -> vector<16x16x384xf32>
    %66 = vector.shape_cast %65 : vector<16x16x384xf32> to vector<256x384xf32>
    %67 = arith.truncf %66 : vector<256x384xf32> to vector<256x384xbf16>
    %c0_63 = arith.constant 0 : index
    %c0_64 = arith.constant 0 : index
    %68 = vector.load %arg15[%c0_63, %c0_64] : memref<256x128xf32, #tpu.memory_space<vmem>>, vector<256x128xf32>
    %c0_65 = arith.constant 0 : index
    %c0_66 = arith.constant 0 : index
    %c0_67 = arith.constant 0 : index
    %69 = vector.load %arg8[%c0_65, %c0_66, %c0_67] : memref<3x384x128xbf16, #tpu.memory_space<vmem>>, vector<1x384x128xbf16>
    %70 = vector.shape_cast %69 : vector<1x384x128xbf16> to vector<384x128xbf16>
    %cst_68 = arith.constant dense<0.000000e+00> : vector<256x128xf32>
    %71 = tpu.matmul %67, %70, %cst_68 {dimension_numbers = #tpu.dot_dimension_numbers<[1], [0], [0], [1], [0, 0, 1, 1], [], []>} : vector<256x384xbf16>, vector<384x128xbf16>, vector<256x128xf32> -> vector<256x128xf32>
    %72 = arith.addf %68, %71 : vector<256x128xf32>
    %c0_69 = arith.constant 0 : index
    %c0_70 = arith.constant 0 : index
    %73 = vector.load %arg15[%c0_69, %c0_70] : memref<256x128xf32, #tpu.memory_space<vmem>>, vector<256x128xf32>
    tpu.vector_store %arg15[%c0_69, %c0_70], %72 {strides = array<i32>} : memref<256x128xf32, #tpu.memory_space<vmem>>, vector<256x128xf32>,
    %c1_71 = arith.constant 1 : index
    %c0_72 = arith.constant 0 : index
    %c0_73 = arith.constant 0 : index
    %74 = vector.load %arg12[%c1_71, %c0_72, %c0_73] : memref<18x18x128xf32, #tpu.memory_space<vmem>>, vector<16x18x128xf32>
    %75 = vector.extract_strided_slice %74 {offsets = [0, 0, 0], sizes = [16, 16, 128], strides = [1, 1, 1]} : vector<16x18x128xf32> to vector<16x16x128xf32>
    %76 = vector.extract_strided_slice %74 {offsets = [0, 1, 0], sizes = [16, 16, 128], strides = [1, 1, 1]} : vector<16x18x128xf32> to vector<16x16x128xf32>
    %77 = vector.extract_strided_slice %74 {offsets = [0, 2, 0], sizes = [16, 16, 128], strides = [1, 1, 1]} : vector<16x18x128xf32> to vector<16x16x128xf32>
    %78 = tpu.concatenate %75, %76, %77 in 2 : vector<16x16x128xf32>, vector<16x16x128xf32>, vector<16x16x128xf32> -> vector<16x16x384xf32>
    %79 = vector.shape_cast %78 : vector<16x16x384xf32> to vector<256x384xf32>
    %80 = arith.truncf %79 : vector<256x384xf32> to vector<256x384xbf16>
    %c0_74 = arith.constant 0 : index
    %c0_75 = arith.constant 0 : index
    %81 = vector.load %arg15[%c0_74, %c0_75] : memref<256x128xf32, #tpu.memory_space<vmem>>, vector<256x128xf32>
    %c1_76 = arith.constant 1 : index
    %c0_77 = arith.constant 0 : index
    %c0_78 = arith.constant 0 : index
    %82 = vector.load %arg8[%c1_76, %c0_77, %c0_78] : memref<3x384x128xbf16, #tpu.memory_space<vmem>>, vector<1x384x128xbf16>
    %83 = vector.shape_cast %82 : vector<1x384x128xbf16> to vector<384x128xbf16>
    %cst_79 = arith.constant dense<0.000000e+00> : vector<256x128xf32>
    %84 = tpu.matmul %80, %83, %cst_79 {dimension_numbers = #tpu.dot_dimension_numbers<[1], [0], [0], [1], [0, 0, 1, 1], [], []>} : vector<256x384xbf16>, vector<384x128xbf16>, vector<256x128xf32> -> vector<256x128xf32>
    %85 = arith.addf %81, %84 : vector<256x128xf32>
    %c0_80 = arith.constant 0 : index
    %c0_81 = arith.constant 0 : index
    %86 = vector.load %arg15[%c0_80, %c0_81] : memref<256x128xf32, #tpu.memory_space<vmem>>, vector<256x128xf32>
    tpu.vector_store %arg15[%c0_80, %c0_81], %85 {strides = array<i32>} : memref<256x128xf32, #tpu.memory_space<vmem>>, vector<256x128xf32>,
    %c2_82 = arith.constant 2 : index
    %c0_83 = arith.constant 0 : index
    %c0_84 = arith.constant 0 : index
    %87 = vector.load %arg12[%c2_82, %c0_83, %c0_84] : memref<18x18x128xf32, #tpu.memory_space<vmem>>, vector<16x18x128xf32>
    %88 = vector.extract_strided_slice %87 {offsets = [0, 0, 0], sizes = [16, 16, 128], strides = [1, 1, 1]} : vector<16x18x128xf32> to vector<16x16x128xf32>
    %89 = vector.extract_strided_slice %87 {offsets = [0, 1, 0], sizes = [16, 16, 128], strides = [1, 1, 1]} : vector<16x18x128xf32> to vector<16x16x128xf32>
    %90 = vector.extract_strided_slice %87 {offsets = [0, 2, 0], sizes = [16, 16, 128], strides = [1, 1, 1]} : vector<16x18x128xf32> to vector<16x16x128xf32>
    %91 = tpu.concatenate %88, %89, %90 in 2 : vector<16x16x128xf32>, vector<16x16x128xf32>, vector<16x16x128xf32> -> vector<16x16x384xf32>
    %92 = vector.shape_cast %91 : vector<16x16x384xf32> to vector<256x384xf32>
    %93 = arith.truncf %92 : vector<256x384xf32> to vector<256x384xbf16>
    %c0_85 = arith.constant 0 : index
    %c0_86 = arith.constant 0 : index
    %94 = vector.load %arg15[%c0_85, %c0_86] : memref<256x128xf32, #tpu.memory_space<vmem>>, vector<256x128xf32>
    %c2_87 = arith.constant 2 : index
    %c0_88 = arith.constant 0 : index
    %c0_89 = arith.constant 0 : index
    %95 = vector.load %arg8[%c2_87, %c0_88, %c0_89] : memref<3x384x128xbf16, #tpu.memory_space<vmem>>, vector<1x384x128xbf16>
    %96 = vector.shape_cast %95 : vector<1x384x128xbf16> to vector<384x128xbf16>
    %cst_90 = arith.constant dense<0.000000e+00> : vector<256x128xf32>
    %97 = tpu.matmul %93, %96, %cst_90 {dimension_numbers = #tpu.dot_dimension_numbers<[1], [0], [0], [1], [0, 0, 1, 1], [], []>} : vector<256x384xbf16>, vector<384x128xbf16>, vector<256x128xf32> -> vector<256x128xf32>
    %98 = arith.addf %94, %97 : vector<256x128xf32>
    %c0_91 = arith.constant 0 : index
    %c0_92 = arith.constant 0 : index
    %99 = vector.load %arg15[%c0_91, %c0_92] : memref<256x128xf32, #tpu.memory_space<vmem>>, vector<256x128xf32>
    tpu.vector_store %arg15[%c0_91, %c0_92], %98 {strides = array<i32>} : memref<256x128xf32, #tpu.memory_space<vmem>>, vector<256x128xf32>,
    %c0_93 = arith.constant 0 : index
    %c0_94 = arith.constant 0 : index
    %100 = vector.load %arg15[%c0_93, %c0_94] : memref<256x128xf32, #tpu.memory_space<vmem>>, vector<256x128xf32>
    %c0_95 = arith.constant 0 : index
    %c0_96 = arith.constant 0 : index
    %101 = vector.load %arg9[%c0_95, %c0_96] : memref<1x128xf32, #tpu.memory_space<vmem>>, vector<1x128xf32>
    %102 = vector.broadcast %101 : vector<1x128xf32> to vector<256x128xf32>
    %103 = arith.mulf %100, %102 : vector<256x128xf32>
    %c0_97 = arith.constant 0 : index
    %c0_98 = arith.constant 0 : index
    %104 = vector.load %arg10[%c0_97, %c0_98] : memref<1x128xf32, #tpu.memory_space<vmem>>, vector<1x128xf32>
    %105 = vector.broadcast %104 : vector<1x128xf32> to vector<256x128xf32>
    %106 = arith.addf %103, %105 : vector<256x128xf32>
    %c0_99 = arith.constant 0 : index
    %c0_100 = arith.constant 0 : index
    %107 = vector.load %arg15[%c0_99, %c0_100] : memref<256x128xf32, #tpu.memory_space<vmem>>, vector<256x128xf32>
    tpu.vector_store %arg15[%c0_99, %c0_100], %106 {strides = array<i32>} : memref<256x128xf32, #tpu.memory_space<vmem>>, vector<256x128xf32>,
    %cst_101 = arith.constant 0.000000e+00 : f32
    %108 = vector.broadcast %cst_101 : f32 to vector<256x128xf32>
    %c0_102 = arith.constant 0 : index
    %c0_103 = arith.constant 0 : index
    %109 = vector.load %arg14[%c0_102, %c0_103] : memref<256x128xf32, #tpu.memory_space<vmem>>, vector<256x128xf32>
    tpu.vector_store %arg14[%c0_102, %c0_103], %108 {strides = array<i32>} : memref<256x128xf32, #tpu.memory_space<vmem>>, vector<256x128xf32>,
    %c0_104 = arith.constant 0 : index
    %c0_105 = arith.constant 0 : index
    %c0_106 = arith.constant 0 : index
    %110 = vector.load %arg13[%c0_104, %c0_105, %c0_106] : memref<18x18x128xf32, #tpu.memory_space<vmem>>, vector<16x18x128xf32>
    %111 = vector.extract_strided_slice %110 {offsets = [0, 0, 0], sizes = [16, 16, 128], strides = [1, 1, 1]} : vector<16x18x128xf32> to vector<16x16x128xf32>
    %112 = vector.extract_strided_slice %110 {offsets = [0, 1, 0], sizes = [16, 16, 128], strides = [1, 1, 1]} : vector<16x18x128xf32> to vector<16x16x128xf32>
    %113 = vector.extract_strided_slice %110 {offsets = [0, 2, 0], sizes = [16, 16, 128], strides = [1, 1, 1]} : vector<16x18x128xf32> to vector<16x16x128xf32>
    %114 = tpu.concatenate %111, %112, %113 in 2 : vector<16x16x128xf32>, vector<16x16x128xf32>, vector<16x16x128xf32> -> vector<16x16x384xf32>
    %115 = vector.shape_cast %114 : vector<16x16x384xf32> to vector<256x384xf32>
    %116 = arith.truncf %115 : vector<256x384xf32> to vector<256x384xbf16>
    %c0_107 = arith.constant 0 : index
    %c0_108 = arith.constant 0 : index
    %117 = vector.load %arg14[%c0_107, %c0_108] : memref<256x128xf32, #tpu.memory_space<vmem>>, vector<256x128xf32>
    %c0_109 = arith.constant 0 : index
    %c0_110 = arith.constant 0 : index
    %c0_111 = arith.constant 0 : index
    %118 = vector.load %arg5[%c0_109, %c0_110, %c0_111] : memref<3x384x128xbf16, #tpu.memory_space<vmem>>, vector<1x384x128xbf16>
    %119 = vector.shape_cast %118 : vector<1x384x128xbf16> to vector<384x128xbf16>
    %cst_112 = arith.constant dense<0.000000e+00> : vector<256x128xf32>
    %120 = tpu.matmul %116, %119, %cst_112 {dimension_numbers = #tpu.dot_dimension_numbers<[1], [0], [0], [1], [0, 0, 1, 1], [], []>} : vector<256x384xbf16>, vector<384x128xbf16>, vector<256x128xf32> -> vector<256x128xf32>
    %121 = arith.addf %117, %120 : vector<256x128xf32>
    %c0_113 = arith.constant 0 : index
    %c0_114 = arith.constant 0 : index
    %122 = vector.load %arg14[%c0_113, %c0_114] : memref<256x128xf32, #tpu.memory_space<vmem>>, vector<256x128xf32>
    tpu.vector_store %arg14[%c0_113, %c0_114], %121 {strides = array<i32>} : memref<256x128xf32, #tpu.memory_space<vmem>>, vector<256x128xf32>,
    %c1_115 = arith.constant 1 : index
    %c0_116 = arith.constant 0 : index
    %c0_117 = arith.constant 0 : index
    %123 = vector.load %arg13[%c1_115, %c0_116, %c0_117] : memref<18x18x128xf32, #tpu.memory_space<vmem>>, vector<16x18x128xf32>
    %124 = vector.extract_strided_slice %123 {offsets = [0, 0, 0], sizes = [16, 16, 128], strides = [1, 1, 1]} : vector<16x18x128xf32> to vector<16x16x128xf32>
    %125 = vector.extract_strided_slice %123 {offsets = [0, 1, 0], sizes = [16, 16, 128], strides = [1, 1, 1]} : vector<16x18x128xf32> to vector<16x16x128xf32>
    %126 = vector.extract_strided_slice %123 {offsets = [0, 2, 0], sizes = [16, 16, 128], strides = [1, 1, 1]} : vector<16x18x128xf32> to vector<16x16x128xf32>
    %127 = tpu.concatenate %124, %125, %126 in 2 : vector<16x16x128xf32>, vector<16x16x128xf32>, vector<16x16x128xf32> -> vector<16x16x384xf32>
    %128 = vector.shape_cast %127 : vector<16x16x384xf32> to vector<256x384xf32>
    %129 = arith.truncf %128 : vector<256x384xf32> to vector<256x384xbf16>
    %c0_118 = arith.constant 0 : index
    %c0_119 = arith.constant 0 : index
    %130 = vector.load %arg14[%c0_118, %c0_119] : memref<256x128xf32, #tpu.memory_space<vmem>>, vector<256x128xf32>
    %c1_120 = arith.constant 1 : index
    %c0_121 = arith.constant 0 : index
    %c0_122 = arith.constant 0 : index
    %131 = vector.load %arg5[%c1_120, %c0_121, %c0_122] : memref<3x384x128xbf16, #tpu.memory_space<vmem>>, vector<1x384x128xbf16>
    %132 = vector.shape_cast %131 : vector<1x384x128xbf16> to vector<384x128xbf16>
    %cst_123 = arith.constant dense<0.000000e+00> : vector<256x128xf32>
    %133 = tpu.matmul %129, %132, %cst_123 {dimension_numbers = #tpu.dot_dimension_numbers<[1], [0], [0], [1], [0, 0, 1, 1], [], []>} : vector<256x384xbf16>, vector<384x128xbf16>, vector<256x128xf32> -> vector<256x128xf32>
    %134 = arith.addf %130, %133 : vector<256x128xf32>
    %c0_124 = arith.constant 0 : index
    %c0_125 = arith.constant 0 : index
    %135 = vector.load %arg14[%c0_124, %c0_125] : memref<256x128xf32, #tpu.memory_space<vmem>>, vector<256x128xf32>
    tpu.vector_store %arg14[%c0_124, %c0_125], %134 {strides = array<i32>} : memref<256x128xf32, #tpu.memory_space<vmem>>, vector<256x128xf32>,
    %c2_126 = arith.constant 2 : index
    %c0_127 = arith.constant 0 : index
    %c0_128 = arith.constant 0 : index
    %136 = vector.load %arg13[%c2_126, %c0_127, %c0_128] : memref<18x18x128xf32, #tpu.memory_space<vmem>>, vector<16x18x128xf32>
    %137 = vector.extract_strided_slice %136 {offsets = [0, 0, 0], sizes = [16, 16, 128], strides = [1, 1, 1]} : vector<16x18x128xf32> to vector<16x16x128xf32>
    %138 = vector.extract_strided_slice %136 {offsets = [0, 1, 0], sizes = [16, 16, 128], strides = [1, 1, 1]} : vector<16x18x128xf32> to vector<16x16x128xf32>
    %139 = vector.extract_strided_slice %136 {offsets = [0, 2, 0], sizes = [16, 16, 128], strides = [1, 1, 1]} : vector<16x18x128xf32> to vector<16x16x128xf32>
    %140 = tpu.concatenate %137, %138, %139 in 2 : vector<16x16x128xf32>, vector<16x16x128xf32>, vector<16x16x128xf32> -> vector<16x16x384xf32>
    %141 = vector.shape_cast %140 : vector<16x16x384xf32> to vector<256x384xf32>
    %142 = arith.truncf %141 : vector<256x384xf32> to vector<256x384xbf16>
    %c0_129 = arith.constant 0 : index
    %c0_130 = arith.constant 0 : index
    %143 = vector.load %arg14[%c0_129, %c0_130] : memref<256x128xf32, #tpu.memory_space<vmem>>, vector<256x128xf32>
    %c2_131 = arith.constant 2 : index
    %c0_132 = arith.constant 0 : index
    %c0_133 = arith.constant 0 : index
    %144 = vector.load %arg5[%c2_131, %c0_132, %c0_133] : memref<3x384x128xbf16, #tpu.memory_space<vmem>>, vector<1x384x128xbf16>
    %145 = vector.shape_cast %144 : vector<1x384x128xbf16> to vector<384x128xbf16>
    %cst_134 = arith.constant dense<0.000000e+00> : vector<256x128xf32>
    %146 = tpu.matmul %142, %145, %cst_134 {dimension_numbers = #tpu.dot_dimension_numbers<[1], [0], [0], [1], [0, 0, 1, 1], [], []>} : vector<256x384xbf16>, vector<384x128xbf16>, vector<256x128xf32> -> vector<256x128xf32>
    %147 = arith.addf %143, %146 : vector<256x128xf32>
    %c0_135 = arith.constant 0 : index
    %c0_136 = arith.constant 0 : index
    %148 = vector.load %arg14[%c0_135, %c0_136] : memref<256x128xf32, #tpu.memory_space<vmem>>, vector<256x128xf32>
    tpu.vector_store %arg14[%c0_135, %c0_136], %147 {strides = array<i32>} : memref<256x128xf32, #tpu.memory_space<vmem>>, vector<256x128xf32>,
    %c0_137 = arith.constant 0 : index
    %c0_138 = arith.constant 0 : index
    %149 = vector.load %arg14[%c0_137, %c0_138] : memref<256x128xf32, #tpu.memory_space<vmem>>, vector<256x128xf32>
    %c0_139 = arith.constant 0 : index
    %c0_140 = arith.constant 0 : index
    %150 = vector.load %arg6[%c0_139, %c0_140] : memref<1x128xf32, #tpu.memory_space<vmem>>, vector<1x128xf32>
    %151 = vector.broadcast %150 : vector<1x128xf32> to vector<256x128xf32>
    %152 = arith.mulf %149, %151 : vector<256x128xf32>
    %c0_141 = arith.constant 0 : index
    %c0_142 = arith.constant 0 : index
    %153 = vector.load %arg7[%c0_141, %c0_142] : memref<1x128xf32, #tpu.memory_space<vmem>>, vector<1x128xf32>
    %154 = vector.broadcast %153 : vector<1x128xf32> to vector<256x128xf32>
    %155 = arith.addf %152, %154 : vector<256x128xf32>
    %c0_143 = arith.constant 0 : index
    %c0_144 = arith.constant 0 : index
    %156 = vector.load %arg15[%c0_143, %c0_144] : memref<256x128xf32, #tpu.memory_space<vmem>>, vector<256x128xf32>
    %157 = arith.addf %155, %156 : vector<256x128xf32>
    %158 = vector.shape_cast %157 : vector<256x128xf32> to vector<16x16x128xf32>
    %cst_145 = arith.constant 0.000000e+00 : f32
    %159 = vector.broadcast %cst_145 : f32 to vector<16x16x128xf32>
    %160 = arith.maximumf %158, %159 : vector<16x16x128xf32>
    %c0_146 = arith.constant 0 : index
    %c0_147 = arith.constant 0 : index
    %c0_148 = arith.constant 0 : index
    %c0_149 = arith.constant 0 : index
    %161 = vector.load %arg11[%c0_146, %c0_147, %c0_148, %c0_149] : memref<1x16x16x128xf32, #tpu.memory_space<vmem>>, vector<1x16x16x128xf32>
    %162 = vector.shape_cast %161 : vector<1x16x16x128xf32> to vector<16x16x128xf32>
    %163 = vector.shape_cast %160 : vector<16x16x128xf32> to vector<1x16x16x128xf32>
    tpu.vector_store %arg11[%c0_146, %c0_147, %c0_148, %c0_149], %163 {strides = array<i32>} : memref<1x16x16x128xf32, #tpu.memory_space<vmem>>, vector<1x16x16x128xf32>,
    return
  }
  func.func @transform_0(%arg0: i32) -> (i32, i32, i32, i32) {
    %c0_i32 = arith.constant 0 : i32
    %c0_i32_0 = arith.constant 0 : i32
    %c0_i32_1 = arith.constant 0 : i32
    %c0_i32_2 = arith.constant 0 : i32
    return %arg0, %c0_i32, %c0_i32_0, %c0_i32_1 : i32, i32, i32, i32
  }
  func.func @transform_1(%arg0: i32) -> (i32, i32, i32) {
    %c0_i32 = arith.constant 0 : i32
    %c0_i32_0 = arith.constant 0 : i32
    %c0_i32_1 = arith.constant 0 : i32
    %c0_i32_2 = arith.constant 0 : i32
    return %c0_i32, %c0_i32_0, %c0_i32_1 : i32, i32, i32
  }
  func.func @transform_2(%arg0: i32) -> (i32, i32) {
    %c0_i32 = arith.constant 0 : i32
    %c0_i32_0 = arith.constant 0 : i32
    %c0_i32_1 = arith.constant 0 : i32
    return %c0_i32, %c0_i32_0 : i32, i32
  }
  func.func @transform_3(%arg0: i32) -> (i32, i32) {
    %c0_i32 = arith.constant 0 : i32
    %c0_i32_0 = arith.constant 0 : i32
    %c0_i32_1 = arith.constant 0 : i32
    return %c0_i32, %c0_i32_0 : i32, i32
  }
  func.func @transform_4(%arg0: i32) -> (i32, i32, i32) {
    %c0_i32 = arith.constant 0 : i32
    %c0_i32_0 = arith.constant 0 : i32
    %c0_i32_1 = arith.constant 0 : i32
    %c0_i32_2 = arith.constant 0 : i32
    return %c0_i32, %c0_i32_0, %c0_i32_1 : i32, i32, i32
  }
  func.func @transform_5(%arg0: i32) -> (i32, i32) {
    %c0_i32 = arith.constant 0 : i32
    %c0_i32_0 = arith.constant 0 : i32
    %c0_i32_1 = arith.constant 0 : i32
    return %c0_i32, %c0_i32_0 : i32, i32
  }
  func.func @transform_6(%arg0: i32) -> (i32, i32) {
    %c0_i32 = arith.constant 0 : i32
    %c0_i32_0 = arith.constant 0 : i32
    %c0_i32_1 = arith.constant 0 : i32
    return %c0_i32, %c0_i32_0 : i32, i32
  }
  func.func @transform_7(%arg0: i32) -> (i32, i32, i32) {
    %c0_i32 = arith.constant 0 : i32
    %c0_i32_0 = arith.constant 0 : i32
    %c0_i32_1 = arith.constant 0 : i32
    %c0_i32_2 = arith.constant 0 : i32
    return %c0_i32, %c0_i32_0, %c0_i32_1 : i32, i32, i32
  }
  func.func @transform_8(%arg0: i32) -> (i32, i32) {
    %c0_i32 = arith.constant 0 : i32
    %c0_i32_0 = arith.constant 0 : i32
    %c0_i32_1 = arith.constant 0 : i32
    return %c0_i32, %c0_i32_0 : i32, i32
  }
  func.func @transform_9(%arg0: i32) -> (i32, i32) {
    %c0_i32 = arith.constant 0 : i32
    %c0_i32_0 = arith.constant 0 : i32
    %c0_i32_1 = arith.constant 0 : i32
    return %c0_i32, %c0_i32_0 : i32, i32
  }
  func.func @transform_10(%arg0: i32) -> (i32, i32, i32, i32) {
    %c0_i32 = arith.constant 0 : i32
    %c0_i32_0 = arith.constant 0 : i32
    %c0_i32_1 = arith.constant 0 : i32
    %c0_i32_2 = arith.constant 0 : i32
    return %arg0, %c0_i32, %c0_i32_0, %c0_i32_1 : i32, i32, i32, i32
  }
}

</mosaic_0001>

<llo_original>
// kernel: tpu_custom_call.1
$region0: #{tpu_custom_call.1}
  #allocation0 [shape = 'u32[]', space=smem, size = 0x4, offset = 0x4, fixed_abs, tag = 'smem constant byte address 0x4 - core index']
  #allocation1 [shape = 'u32[72,128]{1,0:T(1,128)}', space=vmem, size = 0x9000, scoped, tag = 'internal scratch']
  #allocation2 [shape = 'f32[18,18,128]{2,1,0:T(8,128)}', space=vmem, size = 0x36000, scoped, tag = 'scratch operand']
  #allocation3 [shape = 'f32[18,18,128]{2,1,0:T(8,128)}', space=vmem, size = 0x36000, scoped, tag = 'scratch operand']
  #allocation4 [shape = 'f32[256,128]{1,0:T(8,128)}', space=vmem, size = 0x20000, scoped, tag = 'scratch operand']
  #allocation5 [shape = 'f32[256,128]{1,0:T(8,128)}', space=vmem, size = 0x20000, scoped, tag = 'scratch operand']
  %s0 = inlined_call_operand.hbm [shape: f32[2,16,16,128], index: 0, kind: input, shape index: {}]
  %s1 = inlined_call_operand.hbm [shape: bf16[3,384,128], index: 1, kind: input, shape index: {}]
  %s2 = inlined_call_operand.vmem [shape: f32[1,128], index: 2, kind: input, shape index: {}]
  %s3 = inlined_call_operand.vmem [shape: f32[1,128], index: 3, kind: input, shape index: {}]
  %s4 = inlined_call_operand.hbm [shape: bf16[3,384,128], index: 4, kind: input, shape index: {}]
  %s5 = inlined_call_operand.vmem [shape: f32[1,128], index: 5, kind: input, shape index: {}]
  %s6 = inlined_call_operand.vmem [shape: f32[1,128], index: 6, kind: input, shape index: {}]
  %s7 = inlined_call_operand.hbm [shape: bf16[3,384,128], index: 7, kind: input, shape index: {}]
  %s8 = inlined_call_operand.vmem [shape: f32[1,128], index: 8, kind: input, shape index: {}]
  %s9 = inlined_call_operand.vmem [shape: f32[1,128], index: 9, kind: input, shape index: {}]
  %s10 = inlined_call_operand.hbm [shape: f32[2,16,16,128], index: 10, kind: output, shape index: {}]
  %s11 = sld [smem:[#allocation0]]
  $region89: #{tpu_custom_call.1} parent=0
    _
  %s13 = ssub.s32 1, %s11
  %s14 = scalar_select 0, %s13, %s11
  $region1: #{tpu_custom_call.1} parent=0
    #allocation6 [shape = 'u8[262144]{0}', space=vmem, size = 0x40000, scoped, tag = 'input window, operand 0']
    #allocation7 [shape = 's32[2]{0}', space=sflag, size = 0x8, scoped, tag = 'scoped memory for tpu_custom_call.1']
    #allocation8 [shape = 's32[2]{0}', space=sflag, size = 0x8, scoped, tag = 'scoped memory for tpu_custom_call.1']
    #allocation9 [shape = 'u8[294912]{0}', space=vmem, size = 0x48000, scoped, tag = 'input window, operand 1, single buffered']
    #allocation10 [shape = 's32[1]{0}', space=sflag, size = 0x4, scoped, tag = 'scoped memory for tpu_custom_call.1']
    #allocation11 [shape = 'u8[294912]{0}', space=vmem, size = 0x48000, scoped, tag = 'input window, operand 4, single buffered']
    #allocation12 [shape = 'u8[294912]{0}', space=vmem, size = 0x48000, scoped, tag = 'input window, operand 7, single buffered']
    #allocation13 [shape = 's32[1]{0}', space=sflag, size = 0x4, scoped, tag = 'scoped memory for tpu_custom_call.1']
    #allocation14 [shape = 'u8[262144]{0}', space=vmem, size = 0x40000, scoped, tag = 'output window, operand 0']
    %15 = vsyncpa [#allocation7], 0
    %s16 = scalar_lea.sflag [#allocation7], 1
    %17 = vsyncpa %s16, 0
    %18 = vsyncpa [#allocation10], 0
    %19 = vsyncpa [#allocation13], 0
    %20 = vsyncpa [#allocation8], 0
    %s21 = scalar_lea.sflag [#allocation8], 1
    %22 = vsyncpa %s21, 0
    loop: start=0, step=1, limit=4
    $region2: #{tpu_custom_call.1} parent=1 // loop_pre_header
      _
    $region3: #{tpu_custom_call.1} parent=1 // loop_header
      %s24 = sphi 0, %s28
      %p25 = scmp.ge.s32.totalorder %s24, 4
      %s34 = sphi 0, %s36
      %s37 = sphi 0, %s34
      %s38 = sphi 0, %s37
      %s54 = sphi 0, %s38
      %s58 = sphi 0, %s58
      %s60 = sphi 0, %s58
      %s61 = sphi 0, %s60
      %s75 = sphi 0, %s61
      %s79 = sphi 0, %s79
      %s81 = sphi 0, %s79
      %s82 = sphi 0, %s81
      %s96 = sphi 0, %s82
      %s100 = sphi 0, %s100
      %s102 = sphi 0, %s100
      %s103 = sphi 0, %s102
      %s117 = sphi 0, %s103
      %s121 = sphi 0, %s121
      %s123 = sphi 0, %s121
      %s124 = sphi 0, %s123
      %s138 = sphi 0, %s124
      %s142 = sphi 0, %s142
      %s144 = sphi 0, %s142
      %s145 = sphi 0, %s144
      %s159 = sphi 0, %s145
      %s163 = sphi 0, %s163
      %s165 = sphi 0, %s163
      %s166 = sphi 0, %s165
      %s180 = sphi 0, %s166
      %s184 = sphi 0, %s184
      %s186 = sphi 0, %s184
      %s187 = sphi 0, %s186
      %s201 = sphi 0, %s187
      %s205 = sphi 0, %s205
      %s207 = sphi 0, %s205
      %s208 = sphi 0, %s207
      %s222 = sphi 0, %s208
      %s226 = sphi 0, %s226
      %s228 = sphi 0, %s226
      %s229 = sphi 0, %s228
      %s243 = sphi 0, %s229
      %s249 = sphi 0, %s251
      %s252 = sphi 0, %s249
      %s253 = sphi 0, %s252
      %s269 = sphi 0, %s253
    $region4: #{tpu_custom_call.1} parent=1 // loop_header_branch
      %27 = sbr.rel (%p25) target = $region8
    $region5: #{tpu_custom_call.1} parent=1 // loop_body
      %s29 = ssub.s32 %s24, 1
      %s30 = ssub.s32 %s24, 2
      %s31 = sadd.s32 %s24, 1
      %s32 = ssub.s32 %s24, %s31
      %p33 = scmp.eq.s32.totalorder %s32, 0
      %s35 = sadd.s32 %s34, 1
      %s36 = scalar_select %p33, %s34, %s35
      %p39 = pneg %p33
      %p40 = scmp.eq.s32.totalorder %s24, 1
      %p41 = por %p39, %p40
      %p42 = scmp.ne.s32.totalorder %s34, %s37
      %p43 = scmp.eq.s32.totalorder %s24, 0
      %p44 = por %p42, %p43
      %p45 = scmp.ne.s32.totalorder %s34, %s37
      %p46 = scmp.eq.s32.totalorder %s29, 1
      %p47 = por %p45, %p46
      %p48 = scmp.ne.s32.totalorder %s37, %s38
      %p49 = scmp.eq.s32.totalorder %s29, 0
      %p50 = por %p48, %p49
      %p51 = scmp.ne.s32.totalorder %s37, %s38
      %p52 = scmp.eq.s32.totalorder %s30, 1
      %p53 = por %p51, %p52
      %p55 = scmp.ne.s32.totalorder %s38, %s54
      %p56 = scmp.eq.s32.totalorder %s30, 0
      %p57 = por %p55, %p56
      %s59 = sadd.s32 %s58, 1
      %p62 = scmp.eq.s32.totalorder %s24, 1
      %p63 = scmp.ne.s32.totalorder %s58, %s60
      %p64 = scmp.eq.s32.totalorder %s24, 0
      %p65 = por %p63, %p64
      %p66 = scmp.ne.s32.totalorder %s58, %s60
      %p67 = scmp.eq.s32.totalorder %s29, 1
      %p68 = por %p66, %p67
      %p69 = scmp.ne.s32.totalorder %s60, %s61
      %p70 = scmp.eq.s32.totalorder %s29, 0
      %p71 = por %p69, %p70
      %p72 = scmp.ne.s32.totalorder %s60, %s61
      %p73 = scmp.eq.s32.totalorder %s30, 1
      %p74 = por %p72, %p73
      %p76 = scmp.ne.s32.totalorder %s61, %s75
      %p77 = scmp.eq.s32.totalorder %s30, 0
      %p78 = por %p76, %p77
      %s80 = sadd.s32 %s79, 1
      %p83 = scmp.eq.s32.totalorder %s24, 1
      %p84 = scmp.ne.s32.totalorder %s79, %s81
      %p85 = scmp.eq.s32.totalorder %s24, 0
      %p86 = por %p84, %p85
      %p87 = scmp.ne.s32.totalorder %s79, %s81
      %p88 = scmp.eq.s32.totalorder %s29, 1
      %p89 = por %p87, %p88
      %p90 = scmp.ne.s32.totalorder %s81, %s82
      %p91 = scmp.eq.s32.totalorder %s29, 0
      %p92 = por %p90, %p91
      %p93 = scmp.ne.s32.totalorder %s81, %s82
      %p94 = scmp.eq.s32.totalorder %s30, 1
      %p95 = por %p93, %p94
      %p97 = scmp.ne.s32.totalorder %s82, %s96
      %p98 = scmp.eq.s32.totalorder %s30, 0
      %p99 = por %p97, %p98
      %s101 = sadd.s32 %s100, 1
      %p104 = scmp.eq.s32.totalorder %s24, 1
      %p105 = scmp.ne.s32.totalorder %s100, %s102
      %p106 = scmp.eq.s32.totalorder %s24, 0
      %p107 = por %p105, %p106
      %p108 = scmp.ne.s32.totalorder %s100, %s102
      %p109 = scmp.eq.s32.totalorder %s29, 1
      %p110 = por %p108, %p109
      %p111 = scmp.ne.s32.totalorder %s102, %s103
      %p112 = scmp.eq.s32.totalorder %s29, 0
      %p113 = por %p111, %p112
      %p114 = scmp.ne.s32.totalorder %s102, %s103
      %p115 = scmp.eq.s32.totalorder %s30, 1
      %p116 = por %p114, %p115
      %p118 = scmp.ne.s32.totalorder %s103, %s117
      %p119 = scmp.eq.s32.totalorder %s30, 0
      %p120 = por %p118, %p119
      %s122 = sadd.s32 %s121, 1
      %p125 = scmp.eq.s32.totalorder %s24, 1
      %p126 = scmp.ne.s32.totalorder %s121, %s123
      %p127 = scmp.eq.s32.totalorder %s24, 0
      %p128 = por %p126, %p127
      %p129 = scmp.ne.s32.totalorder %s121, %s123
      %p130 = scmp.eq.s32.totalorder %s29, 1
      %p131 = por %p129, %p130
      %p132 = scmp.ne.s32.totalorder %s123, %s124
      %p133 = scmp.eq.s32.totalorder %s29, 0
      %p134 = por %p132, %p133
      %p135 = scmp.ne.s32.totalorder %s123, %s124
      %p136 = scmp.eq.s32.totalorder %s30, 1
      %p137 = por %p135, %p136
      %p139 = scmp.ne.s32.totalorder %s124, %s138
      %p140 = scmp.eq.s32.totalorder %s30, 0
      %p141 = por %p139, %p140
      %s143 = sadd.s32 %s142, 1
      %p146 = scmp.eq.s32.totalorder %s24, 1
      %p147 = scmp.ne.s32.totalorder %s142, %s144
      %p148 = scmp.eq.s32.totalorder %s24, 0
      %p149 = por %p147, %p148
      %p150 = scmp.ne.s32.totalorder %s142, %s144
      %p151 = scmp.eq.s32.totalorder %s29, 1
      %p152 = por %p150, %p151
      %p153 = scmp.ne.s32.totalorder %s144, %s145
      %p154 = scmp.eq.s32.totalorder %s29, 0
      %p155 = por %p153, %p154
      %p156 = scmp.ne.s32.totalorder %s144, %s145
      %p157 = scmp.eq.s32.totalorder %s30, 1
      %p158 = por %p156, %p157
      %p160 = scmp.ne.s32.totalorder %s145, %s159
      %p161 = scmp.eq.s32.totalorder %s30, 0
      %p162 = por %p160, %p161
      %s164 = sadd.s32 %s163, 1
      %p167 = scmp.eq.s32.totalorder %s24, 1
      %p168 = scmp.ne.s32.totalorder %s163, %s165
      %p169 = scmp.eq.s32.totalorder %s24, 0
      %p170 = por %p168, %p169
      %p171 = scmp.ne.s32.totalorder %s163, %s165
      %p172 = scmp.eq.s32.totalorder %s29, 1
      %p173 = por %p171, %p172
      %p174 = scmp.ne.s32.totalorder %s165, %s166
      %p175 = scmp.eq.s32.totalorder %s29, 0
      %p176 = por %p174, %p175
      %p177 = scmp.ne.s32.totalorder %s165, %s166
      %p178 = scmp.eq.s32.totalorder %s30, 1
      %p179 = por %p177, %p178
      %p181 = scmp.ne.s32.totalorder %s166, %s180
      %p182 = scmp.eq.s32.totalorder %s30, 0
      %p183 = por %p181, %p182
      %s185 = sadd.s32 %s184, 1
      %p188 = scmp.eq.s32.totalorder %s24, 1
      %p189 = scmp.ne.s32.totalorder %s184, %s186
      %p190 = scmp.eq.s32.totalorder %s24, 0
      %p191 = por %p189, %p190
      %p192 = scmp.ne.s32.totalorder %s184, %s186
      %p193 = scmp.eq.s32.totalorder %s29, 1
      %p194 = por %p192, %p193
      %p195 = scmp.ne.s32.totalorder %s186, %s187
      %p196 = scmp.eq.s32.totalorder %s29, 0
      %p197 = por %p195, %p196
      %p198 = scmp.ne.s32.totalorder %s186, %s187
      %p199 = scmp.eq.s32.totalorder %s30, 1
      %p200 = por %p198, %p199
      %p202 = scmp.ne.s32.totalorder %s187, %s201
      %p203 = scmp.eq.s32.totalorder %s30, 0
      %p204 = por %p202, %p203
      %s206 = sadd.s32 %s205, 1
      %p209 = scmp.eq.s32.totalorder %s24, 1
      %p210 = scmp.ne.s32.totalorder %s205, %s207
      %p211 = scmp.eq.s32.totalorder %s24, 0
      %p212 = por %p210, %p211
      %p213 = scmp.ne.s32.totalorder %s205, %s207
      %p214 = scmp.eq.s32.totalorder %s29, 1
      %p215 = por %p213, %p214
      %p216 = scmp.ne.s32.totalorder %s207, %s208
      %p217 = scmp.eq.s32.totalorder %s29, 0
      %p218 = por %p216, %p217
      %p219 = scmp.ne.s32.totalorder %s207, %s208
      %p220 = scmp.eq.s32.totalorder %s30, 1
      %p221 = por %p219, %p220
      %p223 = scmp.ne.s32.totalorder %s208, %s222
      %p224 = scmp.eq.s32.totalorder %s30, 0
      %p225 = por %p223, %p224
      %s227 = sadd.s32 %s226, 1
      %p230 = scmp.eq.s32.totalorder %s24, 1
      %p231 = scmp.ne.s32.totalorder %s226, %s228
      %p232 = scmp.eq.s32.totalorder %s24, 0
      %p233 = por %p231, %p232
      %p234 = scmp.ne.s32.totalorder %s226, %s228
      %p235 = scmp.eq.s32.totalorder %s29, 1
      %p236 = por %p234, %p235
      %p237 = scmp.ne.s32.totalorder %s228, %s229
      %p238 = scmp.eq.s32.totalorder %s29, 0
      %p239 = por %p237, %p238
      %p240 = scmp.ne.s32.totalorder %s228, %s229
      %p241 = scmp.eq.s32.totalorder %s30, 1
      %p242 = por %p240, %p241
      %p244 = scmp.ne.s32.totalorder %s229, %s243
      %p245 = scmp.eq.s32.totalorder %s30, 0
      %p246 = por %p244, %p245
      %s247 = ssub.s32 %s24, %s31
      %p248 = scmp.eq.s32.totalorder %s247, 0
      %s250 = sadd.s32 %s249, 1
      %s251 = scalar_select %p248, %s249, %s250
      %p254 = pneg %p248
      %p255 = scmp.eq.s32.totalorder %s24, 1
      %p256 = por %p254, %p255
      %p257 = scmp.ne.s32.totalorder %s249, %s252
      %p258 = scmp.eq.s32.totalorder %s24, 0
      %p259 = por %p257, %p258
      %p260 = scmp.ne.s32.totalorder %s249, %s252
      %p261 = scmp.eq.s32.totalorder %s29, 1
      %p262 = por %p260, %p261
      %p263 = scmp.ne.s32.totalorder %s252, %s253
      %p264 = scmp.eq.s32.totalorder %s29, 0
      %p265 = por %p263, %p264
      %p266 = scmp.ne.s32.totalorder %s252, %s253
      %p267 = scmp.eq.s32.totalorder %s30, 1
      %p268 = por %p266, %p267
      %p270 = scmp.ne.s32.totalorder %s253, %s269
      %p271 = scmp.eq.s32.totalorder %s30, 0
      %p272 = por %p270, %p271
      %p273 = scmp.le.s32.totalorder 1, %s24
      %p274 = scmp.lt.s32.totalorder %s24, 3
      %p275 = pnand %p273, %p274
      %p276 = pneg %p275
      // Predicated region
      $region9: #{tpu_custom_call.1} parent=5 // pred_check
        _
      $region10: #{tpu_custom_call.1} parent=5 // pred_check_branch
        %278 = sbr.rel (%p275) target = $region12
      $region11: #{tpu_custom_call.1} parent=5 // pred_region
        %s279 = ssub.s32 %s24, 1
        // Predicated region
        $region13: #{tpu_custom_call.1} parent=11 // pred_check
          %p280 = pneg %p71
        $region14: #{tpu_custom_call.1} parent=11 // pred_check_branch
          %282 = sbr.rel (%p280) target = $region16
        $region15: #{tpu_custom_call.1} parent=11 // pred_region
          %284 = vsyncadd [#allocation10], 0
          %s285 = sshll.u32 %s1, 4
          %s286 = int_to_ptr.hbm [resolvable:$true] %s285
          %s287 = sshll.u32 [#allocation9], 4
          %s288 = int_to_ptr.vmem [resolvable:$true] %s287
          %293 = dma.hbm_to_vmem [thread:$0]  %s286, 9216, %s288, [#allocation10], 64, 64, 4
        $region16: #{tpu_custom_call.1} parent=11 // pred_fallthru
          _
        // Predicated region
        $region17: #{tpu_custom_call.1} parent=11 // pred_check
          %p294 = pneg %p92
        $region18: #{tpu_custom_call.1} parent=11 // pred_check_branch
          %296 = sbr.rel (%p294) target = $region20
        $region19: #{tpu_custom_call.1} parent=11 // pred_region
          _
        $region20: #{tpu_custom_call.1} parent=11 // pred_fallthru
          _
        // Predicated region
        $region21: #{tpu_custom_call.1} parent=11 // pred_check
          %p297 = pneg %p113
        $region22: #{tpu_custom_call.1} parent=11 // pred_check_branch
          %299 = sbr.rel (%p297) target = $region24
        $region23: #{tpu_custom_call.1} parent=11 // pred_region
          _
        $region24: #{tpu_custom_call.1} parent=11 // pred_fallthru
          _
        // Predicated region
        $region25: #{tpu_custom_call.1} parent=11 // pred_check
          %p300 = pneg %p134
        $region26: #{tpu_custom_call.1} parent=11 // pred_check_branch
          %302 = sbr.rel (%p300) target = $region28
        $region27: #{tpu_custom_call.1} parent=11 // pred_region
          %304 = vsyncadd [#allocation10], 0
          %s305 = sshll.u32 %s4, 4
          %s306 = int_to_ptr.hbm [resolvable:$true] %s305
          %s307 = sshll.u32 [#allocation11], 4
          %s308 = int_to_ptr.vmem [resolvable:$true] %s307
          %313 = dma.hbm_to_vmem [thread:$0]  %s306, 9216, %s308, [#allocation10], 64, 64, 4
        $region28: #{tpu_custom_call.1} parent=11 // pred_fallthru
          _
        // Predicated region
        $region29: #{tpu_custom_call.1} parent=11 // pred_check
          %p314 = pneg %p155
        $region30: #{tpu_custom_call.1} parent=11 // pred_check_branch
          %316 = sbr.rel (%p314) target = $region32
        $region31: #{tpu_custom_call.1} parent=11 // pred_region
          _
        $region32: #{tpu_custom_call.1} parent=11 // pred_fallthru
          _
        // Predicated region
        $region33: #{tpu_custom_call.1} parent=11 // pred_check
          %p317 = pneg %p176
        $region34: #{tpu_custom_call.1} parent=11 // pred_check_branch
          %319 = sbr.rel (%p317) target = $region36
        $region35: #{tpu_custom_call.1} parent=11 // pred_region
          _
        $region36: #{tpu_custom_call.1} parent=11 // pred_fallthru
          _
        // Predicated region
        $region37: #{tpu_custom_call.1} parent=11 // pred_check
          %p320 = pneg %p197
        $region38: #{tpu_custom_call.1} parent=11 // pred_check_branch
          %322 = sbr.rel (%p320) target = $region40
        $region39: #{tpu_custom_call.1} parent=11 // pred_region
          %324 = vsyncadd [#allocation13], 0
          %s325 = sshll.u32 %s7, 4
          %s326 = int_to_ptr.hbm [resolvable:$true] %s325
          %s327 = sshll.u32 [#allocation12], 4
          %s328 = int_to_ptr.vmem [resolvable:$true] %s327
          %333 = dma.hbm_to_vmem [thread:$0]  %s326, 9216, %s328, [#allocation13], 64, 64, 4
        $region40: #{tpu_custom_call.1} parent=11 // pred_fallthru
          _
        // Predicated region
        $region41: #{tpu_custom_call.1} parent=11 // pred_check
          %p334 = pneg %p218
        $region42: #{tpu_custom_call.1} parent=11 // pred_check_branch
          %336 = sbr.rel (%p334) target = $region44
        $region43: #{tpu_custom_call.1} parent=11 // pred_region
          _
        $region44: #{tpu_custom_call.1} parent=11 // pred_fallthru
          _
        // Predicated region
        $region45: #{tpu_custom_call.1} parent=11 // pred_check
          %p337 = pneg %p239
        $region46: #{tpu_custom_call.1} parent=11 // pred_check_branch
          %339 = sbr.rel (%p337) target = $region48
        $region47: #{tpu_custom_call.1} parent=11 // pred_region
          _
        $region48: #{tpu_custom_call.1} parent=11 // pred_fallthru
          _
      $region12: #{tpu_custom_call.1} parent=5 // pred_fallthru
        _
      %p340 = scmp.lt.s32.totalorder %s24, 2
      // Predicated region
      $region49: #{tpu_custom_call.1} parent=5 // pred_check
        %p341 = pneg %p340
      $region50: #{tpu_custom_call.1} parent=5 // pred_check_branch
        %343 = sbr.rel (%p341) target = $region52
      $region51: #{tpu_custom_call.1} parent=5 // pred_region
        // Predicated region
        $region53: #{tpu_custom_call.1} parent=51 // pred_check
          %p344 = pneg %p44
        $region54: #{tpu_custom_call.1} parent=51 // pred_check_branch
          %346 = sbr.rel (%p344) target = $region56
        $region55: #{tpu_custom_call.1} parent=51 // pred_region
          %s347 = sand.u32 %s34, 1
          %s348 = scalar_lea.sflag [#allocation7], %s347
          %s349 = sand.u32 %s34, 1
          %s350 = smul.addr %s349, 256
          %s351 = scalar_lea.vmem [#allocation6], %s350
          %353 = vsyncadd %s348, 0
          %s354 = smul.addr %s24, 32
          %s355 = smul.addr %s354, 8
          %s356 = scalar_lea.hbm %s0, %s355
          %s357 = sshll.u32 %s356, 4
          %s358 = int_to_ptr.hbm [resolvable:$true] %s357
          %s359 = sshll.u32 %s351, 4
          %s360 = int_to_ptr.vmem [resolvable:$true] %s359
          %365 = dma.hbm_to_vmem [thread:$0]  %s358, 4096, %s360, %s348, 128, 128, 8
        $region56: #{tpu_custom_call.1} parent=51 // pred_fallthru
          _
      $region52: #{tpu_custom_call.1} parent=5 // pred_fallthru
        _
      %p366 = scmp.le.s32.totalorder 1, %s24
      %p367 = scmp.lt.s32.totalorder %s24, 3
      %p368 = pnand %p366, %p367
      %p369 = pneg %p368
      // Predicated region
      $region57: #{tpu_custom_call.1} parent=5 // pred_check
        _
      $region58: #{tpu_custom_call.1} parent=5 // pred_check_branch
        %371 = sbr.rel (%p368) target = $region60
      $region59: #{tpu_custom_call.1} parent=5 // pred_region
        %s372 = ssub.s32 %s24, 1
        %s373 = sand.u32 %s37, 1
        %s374 = scalar_lea.sflag [#allocation7], %s373
        %s375 = sand.u32 %s37, 1
        %s376 = smul.addr %s375, 256
        %s377 = scalar_lea.vmem [#allocation6], %s376
        // Predicated region
        $region61: #{tpu_custom_call.1} parent=59 // pred_check
          %p378 = pneg %p50
        $region62: #{tpu_custom_call.1} parent=59 // pred_check_branch
          %380 = sbr.rel (%p378) target = $region64
        $region63: #{tpu_custom_call.1} parent=59 // pred_region
          %382 = dma.done %s374, 4096
        $region64: #{tpu_custom_call.1} parent=59 // pred_fallthru
          _
        // Predicated region
        $region65: #{tpu_custom_call.1} parent=59 // pred_check
          %p383 = pneg %p71
        $region66: #{tpu_custom_call.1} parent=59 // pred_check_branch
          %385 = sbr.rel (%p383) target = $region68
        $region67: #{tpu_custom_call.1} parent=59 // pred_region
          %387 = dma.done [#allocation10], 9216
        $region68: #{tpu_custom_call.1} parent=59 // pred_fallthru
          _
        // Predicated region
        $region69: #{tpu_custom_call.1} parent=59 // pred_check
          %p388 = pneg %p134
        $region70: #{tpu_custom_call.1} parent=59 // pred_check_branch
          %390 = sbr.rel (%p388) target = $region72
        $region71: #{tpu_custom_call.1} parent=59 // pred_region
          %392 = dma.done [#allocation10], 9216
        $region72: #{tpu_custom_call.1} parent=59 // pred_fallthru
          _
        // Predicated region
        $region73: #{tpu_custom_call.1} parent=59 // pred_check
          %p393 = pneg %p197
        $region74: #{tpu_custom_call.1} parent=59 // pred_check_branch
          %395 = sbr.rel (%p393) target = $region76
        $region75: #{tpu_custom_call.1} parent=59 // pred_region
          %397 = dma.done [#allocation13], 9216
        $region76: #{tpu_custom_call.1} parent=59 // pred_fallthru
          _
        %s398 = sand.u32 %s37, 1
        %s399 = scalar_lea.sflag [#allocation7], %s398
        %s400 = sand.u32 %s37, 1
        %s401 = smul.addr %s400, 256
        %s402 = scalar_lea.vmem [#allocation6], %s401
        %p403 = pneg %p50
        %p404 = pneg %p47
        %p405 = pneg %p71
        %p406 = pneg %p68
        %p407 = pneg %p92
        %p408 = pneg %p89
        %p409 = pneg %p113
        %p410 = pneg %p110
        %p411 = pneg %p134
        %p412 = pneg %p131
        %p413 = pneg %p155
        %p414 = pneg %p152
        %p415 = pneg %p176
        %p416 = pneg %p173
        %p417 = pneg %p197
        %p418 = pneg %p194
        %p419 = pneg %p218
        %p420 = pneg %p215
        %p421 = pneg %p239
        %p422 = pneg %p236
        %p423 = pneg %p265
        %p424 = pneg %p262
        %s425 = sand.u32 %s252, 1
        %s426 = scalar_lea.sflag [#allocation8], %s425
        %s427 = sand.u32 %s252, 1
        %s428 = smul.addr %s427, 256
        %s429 = scalar_lea.vmem [#allocation14], %s428
        %430 = vst [vmem:[#allocation2] sm:$0xff] 0.0
        %431 = vst [vmem:[#allocation2 + $0x8] sm:$0xff] 0.0
        %432 = vst [vmem:[#allocation2 + $0x10] sm:$0x3] 0.0
        %433 = vst [vmem:[#allocation2 + $0x18] sm:$0xff] 0.0
        %434 = vst [vmem:[#allocation2 + $0x20] sm:$0xff] 0.0
        %435 = vst [vmem:[#allocation2 + $0x28] sm:$0x3] 0.0
        %436 = vst [vmem:[#allocation2 + $0x30] sm:$0xff] 0.0
        %437 = vst [vmem:[#allocation2 + $0x38] sm:$0xff] 0.0
        %438 = vst [vmem:[#allocation2 + $0x40] sm:$0x3] 0.0
        %439 = vst [vmem:[#allocation2 + $0x48] sm:$0xff] 0.0
        %440 = vst [vmem:[#allocation2 + $0x50] sm:$0xff] 0.0
        %441 = vst [vmem:[#allocation2 + $0x58] sm:$0x3] 0.0
        %442 = vst [vmem:[#allocation2 + $0x60] sm:$0xff] 0.0
        %443 = vst [vmem:[#allocation2 + $0x68] sm:$0xff] 0.0
        %444 = vst [vmem:[#allocation2 + $0x70] sm:$0x3] 0.0
        %445 = vst [vmem:[#allocation2 + $0x78] sm:$0xff] 0.0
        %446 = vst [vmem:[#allocation2 + $0x80] sm:$0xff] 0.0
        %447 = vst [vmem:[#allocation2 + $0x88] sm:$0x3] 0.0
        %448 = vst [vmem:[#allocation2 + $0x90] sm:$0xff] 0.0
        %449 = vst [vmem:[#allocation2 + $0x98] sm:$0xff] 0.0
        %450 = vst [vmem:[#allocation2 + $0xa0] sm:$0x3] 0.0
        %451 = vst [vmem:[#allocation2 + $0xa8] sm:$0xff] 0.0
        %452 = vst [vmem:[#allocation2 + $0xb0] sm:$0xff] 0.0
        %453 = vst [vmem:[#allocation2 + $0xb8] sm:$0x3] 0.0
        %454 = vst [vmem:[#allocation2 + $0xc0] sm:$0xff] 0.0
        %455 = vst [vmem:[#allocation2 + $0xc8] sm:$0xff] 0.0
        %456 = vst [vmem:[#allocation2 + $0xd0] sm:$0x3] 0.0
        %457 = vst [vmem:[#allocation2 + $0xd8] sm:$0xff] 0.0
        %458 = vst [vmem:[#allocation2 + $0xe0] sm:$0xff] 0.0
        %459 = vst [vmem:[#allocation2 + $0xe8] sm:$0x3] 0.0
        %460 = vst [vmem:[#allocation2 + $0xf0] sm:$0xff] 0.0
        %461 = vst [vmem:[#allocation2 + $0xf8] sm:$0xff] 0.0
        %462 = vst [vmem:[#allocation2 + $0x100] sm:$0x3] 0.0
        %463 = vst [vmem:[#allocation2 + $0x108] sm:$0xff] 0.0
        %464 = vst [vmem:[#allocation2 + $0x110] sm:$0xff] 0.0
        %465 = vst [vmem:[#allocation2 + $0x118] sm:$0x3] 0.0
        %466 = vst [vmem:[#allocation2 + $0x120] sm:$0xff] 0.0
        %467 = vst [vmem:[#allocation2 + $0x128] sm:$0xff] 0.0
        %468 = vst [vmem:[#allocation2 + $0x130] sm:$0x3] 0.0
        %469 = vst [vmem:[#allocation2 + $0x138] sm:$0xff] 0.0
        %470 = vst [vmem:[#allocation2 + $0x140] sm:$0xff] 0.0
        %471 = vst [vmem:[#allocation2 + $0x148] sm:$0x3] 0.0
        %472 = vst [vmem:[#allocation2 + $0x150] sm:$0xff] 0.0
        %473 = vst [vmem:[#allocation2 + $0x158] sm:$0xff] 0.0
        %474 = vst [vmem:[#allocation2 + $0x160] sm:$0x3] 0.0
        %475 = vst [vmem:[#allocation2 + $0x168] sm:$0xff] 0.0
        %476 = vst [vmem:[#allocation2 + $0x170] sm:$0xff] 0.0
        %477 = vst [vmem:[#allocation2 + $0x178] sm:$0x3] 0.0
        %478 = vst [vmem:[#allocation2 + $0x180] sm:$0xff] 0.0
        %479 = vst [vmem:[#allocation2 + $0x188] sm:$0xff] 0.0
        %480 = vst [vmem:[#allocation2 + $0x190] sm:$0x3] 0.0
        %481 = vst [vmem:[#allocation2 + $0x198] sm:$0xff] 0.0
        %482 = vst [vmem:[#allocation2 + $0x1a0] sm:$0xff] 0.0
        %483 = vst [vmem:[#allocation2 + $0x1a8] sm:$0x3] 0.0
        %v484 = vld [vmem:[%s377] sm:$0xff]
        %v485 = vld [vmem:[%s377 + $0x8] sm:$0xff]
        %v486 = vld [vmem:[%s377 + $0x10] sm:$0xff]
        %v487 = vld [vmem:[%s377 + $0x18] sm:$0xff]
        %v488 = vld [vmem:[%s377 + $0x20] sm:$0xff]
        %v489 = vld [vmem:[%s377 + $0x28] sm:$0xff]
        %v490 = vld [vmem:[%s377 + $0x30] sm:$0xff]
        %v491 = vld [vmem:[%s377 + $0x38] sm:$0xff]
        %v492 = vld [vmem:[%s377 + $0x40] sm:$0xff]
        %v493 = vld [vmem:[%s377 + $0x48] sm:$0xff]
        %v494 = vld [vmem:[%s377 + $0x50] sm:$0xff]
        %v495 = vld [vmem:[%s377 + $0x58] sm:$0xff]
        %v496 = vld [vmem:[%s377 + $0x60] sm:$0xff]
        %v497 = vld [vmem:[%s377 + $0x68] sm:$0xff]
        %v498 = vld [vmem:[%s377 + $0x70] sm:$0xff]
        %v499 = vld [vmem:[%s377 + $0x78] sm:$0xff]
        %v500 = vld [vmem:[%s377 + $0x80] sm:$0xff]
        %v501 = vld [vmem:[%s377 + $0x88] sm:$0xff]
        %v502 = vld [vmem:[%s377 + $0x90] sm:$0xff]
        %v503 = vld [vmem:[%s377 + $0x98] sm:$0xff]
        %v504 = vld [vmem:[%s377 + $0xa0] sm:$0xff]
        %v505 = vld [vmem:[%s377 + $0xa8] sm:$0xff]
        %v506 = vld [vmem:[%s377 + $0xb0] sm:$0xff]
        %v507 = vld [vmem:[%s377 + $0xb8] sm:$0xff]
        %v508 = vld [vmem:[%s377 + $0xc0] sm:$0xff]
        %v509 = vld [vmem:[%s377 + $0xc8] sm:$0xff]
        %v510 = vld [vmem:[%s377 + $0xd0] sm:$0xff]
        %v511 = vld [vmem:[%s377 + $0xd8] sm:$0xff]
        %v512 = vld [vmem:[%s377 + $0xe0] sm:$0xff]
        %v513 = vld [vmem:[%s377 + $0xe8] sm:$0xff]
        %v514 = vld [vmem:[%s377 + $0xf0] sm:$0xff]
        %v515 = vld [vmem:[%s377 + $0xf8] sm:$0xff]
        %s516 = scalar_lea.vmem [#allocation2], 24
        %517 = vst [vmem:[%s516 + $0x1] sm:$0xff] %v484
        %518 = vst [vmem:[%s516 + $0x9] sm:$0xff] %v485
        %519 = vst [vmem:[%s516 + $0x19] sm:$0xff] %v486
        %520 = vst [vmem:[%s516 + $0x21] sm:$0xff] %v487
        %521 = vst [vmem:[%s516 + $0x31] sm:$0xff] %v488
        %522 = vst [vmem:[%s516 + $0x39] sm:$0xff] %v489
        %523 = vst [vmem:[%s516 + $0x49] sm:$0xff] %v490
        %524 = vst [vmem:[%s516 + $0x51] sm:$0xff] %v491
        %525 = vst [vmem:[%s516 + $0x61] sm:$0xff] %v492
        %526 = vst [vmem:[%s516 + $0x69] sm:$0xff] %v493
        %527 = vst [vmem:[%s516 + $0x79] sm:$0xff] %v494
        %528 = vst [vmem:[%s516 + $0x81] sm:$0xff] %v495
        %529 = vst [vmem:[%s516 + $0x91] sm:$0xff] %v496
        %530 = vst [vmem:[%s516 + $0x99] sm:$0xff] %v497
        %531 = vst [vmem:[%s516 + $0xa9] sm:$0xff] %v498
        %532 = vst [vmem:[%s516 + $0xb1] sm:$0xff] %v499
        %533 = vst [vmem:[%s516 + $0xc1] sm:$0xff] %v500
        %534 = vst [vmem:[%s516 + $0xc9] sm:$0xff] %v501
        %535 = vst [vmem:[%s516 + $0xd9] sm:$0xff] %v502
        %536 = vst [vmem:[%s516 + $0xe1] sm:$0xff] %v503
        %537 = vst [vmem:[%s516 + $0xf1] sm:$0xff] %v504
        %538 = vst [vmem:[%s516 + $0xf9] sm:$0xff] %v505
        %539 = vst [vmem:[%s516 + $0x109] sm:$0xff] %v506
        %540 = vst [vmem:[%s516 + $0x111] sm:$0xff] %v507
        %541 = vst [vmem:[%s516 + $0x121] sm:$0xff] %v508
        %542 = vst [vmem:[%s516 + $0x129] sm:$0xff] %v509
        %543 = vst [vmem:[%s516 + $0x139] sm:$0xff] %v510
        %544 = vst [vmem:[%s516 + $0x141] sm:$0xff] %v511
        %545 = vst [vmem:[%s516 + $0x151] sm:$0xff] %v512
        %546 = vst [vmem:[%s516 + $0x159] sm:$0xff] %v513
        %547 = vst [vmem:[%s516 + $0x169] sm:$0xff] %v514
        %548 = vst [vmem:[%s516 + $0x171] sm:$0xff] %v515
        %549 = vst [vmem:[#allocation4] sm:$0xff] 0.0
        %550 = vst [vmem:[#allocation4 + $0x8] sm:$0xff] 0.0
        %551 = vst [vmem:[#allocation4 + $0x10] sm:$0xff] 0.0
        %552 = vst [vmem:[#allocation4 + $0x18] sm:$0xff] 0.0
        %553 = vst [vmem:[#allocation4 + $0x20] sm:$0xff] 0.0
        %554 = vst [vmem:[#allocation4 + $0x28] sm:$0xff] 0.0
        %555 = vst [vmem:[#allocation4 + $0x30] sm:$0xff] 0.0
        %556 = vst [vmem:[#allocation4 + $0x38] sm:$0xff] 0.0
        %557 = vst [vmem:[#allocation4 + $0x40] sm:$0xff] 0.0
        %558 = vst [vmem:[#allocation4 + $0x48] sm:$0xff] 0.0
        %559 = vst [vmem:[#allocation4 + $0x50] sm:$0xff] 0.0
        %560 = vst [vmem:[#allocation4 + $0x58] sm:$0xff] 0.0
        %561 = vst [vmem:[#allocation4 + $0x60] sm:$0xff] 0.0
        %562 = vst [vmem:[#allocation4 + $0x68] sm:$0xff] 0.0
        %563 = vst [vmem:[#allocation4 + $0x70] sm:$0xff] 0.0
        %564 = vst [vmem:[#allocation4 + $0x78] sm:$0xff] 0.0
        %565 = vst [vmem:[#allocation4 + $0x80] sm:$0xff] 0.0
        %566 = vst [vmem:[#allocation4 + $0x88] sm:$0xff] 0.0
        %567 = vst [vmem:[#allocation4 + $0x90] sm:$0xff] 0.0
        %568 = vst [vmem:[#allocation4 + $0x98] sm:$0xff] 0.0
        %569 = vst [vmem:[#allocation4 + $0xa0] sm:$0xff] 0.0
        %570 = vst [vmem:[#allocation4 + $0xa8] sm:$0xff] 0.0
        %571 = vst [vmem:[#allocation4 + $0xb0] sm:$0xff] 0.0
        %572 = vst [vmem:[#allocation4 + $0xb8] sm:$0xff] 0.0
        %573 = vst [vmem:[#allocation4 + $0xc0] sm:$0xff] 0.0
        %574 = vst [vmem:[#allocation4 + $0xc8] sm:$0xff] 0.0
        %575 = vst [vmem:[#allocation4 + $0xd0] sm:$0xff] 0.0
        %576 = vst [vmem:[#allocation4 + $0xd8] sm:$0xff] 0.0
        %577 = vst [vmem:[#allocation4 + $0xe0] sm:$0xff] 0.0
        %578 = vst [vmem:[#allocation4 + $0xe8] sm:$0xff] 0.0
        %579 = vst [vmem:[#allocation4 + $0xf0] sm:$0xff] 0.0
        %580 = vst [vmem:[#allocation4 + $0xf8] sm:$0xff] 0.0
        %v581 = vld [vmem:[#allocation2] sm:$0xff]
        %v582 = vld [vmem:[#allocation2 + $0x8] sm:$0xff]
        %v583 = vld [vmem:[#allocation2 + $0x10] sm:$0x3]
        %v584 = vld [vmem:[#allocation2 + $0x18] sm:$0xff]
        %v585 = vld [vmem:[#allocation2 + $0x20] sm:$0xff]
        %v586 = vld [vmem:[#allocation2 + $0x28] sm:$0x3]
        %v587 = vld [vmem:[#allocation2 + $0x30] sm:$0xff]
        %v588 = vld [vmem:[#allocation2 + $0x38] sm:$0xff]
        %v589 = vld [vmem:[#allocation2 + $0x40] sm:$0x3]
        %v590 = vld [vmem:[#allocation2 + $0x48] sm:$0xff]
        %v591 = vld [vmem:[#allocation2 + $0x50] sm:$0xff]
        %v592 = vld [vmem:[#allocation2 + $0x58] sm:$0x3]
        %v593 = vld [vmem:[#allocation2 + $0x60] sm:$0xff]
        %v594 = vld [vmem:[#allocation2 + $0x68] sm:$0xff]
        %v595 = vld [vmem:[#allocation2 + $0x70] sm:$0x3]
        %v596 = vld [vmem:[#allocation2 + $0x78] sm:$0xff]
        %v597 = vld [vmem:[#allocation2 + $0x80] sm:$0xff]
        %v598 = vld [vmem:[#allocation2 + $0x88] sm:$0x3]
        %v599 = vld [vmem:[#allocation2 + $0x90] sm:$0xff]
        %v600 = vld [vmem:[#allocation2 + $0x98] sm:$0xff]
        %v601 = vld [vmem:[#allocation2 + $0xa0] sm:$0x3]
        %v602 = vld [vmem:[#allocation2 + $0xa8] sm:$0xff]
        %v603 = vld [vmem:[#allocation2 + $0xb0] sm:$0xff]
        %v604 = vld [vmem:[#allocation2 + $0xb8] sm:$0x3]
        %v605 = vld [vmem:[#allocation2 + $0xc0] sm:$0xff]
        %v606 = vld [vmem:[#allocation2 + $0xc8] sm:$0xff]
        %v607 = vld [vmem:[#allocation2 + $0xd0] sm:$0x3]
        %v608 = vld [vmem:[#allocation2 + $0xd8] sm:$0xff]
        %v609 = vld [vmem:[#allocation2 + $0xe0] sm:$0xff]
        %v610 = vld [vmem:[#allocation2 + $0xe8] sm:$0x3]
        %v611 = vld [vmem:[#allocation2 + $0xf0] sm:$0xff]
        %v612 = vld [vmem:[#allocation2 + $0xf8] sm:$0xff]
        %v613 = vld [vmem:[#allocation2 + $0x100] sm:$0x3]
        %v614 = vld [vmem:[#allocation2 + $0x108] sm:$0xff]
        %v615 = vld [vmem:[#allocation2 + $0x110] sm:$0xff]
        %v616 = vld [vmem:[#allocation2 + $0x118] sm:$0x3]
        %v617 = vld [vmem:[#allocation2 + $0x120] sm:$0xff]
        %v618 = vld [vmem:[#allocation2 + $0x128] sm:$0xff]
        %v619 = vld [vmem:[#allocation2 + $0x130] sm:$0x3]
        %v620 = vld [vmem:[#allocation2 + $0x138] sm:$0xff]
        %v621 = vld [vmem:[#allocation2 + $0x140] sm:$0xff]
        %v622 = vld [vmem:[#allocation2 + $0x148] sm:$0x3]
        %v623 = vld [vmem:[#allocation2 + $0x150] sm:$0xff]
        %v624 = vld [vmem:[#allocation2 + $0x158] sm:$0xff]
        %v625 = vld [vmem:[#allocation2 + $0x160] sm:$0x3]
        %v626 = vld [vmem:[#allocation2 + $0x168] sm:$0xff]
        %v627 = vld [vmem:[#allocation2 + $0x170] sm:$0xff]
        %v628 = vld [vmem:[#allocation2 + $0x178] sm:$0x3]
        %vm677 = vcmask 1046528
        %v678 = vrot.slane %v581, 1
        %v679 = vrot.slane %v582, 1
        %v680 = vsel %vm677, %v678, %v679
        %v681 = vrot.slane %v583, 1
        %v682 = vsel %vm677, %v679, %v681
        %v683 = vrot.slane %v584, 1
        %v684 = vrot.slane %v585, 1
        %v685 = vsel %vm677, %v683, %v684
        %v686 = vrot.slane %v586, 1
        %v687 = vsel %vm677, %v684, %v686
        %v688 = vrot.slane %v587, 1
        %v689 = vrot.slane %v588, 1
        %v690 = vsel %vm677, %v688, %v689
        %v691 = vrot.slane %v589, 1
        %v692 = vsel %vm677, %v689, %v691
        %v693 = vrot.slane %v590, 1
        %v694 = vrot.slane %v591, 1
        %v695 = vsel %vm677, %v693, %v694
        %v696 = vrot.slane %v592, 1
        %v697 = vsel %vm677, %v694, %v696
        %v698 = vrot.slane %v593, 1
        %v699 = vrot.slane %v594, 1
        %v700 = vsel %vm677, %v698, %v699
        %v701 = vrot.slane %v595, 1
        %v702 = vsel %vm677, %v699, %v701
        %v703 = vrot.slane %v596, 1
        %v704 = vrot.slane %v597, 1
        %v705 = vsel %vm677, %v703, %v704
        %v706 = vrot.slane %v598, 1
        %v707 = vsel %vm677, %v704, %v706
        %v708 = vrot.slane %v599, 1
        %v709 = vrot.slane %v600, 1
        %v710 = vsel %vm677, %v708, %v709
        %v711 = vrot.slane %v601, 1
        %v712 = vsel %vm677, %v709, %v711
        %v713 = vrot.slane %v602, 1
        %v714 = vrot.slane %v603, 1
        %v715 = vsel %vm677, %v713, %v714
        %v716 = vrot.slane %v604, 1
        %v717 = vsel %vm677, %v714, %v716
        %v718 = vrot.slane %v605, 1
        %v719 = vrot.slane %v606, 1
        %v720 = vsel %vm677, %v718, %v719
        %v721 = vrot.slane %v607, 1
        %v722 = vsel %vm677, %v719, %v721
        %v723 = vrot.slane %v608, 1
        %v724 = vrot.slane %v609, 1
        %v725 = vsel %vm677, %v723, %v724
        %v726 = vrot.slane %v610, 1
        %v727 = vsel %vm677, %v724, %v726
        %v728 = vrot.slane %v611, 1
        %v729 = vrot.slane %v612, 1
        %v730 = vsel %vm677, %v728, %v729
        %v731 = vrot.slane %v613, 1
        %v732 = vsel %vm677, %v729, %v731
        %v733 = vrot.slane %v614, 1
        %v734 = vrot.slane %v615, 1
        %v735 = vsel %vm677, %v733, %v734
        %v736 = vrot.slane %v616, 1
        %v737 = vsel %vm677, %v734, %v736
        %v738 = vrot.slane %v617, 1
        %v739 = vrot.slane %v618, 1
        %v740 = vsel %vm677, %v738, %v739
        %v741 = vrot.slane %v619, 1
        %v742 = vsel %vm677, %v739, %v741
        %v743 = vrot.slane %v620, 1
        %v744 = vrot.slane %v621, 1
        %v745 = vsel %vm677, %v743, %v744
        %v746 = vrot.slane %v622, 1
        %v747 = vsel %vm677, %v744, %v746
        %v748 = vrot.slane %v623, 1
        %v749 = vrot.slane %v624, 1
        %v750 = vsel %vm677, %v748, %v749
        %v751 = vrot.slane %v625, 1
        %v752 = vsel %vm677, %v749, %v751
        %v753 = vrot.slane %v626, 1
        %v754 = vrot.slane %v627, 1
        %v755 = vsel %vm677, %v753, %v754
        %v756 = vrot.slane %v628, 1
        %v757 = vsel %vm677, %v754, %v756
        %vm790 = vcmask 1045504
        %v791 = vrot.slane %v581, 2
        %v792 = vrot.slane %v582, 2
        %v793 = vsel %vm790, %v791, %v792
        %v794 = vrot.slane %v583, 2
        %v795 = vsel %vm790, %v792, %v794
        %v796 = vrot.slane %v584, 2
        %v797 = vrot.slane %v585, 2
        %v798 = vsel %vm790, %v796, %v797
        %v799 = vrot.slane %v586, 2
        %v800 = vsel %vm790, %v797, %v799
        %v801 = vrot.slane %v587, 2
        %v802 = vrot.slane %v588, 2
        %v803 = vsel %vm790, %v801, %v802
        %v804 = vrot.slane %v589, 2
        %v805 = vsel %vm790, %v802, %v804
        %v806 = vrot.slane %v590, 2
        %v807 = vrot.slane %v591, 2
        %v808 = vsel %vm790, %v806, %v807
        %v809 = vrot.slane %v592, 2
        %v810 = vsel %vm790, %v807, %v809
        %v811 = vrot.slane %v593, 2
        %v812 = vrot.slane %v594, 2
        %v813 = vsel %vm790, %v811, %v812
        %v814 = vrot.slane %v595, 2
        %v815 = vsel %vm790, %v812, %v814
        %v816 = vrot.slane %v596, 2
        %v817 = vrot.slane %v597, 2
        %v818 = vsel %vm790, %v816, %v817
        %v819 = vrot.slane %v598, 2
        %v820 = vsel %vm790, %v817, %v819
        %v821 = vrot.slane %v599, 2
        %v822 = vrot.slane %v600, 2
        %v823 = vsel %vm790, %v821, %v822
        %v824 = vrot.slane %v601, 2
        %v825 = vsel %vm790, %v822, %v824
        %v826 = vrot.slane %v602, 2
        %v827 = vrot.slane %v603, 2
        %v828 = vsel %vm790, %v826, %v827
        %v829 = vrot.slane %v604, 2
        %v830 = vsel %vm790, %v827, %v829
        %v831 = vrot.slane %v605, 2
        %v832 = vrot.slane %v606, 2
        %v833 = vsel %vm790, %v831, %v832
        %v834 = vrot.slane %v607, 2
        %v835 = vsel %vm790, %v832, %v834
        %v836 = vrot.slane %v608, 2
        %v837 = vrot.slane %v609, 2
        %v838 = vsel %vm790, %v836, %v837
        %v839 = vrot.slane %v610, 2
        %v840 = vsel %vm790, %v837, %v839
        %v841 = vrot.slane %v611, 2
        %v842 = vrot.slane %v612, 2
        %v843 = vsel %vm790, %v841, %v842
        %v844 = vrot.slane %v613, 2
        %v845 = vsel %vm790, %v842, %v844
        %v846 = vrot.slane %v614, 2
        %v847 = vrot.slane %v615, 2
        %v848 = vsel %vm790, %v846, %v847
        %v849 = vrot.slane %v616, 2
        %v850 = vsel %vm790, %v847, %v849
        %v851 = vrot.slane %v617, 2
        %v852 = vrot.slane %v618, 2
        %v853 = vsel %vm790, %v851, %v852
        %v854 = vrot.slane %v619, 2
        %v855 = vsel %vm790, %v852, %v854
        %v856 = vrot.slane %v620, 2
        %v857 = vrot.slane %v621, 2
        %v858 = vsel %vm790, %v856, %v857
        %v859 = vrot.slane %v622, 2
        %v860 = vsel %vm790, %v857, %v859
        %v861 = vrot.slane %v623, 2
        %v862 = vrot.slane %v624, 2
        %v863 = vsel %vm790, %v861, %v862
        %v864 = vrot.slane %v625, 2
        %v865 = vsel %vm790, %v862, %v864
        %v866 = vrot.slane %v626, 2
        %v867 = vrot.slane %v627, 2
        %v868 = vsel %vm790, %v866, %v867
        %v869 = vrot.slane %v628, 2
        %v870 = vsel %vm790, %v867, %v869
        %v903 = vpack.c.bf16 %v582, %v581
        %v904 = vpack.c.bf16 %v682, %v680
        %v905 = vpack.c.bf16 %v795, %v793
        %v906 = vpack.c.bf16 %v585, %v584
        %v907 = vpack.c.bf16 %v687, %v685
        %v908 = vpack.c.bf16 %v800, %v798
        %v909 = vpack.c.bf16 %v588, %v587
        %v910 = vpack.c.bf16 %v692, %v690
        %v911 = vpack.c.bf16 %v805, %v803
        %v912 = vpack.c.bf16 %v591, %v590
        %v913 = vpack.c.bf16 %v697, %v695
        %v914 = vpack.c.bf16 %v810, %v808
        %v915 = vpack.c.bf16 %v594, %v593
        %v916 = vpack.c.bf16 %v702, %v700
        %v917 = vpack.c.bf16 %v815, %v813
        %v918 = vpack.c.bf16 %v597, %v596
        %v919 = vpack.c.bf16 %v707, %v705
        %v920 = vpack.c.bf16 %v820, %v818
        %v921 = vpack.c.bf16 %v600, %v599
        %v922 = vpack.c.bf16 %v712, %v710
        %v923 = vpack.c.bf16 %v825, %v823
        %v924 = vpack.c.bf16 %v603, %v602
        %v925 = vpack.c.bf16 %v717, %v715
        %v926 = vpack.c.bf16 %v830, %v828
        %v927 = vpack.c.bf16 %v606, %v605
        %v928 = vpack.c.bf16 %v722, %v720
        %v929 = vpack.c.bf16 %v835, %v833
        %v930 = vpack.c.bf16 %v609, %v608
        %v931 = vpack.c.bf16 %v727, %v725
        %v932 = vpack.c.bf16 %v840, %v838
        %v933 = vpack.c.bf16 %v612, %v611
        %v934 = vpack.c.bf16 %v732, %v730
        %v935 = vpack.c.bf16 %v845, %v843
        %v936 = vpack.c.bf16 %v615, %v614
        %v937 = vpack.c.bf16 %v737, %v735
        %v938 = vpack.c.bf16 %v850, %v848
        %v939 = vpack.c.bf16 %v618, %v617
        %v940 = vpack.c.bf16 %v742, %v740
        %v941 = vpack.c.bf16 %v855, %v853
        %v942 = vpack.c.bf16 %v621, %v620
        %v943 = vpack.c.bf16 %v747, %v745
        %v944 = vpack.c.bf16 %v860, %v858
        %v945 = vpack.c.bf16 %v624, %v623
        %v946 = vpack.c.bf16 %v752, %v750
        %v947 = vpack.c.bf16 %v865, %v863
        %v948 = vpack.c.bf16 %v627, %v626
        %v949 = vpack.c.bf16 %v757, %v755
        %v950 = vpack.c.bf16 %v870, %v868
        %v951 = vld [vmem:[#allocation4] sm:$0xff]
        %v952 = vld [vmem:[#allocation4 + $0x8] sm:$0xff]
        %v953 = vld [vmem:[#allocation4 + $0x10] sm:$0xff]
        %v954 = vld [vmem:[#allocation4 + $0x18] sm:$0xff]
        %v955 = vld [vmem:[#allocation4 + $0x20] sm:$0xff]
        %v956 = vld [vmem:[#allocation4 + $0x28] sm:$0xff]
        %v957 = vld [vmem:[#allocation4 + $0x30] sm:$0xff]
        %v958 = vld [vmem:[#allocation4 + $0x38] sm:$0xff]
        %v959 = vld [vmem:[#allocation4 + $0x40] sm:$0xff]
        %v960 = vld [vmem:[#allocation4 + $0x48] sm:$0xff]
        %v961 = vld [vmem:[#allocation4 + $0x50] sm:$0xff]
        %v962 = vld [vmem:[#allocation4 + $0x58] sm:$0xff]
        %v963 = vld [vmem:[#allocation4 + $0x60] sm:$0xff]
        %v964 = vld [vmem:[#allocation4 + $0x68] sm:$0xff]
        %v965 = vld [vmem:[#allocation4 + $0x70] sm:$0xff]
        %v966 = vld [vmem:[#allocation4 + $0x78] sm:$0xff]
        %v967 = vld [vmem:[#allocation4 + $0x80] sm:$0xff]
        %v968 = vld [vmem:[#allocation4 + $0x88] sm:$0xff]
        %v969 = vld [vmem:[#allocation4 + $0x90] sm:$0xff]
        %v970 = vld [vmem:[#allocation4 + $0x98] sm:$0xff]
        %v971 = vld [vmem:[#allocation4 + $0xa0] sm:$0xff]
        %v972 = vld [vmem:[#allocation4 + $0xa8] sm:$0xff]
        %v973 = vld [vmem:[#allocation4 + $0xb0] sm:$0xff]
        %v974 = vld [vmem:[#allocation4 + $0xb8] sm:$0xff]
        %v975 = vld [vmem:[#allocation4 + $0xc0] sm:$0xff]
        %v976 = vld [vmem:[#allocation4 + $0xc8] sm:$0xff]
        %v977 = vld [vmem:[#allocation4 + $0xd0] sm:$0xff]
        %v978 = vld [vmem:[#allocation4 + $0xd8] sm:$0xff]
        %v979 = vld [vmem:[#allocation4 + $0xe0] sm:$0xff]
        %v980 = vld [vmem:[#allocation4 + $0xe8] sm:$0xff]
        %v981 = vld [vmem:[#allocation4 + $0xf0] sm:$0xff]
        %v982 = vld [vmem:[#allocation4 + $0xf8] sm:$0xff]
        %v983 = vld [vmem:[#allocation9] sm:$0xf]
        %v984 = vld [vmem:[#allocation9 + $0x4] sm:$0xf]
        %v985 = vld [vmem:[#allocation9 + $0x8] sm:$0xf]
        %v986 = vld [vmem:[#allocation9 + $0xc] sm:$0xf]
        %v987 = vld [vmem:[#allocation9 + $0x10] sm:$0xf]
        %v988 = vld [vmem:[#allocation9 + $0x14] sm:$0xf]
        %v989 = vld [vmem:[#allocation9 + $0x18] sm:$0xf]
        %v990 = vld [vmem:[#allocation9 + $0x1c] sm:$0xf]
        %v991 = vld [vmem:[#allocation9 + $0x20] sm:$0xf]
        %v992 = vld [vmem:[#allocation9 + $0x24] sm:$0xf]
        %v993 = vld [vmem:[#allocation9 + $0x28] sm:$0xf]
        %v994 = vld [vmem:[#allocation9 + $0x2c] sm:$0xf]
        %v995 = vld [vmem:[#allocation9 + $0x30] sm:$0xf]
        %v996 = vld [vmem:[#allocation9 + $0x34] sm:$0xf]
        %v997 = vld [vmem:[#allocation9 + $0x38] sm:$0xf]
        %v998 = vld [vmem:[#allocation9 + $0x3c] sm:$0xf]
        %v999 = vld [vmem:[#allocation9 + $0x40] sm:$0xf]
        %v1000 = vld [vmem:[#allocation9 + $0x44] sm:$0xf]
        %v1001 = vld [vmem:[#allocation9 + $0x48] sm:$0xf]
        %v1002 = vld [vmem:[#allocation9 + $0x4c] sm:$0xf]
        %v1003 = vld [vmem:[#allocation9 + $0x50] sm:$0xf]
        %v1004 = vld [vmem:[#allocation9 + $0x54] sm:$0xf]
        %v1005 = vld [vmem:[#allocation9 + $0x58] sm:$0xf]
        %v1006 = vld [vmem:[#allocation9 + $0x5c] sm:$0xf]
        %v1007 = vld [vmem:[#allocation9 + $0x60] sm:$0xf]
        %v1008 = vld [vmem:[#allocation9 + $0x64] sm:$0xf]
        %v1009 = vld [vmem:[#allocation9 + $0x68] sm:$0xf]
        %v1010 = vld [vmem:[#allocation9 + $0x6c] sm:$0xf]
        %v1011 = vld [vmem:[#allocation9 + $0x70] sm:$0xf]
        %v1012 = vld [vmem:[#allocation9 + $0x74] sm:$0xf]
        %v1013 = vld [vmem:[#allocation9 + $0x78] sm:$0xf]
        %v1014 = vld [vmem:[#allocation9 + $0x7c] sm:$0xf]
        %v1015 = vld [vmem:[#allocation9 + $0x80] sm:$0xf]
        %v1016 = vld [vmem:[#allocation9 + $0x84] sm:$0xf]
        %v1017 = vld [vmem:[#allocation9 + $0x88] sm:$0xf]
        %v1018 = vld [vmem:[#allocation9 + $0x8c] sm:$0xf]
        %v1019 = vld [vmem:[#allocation9 + $0x90] sm:$0xf]
        %v1020 = vld [vmem:[#allocation9 + $0x94] sm:$0xf]
        %v1021 = vld [vmem:[#allocation9 + $0x98] sm:$0xf]
        %v1022 = vld [vmem:[#allocation9 + $0x9c] sm:$0xf]
        %v1023 = vld [vmem:[#allocation9 + $0xa0] sm:$0xf]
        %v1024 = vld [vmem:[#allocation9 + $0xa4] sm:$0xf]
        %v1025 = vld [vmem:[#allocation9 + $0xa8] sm:$0xf]
        %v1026 = vld [vmem:[#allocation9 + $0xac] sm:$0xf]
        %v1027 = vld [vmem:[#allocation9 + $0xb0] sm:$0xf]
        %v1028 = vld [vmem:[#allocation9 + $0xb4] sm:$0xf]
        %v1029 = vld [vmem:[#allocation9 + $0xb8] sm:$0xf]
        %v1030 = vld [vmem:[#allocation9 + $0xbc] sm:$0xf]
        %v1079 = vunpack.c.l.b16 %v983
        %v1080 = vunpack.c.l.b16 %v984
        %v1081 = vunpack.c.l.b16 %v985
        %v1082 = vunpack.c.l.b16 %v986
        %v1083 = vunpack.c.l.b16 %v987
        %v1084 = vunpack.c.l.b16 %v988
        %v1085 = vunpack.c.l.b16 %v989
        %v1086 = vunpack.c.l.b16 %v990
        %v1087 = vunpack.c.l.b16 %v991
        %v1088 = vunpack.c.l.b16 %v992
        %v1089 = vunpack.c.l.b16 %v993
        %v1090 = vunpack.c.l.b16 %v994
        %v1091 = vunpack.c.l.b16 %v995
        %v1092 = vunpack.c.l.b16 %v996
        %v1093 = vunpack.c.l.b16 %v997
        %v1094 = vunpack.c.l.b16 %v998
        %v1095 = vunpack.c.l.b16 %v999
        %v1096 = vunpack.c.l.b16 %v1000
        %v1097 = vunpack.c.l.b16 %v1001
        %v1098 = vunpack.c.l.b16 %v1002
        %v1099 = vunpack.c.l.b16 %v1003
        %v1100 = vunpack.c.l.b16 %v1004
        %v1101 = vunpack.c.l.b16 %v1005
        %v1102 = vunpack.c.l.b16 %v1006
        %v1103 = vunpack.c.l.b16 %v1007
        %v1104 = vunpack.c.l.b16 %v1008
        %v1105 = vunpack.c.l.b16 %v1009
        %v1106 = vunpack.c.l.b16 %v1010
        %v1107 = vunpack.c.l.b16 %v1011
        %v1108 = vunpack.c.l.b16 %v1012
        %v1109 = vunpack.c.l.b16 %v1013
        %v1110 = vunpack.c.l.b16 %v1014
        %v1111 = vunpack.c.l.b16 %v1015
        %v1112 = vunpack.c.l.b16 %v1016
        %v1113 = vunpack.c.l.b16 %v1017
        %v1114 = vunpack.c.l.b16 %v1018
        %v1115 = vunpack.c.l.b16 %v1019
        %v1116 = vunpack.c.l.b16 %v1020
        %v1117 = vunpack.c.l.b16 %v1021
        %v1118 = vunpack.c.l.b16 %v1022
        %v1119 = vunpack.c.l.b16 %v1023
        %v1120 = vunpack.c.l.b16 %v1024
        %v1121 = vunpack.c.l.b16 %v1025
        %v1122 = vunpack.c.l.b16 %v1026
        %v1123 = vunpack.c.l.b16 %v1027
        %v1124 = vunpack.c.l.b16 %v1028
        %v1125 = vunpack.c.l.b16 %v1029
        %v1126 = vunpack.c.l.b16 %v1030
        %v1127 = vpack.c.b16 %v1080, %v1079
        %v1128 = vpack.c.b16 %v1082, %v1081
        %v1129 = vpack.c.b16 %v1084, %v1083
        %v1130 = vpack.c.b16 %v1086, %v1085
        %v1131 = vpack.c.b16 %v1088, %v1087
        %v1132 = vpack.c.b16 %v1090, %v1089
        %v1133 = vpack.c.b16 %v1092, %v1091
        %v1134 = vpack.c.b16 %v1094, %v1093
        %v1135 = vpack.c.b16 %v1096, %v1095
        %v1136 = vpack.c.b16 %v1098, %v1097
        %v1137 = vpack.c.b16 %v1100, %v1099
        %v1138 = vpack.c.b16 %v1102, %v1101
        %v1139 = vpack.c.b16 %v1104, %v1103
        %v1140 = vpack.c.b16 %v1106, %v1105
        %v1141 = vpack.c.b16 %v1108, %v1107
        %v1142 = vpack.c.b16 %v1110, %v1109
        %v1143 = vpack.c.b16 %v1112, %v1111
        %v1144 = vpack.c.b16 %v1114, %v1113
        %v1145 = vpack.c.b16 %v1116, %v1115
        %v1146 = vpack.c.b16 %v1118, %v1117
        %v1147 = vpack.c.b16 %v1120, %v1119
        %v1148 = vpack.c.b16 %v1122, %v1121
        %v1149 = vpack.c.b16 %v1124, %v1123
        %v1150 = vpack.c.b16 %v1126, %v1125
        %1175 = vmatpush.bf16.msra.mxu0 %v1134
        %1176 = vmatpush.bf16.msra.mxu0 %v1133
        %1177 = vmatpush.bf16.msra.mxu0 %v1132
        %1178 = vmatpush.bf16.msra.mxu0 %v1131
        %1179 = vmatpush.bf16.msra.mxu0 %v1130
        %1180 = vmatpush.bf16.msra.mxu0 %v1129
        %1181 = vmatpush.bf16.msra.mxu0 %v1128
        %1182 = vmatpush.bf16.msra.mxu0 %v1127
        %1183 = vmatmul.bf16.gmra.mxu0 %v903
        %v1184 = vpop.f32.mrf.mxu0
        %v1185 = vadd.f32 0.0, %v1184
        %v1186 = vpop.f32.mrf.mxu0
        %v1187 = vadd.f32 0.0, %v1186
        %1188 = vmatmul.bf16.gmra.mxu0 %v906
        %v1189 = vpop.f32.mrf.mxu0
        %v1190 = vadd.f32 0.0, %v1189
        %v1191 = vpop.f32.mrf.mxu0
        %v1192 = vadd.f32 0.0, %v1191
        %1193 = vmatmul.bf16.gmra.mxu0 %v909
        %v1194 = vpop.f32.mrf.mxu0
        %v1195 = vadd.f32 0.0, %v1194
        %v1196 = vpop.f32.mrf.mxu0
        %v1197 = vadd.f32 0.0, %v1196
        %1198 = vmatmul.bf16.gmra.mxu0 %v912
        %v1199 = vpop.f32.mrf.mxu0
        %v1200 = vadd.f32 0.0, %v1199
        %v1201 = vpop.f32.mrf.mxu0
        %v1202 = vadd.f32 0.0, %v1201
        %1203 = vmatmul.bf16.gmra.mxu0 %v915
        %v1204 = vpop.f32.mrf.mxu0
        %v1205 = vadd.f32 0.0, %v1204
        %v1206 = vpop.f32.mrf.mxu0
        %v1207 = vadd.f32 0.0, %v1206
        %1208 = vmatmul.bf16.gmra.mxu0 %v918
        %v1209 = vpop.f32.mrf.mxu0
        %v1210 = vadd.f32 0.0, %v1209
        %v1211 = vpop.f32.mrf.mxu0
        %v1212 = vadd.f32 0.0, %v1211
        %1213 = vmatmul.bf16.gmra.mxu0 %v921
        %v1214 = vpop.f32.mrf.mxu0
        %v1215 = vadd.f32 0.0, %v1214
        %v1216 = vpop.f32.mrf.mxu0
        %v1217 = vadd.f32 0.0, %v1216
        %1218 = vmatmul.bf16.gmra.mxu0 %v924
        %v1219 = vpop.f32.mrf.mxu0
        %v1220 = vadd.f32 0.0, %v1219
        %v1221 = vpop.f32.mrf.mxu0
        %v1222 = vadd.f32 0.0, %v1221
        %1223 = vmatmul.bf16.gmra.mxu0 %v927
        %v1224 = vpop.f32.mrf.mxu0
        %v1225 = vadd.f32 0.0, %v1224
        %v1226 = vpop.f32.mrf.mxu0
        %v1227 = vadd.f32 0.0, %v1226
        %1228 = vmatmul.bf16.gmra.mxu0 %v930
        %v1229 = vpop.f32.mrf.mxu0
        %v1230 = vadd.f32 0.0, %v1229
        %v1231 = vpop.f32.mrf.mxu0
        %v1232 = vadd.f32 0.0, %v1231
        %1233 = vmatmul.bf16.gmra.mxu0 %v933
        %v1234 = vpop.f32.mrf.mxu0
        %v1235 = vadd.f32 0.0, %v1234
        %v1236 = vpop.f32.mrf.mxu0
        %v1237 = vadd.f32 0.0, %v1236
        %1238 = vmatmul.bf16.gmra.mxu0 %v936
        %v1239 = vpop.f32.mrf.mxu0
        %v1240 = vadd.f32 0.0, %v1239
        %v1241 = vpop.f32.mrf.mxu0
        %v1242 = vadd.f32 0.0, %v1241
        %1243 = vmatmul.bf16.gmra.mxu0 %v939
        %v1244 = vpop.f32.mrf.mxu0
        %v1245 = vadd.f32 0.0, %v1244
        %v1246 = vpop.f32.mrf.mxu0
        %v1247 = vadd.f32 0.0, %v1246
        %1248 = vmatmul.bf16.gmra.mxu0 %v942
        %v1249 = vpop.f32.mrf.mxu0
        %v1250 = vadd.f32 0.0, %v1249
        %v1251 = vpop.f32.mrf.mxu0
        %v1252 = vadd.f32 0.0, %v1251
        %1253 = vmatmul.bf16.gmra.mxu0 %v945
        %v1254 = vpop.f32.mrf.mxu0
        %v1255 = vadd.f32 0.0, %v1254
        %v1256 = vpop.f32.mrf.mxu0
        %v1257 = vadd.f32 0.0, %v1256
        %1258 = vmatmul.bf16.gmra.mxu0 %v948
        %v1259 = vpop.f32.mrf.mxu0
        %v1260 = vadd.f32 0.0, %v1259
        %v1261 = vpop.f32.mrf.mxu0
        %v1262 = vadd.f32 0.0, %v1261
        %1263 = vdwg.mxu0
        %1264 = vmatpush.bf16.msra.mxu0 %v1142
        %1265 = vmatpush.bf16.msra.mxu0 %v1141
        %1266 = vmatpush.bf16.msra.mxu0 %v1140
        %1267 = vmatpush.bf16.msra.mxu0 %v1139
        %1268 = vmatpush.bf16.msra.mxu0 %v1138
        %1269 = vmatpush.bf16.msra.mxu0 %v1137
        %1270 = vmatpush.bf16.msra.mxu0 %v1136
        %1271 = vmatpush.bf16.msra.mxu0 %v1135
        %1272 = vmatmul.bf16.gmra.mxu0 %v904
        %v1273 = vpop.f32.mrf.mxu0
        %v1274 = vadd.f32 %v1185, %v1273
        %v1275 = vpop.f32.mrf.mxu0
        %v1276 = vadd.f32 %v1187, %v1275
        %1277 = vmatmul.bf16.gmra.mxu0 %v907
        %v1278 = vpop.f32.mrf.mxu0
        %v1279 = vadd.f32 %v1190, %v1278
        %v1280 = vpop.f32.mrf.mxu0
        %v1281 = vadd.f32 %v1192, %v1280
        %1282 = vmatmul.bf16.gmra.mxu0 %v910
        %v1283 = vpop.f32.mrf.mxu0
        %v1284 = vadd.f32 %v1195, %v1283
        %v1285 = vpop.f32.mrf.mxu0
        %v1286 = vadd.f32 %v1197, %v1285
        %1287 = vmatmul.bf16.gmra.mxu0 %v913
        %v1288 = vpop.f32.mrf.mxu0
        %v1289 = vadd.f32 %v1200, %v1288
        %v1290 = vpop.f32.mrf.mxu0
        %v1291 = vadd.f32 %v1202, %v1290
        %1292 = vmatmul.bf16.gmra.mxu0 %v916
        %v1293 = vpop.f32.mrf.mxu0
        %v1294 = vadd.f32 %v1205, %v1293
        %v1295 = vpop.f32.mrf.mxu0
        %v1296 = vadd.f32 %v1207, %v1295
        %1297 = vmatmul.bf16.gmra.mxu0 %v919
        %v1298 = vpop.f32.mrf.mxu0
        %v1299 = vadd.f32 %v1210, %v1298
        %v1300 = vpop.f32.mrf.mxu0
        %v1301 = vadd.f32 %v1212, %v1300
        %1302 = vmatmul.bf16.gmra.mxu0 %v922
        %v1303 = vpop.f32.mrf.mxu0
        %v1304 = vadd.f32 %v1215, %v1303
        %v1305 = vpop.f32.mrf.mxu0
        %v1306 = vadd.f32 %v1217, %v1305
        %1307 = vmatmul.bf16.gmra.mxu0 %v925
        %v1308 = vpop.f32.mrf.mxu0
        %v1309 = vadd.f32 %v1220, %v1308
        %v1310 = vpop.f32.mrf.mxu0
        %v1311 = vadd.f32 %v1222, %v1310
        %1312 = vmatmul.bf16.gmra.mxu0 %v928
        %v1313 = vpop.f32.mrf.mxu0
        %v1314 = vadd.f32 %v1225, %v1313
        %v1315 = vpop.f32.mrf.mxu0
        %v1316 = vadd.f32 %v1227, %v1315
        %1317 = vmatmul.bf16.gmra.mxu0 %v931
        %v1318 = vpop.f32.mrf.mxu0
        %v1319 = vadd.f32 %v1230, %v1318
        %v1320 = vpop.f32.mrf.mxu0
        %v1321 = vadd.f32 %v1232, %v1320
        %1322 = vmatmul.bf16.gmra.mxu0 %v934
        %v1323 = vpop.f32.mrf.mxu0
        %v1324 = vadd.f32 %v1235, %v1323
        %v1325 = vpop.f32.mrf.mxu0
        %v1326 = vadd.f32 %v1237, %v1325
        %1327 = vmatmul.bf16.gmra.mxu0 %v937
        %v1328 = vpop.f32.mrf.mxu0
        %v1329 = vadd.f32 %v1240, %v1328
        %v1330 = vpop.f32.mrf.mxu0
        %v1331 = vadd.f32 %v1242, %v1330
        %1332 = vmatmul.bf16.gmra.mxu0 %v940
        %v1333 = vpop.f32.mrf.mxu0
        %v1334 = vadd.f32 %v1245, %v1333
        %v1335 = vpop.f32.mrf.mxu0
        %v1336 = vadd.f32 %v1247, %v1335
        %1337 = vmatmul.bf16.gmra.mxu0 %v943
        %v1338 = vpop.f32.mrf.mxu0
        %v1339 = vadd.f32 %v1250, %v1338
        %v1340 = vpop.f32.mrf.mxu0
        %v1341 = vadd.f32 %v1252, %v1340
        %1342 = vmatmul.bf16.gmra.mxu0 %v946
        %v1343 = vpop.f32.mrf.mxu0
        %v1344 = vadd.f32 %v1255, %v1343
        %v1345 = vpop.f32.mrf.mxu0
        %v1346 = vadd.f32 %v1257, %v1345
        %1347 = vmatmul.bf16.gmra.mxu0 %v949
        %v1348 = vpop.f32.mrf.mxu0
        %v1349 = vadd.f32 %v1260, %v1348
        %v1350 = vpop.f32.mrf.mxu0
        %v1351 = vadd.f32 %v1262, %v1350
        %1352 = vdwg.mxu0
        %1353 = vmatpush.bf16.msra.mxu0 %v1150
        %1354 = vmatpush.bf16.msra.mxu0 %v1149
        %1355 = vmatpush.bf16.msra.mxu0 %v1148
        %1356 = vmatpush.bf16.msra.mxu0 %v1147
        %1357 = vmatpush.bf16.msra.mxu0 %v1146
        %1358 = vmatpush.bf16.msra.mxu0 %v1145
        %1359 = vmatpush.bf16.msra.mxu0 %v1144
        %1360 = vmatpush.bf16.msra.mxu0 %v1143
        %1361 = vmatmul.bf16.gmra.mxu0 %v905
        %v1362 = vpop.f32.mrf.mxu0
        %v1363 = vadd.f32 %v1274, %v1362
        %v1364 = vpop.f32.mrf.mxu0
        %v1365 = vadd.f32 %v1276, %v1364
        %1366 = vmatmul.bf16.gmra.mxu0 %v908
        %v1367 = vpop.f32.mrf.mxu0
        %v1368 = vadd.f32 %v1279, %v1367
        %v1369 = vpop.f32.mrf.mxu0
        %v1370 = vadd.f32 %v1281, %v1369
        %1371 = vmatmul.bf16.gmra.mxu0 %v911
        %v1372 = vpop.f32.mrf.mxu0
        %v1373 = vadd.f32 %v1284, %v1372
        %v1374 = vpop.f32.mrf.mxu0
        %v1375 = vadd.f32 %v1286, %v1374
        %1376 = vmatmul.bf16.gmra.mxu0 %v914
        %v1377 = vpop.f32.mrf.mxu0
        %v1378 = vadd.f32 %v1289, %v1377
        %v1379 = vpop.f32.mrf.mxu0
        %v1380 = vadd.f32 %v1291, %v1379
        %1381 = vmatmul.bf16.gmra.mxu0 %v917
        %v1382 = vpop.f32.mrf.mxu0
        %v1383 = vadd.f32 %v1294, %v1382
        %v1384 = vpop.f32.mrf.mxu0
        %v1385 = vadd.f32 %v1296, %v1384
        %1386 = vmatmul.bf16.gmra.mxu0 %v920
        %v1387 = vpop.f32.mrf.mxu0
        %v1388 = vadd.f32 %v1299, %v1387
        %v1389 = vpop.f32.mrf.mxu0
        %v1390 = vadd.f32 %v1301, %v1389
        %1391 = vmatmul.bf16.gmra.mxu0 %v923
        %v1392 = vpop.f32.mrf.mxu0
        %v1393 = vadd.f32 %v1304, %v1392
        %v1394 = vpop.f32.mrf.mxu0
        %v1395 = vadd.f32 %v1306, %v1394
        %1396 = vmatmul.bf16.gmra.mxu0 %v926
        %v1397 = vpop.f32.mrf.mxu0
        %v1398 = vadd.f32 %v1309, %v1397
        %v1399 = vpop.f32.mrf.mxu0
        %v1400 = vadd.f32 %v1311, %v1399
        %1401 = vmatmul.bf16.gmra.mxu0 %v929
        %v1402 = vpop.f32.mrf.mxu0
        %v1403 = vadd.f32 %v1314, %v1402
        %v1404 = vpop.f32.mrf.mxu0
        %v1405 = vadd.f32 %v1316, %v1404
        %1406 = vmatmul.bf16.gmra.mxu0 %v932
        %v1407 = vpop.f32.mrf.mxu0
        %v1408 = vadd.f32 %v1319, %v1407
        %v1409 = vpop.f32.mrf.mxu0
        %v1410 = vadd.f32 %v1321, %v1409
        %1411 = vmatmul.bf16.gmra.mxu0 %v935
        %v1412 = vpop.f32.mrf.mxu0
        %v1413 = vadd.f32 %v1324, %v1412
        %v1414 = vpop.f32.mrf.mxu0
        %v1415 = vadd.f32 %v1326, %v1414
        %1416 = vmatmul.bf16.gmra.mxu0 %v938
        %v1417 = vpop.f32.mrf.mxu0
        %v1418 = vadd.f32 %v1329, %v1417
        %v1419 = vpop.f32.mrf.mxu0
        %v1420 = vadd.f32 %v1331, %v1419
        %1421 = vmatmul.bf16.gmra.mxu0 %v941
        %v1422 = vpop.f32.mrf.mxu0
        %v1423 = vadd.f32 %v1334, %v1422
        %v1424 = vpop.f32.mrf.mxu0
        %v1425 = vadd.f32 %v1336, %v1424
        %1426 = vmatmul.bf16.gmra.mxu0 %v944
        %v1427 = vpop.f32.mrf.mxu0
        %v1428 = vadd.f32 %v1339, %v1427
        %v1429 = vpop.f32.mrf.mxu0
        %v1430 = vadd.f32 %v1341, %v1429
        %1431 = vmatmul.bf16.gmra.mxu0 %v947
        %v1432 = vpop.f32.mrf.mxu0
        %v1433 = vadd.f32 %v1344, %v1432
        %v1434 = vpop.f32.mrf.mxu0
        %v1435 = vadd.f32 %v1346, %v1434
        %1436 = vmatmul.bf16.gmra.mxu0 %v950
        %v1437 = vpop.f32.mrf.mxu0
        %v1438 = vadd.f32 %v1349, %v1437
        %v1439 = vpop.f32.mrf.mxu0
        %v1440 = vadd.f32 %v1351, %v1439
        %1441 = vdwg.mxu0
        %v1442 = vadd.f32 %v951, %v1363
        %v1443 = vadd.f32 %v952, %v1365
        %v1444 = vadd.f32 %v953, %v1368
        %v1445 = vadd.f32 %v954, %v1370
        %v1446 = vadd.f32 %v955, %v1373
        %v1447 = vadd.f32 %v956, %v1375
        %v1448 = vadd.f32 %v957, %v1378
        %v1449 = vadd.f32 %v958, %v1380
        %v1450 = vadd.f32 %v959, %v1383
        %v1451 = vadd.f32 %v960, %v1385
        %v1452 = vadd.f32 %v961, %v1388
        %v1453 = vadd.f32 %v962, %v1390
        %v1454 = vadd.f32 %v963, %v1393
        %v1455 = vadd.f32 %v964, %v1395
        %v1456 = vadd.f32 %v965, %v1398
        %v1457 = vadd.f32 %v966, %v1400
        %v1458 = vadd.f32 %v967, %v1403
        %v1459 = vadd.f32 %v968, %v1405
        %v1460 = vadd.f32 %v969, %v1408
        %v1461 = vadd.f32 %v970, %v1410
        %v1462 = vadd.f32 %v971, %v1413
        %v1463 = vadd.f32 %v972, %v1415
        %v1464 = vadd.f32 %v973, %v1418
        %v1465 = vadd.f32 %v974, %v1420
        %v1466 = vadd.f32 %v975, %v1423
        %v1467 = vadd.f32 %v976, %v1425
        %v1468 = vadd.f32 %v977, %v1428
        %v1469 = vadd.f32 %v978, %v1430
        %v1470 = vadd.f32 %v979, %v1433
        %v1471 = vadd.f32 %v980, %v1435
        %v1472 = vadd.f32 %v981, %v1438
        %v1473 = vadd.f32 %v982, %v1440
        %1474 = vst [vmem:[#allocation4] sm:$0xff] %v1442
        %1475 = vst [vmem:[#allocation4 + $0x8] sm:$0xff] %v1443
        %1476 = vst [vmem:[#allocation4 + $0x10] sm:$0xff] %v1444
        %1477 = vst [vmem:[#allocation4 + $0x18] sm:$0xff] %v1445
        %1478 = vst [vmem:[#allocation4 + $0x20] sm:$0xff] %v1446
        %1479 = vst [vmem:[#allocation4 + $0x28] sm:$0xff] %v1447
        %1480 = vst [vmem:[#allocation4 + $0x30] sm:$0xff] %v1448
        %1481 = vst [vmem:[#allocation4 + $0x38] sm:$0xff] %v1449
        %1482 = vst [vmem:[#allocation4 + $0x40] sm:$0xff] %v1450
        %1483 = vst [vmem:[#allocation4 + $0x48] sm:$0xff] %v1451
        %1484 = vst [vmem:[#allocation4 + $0x50] sm:$0xff] %v1452
        %1485 = vst [vmem:[#allocation4 + $0x58] sm:$0xff] %v1453
        %1486 = vst [vmem:[#allocation4 + $0x60] sm:$0xff] %v1454
        %1487 = vst [vmem:[#allocation4 + $0x68] sm:$0xff] %v1455
        %1488 = vst [vmem:[#allocation4 + $0x70] sm:$0xff] %v1456
        %1489 = vst [vmem:[#allocation4 + $0x78] sm:$0xff] %v1457
        %1490 = vst [vmem:[#allocation4 + $0x80] sm:$0xff] %v1458
        %1491 = vst [vmem:[#allocation4 + $0x88] sm:$0xff] %v1459
        %1492 = vst [vmem:[#allocation4 + $0x90] sm:$0xff] %v1460
        %1493 = vst [vmem:[#allocation4 + $0x98] sm:$0xff] %v1461
        %1494 = vst [vmem:[#allocation4 + $0xa0] sm:$0xff] %v1462
        %1495 = vst [vmem:[#allocation4 + $0xa8] sm:$0xff] %v1463
        %1496 = vst [vmem:[#allocation4 + $0xb0] sm:$0xff] %v1464
        %1497 = vst [vmem:[#allocation4 + $0xb8] sm:$0xff] %v1465
        %1498 = vst [vmem:[#allocation4 + $0xc0] sm:$0xff] %v1466
        %1499 = vst [vmem:[#allocation4 + $0xc8] sm:$0xff] %v1467
        %1500 = vst [vmem:[#allocation4 + $0xd0] sm:$0xff] %v1468
        %1501 = vst [vmem:[#allocation4 + $0xd8] sm:$0xff] %v1469
        %1502 = vst [vmem:[#allocation4 + $0xe0] sm:$0xff] %v1470
        %1503 = vst [vmem:[#allocation4 + $0xe8] sm:$0xff] %v1471
        %1504 = vst [vmem:[#allocation4 + $0xf0] sm:$0xff] %v1472
        %1505 = vst [vmem:[#allocation4 + $0xf8] sm:$0xff] %v1473
        %v1506 = vld [vmem:[%s516] sm:$0xff]
        %v1507 = vld [vmem:[%s516 + $0x8] sm:$0xff]
        %v1508 = vld [vmem:[%s516 + $0x10] sm:$0x3]
        %v1509 = vld [vmem:[%s516 + $0x18] sm:$0xff]
        %v1510 = vld [vmem:[%s516 + $0x20] sm:$0xff]
        %v1511 = vld [vmem:[%s516 + $0x28] sm:$0x3]
        %v1512 = vld [vmem:[%s516 + $0x30] sm:$0xff]
        %v1513 = vld [vmem:[%s516 + $0x38] sm:$0xff]
        %v1514 = vld [vmem:[%s516 + $0x40] sm:$0x3]
        %v1515 = vld [vmem:[%s516 + $0x48] sm:$0xff]
        %v1516 = vld [vmem:[%s516 + $0x50] sm:$0xff]
        %v1517 = vld [vmem:[%s516 + $0x58] sm:$0x3]
        %v1518 = vld [vmem:[%s516 + $0x60] sm:$0xff]
        %v1519 = vld [vmem:[%s516 + $0x68] sm:$0xff]
        %v1520 = vld [vmem:[%s516 + $0x70] sm:$0x3]
        %v1521 = vld [vmem:[%s516 + $0x78] sm:$0xff]
        %v1522 = vld [vmem:[%s516 + $0x80] sm:$0xff]
        %v1523 = vld [vmem:[%s516 + $0x88] sm:$0x3]
        %v1524 = vld [vmem:[%s516 + $0x90] sm:$0xff]
        %v1525 = vld [vmem:[%s516 + $0x98] sm:$0xff]
        %v1526 = vld [vmem:[%s516 + $0xa0] sm:$0x3]
        %v1527 = vld [vmem:[%s516 + $0xa8] sm:$0xff]
        %v1528 = vld [vmem:[%s516 + $0xb0] sm:$0xff]
        %v1529 = vld [vmem:[%s516 + $0xb8] sm:$0x3]
        %v1530 = vld [vmem:[%s516 + $0xc0] sm:$0xff]
        %v1531 = vld [vmem:[%s516 + $0xc8] sm:$0xff]
        %v1532 = vld [vmem:[%s516 + $0xd0] sm:$0x3]
        %v1533 = vld [vmem:[%s516 + $0xd8] sm:$0xff]
        %v1534 = vld [vmem:[%s516 + $0xe0] sm:$0xff]
        %v1535 = vld [vmem:[%s516 + $0xe8] sm:$0x3]
        %v1536 = vld [vmem:[%s516 + $0xf0] sm:$0xff]
        %v1537 = vld [vmem:[%s516 + $0xf8] sm:$0xff]
        %v1538 = vld [vmem:[%s516 + $0x100] sm:$0x3]
        %v1539 = vld [vmem:[%s516 + $0x108] sm:$0xff]
        %v1540 = vld [vmem:[%s516 + $0x110] sm:$0xff]
        %v1541 = vld [vmem:[%s516 + $0x118] sm:$0x3]
        %v1542 = vld [vmem:[%s516 + $0x120] sm:$0xff]
        %v1543 = vld [vmem:[%s516 + $0x128] sm:$0xff]
        %v1544 = vld [vmem:[%s516 + $0x130] sm:$0x3]
        %v1545 = vld [vmem:[%s516 + $0x138] sm:$0xff]
        %v1546 = vld [vmem:[%s516 + $0x140] sm:$0xff]
        %v1547 = vld [vmem:[%s516 + $0x148] sm:$0x3]
        %v1548 = vld [vmem:[%s516 + $0x150] sm:$0xff]
        %v1549 = vld [vmem:[%s516 + $0x158] sm:$0xff]
        %v1550 = vld [vmem:[%s516 + $0x160] sm:$0x3]
        %v1551 = vld [vmem:[%s516 + $0x168] sm:$0xff]
        %v1552 = vld [vmem:[%s516 + $0x170] sm:$0xff]
        %v1553 = vld [vmem:[%s516 + $0x178] sm:$0x3]
        %v1602 = vrot.slane %v1506, 1
        %v1603 = vrot.slane %v1507, 1
        %v1604 = vsel %vm677, %v1602, %v1603
        %v1605 = vrot.slane %v1508, 1
        %v1606 = vsel %vm677, %v1603, %v1605
        %v1607 = vrot.slane %v1509, 1
        %v1608 = vrot.slane %v1510, 1
        %v1609 = vsel %vm677, %v1607, %v1608
        %v1610 = vrot.slane %v1511, 1
        %v1611 = vsel %vm677, %v1608, %v1610
        %v1612 = vrot.slane %v1512, 1
        %v1613 = vrot.slane %v1513, 1
        %v1614 = vsel %vm677, %v1612, %v1613
        %v1615 = vrot.slane %v1514, 1
        %v1616 = vsel %vm677, %v1613, %v1615
        %v1617 = vrot.slane %v1515, 1
        %v1618 = vrot.slane %v1516, 1
        %v1619 = vsel %vm677, %v1617, %v1618
        %v1620 = vrot.slane %v1517, 1
        %v1621 = vsel %vm677, %v1618, %v1620
        %v1622 = vrot.slane %v1518, 1
        %v1623 = vrot.slane %v1519, 1
        %v1624 = vsel %vm677, %v1622, %v1623
        %v1625 = vrot.slane %v1520, 1
        %v1626 = vsel %vm677, %v1623, %v1625
        %v1627 = vrot.slane %v1521, 1
        %v1628 = vrot.slane %v1522, 1
        %v1629 = vsel %vm677, %v1627, %v1628
        %v1630 = vrot.slane %v1523, 1
        %v1631 = vsel %vm677, %v1628, %v1630
        %v1632 = vrot.slane %v1524, 1
        %v1633 = vrot.slane %v1525, 1
        %v1634 = vsel %vm677, %v1632, %v1633
        %v1635 = vrot.slane %v1526, 1
        %v1636 = vsel %vm677, %v1633, %v1635
        %v1637 = vrot.slane %v1527, 1
        %v1638 = vrot.slane %v1528, 1
        %v1639 = vsel %vm677, %v1637, %v1638
        %v1640 = vrot.slane %v1529, 1
        %v1641 = vsel %vm677, %v1638, %v1640
        %v1642 = vrot.slane %v1530, 1
        %v1643 = vrot.slane %v1531, 1
        %v1644 = vsel %vm677, %v1642, %v1643
        %v1645 = vrot.slane %v1532, 1
        %v1646 = vsel %vm677, %v1643, %v1645
        %v1647 = vrot.slane %v1533, 1
        %v1648 = vrot.slane %v1534, 1
        %v1649 = vsel %vm677, %v1647, %v1648
        %v1650 = vrot.slane %v1535, 1
        %v1651 = vsel %vm677, %v1648, %v1650
        %v1652 = vrot.slane %v1536, 1
        %v1653 = vrot.slane %v1537, 1
        %v1654 = vsel %vm677, %v1652, %v1653
        %v1655 = vrot.slane %v1538, 1
        %v1656 = vsel %vm677, %v1653, %v1655
        %v1657 = vrot.slane %v1539, 1
        %v1658 = vrot.slane %v1540, 1
        %v1659 = vsel %vm677, %v1657, %v1658
        %v1660 = vrot.slane %v1541, 1
        %v1661 = vsel %vm677, %v1658, %v1660
        %v1662 = vrot.slane %v1542, 1
        %v1663 = vrot.slane %v1543, 1
        %v1664 = vsel %vm677, %v1662, %v1663
        %v1665 = vrot.slane %v1544, 1
        %v1666 = vsel %vm677, %v1663, %v1665
        %v1667 = vrot.slane %v1545, 1
        %v1668 = vrot.slane %v1546, 1
        %v1669 = vsel %vm677, %v1667, %v1668
        %v1670 = vrot.slane %v1547, 1
        %v1671 = vsel %vm677, %v1668, %v1670
        %v1672 = vrot.slane %v1548, 1
        %v1673 = vrot.slane %v1549, 1
        %v1674 = vsel %vm677, %v1672, %v1673
        %v1675 = vrot.slane %v1550, 1
        %v1676 = vsel %vm677, %v1673, %v1675
        %v1677 = vrot.slane %v1551, 1
        %v1678 = vrot.slane %v1552, 1
        %v1679 = vsel %vm677, %v1677, %v1678
        %v1680 = vrot.slane %v1553, 1
        %v1681 = vsel %vm677, %v1678, %v1680
        %v1714 = vrot.slane %v1506, 2
        %v1715 = vrot.slane %v1507, 2
        %v1716 = vsel %vm790, %v1714, %v1715
        %v1717 = vrot.slane %v1508, 2
        %v1718 = vsel %vm790, %v1715, %v1717
        %v1719 = vrot.slane %v1509, 2
        %v1720 = vrot.slane %v1510, 2
        %v1721 = vsel %vm790, %v1719, %v1720
        %v1722 = vrot.slane %v1511, 2
        %v1723 = vsel %vm790, %v1720, %v1722
        %v1724 = vrot.slane %v1512, 2
        %v1725 = vrot.slane %v1513, 2
        %v1726 = vsel %vm790, %v1724, %v1725
        %v1727 = vrot.slane %v1514, 2
        %v1728 = vsel %vm790, %v1725, %v1727
        %v1729 = vrot.slane %v1515, 2
        %v1730 = vrot.slane %v1516, 2
        %v1731 = vsel %vm790, %v1729, %v1730
        %v1732 = vrot.slane %v1517, 2
        %v1733 = vsel %vm790, %v1730, %v1732
        %v1734 = vrot.slane %v1518, 2
        %v1735 = vrot.slane %v1519, 2
        %v1736 = vsel %vm790, %v1734, %v1735
        %v1737 = vrot.slane %v1520, 2
        %v1738 = vsel %vm790, %v1735, %v1737
        %v1739 = vrot.slane %v1521, 2
        %v1740 = vrot.slane %v1522, 2
        %v1741 = vsel %vm790, %v1739, %v1740
        %v1742 = vrot.slane %v1523, 2
        %v1743 = vsel %vm790, %v1740, %v1742
        %v1744 = vrot.slane %v1524, 2
        %v1745 = vrot.slane %v1525, 2
        %v1746 = vsel %vm790, %v1744, %v1745
        %v1747 = vrot.slane %v1526, 2
        %v1748 = vsel %vm790, %v1745, %v1747
        %v1749 = vrot.slane %v1527, 2
        %v1750 = vrot.slane %v1528, 2
        %v1751 = vsel %vm790, %v1749, %v1750
        %v1752 = vrot.slane %v1529, 2
        %v1753 = vsel %vm790, %v1750, %v1752
        %v1754 = vrot.slane %v1530, 2
        %v1755 = vrot.slane %v1531, 2
        %v1756 = vsel %vm790, %v1754, %v1755
        %v1757 = vrot.slane %v1532, 2
        %v1758 = vsel %vm790, %v1755, %v1757
        %v1759 = vrot.slane %v1533, 2
        %v1760 = vrot.slane %v1534, 2
        %v1761 = vsel %vm790, %v1759, %v1760
        %v1762 = vrot.slane %v1535, 2
        %v1763 = vsel %vm790, %v1760, %v1762
        %v1764 = vrot.slane %v1536, 2
        %v1765 = vrot.slane %v1537, 2
        %v1766 = vsel %vm790, %v1764, %v1765
        %v1767 = vrot.slane %v1538, 2
        %v1768 = vsel %vm790, %v1765, %v1767
        %v1769 = vrot.slane %v1539, 2
        %v1770 = vrot.slane %v1540, 2
        %v1771 = vsel %vm790, %v1769, %v1770
        %v1772 = vrot.slane %v1541, 2
        %v1773 = vsel %vm790, %v1770, %v1772
        %v1774 = vrot.slane %v1542, 2
        %v1775 = vrot.slane %v1543, 2
        %v1776 = vsel %vm790, %v1774, %v1775
        %v1777 = vrot.slane %v1544, 2
        %v1778 = vsel %vm790, %v1775, %v1777
        %v1779 = vrot.slane %v1545, 2
        %v1780 = vrot.slane %v1546, 2
        %v1781 = vsel %vm790, %v1779, %v1780
        %v1782 = vrot.slane %v1547, 2
        %v1783 = vsel %vm790, %v1780, %v1782
        %v1784 = vrot.slane %v1548, 2
        %v1785 = vrot.slane %v1549, 2
        %v1786 = vsel %vm790, %v1784, %v1785
        %v1787 = vrot.slane %v1550, 2
        %v1788 = vsel %vm790, %v1785, %v1787
        %v1789 = vrot.slane %v1551, 2
        %v1790 = vrot.slane %v1552, 2
        %v1791 = vsel %vm790, %v1789, %v1790
        %v1792 = vrot.slane %v1553, 2
        %v1793 = vsel %vm790, %v1790, %v1792
        %v1826 = vpack.c.bf16 %v1507, %v1506
        %v1827 = vpack.c.bf16 %v1606, %v1604
        %v1828 = vpack.c.bf16 %v1718, %v1716
        %v1829 = vpack.c.bf16 %v1510, %v1509
        %v1830 = vpack.c.bf16 %v1611, %v1609
        %v1831 = vpack.c.bf16 %v1723, %v1721
        %v1832 = vpack.c.bf16 %v1513, %v1512
        %v1833 = vpack.c.bf16 %v1616, %v1614
        %v1834 = vpack.c.bf16 %v1728, %v1726
        %v1835 = vpack.c.bf16 %v1516, %v1515
        %v1836 = vpack.c.bf16 %v1621, %v1619
        %v1837 = vpack.c.bf16 %v1733, %v1731
        %v1838 = vpack.c.bf16 %v1519, %v1518
        %v1839 = vpack.c.bf16 %v1626, %v1624
        %v1840 = vpack.c.bf16 %v1738, %v1736
        %v1841 = vpack.c.bf16 %v1522, %v1521
        %v1842 = vpack.c.bf16 %v1631, %v1629
        %v1843 = vpack.c.bf16 %v1743, %v1741
        %v1844 = vpack.c.bf16 %v1525, %v1524
        %v1845 = vpack.c.bf16 %v1636, %v1634
        %v1846 = vpack.c.bf16 %v1748, %v1746
        %v1847 = vpack.c.bf16 %v1528, %v1527
        %v1848 = vpack.c.bf16 %v1641, %v1639
        %v1849 = vpack.c.bf16 %v1753, %v1751
        %v1850 = vpack.c.bf16 %v1531, %v1530
        %v1851 = vpack.c.bf16 %v1646, %v1644
        %v1852 = vpack.c.bf16 %v1758, %v1756
        %v1853 = vpack.c.bf16 %v1534, %v1533
        %v1854 = vpack.c.bf16 %v1651, %v1649
        %v1855 = vpack.c.bf16 %v1763, %v1761
        %v1856 = vpack.c.bf16 %v1537, %v1536
        %v1857 = vpack.c.bf16 %v1656, %v1654
        %v1858 = vpack.c.bf16 %v1768, %v1766
        %v1859 = vpack.c.bf16 %v1540, %v1539
        %v1860 = vpack.c.bf16 %v1661, %v1659
        %v1861 = vpack.c.bf16 %v1773, %v1771
        %v1862 = vpack.c.bf16 %v1543, %v1542
        %v1863 = vpack.c.bf16 %v1666, %v1664
        %v1864 = vpack.c.bf16 %v1778, %v1776
        %v1865 = vpack.c.bf16 %v1546, %v1545
        %v1866 = vpack.c.bf16 %v1671, %v1669
        %v1867 = vpack.c.bf16 %v1783, %v1781
        %v1868 = vpack.c.bf16 %v1549, %v1548
        %v1869 = vpack.c.bf16 %v1676, %v1674
        %v1870 = vpack.c.bf16 %v1788, %v1786
        %v1871 = vpack.c.bf16 %v1552, %v1551
        %v1872 = vpack.c.bf16 %v1681, %v1679
        %v1873 = vpack.c.bf16 %v1793, %v1791
        %v1874 = vld [vmem:[#allocation4] sm:$0xff]
        %v1875 = vld [vmem:[#allocation4 + $0x8] sm:$0xff]
        %v1876 = vld [vmem:[#allocation4 + $0x10] sm:$0xff]
        %v1877 = vld [vmem:[#allocation4 + $0x18] sm:$0xff]
        %v1878 = vld [vmem:[#allocation4 + $0x20] sm:$0xff]
        %v1879 = vld [vmem:[#allocation4 + $0x28] sm:$0xff]
        %v1880 = vld [vmem:[#allocation4 + $0x30] sm:$0xff]
        %v1881 = vld [vmem:[#allocation4 + $0x38] sm:$0xff]
        %v1882 = vld [vmem:[#allocation4 + $0x40] sm:$0xff]
        %v1883 = vld [vmem:[#allocation4 + $0x48] sm:$0xff]
        %v1884 = vld [vmem:[#allocation4 + $0x50] sm:$0xff]
        %v1885 = vld [vmem:[#allocation4 + $0x58] sm:$0xff]
        %v1886 = vld [vmem:[#allocation4 + $0x60] sm:$0xff]
        %v1887 = vld [vmem:[#allocation4 + $0x68] sm:$0xff]
        %v1888 = vld [vmem:[#allocation4 + $0x70] sm:$0xff]
        %v1889 = vld [vmem:[#allocation4 + $0x78] sm:$0xff]
        %v1890 = vld [vmem:[#allocation4 + $0x80] sm:$0xff]
        %v1891 = vld [vmem:[#allocation4 + $0x88] sm:$0xff]
        %v1892 = vld [vmem:[#allocation4 + $0x90] sm:$0xff]
        %v1893 = vld [vmem:[#allocation4 + $0x98] sm:$0xff]
        %v1894 = vld [vmem:[#allocation4 + $0xa0] sm:$0xff]
        %v1895 = vld [vmem:[#allocation4 + $0xa8] sm:$0xff]
        %v1896 = vld [vmem:[#allocation4 + $0xb0] sm:$0xff]
        %v1897 = vld [vmem:[#allocation4 + $0xb8] sm:$0xff]
        %v1898 = vld [vmem:[#allocation4 + $0xc0] sm:$0xff]
        %v1899 = vld [vmem:[#allocation4 + $0xc8] sm:$0xff]
        %v1900 = vld [vmem:[#allocation4 + $0xd0] sm:$0xff]
        %v1901 = vld [vmem:[#allocation4 + $0xd8] sm:$0xff]
        %v1902 = vld [vmem:[#allocation4 + $0xe0] sm:$0xff]
        %v1903 = vld [vmem:[#allocation4 + $0xe8] sm:$0xff]
        %v1904 = vld [vmem:[#allocation4 + $0xf0] sm:$0xff]
        %v1905 = vld [vmem:[#allocation4 + $0xf8] sm:$0xff]
        %s1906 = scalar_lea.vmem [#allocation9], 192
        %v1907 = vld [vmem:[%s1906] sm:$0xf]
        %v1908 = vld [vmem:[%s1906 + $0x4] sm:$0xf]
        %v1909 = vld [vmem:[%s1906 + $0x8] sm:$0xf]
        %v1910 = vld [vmem:[%s1906 + $0xc] sm:$0xf]
        %v1911 = vld [vmem:[%s1906 + $0x10] sm:$0xf]
        %v1912 = vld [vmem:[%s1906 + $0x14] sm:$0xf]
        %v1913 = vld [vmem:[%s1906 + $0x18] sm:$0xf]
        %v1914 = vld [vmem:[%s1906 + $0x1c] sm:$0xf]
        %v1915 = vld [vmem:[%s1906 + $0x20] sm:$0xf]
        %v1916 = vld [vmem:[%s1906 + $0x24] sm:$0xf]
        %v1917 = vld [vmem:[%s1906 + $0x28] sm:$0xf]
        %v1918 = vld [vmem:[%s1906 + $0x2c] sm:$0xf]
        %v1919 = vld [vmem:[%s1906 + $0x30] sm:$0xf]
        %v1920 = vld [vmem:[%s1906 + $0x34] sm:$0xf]
        %v1921 = vld [vmem:[%s1906 + $0x38] sm:$0xf]
        %v1922 = vld [vmem:[%s1906 + $0x3c] sm:$0xf]
        %v1923 = vld [vmem:[%s1906 + $0x40] sm:$0xf]
        %v1924 = vld [vmem:[%s1906 + $0x44] sm:$0xf]
        %v1925 = vld [vmem:[%s1906 + $0x48] sm:$0xf]
        %v1926 = vld [vmem:[%s1906 + $0x4c] sm:$0xf]
        %v1927 = vld [vmem:[%s1906 + $0x50] sm:$0xf]
        %v1928 = vld [vmem:[%s1906 + $0x54] sm:$0xf]
        %v1929 = vld [vmem:[%s1906 + $0x58] sm:$0xf]
        %v1930 = vld [vmem:[%s1906 + $0x5c] sm:$0xf]
        %v1931 = vld [vmem:[%s1906 + $0x60] sm:$0xf]
        %v1932 = vld [vmem:[%s1906 + $0x64] sm:$0xf]
        %v1933 = vld [vmem:[%s1906 + $0x68] sm:$0xf]
        %v1934 = vld [vmem:[%s1906 + $0x6c] sm:$0xf]
        %v1935 = vld [vmem:[%s1906 + $0x70] sm:$0xf]
        %v1936 = vld [vmem:[%s1906 + $0x74] sm:$0xf]
        %v1937 = vld [vmem:[%s1906 + $0x78] sm:$0xf]
        %v1938 = vld [vmem:[%s1906 + $0x7c] sm:$0xf]
        %v1939 = vld [vmem:[%s1906 + $0x80] sm:$0xf]
        %v1940 = vld [vmem:[%s1906 + $0x84] sm:$0xf]
        %v1941 = vld [vmem:[%s1906 + $0x88] sm:$0xf]
        %v1942 = vld [vmem:[%s1906 + $0x8c] sm:$0xf]
        %v1943 = vld [vmem:[%s1906 + $0x90] sm:$0xf]
        %v1944 = vld [vmem:[%s1906 + $0x94] sm:$0xf]
        %v1945 = vld [vmem:[%s1906 + $0x98] sm:$0xf]
        %v1946 = vld [vmem:[%s1906 + $0x9c] sm:$0xf]
        %v1947 = vld [vmem:[%s1906 + $0xa0] sm:$0xf]
        %v1948 = vld [vmem:[%s1906 + $0xa4] sm:$0xf]
        %v1949 = vld [vmem:[%s1906 + $0xa8] sm:$0xf]
        %v1950 = vld [vmem:[%s1906 + $0xac] sm:$0xf]
        %v1951 = vld [vmem:[%s1906 + $0xb0] sm:$0xf]
        %v1952 = vld [vmem:[%s1906 + $0xb4] sm:$0xf]
        %v1953 = vld [vmem:[%s1906 + $0xb8] sm:$0xf]
        %v1954 = vld [vmem:[%s1906 + $0xbc] sm:$0xf]
        %v2003 = vunpack.c.l.b16 %v1907
        %v2004 = vunpack.c.l.b16 %v1908
        %v2005 = vunpack.c.l.b16 %v1909
        %v2006 = vunpack.c.l.b16 %v1910
        %v2007 = vunpack.c.l.b16 %v1911
        %v2008 = vunpack.c.l.b16 %v1912
        %v2009 = vunpack.c.l.b16 %v1913
        %v2010 = vunpack.c.l.b16 %v1914
        %v2011 = vunpack.c.l.b16 %v1915
        %v2012 = vunpack.c.l.b16 %v1916
        %v2013 = vunpack.c.l.b16 %v1917
        %v2014 = vunpack.c.l.b16 %v1918
        %v2015 = vunpack.c.l.b16 %v1919
        %v2016 = vunpack.c.l.b16 %v1920
        %v2017 = vunpack.c.l.b16 %v1921
        %v2018 = vunpack.c.l.b16 %v1922
        %v2019 = vunpack.c.l.b16 %v1923
        %v2020 = vunpack.c.l.b16 %v1924
        %v2021 = vunpack.c.l.b16 %v1925
        %v2022 = vunpack.c.l.b16 %v1926
        %v2023 = vunpack.c.l.b16 %v1927
        %v2024 = vunpack.c.l.b16 %v1928
        %v2025 = vunpack.c.l.b16 %v1929
        %v2026 = vunpack.c.l.b16 %v1930
        %v2027 = vunpack.c.l.b16 %v1931
        %v2028 = vunpack.c.l.b16 %v1932
        %v2029 = vunpack.c.l.b16 %v1933
        %v2030 = vunpack.c.l.b16 %v1934
        %v2031 = vunpack.c.l.b16 %v1935
        %v2032 = vunpack.c.l.b16 %v1936
        %v2033 = vunpack.c.l.b16 %v1937
        %v2034 = vunpack.c.l.b16 %v1938
        %v2035 = vunpack.c.l.b16 %v1939
        %v2036 = vunpack.c.l.b16 %v1940
        %v2037 = vunpack.c.l.b16 %v1941
        %v2038 = vunpack.c.l.b16 %v1942
        %v2039 = vunpack.c.l.b16 %v1943
        %v2040 = vunpack.c.l.b16 %v1944
        %v2041 = vunpack.c.l.b16 %v1945
        %v2042 = vunpack.c.l.b16 %v1946
        %v2043 = vunpack.c.l.b16 %v1947
        %v2044 = vunpack.c.l.b16 %v1948
        %v2045 = vunpack.c.l.b16 %v1949
        %v2046 = vunpack.c.l.b16 %v1950
        %v2047 = vunpack.c.l.b16 %v1951
        %v2048 = vunpack.c.l.b16 %v1952
        %v2049 = vunpack.c.l.b16 %v1953
        %v2050 = vunpack.c.l.b16 %v1954
        %v2051 = vpack.c.b16 %v2004, %v2003
        %v2052 = vpack.c.b16 %v2006, %v2005
        %v2053 = vpack.c.b16 %v2008, %v2007
        %v2054 = vpack.c.b16 %v2010, %v2009
        %v2055 = vpack.c.b16 %v2012, %v2011
        %v2056 = vpack.c.b16 %v2014, %v2013
        %v2057 = vpack.c.b16 %v2016, %v2015
        %v2058 = vpack.c.b16 %v2018, %v2017
        %v2059 = vpack.c.b16 %v2020, %v2019
        %v2060 = vpack.c.b16 %v2022, %v2021
        %v2061 = vpack.c.b16 %v2024, %v2023
        %v2062 = vpack.c.b16 %v2026, %v2025
        %v2063 = vpack.c.b16 %v2028, %v2027
        %v2064 = vpack.c.b16 %v2030, %v2029
        %v2065 = vpack.c.b16 %v2032, %v2031
        %v2066 = vpack.c.b16 %v2034, %v2033
        %v2067 = vpack.c.b16 %v2036, %v2035
        %v2068 = vpack.c.b16 %v2038, %v2037
        %v2069 = vpack.c.b16 %v2040, %v2039
        %v2070 = vpack.c.b16 %v2042, %v2041
        %v2071 = vpack.c.b16 %v2044, %v2043
        %v2072 = vpack.c.b16 %v2046, %v2045
        %v2073 = vpack.c.b16 %v2048, %v2047
        %v2074 = vpack.c.b16 %v2050, %v2049
        %2099 = vmatpush.bf16.msra.mxu0 %v2058
        %2100 = vmatpush.bf16.msra.mxu0 %v2057
        %2101 = vmatpush.bf16.msra.mxu0 %v2056
        %2102 = vmatpush.bf16.msra.mxu0 %v2055
        %2103 = vmatpush.bf16.msra.mxu0 %v2054
        %2104 = vmatpush.bf16.msra.mxu0 %v2053
        %2105 = vmatpush.bf16.msra.mxu0 %v2052
        %2106 = vmatpush.bf16.msra.mxu0 %v2051
        %2107 = vmatmul.bf16.gmra.mxu0 %v1826
        %v2108 = vpop.f32.mrf.mxu0
        %v2109 = vadd.f32 0.0, %v2108
        %v2110 = vpop.f32.mrf.mxu0
        %v2111 = vadd.f32 0.0, %v2110
        %2112 = vmatmul.bf16.gmra.mxu0 %v1829
        %v2113 = vpop.f32.mrf.mxu0
        %v2114 = vadd.f32 0.0, %v2113
        %v2115 = vpop.f32.mrf.mxu0
        %v2116 = vadd.f32 0.0, %v2115
        %2117 = vmatmul.bf16.gmra.mxu0 %v1832
        %v2118 = vpop.f32.mrf.mxu0
        %v2119 = vadd.f32 0.0, %v2118
        %v2120 = vpop.f32.mrf.mxu0
        %v2121 = vadd.f32 0.0, %v2120
        %2122 = vmatmul.bf16.gmra.mxu0 %v1835
        %v2123 = vpop.f32.mrf.mxu0
        %v2124 = vadd.f32 0.0, %v2123
        %v2125 = vpop.f32.mrf.mxu0
        %v2126 = vadd.f32 0.0, %v2125
        %2127 = vmatmul.bf16.gmra.mxu0 %v1838
        %v2128 = vpop.f32.mrf.mxu0
        %v2129 = vadd.f32 0.0, %v2128
        %v2130 = vpop.f32.mrf.mxu0
        %v2131 = vadd.f32 0.0, %v2130
        %2132 = vmatmul.bf16.gmra.mxu0 %v1841
        %v2133 = vpop.f32.mrf.mxu0
        %v2134 = vadd.f32 0.0, %v2133
        %v2135 = vpop.f32.mrf.mxu0
        %v2136 = vadd.f32 0.0, %v2135
        %2137 = vmatmul.bf16.gmra.mxu0 %v1844
        %v2138 = vpop.f32.mrf.mxu0
        %v2139 = vadd.f32 0.0, %v2138
        %v2140 = vpop.f32.mrf.mxu0
        %v2141 = vadd.f32 0.0, %v2140
        %2142 = vmatmul.bf16.gmra.mxu0 %v1847
        %v2143 = vpop.f32.mrf.mxu0
        %v2144 = vadd.f32 0.0, %v2143
        %v2145 = vpop.f32.mrf.mxu0
        %v2146 = vadd.f32 0.0, %v2145
        %2147 = vmatmul.bf16.gmra.mxu0 %v1850
        %v2148 = vpop.f32.mrf.mxu0
        %v2149 = vadd.f32 0.0, %v2148
        %v2150 = vpop.f32.mrf.mxu0
        %v2151 = vadd.f32 0.0, %v2150
        %2152 = vmatmul.bf16.gmra.mxu0 %v1853
        %v2153 = vpop.f32.mrf.mxu0
        %v2154 = vadd.f32 0.0, %v2153
        %v2155 = vpop.f32.mrf.mxu0
        %v2156 = vadd.f32 0.0, %v2155
        %2157 = vmatmul.bf16.gmra.mxu0 %v1856
        %v2158 = vpop.f32.mrf.mxu0
        %v2159 = vadd.f32 0.0, %v2158
        %v2160 = vpop.f32.mrf.mxu0
        %v2161 = vadd.f32 0.0, %v2160
        %2162 = vmatmul.bf16.gmra.mxu0 %v1859
        %v2163 = vpop.f32.mrf.mxu0
        %v2164 = vadd.f32 0.0, %v2163
        %v2165 = vpop.f32.mrf.mxu0
        %v2166 = vadd.f32 0.0, %v2165
        %2167 = vmatmul.bf16.gmra.mxu0 %v1862
        %v2168 = vpop.f32.mrf.mxu0
        %v2169 = vadd.f32 0.0, %v2168
        %v2170 = vpop.f32.mrf.mxu0
        %v2171 = vadd.f32 0.0, %v2170
        %2172 = vmatmul.bf16.gmra.mxu0 %v1865
        %v2173 = vpop.f32.mrf.mxu0
        %v2174 = vadd.f32 0.0, %v2173
        %v2175 = vpop.f32.mrf.mxu0
        %v2176 = vadd.f32 0.0, %v2175
        %2177 = vmatmul.bf16.gmra.mxu0 %v1868
        %v2178 = vpop.f32.mrf.mxu0
        %v2179 = vadd.f32 0.0, %v2178
        %v2180 = vpop.f32.mrf.mxu0
        %v2181 = vadd.f32 0.0, %v2180
        %2182 = vmatmul.bf16.gmra.mxu0 %v1871
        %v2183 = vpop.f32.mrf.mxu0
        %v2184 = vadd.f32 0.0, %v2183
        %v2185 = vpop.f32.mrf.mxu0
        %v2186 = vadd.f32 0.0, %v2185
        %2187 = vdwg.mxu0
        %2188 = vmatpush.bf16.msra.mxu0 %v2066
        %2189 = vmatpush.bf16.msra.mxu0 %v2065
        %2190 = vmatpush.bf16.msra.mxu0 %v2064
        %2191 = vmatpush.bf16.msra.mxu0 %v2063
        %2192 = vmatpush.bf16.msra.mxu0 %v2062
        %2193 = vmatpush.bf16.msra.mxu0 %v2061
        %2194 = vmatpush.bf16.msra.mxu0 %v2060
        %2195 = vmatpush.bf16.msra.mxu0 %v2059
        %2196 = vmatmul.bf16.gmra.mxu0 %v1827
        %v2197 = vpop.f32.mrf.mxu0
        %v2198 = vadd.f32 %v2109, %v2197
        %v2199 = vpop.f32.mrf.mxu0
        %v2200 = vadd.f32 %v2111, %v2199
        %2201 = vmatmul.bf16.gmra.mxu0 %v1830
        %v2202 = vpop.f32.mrf.mxu0
        %v2203 = vadd.f32 %v2114, %v2202
        %v2204 = vpop.f32.mrf.mxu0
        %v2205 = vadd.f32 %v2116, %v2204
        %2206 = vmatmul.bf16.gmra.mxu0 %v1833
        %v2207 = vpop.f32.mrf.mxu0
        %v2208 = vadd.f32 %v2119, %v2207
        %v2209 = vpop.f32.mrf.mxu0
        %v2210 = vadd.f32 %v2121, %v2209
        %2211 = vmatmul.bf16.gmra.mxu0 %v1836
        %v2212 = vpop.f32.mrf.mxu0
        %v2213 = vadd.f32 %v2124, %v2212
        %v2214 = vpop.f32.mrf.mxu0
        %v2215 = vadd.f32 %v2126, %v2214
        %2216 = vmatmul.bf16.gmra.mxu0 %v1839
        %v2217 = vpop.f32.mrf.mxu0
        %v2218 = vadd.f32 %v2129, %v2217
        %v2219 = vpop.f32.mrf.mxu0
        %v2220 = vadd.f32 %v2131, %v2219
        %2221 = vmatmul.bf16.gmra.mxu0 %v1842
        %v2222 = vpop.f32.mrf.mxu0
        %v2223 = vadd.f32 %v2134, %v2222
        %v2224 = vpop.f32.mrf.mxu0
        %v2225 = vadd.f32 %v2136, %v2224
        %2226 = vmatmul.bf16.gmra.mxu0 %v1845
        %v2227 = vpop.f32.mrf.mxu0
        %v2228 = vadd.f32 %v2139, %v2227
        %v2229 = vpop.f32.mrf.mxu0
        %v2230 = vadd.f32 %v2141, %v2229
        %2231 = vmatmul.bf16.gmra.mxu0 %v1848
        %v2232 = vpop.f32.mrf.mxu0
        %v2233 = vadd.f32 %v2144, %v2232
        %v2234 = vpop.f32.mrf.mxu0
        %v2235 = vadd.f32 %v2146, %v2234
        %2236 = vmatmul.bf16.gmra.mxu0 %v1851
        %v2237 = vpop.f32.mrf.mxu0
        %v2238 = vadd.f32 %v2149, %v2237
        %v2239 = vpop.f32.mrf.mxu0
        %v2240 = vadd.f32 %v2151, %v2239
        %2241 = vmatmul.bf16.gmra.mxu0 %v1854
        %v2242 = vpop.f32.mrf.mxu0
        %v2243 = vadd.f32 %v2154, %v2242
        %v2244 = vpop.f32.mrf.mxu0
        %v2245 = vadd.f32 %v2156, %v2244
        %2246 = vmatmul.bf16.gmra.mxu0 %v1857
        %v2247 = vpop.f32.mrf.mxu0
        %v2248 = vadd.f32 %v2159, %v2247
        %v2249 = vpop.f32.mrf.mxu0
        %v2250 = vadd.f32 %v2161, %v2249
        %2251 = vmatmul.bf16.gmra.mxu0 %v1860
        %v2252 = vpop.f32.mrf.mxu0
        %v2253 = vadd.f32 %v2164, %v2252
        %v2254 = vpop.f32.mrf.mxu0
        %v2255 = vadd.f32 %v2166, %v2254
        %2256 = vmatmul.bf16.gmra.mxu0 %v1863
        %v2257 = vpop.f32.mrf.mxu0
        %v2258 = vadd.f32 %v2169, %v2257
        %v2259 = vpop.f32.mrf.mxu0
        %v2260 = vadd.f32 %v2171, %v2259
        %2261 = vmatmul.bf16.gmra.mxu0 %v1866
        %v2262 = vpop.f32.mrf.mxu0
        %v2263 = vadd.f32 %v2174, %v2262
        %v2264 = vpop.f32.mrf.mxu0
        %v2265 = vadd.f32 %v2176, %v2264
        %2266 = vmatmul.bf16.gmra.mxu0 %v1869
        %v2267 = vpop.f32.mrf.mxu0
        %v2268 = vadd.f32 %v2179, %v2267
        %v2269 = vpop.f32.mrf.mxu0
        %v2270 = vadd.f32 %v2181, %v2269
        %2271 = vmatmul.bf16.gmra.mxu0 %v1872
        %v2272 = vpop.f32.mrf.mxu0
        %v2273 = vadd.f32 %v2184, %v2272
        %v2274 = vpop.f32.mrf.mxu0
        %v2275 = vadd.f32 %v2186, %v2274
        %2276 = vdwg.mxu0
        %2277 = vmatpush.bf16.msra.mxu0 %v2074
        %2278 = vmatpush.bf16.msra.mxu0 %v2073
        %2279 = vmatpush.bf16.msra.mxu0 %v2072
        %2280 = vmatpush.bf16.msra.mxu0 %v2071
        %2281 = vmatpush.bf16.msra.mxu0 %v2070
        %2282 = vmatpush.bf16.msra.mxu0 %v2069
        %2283 = vmatpush.bf16.msra.mxu0 %v2068
        %2284 = vmatpush.bf16.msra.mxu0 %v2067
        %2285 = vmatmul.bf16.gmra.mxu0 %v1828
        %v2286 = vpop.f32.mrf.mxu0
        %v2287 = vadd.f32 %v2198, %v2286
        %v2288 = vpop.f32.mrf.mxu0
        %v2289 = vadd.f32 %v2200, %v2288
        %2290 = vmatmul.bf16.gmra.mxu0 %v1831
        %v2291 = vpop.f32.mrf.mxu0
        %v2292 = vadd.f32 %v2203, %v2291
        %v2293 = vpop.f32.mrf.mxu0
        %v2294 = vadd.f32 %v2205, %v2293
        %2295 = vmatmul.bf16.gmra.mxu0 %v1834
        %v2296 = vpop.f32.mrf.mxu0
        %v2297 = vadd.f32 %v2208, %v2296
        %v2298 = vpop.f32.mrf.mxu0
        %v2299 = vadd.f32 %v2210, %v2298
        %2300 = vmatmul.bf16.gmra.mxu0 %v1837
        %v2301 = vpop.f32.mrf.mxu0
        %v2302 = vadd.f32 %v2213, %v2301
        %v2303 = vpop.f32.mrf.mxu0
        %v2304 = vadd.f32 %v2215, %v2303
        %2305 = vmatmul.bf16.gmra.mxu0 %v1840
        %v2306 = vpop.f32.mrf.mxu0
        %v2307 = vadd.f32 %v2218, %v2306
        %v2308 = vpop.f32.mrf.mxu0
        %v2309 = vadd.f32 %v2220, %v2308
        %2310 = vmatmul.bf16.gmra.mxu0 %v1843
        %v2311 = vpop.f32.mrf.mxu0
        %v2312 = vadd.f32 %v2223, %v2311
        %v2313 = vpop.f32.mrf.mxu0
        %v2314 = vadd.f32 %v2225, %v2313
        %2315 = vmatmul.bf16.gmra.mxu0 %v1846
        %v2316 = vpop.f32.mrf.mxu0
        %v2317 = vadd.f32 %v2228, %v2316
        %v2318 = vpop.f32.mrf.mxu0
        %v2319 = vadd.f32 %v2230, %v2318
        %2320 = vmatmul.bf16.gmra.mxu0 %v1849
        %v2321 = vpop.f32.mrf.mxu0
        %v2322 = vadd.f32 %v2233, %v2321
        %v2323 = vpop.f32.mrf.mxu0
        %v2324 = vadd.f32 %v2235, %v2323
        %2325 = vmatmul.bf16.gmra.mxu0 %v1852
        %v2326 = vpop.f32.mrf.mxu0
        %v2327 = vadd.f32 %v2238, %v2326
        %v2328 = vpop.f32.mrf.mxu0
        %v2329 = vadd.f32 %v2240, %v2328
        %2330 = vmatmul.bf16.gmra.mxu0 %v1855
        %v2331 = vpop.f32.mrf.mxu0
        %v2332 = vadd.f32 %v2243, %v2331
        %v2333 = vpop.f32.mrf.mxu0
        %v2334 = vadd.f32 %v2245, %v2333
        %2335 = vmatmul.bf16.gmra.mxu0 %v1858
        %v2336 = vpop.f32.mrf.mxu0
        %v2337 = vadd.f32 %v2248, %v2336
        %v2338 = vpop.f32.mrf.mxu0
        %v2339 = vadd.f32 %v2250, %v2338
        %2340 = vmatmul.bf16.gmra.mxu0 %v1861
        %v2341 = vpop.f32.mrf.mxu0
        %v2342 = vadd.f32 %v2253, %v2341
        %v2343 = vpop.f32.mrf.mxu0
        %v2344 = vadd.f32 %v2255, %v2343
        %2345 = vmatmul.bf16.gmra.mxu0 %v1864
        %v2346 = vpop.f32.mrf.mxu0
        %v2347 = vadd.f32 %v2258, %v2346
        %v2348 = vpop.f32.mrf.mxu0
        %v2349 = vadd.f32 %v2260, %v2348
        %2350 = vmatmul.bf16.gmra.mxu0 %v1867
        %v2351 = vpop.f32.mrf.mxu0
        %v2352 = vadd.f32 %v2263, %v2351
        %v2353 = vpop.f32.mrf.mxu0
        %v2354 = vadd.f32 %v2265, %v2353
        %2355 = vmatmul.bf16.gmra.mxu0 %v1870
        %v2356 = vpop.f32.mrf.mxu0
        %v2357 = vadd.f32 %v2268, %v2356
        %v2358 = vpop.f32.mrf.mxu0
        %v2359 = vadd.f32 %v2270, %v2358
        %2360 = vmatmul.bf16.gmra.mxu0 %v1873
        %v2361 = vpop.f32.mrf.mxu0
        %v2362 = vadd.f32 %v2273, %v2361
        %v2363 = vpop.f32.mrf.mxu0
        %v2364 = vadd.f32 %v2275, %v2363
        %2365 = vdwg.mxu0
        %v2366 = vadd.f32 %v1874, %v2287
        %v2367 = vadd.f32 %v1875, %v2289
        %v2368 = vadd.f32 %v1876, %v2292
        %v2369 = vadd.f32 %v1877, %v2294
        %v2370 = vadd.f32 %v1878, %v2297
        %v2371 = vadd.f32 %v1879, %v2299
        %v2372 = vadd.f32 %v1880, %v2302
        %v2373 = vadd.f32 %v1881, %v2304
        %v2374 = vadd.f32 %v1882, %v2307
        %v2375 = vadd.f32 %v1883, %v2309
        %v2376 = vadd.f32 %v1884, %v2312
        %v2377 = vadd.f32 %v1885, %v2314
        %v2378 = vadd.f32 %v1886, %v2317
        %v2379 = vadd.f32 %v1887, %v2319
        %v2380 = vadd.f32 %v1888, %v2322
        %v2381 = vadd.f32 %v1889, %v2324
        %v2382 = vadd.f32 %v1890, %v2327
        %v2383 = vadd.f32 %v1891, %v2329
        %v2384 = vadd.f32 %v1892, %v2332
        %v2385 = vadd.f32 %v1893, %v2334
        %v2386 = vadd.f32 %v1894, %v2337
        %v2387 = vadd.f32 %v1895, %v2339
        %v2388 = vadd.f32 %v1896, %v2342
        %v2389 = vadd.f32 %v1897, %v2344
        %v2390 = vadd.f32 %v1898, %v2347
        %v2391 = vadd.f32 %v1899, %v2349
        %v2392 = vadd.f32 %v1900, %v2352
        %v2393 = vadd.f32 %v1901, %v2354
        %v2394 = vadd.f32 %v1902, %v2357
        %v2395 = vadd.f32 %v1903, %v2359
        %v2396 = vadd.f32 %v1904, %v2362
        %v2397 = vadd.f32 %v1905, %v2364
        %2398 = vst [vmem:[#allocation4] sm:$0xff] %v2366
        %2399 = vst [vmem:[#allocation4 + $0x8] sm:$0xff] %v2367
        %2400 = vst [vmem:[#allocation4 + $0x10] sm:$0xff] %v2368
        %2401 = vst [vmem:[#allocation4 + $0x18] sm:$0xff] %v2369
        %2402 = vst [vmem:[#allocation4 + $0x20] sm:$0xff] %v2370
        %2403 = vst [vmem:[#allocation4 + $0x28] sm:$0xff] %v2371
        %2404 = vst [vmem:[#allocation4 + $0x30] sm:$0xff] %v2372
        %2405 = vst [vmem:[#allocation4 + $0x38] sm:$0xff] %v2373
        %2406 = vst [vmem:[#allocation4 + $0x40] sm:$0xff] %v2374
        %2407 = vst [vmem:[#allocation4 + $0x48] sm:$0xff] %v2375
        %2408 = vst [vmem:[#allocation4 + $0x50] sm:$0xff] %v2376
        %2409 = vst [vmem:[#allocation4 + $0x58] sm:$0xff] %v2377
        %2410 = vst [vmem:[#allocation4 + $0x60] sm:$0xff] %v2378
        %2411 = vst [vmem:[#allocation4 + $0x68] sm:$0xff] %v2379
        %2412 = vst [vmem:[#allocation4 + $0x70] sm:$0xff] %v2380
        %2413 = vst [vmem:[#allocation4 + $0x78] sm:$0xff] %v2381
        %2414 = vst [vmem:[#allocation4 + $0x80] sm:$0xff] %v2382
        %2415 = vst [vmem:[#allocation4 + $0x88] sm:$0xff] %v2383
        %2416 = vst [vmem:[#allocation4 + $0x90] sm:$0xff] %v2384
        %2417 = vst [vmem:[#allocation4 + $0x98] sm:$0xff] %v2385
        %2418 = vst [vmem:[#allocation4 + $0xa0] sm:$0xff] %v2386
        %2419 = vst [vmem:[#allocation4 + $0xa8] sm:$0xff] %v2387
        %2420 = vst [vmem:[#allocation4 + $0xb0] sm:$0xff] %v2388
        %2421 = vst [vmem:[#allocation4 + $0xb8] sm:$0xff] %v2389
        %2422 = vst [vmem:[#allocation4 + $0xc0] sm:$0xff] %v2390
        %2423 = vst [vmem:[#allocation4 + $0xc8] sm:$0xff] %v2391
        %2424 = vst [vmem:[#allocation4 + $0xd0] sm:$0xff] %v2392
        %2425 = vst [vmem:[#allocation4 + $0xd8] sm:$0xff] %v2393
        %2426 = vst [vmem:[#allocation4 + $0xe0] sm:$0xff] %v2394
        %2427 = vst [vmem:[#allocation4 + $0xe8] sm:$0xff] %v2395
        %2428 = vst [vmem:[#allocation4 + $0xf0] sm:$0xff] %v2396
        %2429 = vst [vmem:[#allocation4 + $0xf8] sm:$0xff] %v2397
        %s2430 = scalar_lea.vmem [#allocation2], 48
        %v2431 = vld [vmem:[%s2430] sm:$0xff]
        %v2432 = vld [vmem:[%s2430 + $0x8] sm:$0xff]
        %v2433 = vld [vmem:[%s2430 + $0x10] sm:$0x3]
        %v2434 = vld [vmem:[%s2430 + $0x18] sm:$0xff]
        %v2435 = vld [vmem:[%s2430 + $0x20] sm:$0xff]
        %v2436 = vld [vmem:[%s2430 + $0x28] sm:$0x3]
        %v2437 = vld [vmem:[%s2430 + $0x30] sm:$0xff]
        %v2438 = vld [vmem:[%s2430 + $0x38] sm:$0xff]
        %v2439 = vld [vmem:[%s2430 + $0x40] sm:$0x3]
        %v2440 = vld [vmem:[%s2430 + $0x48] sm:$0xff]
        %v2441 = vld [vmem:[%s2430 + $0x50] sm:$0xff]
        %v2442 = vld [vmem:[%s2430 + $0x58] sm:$0x3]
        %v2443 = vld [vmem:[%s2430 + $0x60] sm:$0xff]
        %v2444 = vld [vmem:[%s2430 + $0x68] sm:$0xff]
        %v2445 = vld [vmem:[%s2430 + $0x70] sm:$0x3]
        %v2446 = vld [vmem:[%s2430 + $0x78] sm:$0xff]
        %v2447 = vld [vmem:[%s2430 + $0x80] sm:$0xff]
        %v2448 = vld [vmem:[%s2430 + $0x88] sm:$0x3]
        %v2449 = vld [vmem:[%s2430 + $0x90] sm:$0xff]
        %v2450 = vld [vmem:[%s2430 + $0x98] sm:$0xff]
        %v2451 = vld [vmem:[%s2430 + $0xa0] sm:$0x3]
        %v2452 = vld [vmem:[%s2430 + $0xa8] sm:$0xff]
        %v2453 = vld [vmem:[%s2430 + $0xb0] sm:$0xff]
        %v2454 = vld [vmem:[%s2430 + $0xb8] sm:$0x3]
        %v2455 = vld [vmem:[%s2430 + $0xc0] sm:$0xff]
        %v2456 = vld [vmem:[%s2430 + $0xc8] sm:$0xff]
        %v2457 = vld [vmem:[%s2430 + $0xd0] sm:$0x3]
        %v2458 = vld [vmem:[%s2430 + $0xd8] sm:$0xff]
        %v2459 = vld [vmem:[%s2430 + $0xe0] sm:$0xff]
        %v2460 = vld [vmem:[%s2430 + $0xe8] sm:$0x3]
        %v2461 = vld [vmem:[%s2430 + $0xf0] sm:$0xff]
        %v2462 = vld [vmem:[%s2430 + $0xf8] sm:$0xff]
        %v2463 = vld [vmem:[%s2430 + $0x100] sm:$0x3]
        %v2464 = vld [vmem:[%s2430 + $0x108] sm:$0xff]
        %v2465 = vld [vmem:[%s2430 + $0x110] sm:$0xff]
        %v2466 = vld [vmem:[%s2430 + $0x118] sm:$0x3]
        %v2467 = vld [vmem:[%s2430 + $0x120] sm:$0xff]
        %v2468 = vld [vmem:[%s2430 + $0x128] sm:$0xff]
        %v2469 = vld [vmem:[%s2430 + $0x130] sm:$0x3]
        %v2470 = vld [vmem:[%s2430 + $0x138] sm:$0xff]
        %v2471 = vld [vmem:[%s2430 + $0x140] sm:$0xff]
        %v2472 = vld [vmem:[%s2430 + $0x148] sm:$0x3]
        %v2473 = vld [vmem:[%s2430 + $0x150] sm:$0xff]
        %v2474 = vld [vmem:[%s2430 + $0x158] sm:$0xff]
        %v2475 = vld [vmem:[%s2430 + $0x160] sm:$0x3]
        %v2476 = vld [vmem:[%s2430 + $0x168] sm:$0xff]
        %v2477 = vld [vmem:[%s2430 + $0x170] sm:$0xff]
        %v2478 = vld [vmem:[%s2430 + $0x178] sm:$0x3]
        %v2527 = vrot.slane %v2431, 1
        %v2528 = vrot.slane %v2432, 1
        %v2529 = vsel %vm677, %v2527, %v2528
        %v2530 = vrot.slane %v2433, 1
        %v2531 = vsel %vm677, %v2528, %v2530
        %v2532 = vrot.slane %v2434, 1
        %v2533 = vrot.slane %v2435, 1
        %v2534 = vsel %vm677, %v2532, %v2533
        %v2535 = vrot.slane %v2436, 1
        %v2536 = vsel %vm677, %v2533, %v2535
        %v2537 = vrot.slane %v2437, 1
        %v2538 = vrot.slane %v2438, 1
        %v2539 = vsel %vm677, %v2537, %v2538
        %v2540 = vrot.slane %v2439, 1
        %v2541 = vsel %vm677, %v2538, %v2540
        %v2542 = vrot.slane %v2440, 1
        %v2543 = vrot.slane %v2441, 1
        %v2544 = vsel %vm677, %v2542, %v2543
        %v2545 = vrot.slane %v2442, 1
        %v2546 = vsel %vm677, %v2543, %v2545
        %v2547 = vrot.slane %v2443, 1
        %v2548 = vrot.slane %v2444, 1
        %v2549 = vsel %vm677, %v2547, %v2548
        %v2550 = vrot.slane %v2445, 1
        %v2551 = vsel %vm677, %v2548, %v2550
        %v2552 = vrot.slane %v2446, 1
        %v2553 = vrot.slane %v2447, 1
        %v2554 = vsel %vm677, %v2552, %v2553
        %v2555 = vrot.slane %v2448, 1
        %v2556 = vsel %vm677, %v2553, %v2555
        %v2557 = vrot.slane %v2449, 1
        %v2558 = vrot.slane %v2450, 1
        %v2559 = vsel %vm677, %v2557, %v2558
        %v2560 = vrot.slane %v2451, 1
        %v2561 = vsel %vm677, %v2558, %v2560
        %v2562 = vrot.slane %v2452, 1
        %v2563 = vrot.slane %v2453, 1
        %v2564 = vsel %vm677, %v2562, %v2563
        %v2565 = vrot.slane %v2454, 1
        %v2566 = vsel %vm677, %v2563, %v2565
        %v2567 = vrot.slane %v2455, 1
        %v2568 = vrot.slane %v2456, 1
        %v2569 = vsel %vm677, %v2567, %v2568
        %v2570 = vrot.slane %v2457, 1
        %v2571 = vsel %vm677, %v2568, %v2570
        %v2572 = vrot.slane %v2458, 1
        %v2573 = vrot.slane %v2459, 1
        %v2574 = vsel %vm677, %v2572, %v2573
        %v2575 = vrot.slane %v2460, 1
        %v2576 = vsel %vm677, %v2573, %v2575
        %v2577 = vrot.slane %v2461, 1
        %v2578 = vrot.slane %v2462, 1
        %v2579 = vsel %vm677, %v2577, %v2578
        %v2580 = vrot.slane %v2463, 1
        %v2581 = vsel %vm677, %v2578, %v2580
        %v2582 = vrot.slane %v2464, 1
        %v2583 = vrot.slane %v2465, 1
        %v2584 = vsel %vm677, %v2582, %v2583
        %v2585 = vrot.slane %v2466, 1
        %v2586 = vsel %vm677, %v2583, %v2585
        %v2587 = vrot.slane %v2467, 1
        %v2588 = vrot.slane %v2468, 1
        %v2589 = vsel %vm677, %v2587, %v2588
        %v2590 = vrot.slane %v2469, 1
        %v2591 = vsel %vm677, %v2588, %v2590
        %v2592 = vrot.slane %v2470, 1
        %v2593 = vrot.slane %v2471, 1
        %v2594 = vsel %vm677, %v2592, %v2593
        %v2595 = vrot.slane %v2472, 1
        %v2596 = vsel %vm677, %v2593, %v2595
        %v2597 = vrot.slane %v2473, 1
        %v2598 = vrot.slane %v2474, 1
        %v2599 = vsel %vm677, %v2597, %v2598
        %v2600 = vrot.slane %v2475, 1
        %v2601 = vsel %vm677, %v2598, %v2600
        %v2602 = vrot.slane %v2476, 1
        %v2603 = vrot.slane %v2477, 1
        %v2604 = vsel %vm677, %v2602, %v2603
        %v2605 = vrot.slane %v2478, 1
        %v2606 = vsel %vm677, %v2603, %v2605
        %v2639 = vrot.slane %v2431, 2
        %v2640 = vrot.slane %v2432, 2
        %v2641 = vsel %vm790, %v2639, %v2640
        %v2642 = vrot.slane %v2433, 2
        %v2643 = vsel %vm790, %v2640, %v2642
        %v2644 = vrot.slane %v2434, 2
        %v2645 = vrot.slane %v2435, 2
        %v2646 = vsel %vm790, %v2644, %v2645
        %v2647 = vrot.slane %v2436, 2
        %v2648 = vsel %vm790, %v2645, %v2647
        %v2649 = vrot.slane %v2437, 2
        %v2650 = vrot.slane %v2438, 2
        %v2651 = vsel %vm790, %v2649, %v2650
        %v2652 = vrot.slane %v2439, 2
        %v2653 = vsel %vm790, %v2650, %v2652
        %v2654 = vrot.slane %v2440, 2
        %v2655 = vrot.slane %v2441, 2
        %v2656 = vsel %vm790, %v2654, %v2655
        %v2657 = vrot.slane %v2442, 2
        %v2658 = vsel %vm790, %v2655, %v2657
        %v2659 = vrot.slane %v2443, 2
        %v2660 = vrot.slane %v2444, 2
        %v2661 = vsel %vm790, %v2659, %v2660
        %v2662 = vrot.slane %v2445, 2
        %v2663 = vsel %vm790, %v2660, %v2662
        %v2664 = vrot.slane %v2446, 2
        %v2665 = vrot.slane %v2447, 2
        %v2666 = vsel %vm790, %v2664, %v2665
        %v2667 = vrot.slane %v2448, 2
        %v2668 = vsel %vm790, %v2665, %v2667
        %v2669 = vrot.slane %v2449, 2
        %v2670 = vrot.slane %v2450, 2
        %v2671 = vsel %vm790, %v2669, %v2670
        %v2672 = vrot.slane %v2451, 2
        %v2673 = vsel %vm790, %v2670, %v2672
        %v2674 = vrot.slane %v2452, 2
        %v2675 = vrot.slane %v2453, 2
        %v2676 = vsel %vm790, %v2674, %v2675
        %v2677 = vrot.slane %v2454, 2
        %v2678 = vsel %vm790, %v2675, %v2677
        %v2679 = vrot.slane %v2455, 2
        %v2680 = vrot.slane %v2456, 2
        %v2681 = vsel %vm790, %v2679, %v2680
        %v2682 = vrot.slane %v2457, 2
        %v2683 = vsel %vm790, %v2680, %v2682
        %v2684 = vrot.slane %v2458, 2
        %v2685 = vrot.slane %v2459, 2
        %v2686 = vsel %vm790, %v2684, %v2685
        %v2687 = vrot.slane %v2460, 2
        %v2688 = vsel %vm790, %v2685, %v2687
        %v2689 = vrot.slane %v2461, 2
        %v2690 = vrot.slane %v2462, 2
        %v2691 = vsel %vm790, %v2689, %v2690
        %v2692 = vrot.slane %v2463, 2
        %v2693 = vsel %vm790, %v2690, %v2692
        %v2694 = vrot.slane %v2464, 2
        %v2695 = vrot.slane %v2465, 2
        %v2696 = vsel %vm790, %v2694, %v2695
        %v2697 = vrot.slane %v2466, 2
        %v2698 = vsel %vm790, %v2695, %v2697
        %v2699 = vrot.slane %v2467, 2
        %v2700 = vrot.slane %v2468, 2
        %v2701 = vsel %vm790, %v2699, %v2700
        %v2702 = vrot.slane %v2469, 2
        %v2703 = vsel %vm790, %v2700, %v2702
        %v2704 = vrot.slane %v2470, 2
        %v2705 = vrot.slane %v2471, 2
        %v2706 = vsel %vm790, %v2704, %v2705
        %v2707 = vrot.slane %v2472, 2
        %v2708 = vsel %vm790, %v2705, %v2707
        %v2709 = vrot.slane %v2473, 2
        %v2710 = vrot.slane %v2474, 2
        %v2711 = vsel %vm790, %v2709, %v2710
        %v2712 = vrot.slane %v2475, 2
        %v2713 = vsel %vm790, %v2710, %v2712
        %v2714 = vrot.slane %v2476, 2
        %v2715 = vrot.slane %v2477, 2
        %v2716 = vsel %vm790, %v2714, %v2715
        %v2717 = vrot.slane %v2478, 2
        %v2718 = vsel %vm790, %v2715, %v2717
        %v2751 = vpack.c.bf16 %v2432, %v2431
        %v2752 = vpack.c.bf16 %v2531, %v2529
        %v2753 = vpack.c.bf16 %v2643, %v2641
        %v2754 = vpack.c.bf16 %v2435, %v2434
        %v2755 = vpack.c.bf16 %v2536, %v2534
        %v2756 = vpack.c.bf16 %v2648, %v2646
        %v2757 = vpack.c.bf16 %v2438, %v2437
        %v2758 = vpack.c.bf16 %v2541, %v2539
        %v2759 = vpack.c.bf16 %v2653, %v2651
        %v2760 = vpack.c.bf16 %v2441, %v2440
        %v2761 = vpack.c.bf16 %v2546, %v2544
        %v2762 = vpack.c.bf16 %v2658, %v2656
        %v2763 = vpack.c.bf16 %v2444, %v2443
        %v2764 = vpack.c.bf16 %v2551, %v2549
        %v2765 = vpack.c.bf16 %v2663, %v2661
        %v2766 = vpack.c.bf16 %v2447, %v2446
        %v2767 = vpack.c.bf16 %v2556, %v2554
        %v2768 = vpack.c.bf16 %v2668, %v2666
        %v2769 = vpack.c.bf16 %v2450, %v2449
        %v2770 = vpack.c.bf16 %v2561, %v2559
        %v2771 = vpack.c.bf16 %v2673, %v2671
        %v2772 = vpack.c.bf16 %v2453, %v2452
        %v2773 = vpack.c.bf16 %v2566, %v2564
        %v2774 = vpack.c.bf16 %v2678, %v2676
        %v2775 = vpack.c.bf16 %v2456, %v2455
        %v2776 = vpack.c.bf16 %v2571, %v2569
        %v2777 = vpack.c.bf16 %v2683, %v2681
        %v2778 = vpack.c.bf16 %v2459, %v2458
        %v2779 = vpack.c.bf16 %v2576, %v2574
        %v2780 = vpack.c.bf16 %v2688, %v2686
        %v2781 = vpack.c.bf16 %v2462, %v2461
        %v2782 = vpack.c.bf16 %v2581, %v2579
        %v2783 = vpack.c.bf16 %v2693, %v2691
        %v2784 = vpack.c.bf16 %v2465, %v2464
        %v2785 = vpack.c.bf16 %v2586, %v2584
        %v2786 = vpack.c.bf16 %v2698, %v2696
        %v2787 = vpack.c.bf16 %v2468, %v2467
        %v2788 = vpack.c.bf16 %v2591, %v2589
        %v2789 = vpack.c.bf16 %v2703, %v2701
        %v2790 = vpack.c.bf16 %v2471, %v2470
        %v2791 = vpack.c.bf16 %v2596, %v2594
        %v2792 = vpack.c.bf16 %v2708, %v2706
        %v2793 = vpack.c.bf16 %v2474, %v2473
        %v2794 = vpack.c.bf16 %v2601, %v2599
        %v2795 = vpack.c.bf16 %v2713, %v2711
        %v2796 = vpack.c.bf16 %v2477, %v2476
        %v2797 = vpack.c.bf16 %v2606, %v2604
        %v2798 = vpack.c.bf16 %v2718, %v2716
        %v2799 = vld [vmem:[#allocation4] sm:$0xff]
        %v2800 = vld [vmem:[#allocation4 + $0x8] sm:$0xff]
        %v2801 = vld [vmem:[#allocation4 + $0x10] sm:$0xff]
        %v2802 = vld [vmem:[#allocation4 + $0x18] sm:$0xff]
        %v2803 = vld [vmem:[#allocation4 + $0x20] sm:$0xff]
        %v2804 = vld [vmem:[#allocation4 + $0x28] sm:$0xff]
        %v2805 = vld [vmem:[#allocation4 + $0x30] sm:$0xff]
        %v2806 = vld [vmem:[#allocation4 + $0x38] sm:$0xff]
        %v2807 = vld [vmem:[#allocation4 + $0x40] sm:$0xff]
        %v2808 = vld [vmem:[#allocation4 + $0x48] sm:$0xff]
        %v2809 = vld [vmem:[#allocation4 + $0x50] sm:$0xff]
        %v2810 = vld [vmem:[#allocation4 + $0x58] sm:$0xff]
        %v2811 = vld [vmem:[#allocation4 + $0x60] sm:$0xff]
        %v2812 = vld [vmem:[#allocation4 + $0x68] sm:$0xff]
        %v2813 = vld [vmem:[#allocation4 + $0x70] sm:$0xff]
        %v2814 = vld [vmem:[#allocation4 + $0x78] sm:$0xff]
        %v2815 = vld [vmem:[#allocation4 + $0x80] sm:$0xff]
        %v2816 = vld [vmem:[#allocation4 + $0x88] sm:$0xff]
        %v2817 = vld [vmem:[#allocation4 + $0x90] sm:$0xff]
        %v2818 = vld [vmem:[#allocation4 + $0x98] sm:$0xff]
        %v2819 = vld [vmem:[#allocation4 + $0xa0] sm:$0xff]
        %v2820 = vld [vmem:[#allocation4 + $0xa8] sm:$0xff]
        %v2821 = vld [vmem:[#allocation4 + $0xb0] sm:$0xff]
        %v2822 = vld [vmem:[#allocation4 + $0xb8] sm:$0xff]
        %v2823 = vld [vmem:[#allocation4 + $0xc0] sm:$0xff]
        %v2824 = vld [vmem:[#allocation4 + $0xc8] sm:$0xff]
        %v2825 = vld [vmem:[#allocation4 + $0xd0] sm:$0xff]
        %v2826 = vld [vmem:[#allocation4 + $0xd8] sm:$0xff]
        %v2827 = vld [vmem:[#allocation4 + $0xe0] sm:$0xff]
        %v2828 = vld [vmem:[#allocation4 + $0xe8] sm:$0xff]
        %v2829 = vld [vmem:[#allocation4 + $0xf0] sm:$0xff]
        %v2830 = vld [vmem:[#allocation4 + $0xf8] sm:$0xff]
        %s2831 = scalar_lea.vmem [#allocation9], 384
        %v2832 = vld [vmem:[%s2831] sm:$0xf]
        %v2833 = vld [vmem:[%s2831 + $0x4] sm:$0xf]
        %v2834 = vld [vmem:[%s2831 + $0x8] sm:$0xf]
        %v2835 = vld [vmem:[%s2831 + $0xc] sm:$0xf]
        %v2836 = vld [vmem:[%s2831 + $0x10] sm:$0xf]
        %v2837 = vld [vmem:[%s2831 + $0x14] sm:$0xf]
        %v2838 = vld [vmem:[%s2831 + $0x18] sm:$0xf]
        %v2839 = vld [vmem:[%s2831 + $0x1c] sm:$0xf]
        %v2840 = vld [vmem:[%s2831 + $0x20] sm:$0xf]
        %v2841 = vld [vmem:[%s2831 + $0x24] sm:$0xf]
        %v2842 = vld [vmem:[%s2831 + $0x28] sm:$0xf]
        %v2843 = vld [vmem:[%s2831 + $0x2c] sm:$0xf]
        %v2844 = vld [vmem:[%s2831 + $0x30] sm:$0xf]
        %v2845 = vld [vmem:[%s2831 + $0x34] sm:$0xf]
        %v2846 = vld [vmem:[%s2831 + $0x38] sm:$0xf]
        %v2847 = vld [vmem:[%s2831 + $0x3c] sm:$0xf]
        %v2848 = vld [vmem:[%s2831 + $0x40] sm:$0xf]
        %v2849 = vld [vmem:[%s2831 + $0x44] sm:$0xf]
        %v2850 = vld [vmem:[%s2831 + $0x48] sm:$0xf]
        %v2851 = vld [vmem:[%s2831 + $0x4c] sm:$0xf]
        %v2852 = vld [vmem:[%s2831 + $0x50] sm:$0xf]
        %v2853 = vld [vmem:[%s2831 + $0x54] sm:$0xf]
        %v2854 = vld [vmem:[%s2831 + $0x58] sm:$0xf]
        %v2855 = vld [vmem:[%s2831 + $0x5c] sm:$0xf]
        %v2856 = vld [vmem:[%s2831 + $0x60] sm:$0xf]
        %v2857 = vld [vmem:[%s2831 + $0x64] sm:$0xf]
        %v2858 = vld [vmem:[%s2831 + $0x68] sm:$0xf]
        %v2859 = vld [vmem:[%s2831 + $0x6c] sm:$0xf]
        %v2860 = vld [vmem:[%s2831 + $0x70] sm:$0xf]
        %v2861 = vld [vmem:[%s2831 + $0x74] sm:$0xf]
        %v2862 = vld [vmem:[%s2831 + $0x78] sm:$0xf]
        %v2863 = vld [vmem:[%s2831 + $0x7c] sm:$0xf]
        %v2864 = vld [vmem:[%s2831 + $0x80] sm:$0xf]
        %v2865 = vld [vmem:[%s2831 + $0x84] sm:$0xf]
        %v2866 = vld [vmem:[%s2831 + $0x88] sm:$0xf]
        %v2867 = vld [vmem:[%s2831 + $0x8c] sm:$0xf]
        %v2868 = vld [vmem:[%s2831 + $0x90] sm:$0xf]
        %v2869 = vld [vmem:[%s2831 + $0x94] sm:$0xf]
        %v2870 = vld [vmem:[%s2831 + $0x98] sm:$0xf]
        %v2871 = vld [vmem:[%s2831 + $0x9c] sm:$0xf]
        %v2872 = vld [vmem:[%s2831 + $0xa0] sm:$0xf]
        %v2873 = vld [vmem:[%s2831 + $0xa4] sm:$0xf]
        %v2874 = vld [vmem:[%s2831 + $0xa8] sm:$0xf]
        %v2875 = vld [vmem:[%s2831 + $0xac] sm:$0xf]
        %v2876 = vld [vmem:[%s2831 + $0xb0] sm:$0xf]
        %v2877 = vld [vmem:[%s2831 + $0xb4] sm:$0xf]
        %v2878 = vld [vmem:[%s2831 + $0xb8] sm:$0xf]
        %v2879 = vld [vmem:[%s2831 + $0xbc] sm:$0xf]
        %v2928 = vunpack.c.l.b16 %v2832
        %v2929 = vunpack.c.l.b16 %v2833
        %v2930 = vunpack.c.l.b16 %v2834
        %v2931 = vunpack.c.l.b16 %v2835
        %v2932 = vunpack.c.l.b16 %v2836
        %v2933 = vunpack.c.l.b16 %v2837
        %v2934 = vunpack.c.l.b16 %v2838
        %v2935 = vunpack.c.l.b16 %v2839
        %v2936 = vunpack.c.l.b16 %v2840
        %v2937 = vunpack.c.l.b16 %v2841
        %v2938 = vunpack.c.l.b16 %v2842
        %v2939 = vunpack.c.l.b16 %v2843
        %v2940 = vunpack.c.l.b16 %v2844
        %v2941 = vunpack.c.l.b16 %v2845
        %v2942 = vunpack.c.l.b16 %v2846
        %v2943 = vunpack.c.l.b16 %v2847
        %v2944 = vunpack.c.l.b16 %v2848
        %v2945 = vunpack.c.l.b16 %v2849
        %v2946 = vunpack.c.l.b16 %v2850
        %v2947 = vunpack.c.l.b16 %v2851
        %v2948 = vunpack.c.l.b16 %v2852
        %v2949 = vunpack.c.l.b16 %v2853
        %v2950 = vunpack.c.l.b16 %v2854
        %v2951 = vunpack.c.l.b16 %v2855
        %v2952 = vunpack.c.l.b16 %v2856
        %v2953 = vunpack.c.l.b16 %v2857
        %v2954 = vunpack.c.l.b16 %v2858
        %v2955 = vunpack.c.l.b16 %v2859
        %v2956 = vunpack.c.l.b16 %v2860
        %v2957 = vunpack.c.l.b16 %v2861
        %v2958 = vunpack.c.l.b16 %v2862
        %v2959 = vunpack.c.l.b16 %v2863
        %v2960 = vunpack.c.l.b16 %v2864
        %v2961 = vunpack.c.l.b16 %v2865
        %v2962 = vunpack.c.l.b16 %v2866
        %v2963 = vunpack.c.l.b16 %v2867
        %v2964 = vunpack.c.l.b16 %v2868
        %v2965 = vunpack.c.l.b16 %v2869
        %v2966 = vunpack.c.l.b16 %v2870
        %v2967 = vunpack.c.l.b16 %v2871
        %v2968 = vunpack.c.l.b16 %v2872
        %v2969 = vunpack.c.l.b16 %v2873
        %v2970 = vunpack.c.l.b16 %v2874
        %v2971 = vunpack.c.l.b16 %v2875
        %v2972 = vunpack.c.l.b16 %v2876
        %v2973 = vunpack.c.l.b16 %v2877
        %v2974 = vunpack.c.l.b16 %v2878
        %v2975 = vunpack.c.l.b16 %v2879
        %v2976 = vpack.c.b16 %v2929, %v2928
        %v2977 = vpack.c.b16 %v2931, %v2930
        %v2978 = vpack.c.b16 %v2933, %v2932
        %v2979 = vpack.c.b16 %v2935, %v2934
        %v2980 = vpack.c.b16 %v2937, %v2936
        %v2981 = vpack.c.b16 %v2939, %v2938
        %v2982 = vpack.c.b16 %v2941, %v2940
        %v2983 = vpack.c.b16 %v2943, %v2942
        %v2984 = vpack.c.b16 %v2945, %v2944
        %v2985 = vpack.c.b16 %v2947, %v2946
        %v2986 = vpack.c.b16 %v2949, %v2948
        %v2987 = vpack.c.b16 %v2951, %v2950
        %v2988 = vpack.c.b16 %v2953, %v2952
        %v2989 = vpack.c.b16 %v2955, %v2954
        %v2990 = vpack.c.b16 %v2957, %v2956
        %v2991 = vpack.c.b16 %v2959, %v2958
        %v2992 = vpack.c.b16 %v2961, %v2960
        %v2993 = vpack.c.b16 %v2963, %v2962
        %v2994 = vpack.c.b16 %v2965, %v2964
        %v2995 = vpack.c.b16 %v2967, %v2966
        %v2996 = vpack.c.b16 %v2969, %v2968
        %v2997 = vpack.c.b16 %v2971, %v2970
        %v2998 = vpack.c.b16 %v2973, %v2972
        %v2999 = vpack.c.b16 %v2975, %v2974
        %3024 = vmatpush.bf16.msra.mxu0 %v2983
        %3025 = vmatpush.bf16.msra.mxu0 %v2982
        %3026 = vmatpush.bf16.msra.mxu0 %v2981
        %3027 = vmatpush.bf16.msra.mxu0 %v2980
        %3028 = vmatpush.bf16.msra.mxu0 %v2979
        %3029 = vmatpush.bf16.msra.mxu0 %v2978
        %3030 = vmatpush.bf16.msra.mxu0 %v2977
        %3031 = vmatpush.bf16.msra.mxu0 %v2976
        %3032 = vmatmul.bf16.gmra.mxu0 %v2751
        %v3033 = vpop.f32.mrf.mxu0
        %v3034 = vadd.f32 0.0, %v3033
        %v3035 = vpop.f32.mrf.mxu0
        %v3036 = vadd.f32 0.0, %v3035
        %3037 = vmatmul.bf16.gmra.mxu0 %v2754
        %v3038 = vpop.f32.mrf.mxu0
        %v3039 = vadd.f32 0.0, %v3038
        %v3040 = vpop.f32.mrf.mxu0
        %v3041 = vadd.f32 0.0, %v3040
        %3042 = vmatmul.bf16.gmra.mxu0 %v2757
        %v3043 = vpop.f32.mrf.mxu0
        %v3044 = vadd.f32 0.0, %v3043
        %v3045 = vpop.f32.mrf.mxu0
        %v3046 = vadd.f32 0.0, %v3045
        %3047 = vmatmul.bf16.gmra.mxu0 %v2760
        %v3048 = vpop.f32.mrf.mxu0
        %v3049 = vadd.f32 0.0, %v3048
        %v3050 = vpop.f32.mrf.mxu0
        %v3051 = vadd.f32 0.0, %v3050
        %3052 = vmatmul.bf16.gmra.mxu0 %v2763
        %v3053 = vpop.f32.mrf.mxu0
        %v3054 = vadd.f32 0.0, %v3053
        %v3055 = vpop.f32.mrf.mxu0
        %v3056 = vadd.f32 0.0, %v3055
        %3057 = vmatmul.bf16.gmra.mxu0 %v2766
        %v3058 = vpop.f32.mrf.mxu0
        %v3059 = vadd.f32 0.0, %v3058
        %v3060 = vpop.f32.mrf.mxu0
        %v3061 = vadd.f32 0.0, %v3060
        %3062 = vmatmul.bf16.gmra.mxu0 %v2769
        %v3063 = vpop.f32.mrf.mxu0
        %v3064 = vadd.f32 0.0, %v3063
        %v3065 = vpop.f32.mrf.mxu0
        %v3066 = vadd.f32 0.0, %v3065
        %3067 = vmatmul.bf16.gmra.mxu0 %v2772
        %v3068 = vpop.f32.mrf.mxu0
        %v3069 = vadd.f32 0.0, %v3068
        %v3070 = vpop.f32.mrf.mxu0
        %v3071 = vadd.f32 0.0, %v3070
        %3072 = vmatmul.bf16.gmra.mxu0 %v2775
        %v3073 = vpop.f32.mrf.mxu0
        %v3074 = vadd.f32 0.0, %v3073
        %v3075 = vpop.f32.mrf.mxu0
        %v3076 = vadd.f32 0.0, %v3075
        %3077 = vmatmul.bf16.gmra.mxu0 %v2778
        %v3078 = vpop.f32.mrf.mxu0
        %v3079 = vadd.f32 0.0, %v3078
        %v3080 = vpop.f32.mrf.mxu0
        %v3081 = vadd.f32 0.0, %v3080
        %3082 = vmatmul.bf16.gmra.mxu0 %v2781
        %v3083 = vpop.f32.mrf.mxu0
        %v3084 = vadd.f32 0.0, %v3083
        %v3085 = vpop.f32.mrf.mxu0
        %v3086 = vadd.f32 0.0, %v3085
        %3087 = vmatmul.bf16.gmra.mxu0 %v2784
        %v3088 = vpop.f32.mrf.mxu0
        %v3089 = vadd.f32 0.0, %v3088
        %v3090 = vpop.f32.mrf.mxu0
        %v3091 = vadd.f32 0.0, %v3090
        %3092 = vmatmul.bf16.gmra.mxu0 %v2787
        %v3093 = vpop.f32.mrf.mxu0
        %v3094 = vadd.f32 0.0, %v3093
        %v3095 = vpop.f32.mrf.mxu0
        %v3096 = vadd.f32 0.0, %v3095
        %3097 = vmatmul.bf16.gmra.mxu0 %v2790
        %v3098 = vpop.f32.mrf.mxu0
        %v3099 = vadd.f32 0.0, %v3098
        %v3100 = vpop.f32.mrf.mxu0
        %v3101 = vadd.f32 0.0, %v3100
        %3102 = vmatmul.bf16.gmra.mxu0 %v2793
        %v3103 = vpop.f32.mrf.mxu0
        %v3104 = vadd.f32 0.0, %v3103
        %v3105 = vpop.f32.mrf.mxu0
        %v3106 = vadd.f32 0.0, %v3105
        %3107 = vmatmul.bf16.gmra.mxu0 %v2796
        %v3108 = vpop.f32.mrf.mxu0
        %v3109 = vadd.f32 0.0, %v3108
        %v3110 = vpop.f32.mrf.mxu0
        %v3111 = vadd.f32 0.0, %v3110
        %3112 = vdwg.mxu0
        %3113 = vmatpush.bf16.msra.mxu0 %v2991
        %3114 = vmatpush.bf16.msra.mxu0 %v2990
        %3115 = vmatpush.bf16.msra.mxu0 %v2989
        %3116 = vmatpush.bf16.msra.mxu0 %v2988
        %3117 = vmatpush.bf16.msra.mxu0 %v2987
        %3118 = vmatpush.bf16.msra.mxu0 %v2986
        %3119 = vmatpush.bf16.msra.mxu0 %v2985
        %3120 = vmatpush.bf16.msra.mxu0 %v2984
        %3121 = vmatmul.bf16.gmra.mxu0 %v2752
        %v3122 = vpop.f32.mrf.mxu0
        %v3123 = vadd.f32 %v3034, %v3122
        %v3124 = vpop.f32.mrf.mxu0
        %v3125 = vadd.f32 %v3036, %v3124
        %3126 = vmatmul.bf16.gmra.mxu0 %v2755
        %v3127 = vpop.f32.mrf.mxu0
        %v3128 = vadd.f32 %v3039, %v3127
        %v3129 = vpop.f32.mrf.mxu0
        %v3130 = vadd.f32 %v3041, %v3129
        %3131 = vmatmul.bf16.gmra.mxu0 %v2758
        %v3132 = vpop.f32.mrf.mxu0
        %v3133 = vadd.f32 %v3044, %v3132
        %v3134 = vpop.f32.mrf.mxu0
        %v3135 = vadd.f32 %v3046, %v3134
        %3136 = vmatmul.bf16.gmra.mxu0 %v2761
        %v3137 = vpop.f32.mrf.mxu0
        %v3138 = vadd.f32 %v3049, %v3137
        %v3139 = vpop.f32.mrf.mxu0
        %v3140 = vadd.f32 %v3051, %v3139
        %3141 = vmatmul.bf16.gmra.mxu0 %v2764
        %v3142 = vpop.f32.mrf.mxu0
        %v3143 = vadd.f32 %v3054, %v3142
        %v3144 = vpop.f32.mrf.mxu0
        %v3145 = vadd.f32 %v3056, %v3144
        %3146 = vmatmul.bf16.gmra.mxu0 %v2767
        %v3147 = vpop.f32.mrf.mxu0
        %v3148 = vadd.f32 %v3059, %v3147
        %v3149 = vpop.f32.mrf.mxu0
        %v3150 = vadd.f32 %v3061, %v3149
        %3151 = vmatmul.bf16.gmra.mxu0 %v2770
        %v3152 = vpop.f32.mrf.mxu0
        %v3153 = vadd.f32 %v3064, %v3152
        %v3154 = vpop.f32.mrf.mxu0
        %v3155 = vadd.f32 %v3066, %v3154
        %3156 = vmatmul.bf16.gmra.mxu0 %v2773
        %v3157 = vpop.f32.mrf.mxu0
        %v3158 = vadd.f32 %v3069, %v3157
        %v3159 = vpop.f32.mrf.mxu0
        %v3160 = vadd.f32 %v3071, %v3159
        %3161 = vmatmul.bf16.gmra.mxu0 %v2776
        %v3162 = vpop.f32.mrf.mxu0
        %v3163 = vadd.f32 %v3074, %v3162
        %v3164 = vpop.f32.mrf.mxu0
        %v3165 = vadd.f32 %v3076, %v3164
        %3166 = vmatmul.bf16.gmra.mxu0 %v2779
        %v3167 = vpop.f32.mrf.mxu0
        %v3168 = vadd.f32 %v3079, %v3167
        %v3169 = vpop.f32.mrf.mxu0
        %v3170 = vadd.f32 %v3081, %v3169
        %3171 = vmatmul.bf16.gmra.mxu0 %v2782
        %v3172 = vpop.f32.mrf.mxu0
        %v3173 = vadd.f32 %v3084, %v3172
        %v3174 = vpop.f32.mrf.mxu0
        %v3175 = vadd.f32 %v3086, %v3174
        %3176 = vmatmul.bf16.gmra.mxu0 %v2785
        %v3177 = vpop.f32.mrf.mxu0
        %v3178 = vadd.f32 %v3089, %v3177
        %v3179 = vpop.f32.mrf.mxu0
        %v3180 = vadd.f32 %v3091, %v3179
        %3181 = vmatmul.bf16.gmra.mxu0 %v2788
        %v3182 = vpop.f32.mrf.mxu0
        %v3183 = vadd.f32 %v3094, %v3182
        %v3184 = vpop.f32.mrf.mxu0
        %v3185 = vadd.f32 %v3096, %v3184
        %3186 = vmatmul.bf16.gmra.mxu0 %v2791
        %v3187 = vpop.f32.mrf.mxu0
        %v3188 = vadd.f32 %v3099, %v3187
        %v3189 = vpop.f32.mrf.mxu0
        %v3190 = vadd.f32 %v3101, %v3189
        %3191 = vmatmul.bf16.gmra.mxu0 %v2794
        %v3192 = vpop.f32.mrf.mxu0
        %v3193 = vadd.f32 %v3104, %v3192
        %v3194 = vpop.f32.mrf.mxu0
        %v3195 = vadd.f32 %v3106, %v3194
        %3196 = vmatmul.bf16.gmra.mxu0 %v2797
        %v3197 = vpop.f32.mrf.mxu0
        %v3198 = vadd.f32 %v3109, %v3197
        %v3199 = vpop.f32.mrf.mxu0
        %v3200 = vadd.f32 %v3111, %v3199
        %3201 = vdwg.mxu0
        %3202 = vmatpush.bf16.msra.mxu0 %v2999
        %3203 = vmatpush.bf16.msra.mxu0 %v2998
        %3204 = vmatpush.bf16.msra.mxu0 %v2997
        %3205 = vmatpush.bf16.msra.mxu0 %v2996
        %3206 = vmatpush.bf16.msra.mxu0 %v2995
        %3207 = vmatpush.bf16.msra.mxu0 %v2994
        %3208 = vmatpush.bf16.msra.mxu0 %v2993
        %3209 = vmatpush.bf16.msra.mxu0 %v2992
        %3210 = vmatmul.bf16.gmra.mxu0 %v2753
        %v3211 = vpop.f32.mrf.mxu0
        %v3212 = vadd.f32 %v3123, %v3211
        %v3213 = vpop.f32.mrf.mxu0
        %v3214 = vadd.f32 %v3125, %v3213
        %3215 = vmatmul.bf16.gmra.mxu0 %v2756
        %v3216 = vpop.f32.mrf.mxu0
        %v3217 = vadd.f32 %v3128, %v3216
        %v3218 = vpop.f32.mrf.mxu0
        %v3219 = vadd.f32 %v3130, %v3218
        %3220 = vmatmul.bf16.gmra.mxu0 %v2759
        %v3221 = vpop.f32.mrf.mxu0
        %v3222 = vadd.f32 %v3133, %v3221
        %v3223 = vpop.f32.mrf.mxu0
        %v3224 = vadd.f32 %v3135, %v3223
        %3225 = vmatmul.bf16.gmra.mxu0 %v2762
        %v3226 = vpop.f32.mrf.mxu0
        %v3227 = vadd.f32 %v3138, %v3226
        %v3228 = vpop.f32.mrf.mxu0
        %v3229 = vadd.f32 %v3140, %v3228
        %3230 = vmatmul.bf16.gmra.mxu0 %v2765
        %v3231 = vpop.f32.mrf.mxu0
        %v3232 = vadd.f32 %v3143, %v3231
        %v3233 = vpop.f32.mrf.mxu0
        %v3234 = vadd.f32 %v3145, %v3233
        %3235 = vmatmul.bf16.gmra.mxu0 %v2768
        %v3236 = vpop.f32.mrf.mxu0
        %v3237 = vadd.f32 %v3148, %v3236
        %v3238 = vpop.f32.mrf.mxu0
        %v3239 = vadd.f32 %v3150, %v3238
        %3240 = vmatmul.bf16.gmra.mxu0 %v2771
        %v3241 = vpop.f32.mrf.mxu0
        %v3242 = vadd.f32 %v3153, %v3241
        %v3243 = vpop.f32.mrf.mxu0
        %v3244 = vadd.f32 %v3155, %v3243
        %3245 = vmatmul.bf16.gmra.mxu0 %v2774
        %v3246 = vpop.f32.mrf.mxu0
        %v3247 = vadd.f32 %v3158, %v3246
        %v3248 = vpop.f32.mrf.mxu0
        %v3249 = vadd.f32 %v3160, %v3248
        %3250 = vmatmul.bf16.gmra.mxu0 %v2777
        %v3251 = vpop.f32.mrf.mxu0
        %v3252 = vadd.f32 %v3163, %v3251
        %v3253 = vpop.f32.mrf.mxu0
        %v3254 = vadd.f32 %v3165, %v3253
        %3255 = vmatmul.bf16.gmra.mxu0 %v2780
        %v3256 = vpop.f32.mrf.mxu0
        %v3257 = vadd.f32 %v3168, %v3256
        %v3258 = vpop.f32.mrf.mxu0
        %v3259 = vadd.f32 %v3170, %v3258
        %3260 = vmatmul.bf16.gmra.mxu0 %v2783
        %v3261 = vpop.f32.mrf.mxu0
        %v3262 = vadd.f32 %v3173, %v3261
        %v3263 = vpop.f32.mrf.mxu0
        %v3264 = vadd.f32 %v3175, %v3263
        %3265 = vmatmul.bf16.gmra.mxu0 %v2786
        %v3266 = vpop.f32.mrf.mxu0
        %v3267 = vadd.f32 %v3178, %v3266
        %v3268 = vpop.f32.mrf.mxu0
        %v3269 = vadd.f32 %v3180, %v3268
        %3270 = vmatmul.bf16.gmra.mxu0 %v2789
        %v3271 = vpop.f32.mrf.mxu0
        %v3272 = vadd.f32 %v3183, %v3271
        %v3273 = vpop.f32.mrf.mxu0
        %v3274 = vadd.f32 %v3185, %v3273
        %3275 = vmatmul.bf16.gmra.mxu0 %v2792
        %v3276 = vpop.f32.mrf.mxu0
        %v3277 = vadd.f32 %v3188, %v3276
        %v3278 = vpop.f32.mrf.mxu0
        %v3279 = vadd.f32 %v3190, %v3278
        %3280 = vmatmul.bf16.gmra.mxu0 %v2795
        %v3281 = vpop.f32.mrf.mxu0
        %v3282 = vadd.f32 %v3193, %v3281
        %v3283 = vpop.f32.mrf.mxu0
        %v3284 = vadd.f32 %v3195, %v3283
        %3285 = vmatmul.bf16.gmra.mxu0 %v2798
        %v3286 = vpop.f32.mrf.mxu0
        %v3287 = vadd.f32 %v3198, %v3286
        %v3288 = vpop.f32.mrf.mxu0
        %v3289 = vadd.f32 %v3200, %v3288
        %3290 = vdwg.mxu0
        %v3291 = vadd.f32 %v2799, %v3212
        %v3292 = vadd.f32 %v2800, %v3214
        %v3293 = vadd.f32 %v2801, %v3217
        %v3294 = vadd.f32 %v2802, %v3219
        %v3295 = vadd.f32 %v2803, %v3222
        %v3296 = vadd.f32 %v2804, %v3224
        %v3297 = vadd.f32 %v2805, %v3227
        %v3298 = vadd.f32 %v2806, %v3229
        %v3299 = vadd.f32 %v2807, %v3232
        %v3300 = vadd.f32 %v2808, %v3234
        %v3301 = vadd.f32 %v2809, %v3237
        %v3302 = vadd.f32 %v2810, %v3239
        %v3303 = vadd.f32 %v2811, %v3242
        %v3304 = vadd.f32 %v2812, %v3244
        %v3305 = vadd.f32 %v2813, %v3247
        %v3306 = vadd.f32 %v2814, %v3249
        %v3307 = vadd.f32 %v2815, %v3252
        %v3308 = vadd.f32 %v2816, %v3254
        %v3309 = vadd.f32 %v2817, %v3257
        %v3310 = vadd.f32 %v2818, %v3259
        %v3311 = vadd.f32 %v2819, %v3262
        %v3312 = vadd.f32 %v2820, %v3264
        %v3313 = vadd.f32 %v2821, %v3267
        %v3314 = vadd.f32 %v2822, %v3269
        %v3315 = vadd.f32 %v2823, %v3272
        %v3316 = vadd.f32 %v2824, %v3274
        %v3317 = vadd.f32 %v2825, %v3277
        %v3318 = vadd.f32 %v2826, %v3279
        %v3319 = vadd.f32 %v2827, %v3282
        %v3320 = vadd.f32 %v2828, %v3284
        %v3321 = vadd.f32 %v2829, %v3287
        %v3322 = vadd.f32 %v2830, %v3289
        %3323 = vst [vmem:[#allocation4] sm:$0xff] %v3291
        %3324 = vst [vmem:[#allocation4 + $0x8] sm:$0xff] %v3292
        %3325 = vst [vmem:[#allocation4 + $0x10] sm:$0xff] %v3293
        %3326 = vst [vmem:[#allocation4 + $0x18] sm:$0xff] %v3294
        %3327 = vst [vmem:[#allocation4 + $0x20] sm:$0xff] %v3295
        %3328 = vst [vmem:[#allocation4 + $0x28] sm:$0xff] %v3296
        %3329 = vst [vmem:[#allocation4 + $0x30] sm:$0xff] %v3297
        %3330 = vst [vmem:[#allocation4 + $0x38] sm:$0xff] %v3298
        %3331 = vst [vmem:[#allocation4 + $0x40] sm:$0xff] %v3299
        %3332 = vst [vmem:[#allocation4 + $0x48] sm:$0xff] %v3300
        %3333 = vst [vmem:[#allocation4 + $0x50] sm:$0xff] %v3301
        %3334 = vst [vmem:[#allocation4 + $0x58] sm:$0xff] %v3302
        %3335 = vst [vmem:[#allocation4 + $0x60] sm:$0xff] %v3303
        %3336 = vst [vmem:[#allocation4 + $0x68] sm:$0xff] %v3304
        %3337 = vst [vmem:[#allocation4 + $0x70] sm:$0xff] %v3305
        %3338 = vst [vmem:[#allocation4 + $0x78] sm:$0xff] %v3306
        %3339 = vst [vmem:[#allocation4 + $0x80] sm:$0xff] %v3307
        %3340 = vst [vmem:[#allocation4 + $0x88] sm:$0xff] %v3308
        %3341 = vst [vmem:[#allocation4 + $0x90] sm:$0xff] %v3309
        %3342 = vst [vmem:[#allocation4 + $0x98] sm:$0xff] %v3310
        %3343 = vst [vmem:[#allocation4 + $0xa0] sm:$0xff] %v3311
        %3344 = vst [vmem:[#allocation4 + $0xa8] sm:$0xff] %v3312
        %3345 = vst [vmem:[#allocation4 + $0xb0] sm:$0xff] %v3313
        %3346 = vst [vmem:[#allocation4 + $0xb8] sm:$0xff] %v3314
        %3347 = vst [vmem:[#allocation4 + $0xc0] sm:$0xff] %v3315
        %3348 = vst [vmem:[#allocation4 + $0xc8] sm:$0xff] %v3316
        %3349 = vst [vmem:[#allocation4 + $0xd0] sm:$0xff] %v3317
        %3350 = vst [vmem:[#allocation4 + $0xd8] sm:$0xff] %v3318
        %3351 = vst [vmem:[#allocation4 + $0xe0] sm:$0xff] %v3319
        %3352 = vst [vmem:[#allocation4 + $0xe8] sm:$0xff] %v3320
        %3353 = vst [vmem:[#allocation4 + $0xf0] sm:$0xff] %v3321
        %3354 = vst [vmem:[#allocation4 + $0xf8] sm:$0xff] %v3322
        %v3355 = vld [vmem:[#allocation4] sm:$0xff]
        %v3356 = vld [vmem:[#allocation4 + $0x8] sm:$0xff]
        %v3357 = vld [vmem:[#allocation4 + $0x10] sm:$0xff]
        %v3358 = vld [vmem:[#allocation4 + $0x18] sm:$0xff]
        %v3359 = vld [vmem:[#allocation4 + $0x20] sm:$0xff]
        %v3360 = vld [vmem:[#allocation4 + $0x28] sm:$0xff]
        %v3361 = vld [vmem:[#allocation4 + $0x30] sm:$0xff]
        %v3362 = vld [vmem:[#allocation4 + $0x38] sm:$0xff]
        %v3363 = vld [vmem:[#allocation4 + $0x40] sm:$0xff]
        %v3364 = vld [vmem:[#allocation4 + $0x48] sm:$0xff]
        %v3365 = vld [vmem:[#allocation4 + $0x50] sm:$0xff]
        %v3366 = vld [vmem:[#allocation4 + $0x58] sm:$0xff]
        %v3367 = vld [vmem:[#allocation4 + $0x60] sm:$0xff]
        %v3368 = vld [vmem:[#allocation4 + $0x68] sm:$0xff]
        %v3369 = vld [vmem:[#allocation4 + $0x70] sm:$0xff]
        %v3370 = vld [vmem:[#allocation4 + $0x78] sm:$0xff]
        %v3371 = vld [vmem:[#allocation4 + $0x80] sm:$0xff]
        %v3372 = vld [vmem:[#allocation4 + $0x88] sm:$0xff]
        %v3373 = vld [vmem:[#allocation4 + $0x90] sm:$0xff]
        %v3374 = vld [vmem:[#allocation4 + $0x98] sm:$0xff]
        %v3375 = vld [vmem:[#allocation4 + $0xa0] sm:$0xff]
        %v3376 = vld [vmem:[#allocation4 + $0xa8] sm:$0xff]
        %v3377 = vld [vmem:[#allocation4 + $0xb0] sm:$0xff]
        %v3378 = vld [vmem:[#allocation4 + $0xb8] sm:$0xff]
        %v3379 = vld [vmem:[#allocation4 + $0xc0] sm:$0xff]
        %v3380 = vld [vmem:[#allocation4 + $0xc8] sm:$0xff]
        %v3381 = vld [vmem:[#allocation4 + $0xd0] sm:$0xff]
        %v3382 = vld [vmem:[#allocation4 + $0xd8] sm:$0xff]
        %v3383 = vld [vmem:[#allocation4 + $0xe0] sm:$0xff]
        %v3384 = vld [vmem:[#allocation4 + $0xe8] sm:$0xff]
        %v3385 = vld [vmem:[#allocation4 + $0xf0] sm:$0xff]
        %v3386 = vld [vmem:[#allocation4 + $0xf8] sm:$0xff]
        %v3387 = vld [vmem:[%s2] sm:$0x1]
        %v3389 = vperm.slane %v3387, 0
        %v3391 = vmul.f32 %v3355, %v3389
        %v3392 = vmul.f32 %v3356, %v3389
        %v3393 = vmul.f32 %v3357, %v3389
        %v3394 = vmul.f32 %v3358, %v3389
        %v3395 = vmul.f32 %v3359, %v3389
        %v3396 = vmul.f32 %v3360, %v3389
        %v3397 = vmul.f32 %v3361, %v3389
        %v3398 = vmul.f32 %v3362, %v3389
        %v3399 = vmul.f32 %v3363, %v3389
        %v3400 = vmul.f32 %v3364, %v3389
        %v3401 = vmul.f32 %v3365, %v3389
        %v3402 = vmul.f32 %v3366, %v3389
        %v3403 = vmul.f32 %v3367, %v3389
        %v3404 = vmul.f32 %v3368, %v3389
        %v3405 = vmul.f32 %v3369, %v3389
        %v3406 = vmul.f32 %v3370, %v3389
        %v3407 = vmul.f32 %v3371, %v3389
        %v3408 = vmul.f32 %v3372, %v3389
        %v3409 = vmul.f32 %v3373, %v3389
        %v3410 = vmul.f32 %v3374, %v3389
        %v3411 = vmul.f32 %v3375, %v3389
        %v3412 = vmul.f32 %v3376, %v3389
        %v3413 = vmul.f32 %v3377, %v3389
        %v3414 = vmul.f32 %v3378, %v3389
        %v3415 = vmul.f32 %v3379, %v3389
        %v3416 = vmul.f32 %v3380, %v3389
        %v3417 = vmul.f32 %v3381, %v3389
        %v3418 = vmul.f32 %v3382, %v3389
        %v3419 = vmul.f32 %v3383, %v3389
        %v3420 = vmul.f32 %v3384, %v3389
        %v3421 = vmul.f32 %v3385, %v3389
        %v3422 = vmul.f32 %v3386, %v3389
        %v3423 = vld [vmem:[%s3] sm:$0x1]
        %v3425 = vperm.slane %v3423, 0
        %v3427 = vadd.f32 %v3391, %v3425
        %v3428 = vadd.f32 %v3392, %v3425
        %v3429 = vadd.f32 %v3393, %v3425
        %v3430 = vadd.f32 %v3394, %v3425
        %v3431 = vadd.f32 %v3395, %v3425
        %v3432 = vadd.f32 %v3396, %v3425
        %v3433 = vadd.f32 %v3397, %v3425
        %v3434 = vadd.f32 %v3398, %v3425
        %v3435 = vadd.f32 %v3399, %v3425
        %v3436 = vadd.f32 %v3400, %v3425
        %v3437 = vadd.f32 %v3401, %v3425
        %v3438 = vadd.f32 %v3402, %v3425
        %v3439 = vadd.f32 %v3403, %v3425
        %v3440 = vadd.f32 %v3404, %v3425
        %v3441 = vadd.f32 %v3405, %v3425
        %v3442 = vadd.f32 %v3406, %v3425
        %v3443 = vadd.f32 %v3407, %v3425
        %v3444 = vadd.f32 %v3408, %v3425
        %v3445 = vadd.f32 %v3409, %v3425
        %v3446 = vadd.f32 %v3410, %v3425
        %v3447 = vadd.f32 %v3411, %v3425
        %v3448 = vadd.f32 %v3412, %v3425
        %v3449 = vadd.f32 %v3413, %v3425
        %v3450 = vadd.f32 %v3414, %v3425
        %v3451 = vadd.f32 %v3415, %v3425
        %v3452 = vadd.f32 %v3416, %v3425
        %v3453 = vadd.f32 %v3417, %v3425
        %v3454 = vadd.f32 %v3418, %v3425
        %v3455 = vadd.f32 %v3419, %v3425
        %v3456 = vadd.f32 %v3420, %v3425
        %v3457 = vadd.f32 %v3421, %v3425
        %v3458 = vadd.f32 %v3422, %v3425
        %v3459 = vmax.f32 %v3427, 0.0
        %v3460 = vmax.f32 %v3428, 0.0
        %v3461 = vmax.f32 %v3429, 0.0
        %v3462 = vmax.f32 %v3430, 0.0
        %v3463 = vmax.f32 %v3431, 0.0
        %v3464 = vmax.f32 %v3432, 0.0
        %v3465 = vmax.f32 %v3433, 0.0
        %v3466 = vmax.f32 %v3434, 0.0
        %v3467 = vmax.f32 %v3435, 0.0
        %v3468 = vmax.f32 %v3436, 0.0
        %v3469 = vmax.f32 %v3437, 0.0
        %v3470 = vmax.f32 %v3438, 0.0
        %v3471 = vmax.f32 %v3439, 0.0
        %v3472 = vmax.f32 %v3440, 0.0
        %v3473 = vmax.f32 %v3441, 0.0
        %v3474 = vmax.f32 %v3442, 0.0
        %v3475 = vmax.f32 %v3443, 0.0
        %v3476 = vmax.f32 %v3444, 0.0
        %v3477 = vmax.f32 %v3445, 0.0
        %v3478 = vmax.f32 %v3446, 0.0
        %v3479 = vmax.f32 %v3447, 0.0
        %v3480 = vmax.f32 %v3448, 0.0
        %v3481 = vmax.f32 %v3449, 0.0
        %v3482 = vmax.f32 %v3450, 0.0
        %v3483 = vmax.f32 %v3451, 0.0
        %v3484 = vmax.f32 %v3452, 0.0
        %v3485 = vmax.f32 %v3453, 0.0
        %v3486 = vmax.f32 %v3454, 0.0
        %v3487 = vmax.f32 %v3455, 0.0
        %v3488 = vmax.f32 %v3456, 0.0
        %v3489 = vmax.f32 %v3457, 0.0
        %v3490 = vmax.f32 %v3458, 0.0
        %3491 = vst [vmem:[#allocation3] sm:$0xff] 0.0
        %3492 = vst [vmem:[#allocation3 + $0x8] sm:$0xff] 0.0
        %3493 = vst [vmem:[#allocation3 + $0x10] sm:$0x3] 0.0
        %3494 = vst [vmem:[#allocation3 + $0x18] sm:$0xff] 0.0
        %3495 = vst [vmem:[#allocation3 + $0x20] sm:$0xff] 0.0
        %3496 = vst [vmem:[#allocation3 + $0x28] sm:$0x3] 0.0
        %3497 = vst [vmem:[#allocation3 + $0x30] sm:$0xff] 0.0
        %3498 = vst [vmem:[#allocation3 + $0x38] sm:$0xff] 0.0
        %3499 = vst [vmem:[#allocation3 + $0x40] sm:$0x3] 0.0
        %3500 = vst [vmem:[#allocation3 + $0x48] sm:$0xff] 0.0
        %3501 = vst [vmem:[#allocation3 + $0x50] sm:$0xff] 0.0
        %3502 = vst [vmem:[#allocation3 + $0x58] sm:$0x3] 0.0
        %3503 = vst [vmem:[#allocation3 + $0x60] sm:$0xff] 0.0
        %3504 = vst [vmem:[#allocation3 + $0x68] sm:$0xff] 0.0
        %3505 = vst [vmem:[#allocation3 + $0x70] sm:$0x3] 0.0
        %3506 = vst [vmem:[#allocation3 + $0x78] sm:$0xff] 0.0
        %3507 = vst [vmem:[#allocation3 + $0x80] sm:$0xff] 0.0
        %3508 = vst [vmem:[#allocation3 + $0x88] sm:$0x3] 0.0
        %3509 = vst [vmem:[#allocation3 + $0x90] sm:$0xff] 0.0
        %3510 = vst [vmem:[#allocation3 + $0x98] sm:$0xff] 0.0
        %3511 = vst [vmem:[#allocation3 + $0xa0] sm:$0x3] 0.0
        %3512 = vst [vmem:[#allocation3 + $0xa8] sm:$0xff] 0.0
        %3513 = vst [vmem:[#allocation3 + $0xb0] sm:$0xff] 0.0
        %3514 = vst [vmem:[#allocation3 + $0xb8] sm:$0x3] 0.0
        %3515 = vst [vmem:[#allocation3 + $0xc0] sm:$0xff] 0.0
        %3516 = vst [vmem:[#allocation3 + $0xc8] sm:$0xff] 0.0
        %3517 = vst [vmem:[#allocation3 + $0xd0] sm:$0x3] 0.0
        %3518 = vst [vmem:[#allocation3 + $0xd8] sm:$0xff] 0.0
        %3519 = vst [vmem:[#allocation3 + $0xe0] sm:$0xff] 0.0
        %3520 = vst [vmem:[#allocation3 + $0xe8] sm:$0x3] 0.0
        %3521 = vst [vmem:[#allocation3 + $0xf0] sm:$0xff] 0.0
        %3522 = vst [vmem:[#allocation3 + $0xf8] sm:$0xff] 0.0
        %3523 = vst [vmem:[#allocation3 + $0x100] sm:$0x3] 0.0
        %3524 = vst [vmem:[#allocation3 + $0x108] sm:$0xff] 0.0
        %3525 = vst [vmem:[#allocation3 + $0x110] sm:$0xff] 0.0
        %3526 = vst [vmem:[#allocation3 + $0x118] sm:$0x3] 0.0
        %3527 = vst [vmem:[#allocation3 + $0x120] sm:$0xff] 0.0
        %3528 = vst [vmem:[#allocation3 + $0x128] sm:$0xff] 0.0
        %3529 = vst [vmem:[#allocation3 + $0x130] sm:$0x3] 0.0
        %3530 = vst [vmem:[#allocation3 + $0x138] sm:$0xff] 0.0
        %3531 = vst [vmem:[#allocation3 + $0x140] sm:$0xff] 0.0
        %3532 = vst [vmem:[#allocation3 + $0x148] sm:$0x3] 0.0
        %3533 = vst [vmem:[#allocation3 + $0x150] sm:$0xff] 0.0
        %3534 = vst [vmem:[#allocation3 + $0x158] sm:$0xff] 0.0
        %3535 = vst [vmem:[#allocation3 + $0x160] sm:$0x3] 0.0
        %3536 = vst [vmem:[#allocation3 + $0x168] sm:$0xff] 0.0
        %3537 = vst [vmem:[#allocation3 + $0x170] sm:$0xff] 0.0
        %3538 = vst [vmem:[#allocation3 + $0x178] sm:$0x3] 0.0
        %3539 = vst [vmem:[#allocation3 + $0x180] sm:$0xff] 0.0
        %3540 = vst [vmem:[#allocation3 + $0x188] sm:$0xff] 0.0
        %3541 = vst [vmem:[#allocation3 + $0x190] sm:$0x3] 0.0
        %3542 = vst [vmem:[#allocation3 + $0x198] sm:$0xff] 0.0
        %3543 = vst [vmem:[#allocation3 + $0x1a0] sm:$0xff] 0.0
        %3544 = vst [vmem:[#allocation3 + $0x1a8] sm:$0x3] 0.0
        %s3545 = scalar_lea.vmem [#allocation3], 24
        %3546 = vst [vmem:[%s3545 + $0x1] sm:$0xff] %v3459
        %3547 = vst [vmem:[%s3545 + $0x9] sm:$0xff] %v3460
        %3548 = vst [vmem:[%s3545 + $0x19] sm:$0xff] %v3461
        %3549 = vst [vmem:[%s3545 + $0x21] sm:$0xff] %v3462
        %3550 = vst [vmem:[%s3545 + $0x31] sm:$0xff] %v3463
        %3551 = vst [vmem:[%s3545 + $0x39] sm:$0xff] %v3464
        %3552 = vst [vmem:[%s3545 + $0x49] sm:$0xff] %v3465
        %3553 = vst [vmem:[%s3545 + $0x51] sm:$0xff] %v3466
        %3554 = vst [vmem:[%s3545 + $0x61] sm:$0xff] %v3467
        %3555 = vst [vmem:[%s3545 + $0x69] sm:$0xff] %v3468
        %3556 = vst [vmem:[%s3545 + $0x79] sm:$0xff] %v3469
        %3557 = vst [vmem:[%s3545 + $0x81] sm:$0xff] %v3470
        %3558 = vst [vmem:[%s3545 + $0x91] sm:$0xff] %v3471
        %3559 = vst [vmem:[%s3545 + $0x99] sm:$0xff] %v3472
        %3560 = vst [vmem:[%s3545 + $0xa9] sm:$0xff] %v3473
        %3561 = vst [vmem:[%s3545 + $0xb1] sm:$0xff] %v3474
        %3562 = vst [vmem:[%s3545 + $0xc1] sm:$0xff] %v3475
        %3563 = vst [vmem:[%s3545 + $0xc9] sm:$0xff] %v3476
        %3564 = vst [vmem:[%s3545 + $0xd9] sm:$0xff] %v3477
        %3565 = vst [vmem:[%s3545 + $0xe1] sm:$0xff] %v3478
        %3566 = vst [vmem:[%s3545 + $0xf1] sm:$0xff] %v3479
        %3567 = vst [vmem:[%s3545 + $0xf9] sm:$0xff] %v3480
        %3568 = vst [vmem:[%s3545 + $0x109] sm:$0xff] %v3481
        %3569 = vst [vmem:[%s3545 + $0x111] sm:$0xff] %v3482
        %3570 = vst [vmem:[%s3545 + $0x121] sm:$0xff] %v3483
        %3571 = vst [vmem:[%s3545 + $0x129] sm:$0xff] %v3484
        %3572 = vst [vmem:[%s3545 + $0x139] sm:$0xff] %v3485
        %3573 = vst [vmem:[%s3545 + $0x141] sm:$0xff] %v3486
        %3574 = vst [vmem:[%s3545 + $0x151] sm:$0xff] %v3487
        %3575 = vst [vmem:[%s3545 + $0x159] sm:$0xff] %v3488
        %3576 = vst [vmem:[%s3545 + $0x169] sm:$0xff] %v3489
        %3577 = vst [vmem:[%s3545 + $0x171] sm:$0xff] %v3490
        %3578 = vst [vmem:[#allocation5] sm:$0xff] 0.0
        %3579 = vst [vmem:[#allocation5 + $0x8] sm:$0xff] 0.0
        %3580 = vst [vmem:[#allocation5 + $0x10] sm:$0xff] 0.0
        %3581 = vst [vmem:[#allocation5 + $0x18] sm:$0xff] 0.0
        %3582 = vst [vmem:[#allocation5 + $0x20] sm:$0xff] 0.0
        %3583 = vst [vmem:[#allocation5 + $0x28] sm:$0xff] 0.0
        %3584 = vst [vmem:[#allocation5 + $0x30] sm:$0xff] 0.0
        %3585 = vst [vmem:[#allocation5 + $0x38] sm:$0xff] 0.0
        %3586 = vst [vmem:[#allocation5 + $0x40] sm:$0xff] 0.0
        %3587 = vst [vmem:[#allocation5 + $0x48] sm:$0xff] 0.0
        %3588 = vst [vmem:[#allocation5 + $0x50] sm:$0xff] 0.0
        %3589 = vst [vmem:[#allocation5 + $0x58] sm:$0xff] 0.0
        %3590 = vst [vmem:[#allocation5 + $0x60] sm:$0xff] 0.0
        %3591 = vst [vmem:[#allocation5 + $0x68] sm:$0xff] 0.0
        %3592 = vst [vmem:[#allocation5 + $0x70] sm:$0xff] 0.0
        %3593 = vst [vmem:[#allocation5 + $0x78] sm:$0xff] 0.0
        %3594 = vst [vmem:[#allocation5 + $0x80] sm:$0xff] 0.0
        %3595 = vst [vmem:[#allocation5 + $0x88] sm:$0xff] 0.0
        %3596 = vst [vmem:[#allocation5 + $0x90] sm:$0xff] 0.0
        %3597 = vst [vmem:[#allocation5 + $0x98] sm:$0xff] 0.0
        %3598 = vst [vmem:[#allocation5 + $0xa0] sm:$0xff] 0.0
        %3599 = vst [vmem:[#allocation5 + $0xa8] sm:$0xff] 0.0
        %3600 = vst [vmem:[#allocation5 + $0xb0] sm:$0xff] 0.0
        %3601 = vst [vmem:[#allocation5 + $0xb8] sm:$0xff] 0.0
        %3602 = vst [vmem:[#allocation5 + $0xc0] sm:$0xff] 0.0
        %3603 = vst [vmem:[#allocation5 + $0xc8] sm:$0xff] 0.0
        %3604 = vst [vmem:[#allocation5 + $0xd0] sm:$0xff] 0.0
        %3605 = vst [vmem:[#allocation5 + $0xd8] sm:$0xff] 0.0
        %3606 = vst [vmem:[#allocation5 + $0xe0] sm:$0xff] 0.0
        %3607 = vst [vmem:[#allocation5 + $0xe8] sm:$0xff] 0.0
        %3608 = vst [vmem:[#allocation5 + $0xf0] sm:$0xff] 0.0
        %3609 = vst [vmem:[#allocation5 + $0xf8] sm:$0xff] 0.0
        %v3610 = vld [vmem:[#allocation2] sm:$0xff]
        %v3611 = vld [vmem:[#allocation2 + $0x8] sm:$0xff]
        %v3612 = vld [vmem:[#allocation2 + $0x10] sm:$0x3]
        %v3613 = vld [vmem:[#allocation2 + $0x18] sm:$0xff]
        %v3614 = vld [vmem:[#allocation2 + $0x20] sm:$0xff]
        %v3615 = vld [vmem:[#allocation2 + $0x28] sm:$0x3]
        %v3616 = vld [vmem:[#allocation2 + $0x30] sm:$0xff]
        %v3617 = vld [vmem:[#allocation2 + $0x38] sm:$0xff]
        %v3618 = vld [vmem:[#allocation2 + $0x40] sm:$0x3]
        %v3619 = vld [vmem:[#allocation2 + $0x48] sm:$0xff]
        %v3620 = vld [vmem:[#allocation2 + $0x50] sm:$0xff]
        %v3621 = vld [vmem:[#allocation2 + $0x58] sm:$0x3]
        %v3622 = vld [vmem:[#allocation2 + $0x60] sm:$0xff]
        %v3623 = vld [vmem:[#allocation2 + $0x68] sm:$0xff]
        %v3624 = vld [vmem:[#allocation2 + $0x70] sm:$0x3]
        %v3625 = vld [vmem:[#allocation2 + $0x78] sm:$0xff]
        %v3626 = vld [vmem:[#allocation2 + $0x80] sm:$0xff]
        %v3627 = vld [vmem:[#allocation2 + $0x88] sm:$0x3]
        %v3628 = vld [vmem:[#allocation2 + $0x90] sm:$0xff]
        %v3629 = vld [vmem:[#allocation2 + $0x98] sm:$0xff]
        %v3630 = vld [vmem:[#allocation2 + $0xa0] sm:$0x3]
        %v3631 = vld [vmem:[#allocation2 + $0xa8] sm:$0xff]
        %v3632 = vld [vmem:[#allocation2 + $0xb0] sm:$0xff]
        %v3633 = vld [vmem:[#allocation2 + $0xb8] sm:$0x3]
        %v3634 = vld [vmem:[#allocation2 + $0xc0] sm:$0xff]
        %v3635 = vld [vmem:[#allocation2 + $0xc8] sm:$0xff]
        %v3636 = vld [vmem:[#allocation2 + $0xd0] sm:$0x3]
        %v3637 = vld [vmem:[#allocation2 + $0xd8] sm:$0xff]
        %v3638 = vld [vmem:[#allocation2 + $0xe0] sm:$0xff]
        %v3639 = vld [vmem:[#allocation2 + $0xe8] sm:$0x3]
        %v3640 = vld [vmem:[#allocation2 + $0xf0] sm:$0xff]
        %v3641 = vld [vmem:[#allocation2 + $0xf8] sm:$0xff]
        %v3642 = vld [vmem:[#allocation2 + $0x100] sm:$0x3]
        %v3643 = vld [vmem:[#allocation2 + $0x108] sm:$0xff]
        %v3644 = vld [vmem:[#allocation2 + $0x110] sm:$0xff]
        %v3645 = vld [vmem:[#allocation2 + $0x118] sm:$0x3]
        %v3646 = vld [vmem:[#allocation2 + $0x120] sm:$0xff]
        %v3647 = vld [vmem:[#allocation2 + $0x128] sm:$0xff]
        %v3648 = vld [vmem:[#allocation2 + $0x130] sm:$0x3]
        %v3649 = vld [vmem:[#allocation2 + $0x138] sm:$0xff]
        %v3650 = vld [vmem:[#allocation2 + $0x140] sm:$0xff]
        %v3651 = vld [vmem:[#allocation2 + $0x148] sm:$0x3]
        %v3652 = vld [vmem:[#allocation2 + $0x150] sm:$0xff]
        %v3653 = vld [vmem:[#allocation2 + $0x158] sm:$0xff]
        %v3654 = vld [vmem:[#allocation2 + $0x160] sm:$0x3]
        %v3655 = vld [vmem:[#allocation2 + $0x168] sm:$0xff]
        %v3656 = vld [vmem:[#allocation2 + $0x170] sm:$0xff]
        %v3657 = vld [vmem:[#allocation2 + $0x178] sm:$0x3]
        %v3706 = vrot.slane %v3610, 1
        %v3707 = vrot.slane %v3611, 1
        %v3708 = vsel %vm677, %v3706, %v3707
        %v3709 = vrot.slane %v3612, 1
        %v3710 = vsel %vm677, %v3707, %v3709
        %v3711 = vrot.slane %v3613, 1
        %v3712 = vrot.slane %v3614, 1
        %v3713 = vsel %vm677, %v3711, %v3712
        %v3714 = vrot.slane %v3615, 1
        %v3715 = vsel %vm677, %v3712, %v3714
        %v3716 = vrot.slane %v3616, 1
        %v3717 = vrot.slane %v3617, 1
        %v3718 = vsel %vm677, %v3716, %v3717
        %v3719 = vrot.slane %v3618, 1
        %v3720 = vsel %vm677, %v3717, %v3719
        %v3721 = vrot.slane %v3619, 1
        %v3722 = vrot.slane %v3620, 1
        %v3723 = vsel %vm677, %v3721, %v3722
        %v3724 = vrot.slane %v3621, 1
        %v3725 = vsel %vm677, %v3722, %v3724
        %v3726 = vrot.slane %v3622, 1
        %v3727 = vrot.slane %v3623, 1
        %v3728 = vsel %vm677, %v3726, %v3727
        %v3729 = vrot.slane %v3624, 1
        %v3730 = vsel %vm677, %v3727, %v3729
        %v3731 = vrot.slane %v3625, 1
        %v3732 = vrot.slane %v3626, 1
        %v3733 = vsel %vm677, %v3731, %v3732
        %v3734 = vrot.slane %v3627, 1
        %v3735 = vsel %vm677, %v3732, %v3734
        %v3736 = vrot.slane %v3628, 1
        %v3737 = vrot.slane %v3629, 1
        %v3738 = vsel %vm677, %v3736, %v3737
        %v3739 = vrot.slane %v3630, 1
        %v3740 = vsel %vm677, %v3737, %v3739
        %v3741 = vrot.slane %v3631, 1
        %v3742 = vrot.slane %v3632, 1
        %v3743 = vsel %vm677, %v3741, %v3742
        %v3744 = vrot.slane %v3633, 1
        %v3745 = vsel %vm677, %v3742, %v3744
        %v3746 = vrot.slane %v3634, 1
        %v3747 = vrot.slane %v3635, 1
        %v3748 = vsel %vm677, %v3746, %v3747
        %v3749 = vrot.slane %v3636, 1
        %v3750 = vsel %vm677, %v3747, %v3749
        %v3751 = vrot.slane %v3637, 1
        %v3752 = vrot.slane %v3638, 1
        %v3753 = vsel %vm677, %v3751, %v3752
        %v3754 = vrot.slane %v3639, 1
        %v3755 = vsel %vm677, %v3752, %v3754
        %v3756 = vrot.slane %v3640, 1
        %v3757 = vrot.slane %v3641, 1
        %v3758 = vsel %vm677, %v3756, %v3757
        %v3759 = vrot.slane %v3642, 1
        %v3760 = vsel %vm677, %v3757, %v3759
        %v3761 = vrot.slane %v3643, 1
        %v3762 = vrot.slane %v3644, 1
        %v3763 = vsel %vm677, %v3761, %v3762
        %v3764 = vrot.slane %v3645, 1
        %v3765 = vsel %vm677, %v3762, %v3764
        %v3766 = vrot.slane %v3646, 1
        %v3767 = vrot.slane %v3647, 1
        %v3768 = vsel %vm677, %v3766, %v3767
        %v3769 = vrot.slane %v3648, 1
        %v3770 = vsel %vm677, %v3767, %v3769
        %v3771 = vrot.slane %v3649, 1
        %v3772 = vrot.slane %v3650, 1
        %v3773 = vsel %vm677, %v3771, %v3772
        %v3774 = vrot.slane %v3651, 1
        %v3775 = vsel %vm677, %v3772, %v3774
        %v3776 = vrot.slane %v3652, 1
        %v3777 = vrot.slane %v3653, 1
        %v3778 = vsel %vm677, %v3776, %v3777
        %v3779 = vrot.slane %v3654, 1
        %v3780 = vsel %vm677, %v3777, %v3779
        %v3781 = vrot.slane %v3655, 1
        %v3782 = vrot.slane %v3656, 1
        %v3783 = vsel %vm677, %v3781, %v3782
        %v3784 = vrot.slane %v3657, 1
        %v3785 = vsel %vm677, %v3782, %v3784
        %v3818 = vrot.slane %v3610, 2
        %v3819 = vrot.slane %v3611, 2
        %v3820 = vsel %vm790, %v3818, %v3819
        %v3821 = vrot.slane %v3612, 2
        %v3822 = vsel %vm790, %v3819, %v3821
        %v3823 = vrot.slane %v3613, 2
        %v3824 = vrot.slane %v3614, 2
        %v3825 = vsel %vm790, %v3823, %v3824
        %v3826 = vrot.slane %v3615, 2
        %v3827 = vsel %vm790, %v3824, %v3826
        %v3828 = vrot.slane %v3616, 2
        %v3829 = vrot.slane %v3617, 2
        %v3830 = vsel %vm790, %v3828, %v3829
        %v3831 = vrot.slane %v3618, 2
        %v3832 = vsel %vm790, %v3829, %v3831
        %v3833 = vrot.slane %v3619, 2
        %v3834 = vrot.slane %v3620, 2
        %v3835 = vsel %vm790, %v3833, %v3834
        %v3836 = vrot.slane %v3621, 2
        %v3837 = vsel %vm790, %v3834, %v3836
        %v3838 = vrot.slane %v3622, 2
        %v3839 = vrot.slane %v3623, 2
        %v3840 = vsel %vm790, %v3838, %v3839
        %v3841 = vrot.slane %v3624, 2
        %v3842 = vsel %vm790, %v3839, %v3841
        %v3843 = vrot.slane %v3625, 2
        %v3844 = vrot.slane %v3626, 2
        %v3845 = vsel %vm790, %v3843, %v3844
        %v3846 = vrot.slane %v3627, 2
        %v3847 = vsel %vm790, %v3844, %v3846
        %v3848 = vrot.slane %v3628, 2
        %v3849 = vrot.slane %v3629, 2
        %v3850 = vsel %vm790, %v3848, %v3849
        %v3851 = vrot.slane %v3630, 2
        %v3852 = vsel %vm790, %v3849, %v3851
        %v3853 = vrot.slane %v3631, 2
        %v3854 = vrot.slane %v3632, 2
        %v3855 = vsel %vm790, %v3853, %v3854
        %v3856 = vrot.slane %v3633, 2
        %v3857 = vsel %vm790, %v3854, %v3856
        %v3858 = vrot.slane %v3634, 2
        %v3859 = vrot.slane %v3635, 2
        %v3860 = vsel %vm790, %v3858, %v3859
        %v3861 = vrot.slane %v3636, 2
        %v3862 = vsel %vm790, %v3859, %v3861
        %v3863 = vrot.slane %v3637, 2
        %v3864 = vrot.slane %v3638, 2
        %v3865 = vsel %vm790, %v3863, %v3864
        %v3866 = vrot.slane %v3639, 2
        %v3867 = vsel %vm790, %v3864, %v3866
        %v3868 = vrot.slane %v3640, 2
        %v3869 = vrot.slane %v3641, 2
        %v3870 = vsel %vm790, %v3868, %v3869
        %v3871 = vrot.slane %v3642, 2
        %v3872 = vsel %vm790, %v3869, %v3871
        %v3873 = vrot.slane %v3643, 2
        %v3874 = vrot.slane %v3644, 2
        %v3875 = vsel %vm790, %v3873, %v3874
        %v3876 = vrot.slane %v3645, 2
        %v3877 = vsel %vm790, %v3874, %v3876
        %v3878 = vrot.slane %v3646, 2
        %v3879 = vrot.slane %v3647, 2
        %v3880 = vsel %vm790, %v3878, %v3879
        %v3881 = vrot.slane %v3648, 2
        %v3882 = vsel %vm790, %v3879, %v3881
        %v3883 = vrot.slane %v3649, 2
        %v3884 = vrot.slane %v3650, 2
        %v3885 = vsel %vm790, %v3883, %v3884
        %v3886 = vrot.slane %v3651, 2
        %v3887 = vsel %vm790, %v3884, %v3886
        %v3888 = vrot.slane %v3652, 2
        %v3889 = vrot.slane %v3653, 2
        %v3890 = vsel %vm790, %v3888, %v3889
        %v3891 = vrot.slane %v3654, 2
        %v3892 = vsel %vm790, %v3889, %v3891
        %v3893 = vrot.slane %v3655, 2
        %v3894 = vrot.slane %v3656, 2
        %v3895 = vsel %vm790, %v3893, %v3894
        %v3896 = vrot.slane %v3657, 2
        %v3897 = vsel %vm790, %v3894, %v3896
        %v3930 = vpack.c.bf16 %v3611, %v3610
        %v3931 = vpack.c.bf16 %v3710, %v3708
        %v3932 = vpack.c.bf16 %v3822, %v3820
        %v3933 = vpack.c.bf16 %v3614, %v3613
        %v3934 = vpack.c.bf16 %v3715, %v3713
        %v3935 = vpack.c.bf16 %v3827, %v3825
        %v3936 = vpack.c.bf16 %v3617, %v3616
        %v3937 = vpack.c.bf16 %v3720, %v3718
        %v3938 = vpack.c.bf16 %v3832, %v3830
        %v3939 = vpack.c.bf16 %v3620, %v3619
        %v3940 = vpack.c.bf16 %v3725, %v3723
        %v3941 = vpack.c.bf16 %v3837, %v3835
        %v3942 = vpack.c.bf16 %v3623, %v3622
        %v3943 = vpack.c.bf16 %v3730, %v3728
        %v3944 = vpack.c.bf16 %v3842, %v3840
        %v3945 = vpack.c.bf16 %v3626, %v3625
        %v3946 = vpack.c.bf16 %v3735, %v3733
        %v3947 = vpack.c.bf16 %v3847, %v3845
        %v3948 = vpack.c.bf16 %v3629, %v3628
        %v3949 = vpack.c.bf16 %v3740, %v3738
        %v3950 = vpack.c.bf16 %v3852, %v3850
        %v3951 = vpack.c.bf16 %v3632, %v3631
        %v3952 = vpack.c.bf16 %v3745, %v3743
        %v3953 = vpack.c.bf16 %v3857, %v3855
        %v3954 = vpack.c.bf16 %v3635, %v3634
        %v3955 = vpack.c.bf16 %v3750, %v3748
        %v3956 = vpack.c.bf16 %v3862, %v3860
        %v3957 = vpack.c.bf16 %v3638, %v3637
        %v3958 = vpack.c.bf16 %v3755, %v3753
        %v3959 = vpack.c.bf16 %v3867, %v3865
        %v3960 = vpack.c.bf16 %v3641, %v3640
        %v3961 = vpack.c.bf16 %v3760, %v3758
        %v3962 = vpack.c.bf16 %v3872, %v3870
        %v3963 = vpack.c.bf16 %v3644, %v3643
        %v3964 = vpack.c.bf16 %v3765, %v3763
        %v3965 = vpack.c.bf16 %v3877, %v3875
        %v3966 = vpack.c.bf16 %v3647, %v3646
        %v3967 = vpack.c.bf16 %v3770, %v3768
        %v3968 = vpack.c.bf16 %v3882, %v3880
        %v3969 = vpack.c.bf16 %v3650, %v3649
        %v3970 = vpack.c.bf16 %v3775, %v3773
        %v3971 = vpack.c.bf16 %v3887, %v3885
        %v3972 = vpack.c.bf16 %v3653, %v3652
        %v3973 = vpack.c.bf16 %v3780, %v3778
        %v3974 = vpack.c.bf16 %v3892, %v3890
        %v3975 = vpack.c.bf16 %v3656, %v3655
        %v3976 = vpack.c.bf16 %v3785, %v3783
        %v3977 = vpack.c.bf16 %v3897, %v3895
        %v3978 = vld [vmem:[#allocation5] sm:$0xff]
        %v3979 = vld [vmem:[#allocation5 + $0x8] sm:$0xff]
        %v3980 = vld [vmem:[#allocation5 + $0x10] sm:$0xff]
        %v3981 = vld [vmem:[#allocation5 + $0x18] sm:$0xff]
        %v3982 = vld [vmem:[#allocation5 + $0x20] sm:$0xff]
        %v3983 = vld [vmem:[#allocation5 + $0x28] sm:$0xff]
        %v3984 = vld [vmem:[#allocation5 + $0x30] sm:$0xff]
        %v3985 = vld [vmem:[#allocation5 + $0x38] sm:$0xff]
        %v3986 = vld [vmem:[#allocation5 + $0x40] sm:$0xff]
        %v3987 = vld [vmem:[#allocation5 + $0x48] sm:$0xff]
        %v3988 = vld [vmem:[#allocation5 + $0x50] sm:$0xff]
        %v3989 = vld [vmem:[#allocation5 + $0x58] sm:$0xff]
        %v3990 = vld [vmem:[#allocation5 + $0x60] sm:$0xff]
        %v3991 = vld [vmem:[#allocation5 + $0x68] sm:$0xff]
        %v3992 = vld [vmem:[#allocation5 + $0x70] sm:$0xff]
        %v3993 = vld [vmem:[#allocation5 + $0x78] sm:$0xff]
        %v3994 = vld [vmem:[#allocation5 + $0x80] sm:$0xff]
        %v3995 = vld [vmem:[#allocation5 + $0x88] sm:$0xff]
        %v3996 = vld [vmem:[#allocation5 + $0x90] sm:$0xff]
        %v3997 = vld [vmem:[#allocation5 + $0x98] sm:$0xff]
        %v3998 = vld [vmem:[#allocation5 + $0xa0] sm:$0xff]
        %v3999 = vld [vmem:[#allocation5 + $0xa8] sm:$0xff]
        %v4000 = vld [vmem:[#allocation5 + $0xb0] sm:$0xff]
        %v4001 = vld [vmem:[#allocation5 + $0xb8] sm:$0xff]
        %v4002 = vld [vmem:[#allocation5 + $0xc0] sm:$0xff]
        %v4003 = vld [vmem:[#allocation5 + $0xc8] sm:$0xff]
        %v4004 = vld [vmem:[#allocation5 + $0xd0] sm:$0xff]
        %v4005 = vld [vmem:[#allocation5 + $0xd8] sm:$0xff]
        %v4006 = vld [vmem:[#allocation5 + $0xe0] sm:$0xff]
        %v4007 = vld [vmem:[#allocation5 + $0xe8] sm:$0xff]
        %v4008 = vld [vmem:[#allocation5 + $0xf0] sm:$0xff]
        %v4009 = vld [vmem:[#allocation5 + $0xf8] sm:$0xff]
        %v4010 = vld [vmem:[#allocation12] sm:$0xf]
        %v4011 = vld [vmem:[#allocation12 + $0x4] sm:$0xf]
        %v4012 = vld [vmem:[#allocation12 + $0x8] sm:$0xf]
        %v4013 = vld [vmem:[#allocation12 + $0xc] sm:$0xf]
        %v4014 = vld [vmem:[#allocation12 + $0x10] sm:$0xf]
        %v4015 = vld [vmem:[#allocation12 + $0x14] sm:$0xf]
        %v4016 = vld [vmem:[#allocation12 + $0x18] sm:$0xf]
        %v4017 = vld [vmem:[#allocation12 + $0x1c] sm:$0xf]
        %v4018 = vld [vmem:[#allocation12 + $0x20] sm:$0xf]
        %v4019 = vld [vmem:[#allocation12 + $0x24] sm:$0xf]
        %v4020 = vld [vmem:[#allocation12 + $0x28] sm:$0xf]
        %v4021 = vld [vmem:[#allocation12 + $0x2c] sm:$0xf]
        %v4022 = vld [vmem:[#allocation12 + $0x30] sm:$0xf]
        %v4023 = vld [vmem:[#allocation12 + $0x34] sm:$0xf]
        %v4024 = vld [vmem:[#allocation12 + $0x38] sm:$0xf]
        %v4025 = vld [vmem:[#allocation12 + $0x3c] sm:$0xf]
        %v4026 = vld [vmem:[#allocation12 + $0x40] sm:$0xf]
        %v4027 = vld [vmem:[#allocation12 + $0x44] sm:$0xf]
        %v4028 = vld [vmem:[#allocation12 + $0x48] sm:$0xf]
        %v4029 = vld [vmem:[#allocation12 + $0x4c] sm:$0xf]
        %v4030 = vld [vmem:[#allocation12 + $0x50] sm:$0xf]
        %v4031 = vld [vmem:[#allocation12 + $0x54] sm:$0xf]
        %v4032 = vld [vmem:[#allocation12 + $0x58] sm:$0xf]
        %v4033 = vld [vmem:[#allocation12 + $0x5c] sm:$0xf]
        %v4034 = vld [vmem:[#allocation12 + $0x60] sm:$0xf]
        %v4035 = vld [vmem:[#allocation12 + $0x64] sm:$0xf]
        %v4036 = vld [vmem:[#allocation12 + $0x68] sm:$0xf]
        %v4037 = vld [vmem:[#allocation12 + $0x6c] sm:$0xf]
        %v4038 = vld [vmem:[#allocation12 + $0x70] sm:$0xf]
        %v4039 = vld [vmem:[#allocation12 + $0x74] sm:$0xf]
        %v4040 = vld [vmem:[#allocation12 + $0x78] sm:$0xf]
        %v4041 = vld [vmem:[#allocation12 + $0x7c] sm:$0xf]
        %v4042 = vld [vmem:[#allocation12 + $0x80] sm:$0xf]
        %v4043 = vld [vmem:[#allocation12 + $0x84] sm:$0xf]
        %v4044 = vld [vmem:[#allocation12 + $0x88] sm:$0xf]
        %v4045 = vld [vmem:[#allocation12 + $0x8c] sm:$0xf]
        %v4046 = vld [vmem:[#allocation12 + $0x90] sm:$0xf]
        %v4047 = vld [vmem:[#allocation12 + $0x94] sm:$0xf]
        %v4048 = vld [vmem:[#allocation12 + $0x98] sm:$0xf]
        %v4049 = vld [vmem:[#allocation12 + $0x9c] sm:$0xf]
        %v4050 = vld [vmem:[#allocation12 + $0xa0] sm:$0xf]
        %v4051 = vld [vmem:[#allocation12 + $0xa4] sm:$0xf]
        %v4052 = vld [vmem:[#allocation12 + $0xa8] sm:$0xf]
        %v4053 = vld [vmem:[#allocation12 + $0xac] sm:$0xf]
        %v4054 = vld [vmem:[#allocation12 + $0xb0] sm:$0xf]
        %v4055 = vld [vmem:[#allocation12 + $0xb4] sm:$0xf]
        %v4056 = vld [vmem:[#allocation12 + $0xb8] sm:$0xf]
        %v4057 = vld [vmem:[#allocation12 + $0xbc] sm:$0xf]
        %v4106 = vunpack.c.l.b16 %v4010
        %v4107 = vunpack.c.l.b16 %v4011
        %v4108 = vunpack.c.l.b16 %v4012
        %v4109 = vunpack.c.l.b16 %v4013
        %v4110 = vunpack.c.l.b16 %v4014
        %v4111 = vunpack.c.l.b16 %v4015
        %v4112 = vunpack.c.l.b16 %v4016
        %v4113 = vunpack.c.l.b16 %v4017
        %v4114 = vunpack.c.l.b16 %v4018
        %v4115 = vunpack.c.l.b16 %v4019
        %v4116 = vunpack.c.l.b16 %v4020
        %v4117 = vunpack.c.l.b16 %v4021
        %v4118 = vunpack.c.l.b16 %v4022
        %v4119 = vunpack.c.l.b16 %v4023
        %v4120 = vunpack.c.l.b16 %v4024
        %v4121 = vunpack.c.l.b16 %v4025
        %v4122 = vunpack.c.l.b16 %v4026
        %v4123 = vunpack.c.l.b16 %v4027
        %v4124 = vunpack.c.l.b16 %v4028
        %v4125 = vunpack.c.l.b16 %v4029
        %v4126 = vunpack.c.l.b16 %v4030
        %v4127 = vunpack.c.l.b16 %v4031
        %v4128 = vunpack.c.l.b16 %v4032
        %v4129 = vunpack.c.l.b16 %v4033
        %v4130 = vunpack.c.l.b16 %v4034
        %v4131 = vunpack.c.l.b16 %v4035
        %v4132 = vunpack.c.l.b16 %v4036
        %v4133 = vunpack.c.l.b16 %v4037
        %v4134 = vunpack.c.l.b16 %v4038
        %v4135 = vunpack.c.l.b16 %v4039
        %v4136 = vunpack.c.l.b16 %v4040
        %v4137 = vunpack.c.l.b16 %v4041
        %v4138 = vunpack.c.l.b16 %v4042
        %v4139 = vunpack.c.l.b16 %v4043
        %v4140 = vunpack.c.l.b16 %v4044
        %v4141 = vunpack.c.l.b16 %v4045
        %v4142 = vunpack.c.l.b16 %v4046
        %v4143 = vunpack.c.l.b16 %v4047
        %v4144 = vunpack.c.l.b16 %v4048
        %v4145 = vunpack.c.l.b16 %v4049
        %v4146 = vunpack.c.l.b16 %v4050
        %v4147 = vunpack.c.l.b16 %v4051
        %v4148 = vunpack.c.l.b16 %v4052
        %v4149 = vunpack.c.l.b16 %v4053
        %v4150 = vunpack.c.l.b16 %v4054
        %v4151 = vunpack.c.l.b16 %v4055
        %v4152 = vunpack.c.l.b16 %v4056
        %v4153 = vunpack.c.l.b16 %v4057
        %v4154 = vpack.c.b16 %v4107, %v4106
        %v4155 = vpack.c.b16 %v4109, %v4108
        %v4156 = vpack.c.b16 %v4111, %v4110
        %v4157 = vpack.c.b16 %v4113, %v4112
        %v4158 = vpack.c.b16 %v4115, %v4114
        %v4159 = vpack.c.b16 %v4117, %v4116
        %v4160 = vpack.c.b16 %v4119, %v4118
        %v4161 = vpack.c.b16 %v4121, %v4120
        %v4162 = vpack.c.b16 %v4123, %v4122
        %v4163 = vpack.c.b16 %v4125, %v4124
        %v4164 = vpack.c.b16 %v4127, %v4126
        %v4165 = vpack.c.b16 %v4129, %v4128
        %v4166 = vpack.c.b16 %v4131, %v4130
        %v4167 = vpack.c.b16 %v4133, %v4132
        %v4168 = vpack.c.b16 %v4135, %v4134
        %v4169 = vpack.c.b16 %v4137, %v4136
        %v4170 = vpack.c.b16 %v4139, %v4138
        %v4171 = vpack.c.b16 %v4141, %v4140
        %v4172 = vpack.c.b16 %v4143, %v4142
        %v4173 = vpack.c.b16 %v4145, %v4144
        %v4174 = vpack.c.b16 %v4147, %v4146
        %v4175 = vpack.c.b16 %v4149, %v4148
        %v4176 = vpack.c.b16 %v4151, %v4150
        %v4177 = vpack.c.b16 %v4153, %v4152
        %4202 = vmatpush.bf16.msra.mxu0 %v4161
        %4203 = vmatpush.bf16.msra.mxu0 %v4160
        %4204 = vmatpush.bf16.msra.mxu0 %v4159
        %4205 = vmatpush.bf16.msra.mxu0 %v4158
        %4206 = vmatpush.bf16.msra.mxu0 %v4157
        %4207 = vmatpush.bf16.msra.mxu0 %v4156
        %4208 = vmatpush.bf16.msra.mxu0 %v4155
        %4209 = vmatpush.bf16.msra.mxu0 %v4154
        %4210 = vmatmul.bf16.gmra.mxu0 %v3930
        %v4211 = vpop.f32.mrf.mxu0
        %v4212 = vadd.f32 0.0, %v4211
        %v4213 = vpop.f32.mrf.mxu0
        %v4214 = vadd.f32 0.0, %v4213
        %4215 = vmatmul.bf16.gmra.mxu0 %v3933
        %v4216 = vpop.f32.mrf.mxu0
        %v4217 = vadd.f32 0.0, %v4216
        %v4218 = vpop.f32.mrf.mxu0
        %v4219 = vadd.f32 0.0, %v4218
        %4220 = vmatmul.bf16.gmra.mxu0 %v3936
        %v4221 = vpop.f32.mrf.mxu0
        %v4222 = vadd.f32 0.0, %v4221
        %v4223 = vpop.f32.mrf.mxu0
        %v4224 = vadd.f32 0.0, %v4223
        %4225 = vmatmul.bf16.gmra.mxu0 %v3939
        %v4226 = vpop.f32.mrf.mxu0
        %v4227 = vadd.f32 0.0, %v4226
        %v4228 = vpop.f32.mrf.mxu0
        %v4229 = vadd.f32 0.0, %v4228
        %4230 = vmatmul.bf16.gmra.mxu0 %v3942
        %v4231 = vpop.f32.mrf.mxu0
        %v4232 = vadd.f32 0.0, %v4231
        %v4233 = vpop.f32.mrf.mxu0
        %v4234 = vadd.f32 0.0, %v4233
        %4235 = vmatmul.bf16.gmra.mxu0 %v3945
        %v4236 = vpop.f32.mrf.mxu0
        %v4237 = vadd.f32 0.0, %v4236
        %v4238 = vpop.f32.mrf.mxu0
        %v4239 = vadd.f32 0.0, %v4238
        %4240 = vmatmul.bf16.gmra.mxu0 %v3948
        %v4241 = vpop.f32.mrf.mxu0
        %v4242 = vadd.f32 0.0, %v4241
        %v4243 = vpop.f32.mrf.mxu0
        %v4244 = vadd.f32 0.0, %v4243
        %4245 = vmatmul.bf16.gmra.mxu0 %v3951
        %v4246 = vpop.f32.mrf.mxu0
        %v4247 = vadd.f32 0.0, %v4246
        %v4248 = vpop.f32.mrf.mxu0
        %v4249 = vadd.f32 0.0, %v4248
        %4250 = vmatmul.bf16.gmra.mxu0 %v3954
        %v4251 = vpop.f32.mrf.mxu0
        %v4252 = vadd.f32 0.0, %v4251
        %v4253 = vpop.f32.mrf.mxu0
        %v4254 = vadd.f32 0.0, %v4253
        %4255 = vmatmul.bf16.gmra.mxu0 %v3957
        %v4256 = vpop.f32.mrf.mxu0
        %v4257 = vadd.f32 0.0, %v4256
        %v4258 = vpop.f32.mrf.mxu0
        %v4259 = vadd.f32 0.0, %v4258
        %4260 = vmatmul.bf16.gmra.mxu0 %v3960
        %v4261 = vpop.f32.mrf.mxu0
        %v4262 = vadd.f32 0.0, %v4261
        %v4263 = vpop.f32.mrf.mxu0
        %v4264 = vadd.f32 0.0, %v4263
        %4265 = vmatmul.bf16.gmra.mxu0 %v3963
        %v4266 = vpop.f32.mrf.mxu0
        %v4267 = vadd.f32 0.0, %v4266
        %v4268 = vpop.f32.mrf.mxu0
        %v4269 = vadd.f32 0.0, %v4268
        %4270 = vmatmul.bf16.gmra.mxu0 %v3966
        %v4271 = vpop.f32.mrf.mxu0
        %v4272 = vadd.f32 0.0, %v4271
        %v4273 = vpop.f32.mrf.mxu0
        %v4274 = vadd.f32 0.0, %v4273
        %4275 = vmatmul.bf16.gmra.mxu0 %v3969
        %v4276 = vpop.f32.mrf.mxu0
        %v4277 = vadd.f32 0.0, %v4276
        %v4278 = vpop.f32.mrf.mxu0
        %v4279 = vadd.f32 0.0, %v4278
        %4280 = vmatmul.bf16.gmra.mxu0 %v3972
        %v4281 = vpop.f32.mrf.mxu0
        %v4282 = vadd.f32 0.0, %v4281
        %v4283 = vpop.f32.mrf.mxu0
        %v4284 = vadd.f32 0.0, %v4283
        %4285 = vmatmul.bf16.gmra.mxu0 %v3975
        %v4286 = vpop.f32.mrf.mxu0
        %v4287 = vadd.f32 0.0, %v4286
        %v4288 = vpop.f32.mrf.mxu0
        %v4289 = vadd.f32 0.0, %v4288
        %4290 = vdwg.mxu0
        %4291 = vmatpush.bf16.msra.mxu0 %v4169
        %4292 = vmatpush.bf16.msra.mxu0 %v4168
        %4293 = vmatpush.bf16.msra.mxu0 %v4167
        %4294 = vmatpush.bf16.msra.mxu0 %v4166
        %4295 = vmatpush.bf16.msra.mxu0 %v4165
        %4296 = vmatpush.bf16.msra.mxu0 %v4164
        %4297 = vmatpush.bf16.msra.mxu0 %v4163
        %4298 = vmatpush.bf16.msra.mxu0 %v4162
        %4299 = vmatmul.bf16.gmra.mxu0 %v3931
        %v4300 = vpop.f32.mrf.mxu0
        %v4301 = vadd.f32 %v4212, %v4300
        %v4302 = vpop.f32.mrf.mxu0
        %v4303 = vadd.f32 %v4214, %v4302
        %4304 = vmatmul.bf16.gmra.mxu0 %v3934
        %v4305 = vpop.f32.mrf.mxu0
        %v4306 = vadd.f32 %v4217, %v4305
        %v4307 = vpop.f32.mrf.mxu0
        %v4308 = vadd.f32 %v4219, %v4307
        %4309 = vmatmul.bf16.gmra.mxu0 %v3937
        %v4310 = vpop.f32.mrf.mxu0
        %v4311 = vadd.f32 %v4222, %v4310
        %v4312 = vpop.f32.mrf.mxu0
        %v4313 = vadd.f32 %v4224, %v4312
        %4314 = vmatmul.bf16.gmra.mxu0 %v3940
        %v4315 = vpop.f32.mrf.mxu0
        %v4316 = vadd.f32 %v4227, %v4315
        %v4317 = vpop.f32.mrf.mxu0
        %v4318 = vadd.f32 %v4229, %v4317
        %4319 = vmatmul.bf16.gmra.mxu0 %v3943
        %v4320 = vpop.f32.mrf.mxu0
        %v4321 = vadd.f32 %v4232, %v4320
        %v4322 = vpop.f32.mrf.mxu0
        %v4323 = vadd.f32 %v4234, %v4322
        %4324 = vmatmul.bf16.gmra.mxu0 %v3946
        %v4325 = vpop.f32.mrf.mxu0
        %v4326 = vadd.f32 %v4237, %v4325
        %v4327 = vpop.f32.mrf.mxu0
        %v4328 = vadd.f32 %v4239, %v4327
        %4329 = vmatmul.bf16.gmra.mxu0 %v3949
        %v4330 = vpop.f32.mrf.mxu0
        %v4331 = vadd.f32 %v4242, %v4330
        %v4332 = vpop.f32.mrf.mxu0
        %v4333 = vadd.f32 %v4244, %v4332
        %4334 = vmatmul.bf16.gmra.mxu0 %v3952
        %v4335 = vpop.f32.mrf.mxu0
        %v4336 = vadd.f32 %v4247, %v4335
        %v4337 = vpop.f32.mrf.mxu0
        %v4338 = vadd.f32 %v4249, %v4337
        %4339 = vmatmul.bf16.gmra.mxu0 %v3955
        %v4340 = vpop.f32.mrf.mxu0
        %v4341 = vadd.f32 %v4252, %v4340
        %v4342 = vpop.f32.mrf.mxu0
        %v4343 = vadd.f32 %v4254, %v4342
        %4344 = vmatmul.bf16.gmra.mxu0 %v3958
        %v4345 = vpop.f32.mrf.mxu0
        %v4346 = vadd.f32 %v4257, %v4345
        %v4347 = vpop.f32.mrf.mxu0
        %v4348 = vadd.f32 %v4259, %v4347
        %4349 = vmatmul.bf16.gmra.mxu0 %v3961
        %v4350 = vpop.f32.mrf.mxu0
        %v4351 = vadd.f32 %v4262, %v4350
        %v4352 = vpop.f32.mrf.mxu0
        %v4353 = vadd.f32 %v4264, %v4352
        %4354 = vmatmul.bf16.gmra.mxu0 %v3964
        %v4355 = vpop.f32.mrf.mxu0
        %v4356 = vadd.f32 %v4267, %v4355
        %v4357 = vpop.f32.mrf.mxu0
        %v4358 = vadd.f32 %v4269, %v4357
        %4359 = vmatmul.bf16.gmra.mxu0 %v3967
        %v4360 = vpop.f32.mrf.mxu0
        %v4361 = vadd.f32 %v4272, %v4360
        %v4362 = vpop.f32.mrf.mxu0
        %v4363 = vadd.f32 %v4274, %v4362
        %4364 = vmatmul.bf16.gmra.mxu0 %v3970
        %v4365 = vpop.f32.mrf.mxu0
        %v4366 = vadd.f32 %v4277, %v4365
        %v4367 = vpop.f32.mrf.mxu0
        %v4368 = vadd.f32 %v4279, %v4367
        %4369 = vmatmul.bf16.gmra.mxu0 %v3973
        %v4370 = vpop.f32.mrf.mxu0
        %v4371 = vadd.f32 %v4282, %v4370
        %v4372 = vpop.f32.mrf.mxu0
        %v4373 = vadd.f32 %v4284, %v4372
        %4374 = vmatmul.bf16.gmra.mxu0 %v3976
        %v4375 = vpop.f32.mrf.mxu0
        %v4376 = vadd.f32 %v4287, %v4375
        %v4377 = vpop.f32.mrf.mxu0
        %v4378 = vadd.f32 %v4289, %v4377
        %4379 = vdwg.mxu0
        %4380 = vmatpush.bf16.msra.mxu0 %v4177
        %4381 = vmatpush.bf16.msra.mxu0 %v4176
        %4382 = vmatpush.bf16.msra.mxu0 %v4175
        %4383 = vmatpush.bf16.msra.mxu0 %v4174
        %4384 = vmatpush.bf16.msra.mxu0 %v4173
        %4385 = vmatpush.bf16.msra.mxu0 %v4172
        %4386 = vmatpush.bf16.msra.mxu0 %v4171
        %4387 = vmatpush.bf16.msra.mxu0 %v4170
        %4388 = vmatmul.bf16.gmra.mxu0 %v3932
        %v4389 = vpop.f32.mrf.mxu0
        %v4390 = vadd.f32 %v4301, %v4389
        %v4391 = vpop.f32.mrf.mxu0
        %v4392 = vadd.f32 %v4303, %v4391
        %4393 = vmatmul.bf16.gmra.mxu0 %v3935
        %v4394 = vpop.f32.mrf.mxu0
        %v4395 = vadd.f32 %v4306, %v4394
        %v4396 = vpop.f32.mrf.mxu0
        %v4397 = vadd.f32 %v4308, %v4396
        %4398 = vmatmul.bf16.gmra.mxu0 %v3938
        %v4399 = vpop.f32.mrf.mxu0
        %v4400 = vadd.f32 %v4311, %v4399
        %v4401 = vpop.f32.mrf.mxu0
        %v4402 = vadd.f32 %v4313, %v4401
        %4403 = vmatmul.bf16.gmra.mxu0 %v3941
        %v4404 = vpop.f32.mrf.mxu0
        %v4405 = vadd.f32 %v4316, %v4404
        %v4406 = vpop.f32.mrf.mxu0
        %v4407 = vadd.f32 %v4318, %v4406
        %4408 = vmatmul.bf16.gmra.mxu0 %v3944
        %v4409 = vpop.f32.mrf.mxu0
        %v4410 = vadd.f32 %v4321, %v4409
        %v4411 = vpop.f32.mrf.mxu0
        %v4412 = vadd.f32 %v4323, %v4411
        %4413 = vmatmul.bf16.gmra.mxu0 %v3947
        %v4414 = vpop.f32.mrf.mxu0
        %v4415 = vadd.f32 %v4326, %v4414
        %v4416 = vpop.f32.mrf.mxu0
        %v4417 = vadd.f32 %v4328, %v4416
        %4418 = vmatmul.bf16.gmra.mxu0 %v3950
        %v4419 = vpop.f32.mrf.mxu0
        %v4420 = vadd.f32 %v4331, %v4419
        %v4421 = vpop.f32.mrf.mxu0
        %v4422 = vadd.f32 %v4333, %v4421
        %4423 = vmatmul.bf16.gmra.mxu0 %v3953
        %v4424 = vpop.f32.mrf.mxu0
        %v4425 = vadd.f32 %v4336, %v4424
        %v4426 = vpop.f32.mrf.mxu0
        %v4427 = vadd.f32 %v4338, %v4426
        %4428 = vmatmul.bf16.gmra.mxu0 %v3956
        %v4429 = vpop.f32.mrf.mxu0
        %v4430 = vadd.f32 %v4341, %v4429
        %v4431 = vpop.f32.mrf.mxu0
        %v4432 = vadd.f32 %v4343, %v4431
        %4433 = vmatmul.bf16.gmra.mxu0 %v3959
        %v4434 = vpop.f32.mrf.mxu0
        %v4435 = vadd.f32 %v4346, %v4434
        %v4436 = vpop.f32.mrf.mxu0
        %v4437 = vadd.f32 %v4348, %v4436
        %4438 = vmatmul.bf16.gmra.mxu0 %v3962
        %v4439 = vpop.f32.mrf.mxu0
        %v4440 = vadd.f32 %v4351, %v4439
        %v4441 = vpop.f32.mrf.mxu0
        %v4442 = vadd.f32 %v4353, %v4441
        %4443 = vmatmul.bf16.gmra.mxu0 %v3965
        %v4444 = vpop.f32.mrf.mxu0
        %v4445 = vadd.f32 %v4356, %v4444
        %v4446 = vpop.f32.mrf.mxu0
        %v4447 = vadd.f32 %v4358, %v4446
        %4448 = vmatmul.bf16.gmra.mxu0 %v3968
        %v4449 = vpop.f32.mrf.mxu0
        %v4450 = vadd.f32 %v4361, %v4449
        %v4451 = vpop.f32.mrf.mxu0
        %v4452 = vadd.f32 %v4363, %v4451
        %4453 = vmatmul.bf16.gmra.mxu0 %v3971
        %v4454 = vpop.f32.mrf.mxu0
        %v4455 = vadd.f32 %v4366, %v4454
        %v4456 = vpop.f32.mrf.mxu0
        %v4457 = vadd.f32 %v4368, %v4456
        %4458 = vmatmul.bf16.gmra.mxu0 %v3974
        %v4459 = vpop.f32.mrf.mxu0
        %v4460 = vadd.f32 %v4371, %v4459
        %v4461 = vpop.f32.mrf.mxu0
        %v4462 = vadd.f32 %v4373, %v4461
        %4463 = vmatmul.bf16.gmra.mxu0 %v3977
        %v4464 = vpop.f32.mrf.mxu0
        %v4465 = vadd.f32 %v4376, %v4464
        %v4466 = vpop.f32.mrf.mxu0
        %v4467 = vadd.f32 %v4378, %v4466
        %4468 = vdwg.mxu0
        %v4469 = vadd.f32 %v3978, %v4390
        %v4470 = vadd.f32 %v3979, %v4392
        %v4471 = vadd.f32 %v3980, %v4395
        %v4472 = vadd.f32 %v3981, %v4397
        %v4473 = vadd.f32 %v3982, %v4400
        %v4474 = vadd.f32 %v3983, %v4402
        %v4475 = vadd.f32 %v3984, %v4405
        %v4476 = vadd.f32 %v3985, %v4407
        %v4477 = vadd.f32 %v3986, %v4410
        %v4478 = vadd.f32 %v3987, %v4412
        %v4479 = vadd.f32 %v3988, %v4415
        %v4480 = vadd.f32 %v3989, %v4417
        %v4481 = vadd.f32 %v3990, %v4420
        %v4482 = vadd.f32 %v3991, %v4422
        %v4483 = vadd.f32 %v3992, %v4425
        %v4484 = vadd.f32 %v3993, %v4427
        %v4485 = vadd.f32 %v3994, %v4430
        %v4486 = vadd.f32 %v3995, %v4432
        %v4487 = vadd.f32 %v3996, %v4435
        %v4488 = vadd.f32 %v3997, %v4437
        %v4489 = vadd.f32 %v3998, %v4440
        %v4490 = vadd.f32 %v3999, %v4442
        %v4491 = vadd.f32 %v4000, %v4445
        %v4492 = vadd.f32 %v4001, %v4447
        %v4493 = vadd.f32 %v4002, %v4450
        %v4494 = vadd.f32 %v4003, %v4452
        %v4495 = vadd.f32 %v4004, %v4455
        %v4496 = vadd.f32 %v4005, %v4457
        %v4497 = vadd.f32 %v4006, %v4460
        %v4498 = vadd.f32 %v4007, %v4462
        %v4499 = vadd.f32 %v4008, %v4465
        %v4500 = vadd.f32 %v4009, %v4467
        %4501 = vst [vmem:[#allocation5] sm:$0xff] %v4469
        %4502 = vst [vmem:[#allocation5 + $0x8] sm:$0xff] %v4470
        %4503 = vst [vmem:[#allocation5 + $0x10] sm:$0xff] %v4471
        %4504 = vst [vmem:[#allocation5 + $0x18] sm:$0xff] %v4472
        %4505 = vst [vmem:[#allocation5 + $0x20] sm:$0xff] %v4473
        %4506 = vst [vmem:[#allocation5 + $0x28] sm:$0xff] %v4474
        %4507 = vst [vmem:[#allocation5 + $0x30] sm:$0xff] %v4475
        %4508 = vst [vmem:[#allocation5 + $0x38] sm:$0xff] %v4476
        %4509 = vst [vmem:[#allocation5 + $0x40] sm:$0xff] %v4477
        %4510 = vst [vmem:[#allocation5 + $0x48] sm:$0xff] %v4478
        %4511 = vst [vmem:[#allocation5 + $0x50] sm:$0xff] %v4479
        %4512 = vst [vmem:[#allocation5 + $0x58] sm:$0xff] %v4480
        %4513 = vst [vmem:[#allocation5 + $0x60] sm:$0xff] %v4481
        %4514 = vst [vmem:[#allocation5 + $0x68] sm:$0xff] %v4482
        %4515 = vst [vmem:[#allocation5 + $0x70] sm:$0xff] %v4483
        %4516 = vst [vmem:[#allocation5 + $0x78] sm:$0xff] %v4484
        %4517 = vst [vmem:[#allocation5 + $0x80] sm:$0xff] %v4485
        %4518 = vst [vmem:[#allocation5 + $0x88] sm:$0xff] %v4486
        %4519 = vst [vmem:[#allocation5 + $0x90] sm:$0xff] %v4487
        %4520 = vst [vmem:[#allocation5 + $0x98] sm:$0xff] %v4488
        %4521 = vst [vmem:[#allocation5 + $0xa0] sm:$0xff] %v4489
        %4522 = vst [vmem:[#allocation5 + $0xa8] sm:$0xff] %v4490
        %4523 = vst [vmem:[#allocation5 + $0xb0] sm:$0xff] %v4491
        %4524 = vst [vmem:[#allocation5 + $0xb8] sm:$0xff] %v4492
        %4525 = vst [vmem:[#allocation5 + $0xc0] sm:$0xff] %v4493
        %4526 = vst [vmem:[#allocation5 + $0xc8] sm:$0xff] %v4494
        %4527 = vst [vmem:[#allocation5 + $0xd0] sm:$0xff] %v4495
        %4528 = vst [vmem:[#allocation5 + $0xd8] sm:$0xff] %v4496
        %4529 = vst [vmem:[#allocation5 + $0xe0] sm:$0xff] %v4497
        %4530 = vst [vmem:[#allocation5 + $0xe8] sm:$0xff] %v4498
        %4531 = vst [vmem:[#allocation5 + $0xf0] sm:$0xff] %v4499
        %4532 = vst [vmem:[#allocation5 + $0xf8] sm:$0xff] %v4500
        %v4533 = vld [vmem:[%s516] sm:$0xff]
        %v4534 = vld [vmem:[%s516 + $0x8] sm:$0xff]
        %v4535 = vld [vmem:[%s516 + $0x10] sm:$0x3]
        %v4536 = vld [vmem:[%s516 + $0x18] sm:$0xff]
        %v4537 = vld [vmem:[%s516 + $0x20] sm:$0xff]
        %v4538 = vld [vmem:[%s516 + $0x28] sm:$0x3]
        %v4539 = vld [vmem:[%s516 + $0x30] sm:$0xff]
        %v4540 = vld [vmem:[%s516 + $0x38] sm:$0xff]
        %v4541 = vld [vmem:[%s516 + $0x40] sm:$0x3]
        %v4542 = vld [vmem:[%s516 + $0x48] sm:$0xff]
        %v4543 = vld [vmem:[%s516 + $0x50] sm:$0xff]
        %v4544 = vld [vmem:[%s516 + $0x58] sm:$0x3]
        %v4545 = vld [vmem:[%s516 + $0x60] sm:$0xff]
        %v4546 = vld [vmem:[%s516 + $0x68] sm:$0xff]
        %v4547 = vld [vmem:[%s516 + $0x70] sm:$0x3]
        %v4548 = vld [vmem:[%s516 + $0x78] sm:$0xff]
        %v4549 = vld [vmem:[%s516 + $0x80] sm:$0xff]
        %v4550 = vld [vmem:[%s516 + $0x88] sm:$0x3]
        %v4551 = vld [vmem:[%s516 + $0x90] sm:$0xff]
        %v4552 = vld [vmem:[%s516 + $0x98] sm:$0xff]
        %v4553 = vld [vmem:[%s516 + $0xa0] sm:$0x3]
        %v4554 = vld [vmem:[%s516 + $0xa8] sm:$0xff]
        %v4555 = vld [vmem:[%s516 + $0xb0] sm:$0xff]
        %v4556 = vld [vmem:[%s516 + $0xb8] sm:$0x3]
        %v4557 = vld [vmem:[%s516 + $0xc0] sm:$0xff]
        %v4558 = vld [vmem:[%s516 + $0xc8] sm:$0xff]
        %v4559 = vld [vmem:[%s516 + $0xd0] sm:$0x3]
        %v4560 = vld [vmem:[%s516 + $0xd8] sm:$0xff]
        %v4561 = vld [vmem:[%s516 + $0xe0] sm:$0xff]
        %v4562 = vld [vmem:[%s516 + $0xe8] sm:$0x3]
        %v4563 = vld [vmem:[%s516 + $0xf0] sm:$0xff]
        %v4564 = vld [vmem:[%s516 + $0xf8] sm:$0xff]
        %v4565 = vld [vmem:[%s516 + $0x100] sm:$0x3]
        %v4566 = vld [vmem:[%s516 + $0x108] sm:$0xff]
        %v4567 = vld [vmem:[%s516 + $0x110] sm:$0xff]
        %v4568 = vld [vmem:[%s516 + $0x118] sm:$0x3]
        %v4569 = vld [vmem:[%s516 + $0x120] sm:$0xff]
        %v4570 = vld [vmem:[%s516 + $0x128] sm:$0xff]
        %v4571 = vld [vmem:[%s516 + $0x130] sm:$0x3]
        %v4572 = vld [vmem:[%s516 + $0x138] sm:$0xff]
        %v4573 = vld [vmem:[%s516 + $0x140] sm:$0xff]
        %v4574 = vld [vmem:[%s516 + $0x148] sm:$0x3]
        %v4575 = vld [vmem:[%s516 + $0x150] sm:$0xff]
        %v4576 = vld [vmem:[%s516 + $0x158] sm:$0xff]
        %v4577 = vld [vmem:[%s516 + $0x160] sm:$0x3]
        %v4578 = vld [vmem:[%s516 + $0x168] sm:$0xff]
        %v4579 = vld [vmem:[%s516 + $0x170] sm:$0xff]
        %v4580 = vld [vmem:[%s516 + $0x178] sm:$0x3]
        %v4629 = vrot.slane %v4533, 1
        %v4630 = vrot.slane %v4534, 1
        %v4631 = vsel %vm677, %v4629, %v4630
        %v4632 = vrot.slane %v4535, 1
        %v4633 = vsel %vm677, %v4630, %v4632
        %v4634 = vrot.slane %v4536, 1
        %v4635 = vrot.slane %v4537, 1
        %v4636 = vsel %vm677, %v4634, %v4635
        %v4637 = vrot.slane %v4538, 1
        %v4638 = vsel %vm677, %v4635, %v4637
        %v4639 = vrot.slane %v4539, 1
        %v4640 = vrot.slane %v4540, 1
        %v4641 = vsel %vm677, %v4639, %v4640
        %v4642 = vrot.slane %v4541, 1
        %v4643 = vsel %vm677, %v4640, %v4642
        %v4644 = vrot.slane %v4542, 1
        %v4645 = vrot.slane %v4543, 1
        %v4646 = vsel %vm677, %v4644, %v4645
        %v4647 = vrot.slane %v4544, 1
        %v4648 = vsel %vm677, %v4645, %v4647
        %v4649 = vrot.slane %v4545, 1
        %v4650 = vrot.slane %v4546, 1
        %v4651 = vsel %vm677, %v4649, %v4650
        %v4652 = vrot.slane %v4547, 1
        %v4653 = vsel %vm677, %v4650, %v4652
        %v4654 = vrot.slane %v4548, 1
        %v4655 = vrot.slane %v4549, 1
        %v4656 = vsel %vm677, %v4654, %v4655
        %v4657 = vrot.slane %v4550, 1
        %v4658 = vsel %vm677, %v4655, %v4657
        %v4659 = vrot.slane %v4551, 1
        %v4660 = vrot.slane %v4552, 1
        %v4661 = vsel %vm677, %v4659, %v4660
        %v4662 = vrot.slane %v4553, 1
        %v4663 = vsel %vm677, %v4660, %v4662
        %v4664 = vrot.slane %v4554, 1
        %v4665 = vrot.slane %v4555, 1
        %v4666 = vsel %vm677, %v4664, %v4665
        %v4667 = vrot.slane %v4556, 1
        %v4668 = vsel %vm677, %v4665, %v4667
        %v4669 = vrot.slane %v4557, 1
        %v4670 = vrot.slane %v4558, 1
        %v4671 = vsel %vm677, %v4669, %v4670
        %v4672 = vrot.slane %v4559, 1
        %v4673 = vsel %vm677, %v4670, %v4672
        %v4674 = vrot.slane %v4560, 1
        %v4675 = vrot.slane %v4561, 1
        %v4676 = vsel %vm677, %v4674, %v4675
        %v4677 = vrot.slane %v4562, 1
        %v4678 = vsel %vm677, %v4675, %v4677
        %v4679 = vrot.slane %v4563, 1
        %v4680 = vrot.slane %v4564, 1
        %v4681 = vsel %vm677, %v4679, %v4680
        %v4682 = vrot.slane %v4565, 1
        %v4683 = vsel %vm677, %v4680, %v4682
        %v4684 = vrot.slane %v4566, 1
        %v4685 = vrot.slane %v4567, 1
        %v4686 = vsel %vm677, %v4684, %v4685
        %v4687 = vrot.slane %v4568, 1
        %v4688 = vsel %vm677, %v4685, %v4687
        %v4689 = vrot.slane %v4569, 1
        %v4690 = vrot.slane %v4570, 1
        %v4691 = vsel %vm677, %v4689, %v4690
        %v4692 = vrot.slane %v4571, 1
        %v4693 = vsel %vm677, %v4690, %v4692
        %v4694 = vrot.slane %v4572, 1
        %v4695 = vrot.slane %v4573, 1
        %v4696 = vsel %vm677, %v4694, %v4695
        %v4697 = vrot.slane %v4574, 1
        %v4698 = vsel %vm677, %v4695, %v4697
        %v4699 = vrot.slane %v4575, 1
        %v4700 = vrot.slane %v4576, 1
        %v4701 = vsel %vm677, %v4699, %v4700
        %v4702 = vrot.slane %v4577, 1
        %v4703 = vsel %vm677, %v4700, %v4702
        %v4704 = vrot.slane %v4578, 1
        %v4705 = vrot.slane %v4579, 1
        %v4706 = vsel %vm677, %v4704, %v4705
        %v4707 = vrot.slane %v4580, 1
        %v4708 = vsel %vm677, %v4705, %v4707
        %v4741 = vrot.slane %v4533, 2
        %v4742 = vrot.slane %v4534, 2
        %v4743 = vsel %vm790, %v4741, %v4742
        %v4744 = vrot.slane %v4535, 2
        %v4745 = vsel %vm790, %v4742, %v4744
        %v4746 = vrot.slane %v4536, 2
        %v4747 = vrot.slane %v4537, 2
        %v4748 = vsel %vm790, %v4746, %v4747
        %v4749 = vrot.slane %v4538, 2
        %v4750 = vsel %vm790, %v4747, %v4749
        %v4751 = vrot.slane %v4539, 2
        %v4752 = vrot.slane %v4540, 2
        %v4753 = vsel %vm790, %v4751, %v4752
        %v4754 = vrot.slane %v4541, 2
        %v4755 = vsel %vm790, %v4752, %v4754
        %v4756 = vrot.slane %v4542, 2
        %v4757 = vrot.slane %v4543, 2
        %v4758 = vsel %vm790, %v4756, %v4757
        %v4759 = vrot.slane %v4544, 2
        %v4760 = vsel %vm790, %v4757, %v4759
        %v4761 = vrot.slane %v4545, 2
        %v4762 = vrot.slane %v4546, 2
        %v4763 = vsel %vm790, %v4761, %v4762
        %v4764 = vrot.slane %v4547, 2
        %v4765 = vsel %vm790, %v4762, %v4764
        %v4766 = vrot.slane %v4548, 2
        %v4767 = vrot.slane %v4549, 2
        %v4768 = vsel %vm790, %v4766, %v4767
        %v4769 = vrot.slane %v4550, 2
        %v4770 = vsel %vm790, %v4767, %v4769
        %v4771 = vrot.slane %v4551, 2
        %v4772 = vrot.slane %v4552, 2
        %v4773 = vsel %vm790, %v4771, %v4772
        %v4774 = vrot.slane %v4553, 2
        %v4775 = vsel %vm790, %v4772, %v4774
        %v4776 = vrot.slane %v4554, 2
        %v4777 = vrot.slane %v4555, 2
        %v4778 = vsel %vm790, %v4776, %v4777
        %v4779 = vrot.slane %v4556, 2
        %v4780 = vsel %vm790, %v4777, %v4779
        %v4781 = vrot.slane %v4557, 2
        %v4782 = vrot.slane %v4558, 2
        %v4783 = vsel %vm790, %v4781, %v4782
        %v4784 = vrot.slane %v4559, 2
        %v4785 = vsel %vm790, %v4782, %v4784
        %v4786 = vrot.slane %v4560, 2
        %v4787 = vrot.slane %v4561, 2
        %v4788 = vsel %vm790, %v4786, %v4787
        %v4789 = vrot.slane %v4562, 2
        %v4790 = vsel %vm790, %v4787, %v4789
        %v4791 = vrot.slane %v4563, 2
        %v4792 = vrot.slane %v4564, 2
        %v4793 = vsel %vm790, %v4791, %v4792
        %v4794 = vrot.slane %v4565, 2
        %v4795 = vsel %vm790, %v4792, %v4794
        %v4796 = vrot.slane %v4566, 2
        %v4797 = vrot.slane %v4567, 2
        %v4798 = vsel %vm790, %v4796, %v4797
        %v4799 = vrot.slane %v4568, 2
        %v4800 = vsel %vm790, %v4797, %v4799
        %v4801 = vrot.slane %v4569, 2
        %v4802 = vrot.slane %v4570, 2
        %v4803 = vsel %vm790, %v4801, %v4802
        %v4804 = vrot.slane %v4571, 2
        %v4805 = vsel %vm790, %v4802, %v4804
        %v4806 = vrot.slane %v4572, 2
        %v4807 = vrot.slane %v4573, 2
        %v4808 = vsel %vm790, %v4806, %v4807
        %v4809 = vrot.slane %v4574, 2
        %v4810 = vsel %vm790, %v4807, %v4809
        %v4811 = vrot.slane %v4575, 2
        %v4812 = vrot.slane %v4576, 2
        %v4813 = vsel %vm790, %v4811, %v4812
        %v4814 = vrot.slane %v4577, 2
        %v4815 = vsel %vm790, %v4812, %v4814
        %v4816 = vrot.slane %v4578, 2
        %v4817 = vrot.slane %v4579, 2
        %v4818 = vsel %vm790, %v4816, %v4817
        %v4819 = vrot.slane %v4580, 2
        %v4820 = vsel %vm790, %v4817, %v4819
        %v4853 = vpack.c.bf16 %v4534, %v4533
        %v4854 = vpack.c.bf16 %v4633, %v4631
        %v4855 = vpack.c.bf16 %v4745, %v4743
        %v4856 = vpack.c.bf16 %v4537, %v4536
        %v4857 = vpack.c.bf16 %v4638, %v4636
        %v4858 = vpack.c.bf16 %v4750, %v4748
        %v4859 = vpack.c.bf16 %v4540, %v4539
        %v4860 = vpack.c.bf16 %v4643, %v4641
        %v4861 = vpack.c.bf16 %v4755, %v4753
        %v4862 = vpack.c.bf16 %v4543, %v4542
        %v4863 = vpack.c.bf16 %v4648, %v4646
        %v4864 = vpack.c.bf16 %v4760, %v4758
        %v4865 = vpack.c.bf16 %v4546, %v4545
        %v4866 = vpack.c.bf16 %v4653, %v4651
        %v4867 = vpack.c.bf16 %v4765, %v4763
        %v4868 = vpack.c.bf16 %v4549, %v4548
        %v4869 = vpack.c.bf16 %v4658, %v4656
        %v4870 = vpack.c.bf16 %v4770, %v4768
        %v4871 = vpack.c.bf16 %v4552, %v4551
        %v4872 = vpack.c.bf16 %v4663, %v4661
        %v4873 = vpack.c.bf16 %v4775, %v4773
        %v4874 = vpack.c.bf16 %v4555, %v4554
        %v4875 = vpack.c.bf16 %v4668, %v4666
        %v4876 = vpack.c.bf16 %v4780, %v4778
        %v4877 = vpack.c.bf16 %v4558, %v4557
        %v4878 = vpack.c.bf16 %v4673, %v4671
        %v4879 = vpack.c.bf16 %v4785, %v4783
        %v4880 = vpack.c.bf16 %v4561, %v4560
        %v4881 = vpack.c.bf16 %v4678, %v4676
        %v4882 = vpack.c.bf16 %v4790, %v4788
        %v4883 = vpack.c.bf16 %v4564, %v4563
        %v4884 = vpack.c.bf16 %v4683, %v4681
        %v4885 = vpack.c.bf16 %v4795, %v4793
        %v4886 = vpack.c.bf16 %v4567, %v4566
        %v4887 = vpack.c.bf16 %v4688, %v4686
        %v4888 = vpack.c.bf16 %v4800, %v4798
        %v4889 = vpack.c.bf16 %v4570, %v4569
        %v4890 = vpack.c.bf16 %v4693, %v4691
        %v4891 = vpack.c.bf16 %v4805, %v4803
        %v4892 = vpack.c.bf16 %v4573, %v4572
        %v4893 = vpack.c.bf16 %v4698, %v4696
        %v4894 = vpack.c.bf16 %v4810, %v4808
        %v4895 = vpack.c.bf16 %v4576, %v4575
        %v4896 = vpack.c.bf16 %v4703, %v4701
        %v4897 = vpack.c.bf16 %v4815, %v4813
        %v4898 = vpack.c.bf16 %v4579, %v4578
        %v4899 = vpack.c.bf16 %v4708, %v4706
        %v4900 = vpack.c.bf16 %v4820, %v4818
        %v4901 = vld [vmem:[#allocation5] sm:$0xff]
        %v4902 = vld [vmem:[#allocation5 + $0x8] sm:$0xff]
        %v4903 = vld [vmem:[#allocation5 + $0x10] sm:$0xff]
        %v4904 = vld [vmem:[#allocation5 + $0x18] sm:$0xff]
        %v4905 = vld [vmem:[#allocation5 + $0x20] sm:$0xff]
        %v4906 = vld [vmem:[#allocation5 + $0x28] sm:$0xff]
        %v4907 = vld [vmem:[#allocation5 + $0x30] sm:$0xff]
        %v4908 = vld [vmem:[#allocation5 + $0x38] sm:$0xff]
        %v4909 = vld [vmem:[#allocation5 + $0x40] sm:$0xff]
        %v4910 = vld [vmem:[#allocation5 + $0x48] sm:$0xff]
        %v4911 = vld [vmem:[#allocation5 + $0x50] sm:$0xff]
        %v4912 = vld [vmem:[#allocation5 + $0x58] sm:$0xff]
        %v4913 = vld [vmem:[#allocation5 + $0x60] sm:$0xff]
        %v4914 = vld [vmem:[#allocation5 + $0x68] sm:$0xff]
        %v4915 = vld [vmem:[#allocation5 + $0x70] sm:$0xff]
        %v4916 = vld [vmem:[#allocation5 + $0x78] sm:$0xff]
        %v4917 = vld [vmem:[#allocation5 + $0x80] sm:$0xff]
        %v4918 = vld [vmem:[#allocation5 + $0x88] sm:$0xff]
        %v4919 = vld [vmem:[#allocation5 + $0x90] sm:$0xff]
        %v4920 = vld [vmem:[#allocation5 + $0x98] sm:$0xff]
        %v4921 = vld [vmem:[#allocation5 + $0xa0] sm:$0xff]
        %v4922 = vld [vmem:[#allocation5 + $0xa8] sm:$0xff]
        %v4923 = vld [vmem:[#allocation5 + $0xb0] sm:$0xff]
        %v4924 = vld [vmem:[#allocation5 + $0xb8] sm:$0xff]
        %v4925 = vld [vmem:[#allocation5 + $0xc0] sm:$0xff]
        %v4926 = vld [vmem:[#allocation5 + $0xc8] sm:$0xff]
        %v4927 = vld [vmem:[#allocation5 + $0xd0] sm:$0xff]
        %v4928 = vld [vmem:[#allocation5 + $0xd8] sm:$0xff]
        %v4929 = vld [vmem:[#allocation5 + $0xe0] sm:$0xff]
        %v4930 = vld [vmem:[#allocation5 + $0xe8] sm:$0xff]
        %v4931 = vld [vmem:[#allocation5 + $0xf0] sm:$0xff]
        %v4932 = vld [vmem:[#allocation5 + $0xf8] sm:$0xff]
        %s4933 = scalar_lea.vmem [#allocation12], 192
        %v4934 = vld [vmem:[%s4933] sm:$0xf]
        %v4935 = vld [vmem:[%s4933 + $0x4] sm:$0xf]
        %v4936 = vld [vmem:[%s4933 + $0x8] sm:$0xf]
        %v4937 = vld [vmem:[%s4933 + $0xc] sm:$0xf]
        %v4938 = vld [vmem:[%s4933 + $0x10] sm:$0xf]
        %v4939 = vld [vmem:[%s4933 + $0x14] sm:$0xf]
        %v4940 = vld [vmem:[%s4933 + $0x18] sm:$0xf]
        %v4941 = vld [vmem:[%s4933 + $0x1c] sm:$0xf]
        %v4942 = vld [vmem:[%s4933 + $0x20] sm:$0xf]
        %v4943 = vld [vmem:[%s4933 + $0x24] sm:$0xf]
        %v4944 = vld [vmem:[%s4933 + $0x28] sm:$0xf]
        %v4945 = vld [vmem:[%s4933 + $0x2c] sm:$0xf]
        %v4946 = vld [vmem:[%s4933 + $0x30] sm:$0xf]
        %v4947 = vld [vmem:[%s4933 + $0x34] sm:$0xf]
        %v4948 = vld [vmem:[%s4933 + $0x38] sm:$0xf]
        %v4949 = vld [vmem:[%s4933 + $0x3c] sm:$0xf]
        %v4950 = vld [vmem:[%s4933 + $0x40] sm:$0xf]
        %v4951 = vld [vmem:[%s4933 + $0x44] sm:$0xf]
        %v4952 = vld [vmem:[%s4933 + $0x48] sm:$0xf]
        %v4953 = vld [vmem:[%s4933 + $0x4c] sm:$0xf]
        %v4954 = vld [vmem:[%s4933 + $0x50] sm:$0xf]
        %v4955 = vld [vmem:[%s4933 + $0x54] sm:$0xf]
        %v4956 = vld [vmem:[%s4933 + $0x58] sm:$0xf]
        %v4957 = vld [vmem:[%s4933 + $0x5c] sm:$0xf]
        %v4958 = vld [vmem:[%s4933 + $0x60] sm:$0xf]
        %v4959 = vld [vmem:[%s4933 + $0x64] sm:$0xf]
        %v4960 = vld [vmem:[%s4933 + $0x68] sm:$0xf]
        %v4961 = vld [vmem:[%s4933 + $0x6c] sm:$0xf]
        %v4962 = vld [vmem:[%s4933 + $0x70] sm:$0xf]
        %v4963 = vld [vmem:[%s4933 + $0x74] sm:$0xf]
        %v4964 = vld [vmem:[%s4933 + $0x78] sm:$0xf]
        %v4965 = vld [vmem:[%s4933 + $0x7c] sm:$0xf]
        %v4966 = vld [vmem:[%s4933 + $0x80] sm:$0xf]
        %v4967 = vld [vmem:[%s4933 + $0x84] sm:$0xf]
        %v4968 = vld [vmem:[%s4933 + $0x88] sm:$0xf]
        %v4969 = vld [vmem:[%s4933 + $0x8c] sm:$0xf]
        %v4970 = vld [vmem:[%s4933 + $0x90] sm:$0xf]
        %v4971 = vld [vmem:[%s4933 + $0x94] sm:$0xf]
        %v4972 = vld [vmem:[%s4933 + $0x98] sm:$0xf]
        %v4973 = vld [vmem:[%s4933 + $0x9c] sm:$0xf]
        %v4974 = vld [vmem:[%s4933 + $0xa0] sm:$0xf]
        %v4975 = vld [vmem:[%s4933 + $0xa4] sm:$0xf]
        %v4976 = vld [vmem:[%s4933 + $0xa8] sm:$0xf]
        %v4977 = vld [vmem:[%s4933 + $0xac] sm:$0xf]
        %v4978 = vld [vmem:[%s4933 + $0xb0] sm:$0xf]
        %v4979 = vld [vmem:[%s4933 + $0xb4] sm:$0xf]
        %v4980 = vld [vmem:[%s4933 + $0xb8] sm:$0xf]
        %v4981 = vld [vmem:[%s4933 + $0xbc] sm:$0xf]
        %v5030 = vunpack.c.l.b16 %v4934
        %v5031 = vunpack.c.l.b16 %v4935
        %v5032 = vunpack.c.l.b16 %v4936
        %v5033 = vunpack.c.l.b16 %v4937
        %v5034 = vunpack.c.l.b16 %v4938
        %v5035 = vunpack.c.l.b16 %v4939
        %v5036 = vunpack.c.l.b16 %v4940
        %v5037 = vunpack.c.l.b16 %v4941
        %v5038 = vunpack.c.l.b16 %v4942
        %v5039 = vunpack.c.l.b16 %v4943
        %v5040 = vunpack.c.l.b16 %v4944
        %v5041 = vunpack.c.l.b16 %v4945
        %v5042 = vunpack.c.l.b16 %v4946
        %v5043 = vunpack.c.l.b16 %v4947
        %v5044 = vunpack.c.l.b16 %v4948
        %v5045 = vunpack.c.l.b16 %v4949
        %v5046 = vunpack.c.l.b16 %v4950
        %v5047 = vunpack.c.l.b16 %v4951
        %v5048 = vunpack.c.l.b16 %v4952
        %v5049 = vunpack.c.l.b16 %v4953
        %v5050 = vunpack.c.l.b16 %v4954
        %v5051 = vunpack.c.l.b16 %v4955
        %v5052 = vunpack.c.l.b16 %v4956
        %v5053 = vunpack.c.l.b16 %v4957
        %v5054 = vunpack.c.l.b16 %v4958
        %v5055 = vunpack.c.l.b16 %v4959
        %v5056 = vunpack.c.l.b16 %v4960
        %v5057 = vunpack.c.l.b16 %v4961
        %v5058 = vunpack.c.l.b16 %v4962
        %v5059 = vunpack.c.l.b16 %v4963
        %v5060 = vunpack.c.l.b16 %v4964
        %v5061 = vunpack.c.l.b16 %v4965
        %v5062 = vunpack.c.l.b16 %v4966
        %v5063 = vunpack.c.l.b16 %v4967
        %v5064 = vunpack.c.l.b16 %v4968
        %v5065 = vunpack.c.l.b16 %v4969
        %v5066 = vunpack.c.l.b16 %v4970
        %v5067 = vunpack.c.l.b16 %v4971
        %v5068 = vunpack.c.l.b16 %v4972
        %v5069 = vunpack.c.l.b16 %v4973
        %v5070 = vunpack.c.l.b16 %v4974
        %v5071 = vunpack.c.l.b16 %v4975
        %v5072 = vunpack.c.l.b16 %v4976
        %v5073 = vunpack.c.l.b16 %v4977
        %v5074 = vunpack.c.l.b16 %v4978
        %v5075 = vunpack.c.l.b16 %v4979
        %v5076 = vunpack.c.l.b16 %v4980
        %v5077 = vunpack.c.l.b16 %v4981
        %v5078 = vpack.c.b16 %v5031, %v5030
        %v5079 = vpack.c.b16 %v5033, %v5032
        %v5080 = vpack.c.b16 %v5035, %v5034
        %v5081 = vpack.c.b16 %v5037, %v5036
        %v5082 = vpack.c.b16 %v5039, %v5038
        %v5083 = vpack.c.b16 %v5041, %v5040
        %v5084 = vpack.c.b16 %v5043, %v5042
        %v5085 = vpack.c.b16 %v5045, %v5044
        %v5086 = vpack.c.b16 %v5047, %v5046
        %v5087 = vpack.c.b16 %v5049, %v5048
        %v5088 = vpack.c.b16 %v5051, %v5050
        %v5089 = vpack.c.b16 %v5053, %v5052
        %v5090 = vpack.c.b16 %v5055, %v5054
        %v5091 = vpack.c.b16 %v5057, %v5056
        %v5092 = vpack.c.b16 %v5059, %v5058
        %v5093 = vpack.c.b16 %v5061, %v5060
        %v5094 = vpack.c.b16 %v5063, %v5062
        %v5095 = vpack.c.b16 %v5065, %v5064
        %v5096 = vpack.c.b16 %v5067, %v5066
        %v5097 = vpack.c.b16 %v5069, %v5068
        %v5098 = vpack.c.b16 %v5071, %v5070
        %v5099 = vpack.c.b16 %v5073, %v5072
        %v5100 = vpack.c.b16 %v5075, %v5074
        %v5101 = vpack.c.b16 %v5077, %v5076
        %5126 = vmatpush.bf16.msra.mxu0 %v5085
        %5127 = vmatpush.bf16.msra.mxu0 %v5084
        %5128 = vmatpush.bf16.msra.mxu0 %v5083
        %5129 = vmatpush.bf16.msra.mxu0 %v5082
        %5130 = vmatpush.bf16.msra.mxu0 %v5081
        %5131 = vmatpush.bf16.msra.mxu0 %v5080
        %5132 = vmatpush.bf16.msra.mxu0 %v5079
        %5133 = vmatpush.bf16.msra.mxu0 %v5078
        %5134 = vmatmul.bf16.gmra.mxu0 %v4853
        %v5135 = vpop.f32.mrf.mxu0
        %v5136 = vadd.f32 0.0, %v5135
        %v5137 = vpop.f32.mrf.mxu0
        %v5138 = vadd.f32 0.0, %v5137
        %5139 = vmatmul.bf16.gmra.mxu0 %v4856
        %v5140 = vpop.f32.mrf.mxu0
        %v5141 = vadd.f32 0.0, %v5140
        %v5142 = vpop.f32.mrf.mxu0
        %v5143 = vadd.f32 0.0, %v5142
        %5144 = vmatmul.bf16.gmra.mxu0 %v4859
        %v5145 = vpop.f32.mrf.mxu0
        %v5146 = vadd.f32 0.0, %v5145
        %v5147 = vpop.f32.mrf.mxu0
        %v5148 = vadd.f32 0.0, %v5147
        %5149 = vmatmul.bf16.gmra.mxu0 %v4862
        %v5150 = vpop.f32.mrf.mxu0
        %v5151 = vadd.f32 0.0, %v5150
        %v5152 = vpop.f32.mrf.mxu0
        %v5153 = vadd.f32 0.0, %v5152
        %5154 = vmatmul.bf16.gmra.mxu0 %v4865
        %v5155 = vpop.f32.mrf.mxu0
        %v5156 = vadd.f32 0.0, %v5155
        %v5157 = vpop.f32.mrf.mxu0
        %v5158 = vadd.f32 0.0, %v5157
        %5159 = vmatmul.bf16.gmra.mxu0 %v4868
        %v5160 = vpop.f32.mrf.mxu0
        %v5161 = vadd.f32 0.0, %v5160
        %v5162 = vpop.f32.mrf.mxu0
        %v5163 = vadd.f32 0.0, %v5162
        %5164 = vmatmul.bf16.gmra.mxu0 %v4871
        %v5165 = vpop.f32.mrf.mxu0
        %v5166 = vadd.f32 0.0, %v5165
        %v5167 = vpop.f32.mrf.mxu0
        %v5168 = vadd.f32 0.0, %v5167
        %5169 = vmatmul.bf16.gmra.mxu0 %v4874
        %v5170 = vpop.f32.mrf.mxu0
        %v5171 = vadd.f32 0.0, %v5170
        %v5172 = vpop.f32.mrf.mxu0
        %v5173 = vadd.f32 0.0, %v5172
        %5174 = vmatmul.bf16.gmra.mxu0 %v4877
        %v5175 = vpop.f32.mrf.mxu0
        %v5176 = vadd.f32 0.0, %v5175
        %v5177 = vpop.f32.mrf.mxu0
        %v5178 = vadd.f32 0.0, %v5177
        %5179 = vmatmul.bf16.gmra.mxu0 %v4880
        %v5180 = vpop.f32.mrf.mxu0
        %v5181 = vadd.f32 0.0, %v5180
        %v5182 = vpop.f32.mrf.mxu0
        %v5183 = vadd.f32 0.0, %v5182
        %5184 = vmatmul.bf16.gmra.mxu0 %v4883
        %v5185 = vpop.f32.mrf.mxu0
        %v5186 = vadd.f32 0.0, %v5185
        %v5187 = vpop.f32.mrf.mxu0
        %v5188 = vadd.f32 0.0, %v5187
        %5189 = vmatmul.bf16.gmra.mxu0 %v4886
        %v5190 = vpop.f32.mrf.mxu0
        %v5191 = vadd.f32 0.0, %v5190
        %v5192 = vpop.f32.mrf.mxu0
        %v5193 = vadd.f32 0.0, %v5192
        %5194 = vmatmul.bf16.gmra.mxu0 %v4889
        %v5195 = vpop.f32.mrf.mxu0
        %v5196 = vadd.f32 0.0, %v5195
        %v5197 = vpop.f32.mrf.mxu0
        %v5198 = vadd.f32 0.0, %v5197
        %5199 = vmatmul.bf16.gmra.mxu0 %v4892
        %v5200 = vpop.f32.mrf.mxu0
        %v5201 = vadd.f32 0.0, %v5200
        %v5202 = vpop.f32.mrf.mxu0
        %v5203 = vadd.f32 0.0, %v5202
        %5204 = vmatmul.bf16.gmra.mxu0 %v4895
        %v5205 = vpop.f32.mrf.mxu0
        %v5206 = vadd.f32 0.0, %v5205
        %v5207 = vpop.f32.mrf.mxu0
        %v5208 = vadd.f32 0.0, %v5207
        %5209 = vmatmul.bf16.gmra.mxu0 %v4898
        %v5210 = vpop.f32.mrf.mxu0
        %v5211 = vadd.f32 0.0, %v5210
        %v5212 = vpop.f32.mrf.mxu0
        %v5213 = vadd.f32 0.0, %v5212
        %5214 = vdwg.mxu0
        %5215 = vmatpush.bf16.msra.mxu0 %v5093
        %5216 = vmatpush.bf16.msra.mxu0 %v5092
        %5217 = vmatpush.bf16.msra.mxu0 %v5091
        %5218 = vmatpush.bf16.msra.mxu0 %v5090
        %5219 = vmatpush.bf16.msra.mxu0 %v5089
        %5220 = vmatpush.bf16.msra.mxu0 %v5088
        %5221 = vmatpush.bf16.msra.mxu0 %v5087
        %5222 = vmatpush.bf16.msra.mxu0 %v5086
        %5223 = vmatmul.bf16.gmra.mxu0 %v4854
        %v5224 = vpop.f32.mrf.mxu0
        %v5225 = vadd.f32 %v5136, %v5224
        %v5226 = vpop.f32.mrf.mxu0
        %v5227 = vadd.f32 %v5138, %v5226
        %5228 = vmatmul.bf16.gmra.mxu0 %v4857
        %v5229 = vpop.f32.mrf.mxu0
        %v5230 = vadd.f32 %v5141, %v5229
        %v5231 = vpop.f32.mrf.mxu0
        %v5232 = vadd.f32 %v5143, %v5231
        %5233 = vmatmul.bf16.gmra.mxu0 %v4860
        %v5234 = vpop.f32.mrf.mxu0
        %v5235 = vadd.f32 %v5146, %v5234
        %v5236 = vpop.f32.mrf.mxu0
        %v5237 = vadd.f32 %v5148, %v5236
        %5238 = vmatmul.bf16.gmra.mxu0 %v4863
        %v5239 = vpop.f32.mrf.mxu0
        %v5240 = vadd.f32 %v5151, %v5239
        %v5241 = vpop.f32.mrf.mxu0
        %v5242 = vadd.f32 %v5153, %v5241
        %5243 = vmatmul.bf16.gmra.mxu0 %v4866
        %v5244 = vpop.f32.mrf.mxu0
        %v5245 = vadd.f32 %v5156, %v5244
        %v5246 = vpop.f32.mrf.mxu0
        %v5247 = vadd.f32 %v5158, %v5246
        %5248 = vmatmul.bf16.gmra.mxu0 %v4869
        %v5249 = vpop.f32.mrf.mxu0
        %v5250 = vadd.f32 %v5161, %v5249
        %v5251 = vpop.f32.mrf.mxu0
        %v5252 = vadd.f32 %v5163, %v5251
        %5253 = vmatmul.bf16.gmra.mxu0 %v4872
        %v5254 = vpop.f32.mrf.mxu0
        %v5255 = vadd.f32 %v5166, %v5254
        %v5256 = vpop.f32.mrf.mxu0
        %v5257 = vadd.f32 %v5168, %v5256
        %5258 = vmatmul.bf16.gmra.mxu0 %v4875
        %v5259 = vpop.f32.mrf.mxu0
        %v5260 = vadd.f32 %v5171, %v5259
        %v5261 = vpop.f32.mrf.mxu0
        %v5262 = vadd.f32 %v5173, %v5261
        %5263 = vmatmul.bf16.gmra.mxu0 %v4878
        %v5264 = vpop.f32.mrf.mxu0
        %v5265 = vadd.f32 %v5176, %v5264
        %v5266 = vpop.f32.mrf.mxu0
        %v5267 = vadd.f32 %v5178, %v5266
        %5268 = vmatmul.bf16.gmra.mxu0 %v4881
        %v5269 = vpop.f32.mrf.mxu0
        %v5270 = vadd.f32 %v5181, %v5269
        %v5271 = vpop.f32.mrf.mxu0
        %v5272 = vadd.f32 %v5183, %v5271
        %5273 = vmatmul.bf16.gmra.mxu0 %v4884
        %v5274 = vpop.f32.mrf.mxu0
        %v5275 = vadd.f32 %v5186, %v5274
        %v5276 = vpop.f32.mrf.mxu0
        %v5277 = vadd.f32 %v5188, %v5276
        %5278 = vmatmul.bf16.gmra.mxu0 %v4887
        %v5279 = vpop.f32.mrf.mxu0
        %v5280 = vadd.f32 %v5191, %v5279
        %v5281 = vpop.f32.mrf.mxu0
        %v5282 = vadd.f32 %v5193, %v5281
        %5283 = vmatmul.bf16.gmra.mxu0 %v4890
        %v5284 = vpop.f32.mrf.mxu0
        %v5285 = vadd.f32 %v5196, %v5284
        %v5286 = vpop.f32.mrf.mxu0
        %v5287 = vadd.f32 %v5198, %v5286
        %5288 = vmatmul.bf16.gmra.mxu0 %v4893
        %v5289 = vpop.f32.mrf.mxu0
        %v5290 = vadd.f32 %v5201, %v5289
        %v5291 = vpop.f32.mrf.mxu0
        %v5292 = vadd.f32 %v5203, %v5291
        %5293 = vmatmul.bf16.gmra.mxu0 %v4896
        %v5294 = vpop.f32.mrf.mxu0
        %v5295 = vadd.f32 %v5206, %v5294
        %v5296 = vpop.f32.mrf.mxu0
        %v5297 = vadd.f32 %v5208, %v5296
        %5298 = vmatmul.bf16.gmra.mxu0 %v4899
        %v5299 = vpop.f32.mrf.mxu0
        %v5300 = vadd.f32 %v5211, %v5299
        %v5301 = vpop.f32.mrf.mxu0
        %v5302 = vadd.f32 %v5213, %v5301
        %5303 = vdwg.mxu0
        %5304 = vmatpush.bf16.msra.mxu0 %v5101
        %5305 = vmatpush.bf16.msra.mxu0 %v5100
        %5306 = vmatpush.bf16.msra.mxu0 %v5099
        %5307 = vmatpush.bf16.msra.mxu0 %v5098
        %5308 = vmatpush.bf16.msra.mxu0 %v5097
        %5309 = vmatpush.bf16.msra.mxu0 %v5096
        %5310 = vmatpush.bf16.msra.mxu0 %v5095
        %5311 = vmatpush.bf16.msra.mxu0 %v5094
        %5312 = vmatmul.bf16.gmra.mxu0 %v4855
        %v5313 = vpop.f32.mrf.mxu0
        %v5314 = vadd.f32 %v5225, %v5313
        %v5315 = vpop.f32.mrf.mxu0
        %v5316 = vadd.f32 %v5227, %v5315
        %5317 = vmatmul.bf16.gmra.mxu0 %v4858
        %v5318 = vpop.f32.mrf.mxu0
        %v5319 = vadd.f32 %v5230, %v5318
        %v5320 = vpop.f32.mrf.mxu0
        %v5321 = vadd.f32 %v5232, %v5320
        %5322 = vmatmul.bf16.gmra.mxu0 %v4861
        %v5323 = vpop.f32.mrf.mxu0
        %v5324 = vadd.f32 %v5235, %v5323
        %v5325 = vpop.f32.mrf.mxu0
        %v5326 = vadd.f32 %v5237, %v5325
        %5327 = vmatmul.bf16.gmra.mxu0 %v4864
        %v5328 = vpop.f32.mrf.mxu0
        %v5329 = vadd.f32 %v5240, %v5328
        %v5330 = vpop.f32.mrf.mxu0
        %v5331 = vadd.f32 %v5242, %v5330
        %5332 = vmatmul.bf16.gmra.mxu0 %v4867
        %v5333 = vpop.f32.mrf.mxu0
        %v5334 = vadd.f32 %v5245, %v5333
        %v5335 = vpop.f32.mrf.mxu0
        %v5336 = vadd.f32 %v5247, %v5335
        %5337 = vmatmul.bf16.gmra.mxu0 %v4870
        %v5338 = vpop.f32.mrf.mxu0
        %v5339 = vadd.f32 %v5250, %v5338
        %v5340 = vpop.f32.mrf.mxu0
        %v5341 = vadd.f32 %v5252, %v5340
        %5342 = vmatmul.bf16.gmra.mxu0 %v4873
        %v5343 = vpop.f32.mrf.mxu0
        %v5344 = vadd.f32 %v5255, %v5343
        %v5345 = vpop.f32.mrf.mxu0
        %v5346 = vadd.f32 %v5257, %v5345
        %5347 = vmatmul.bf16.gmra.mxu0 %v4876
        %v5348 = vpop.f32.mrf.mxu0
        %v5349 = vadd.f32 %v5260, %v5348
        %v5350 = vpop.f32.mrf.mxu0
        %v5351 = vadd.f32 %v5262, %v5350
        %5352 = vmatmul.bf16.gmra.mxu0 %v4879
        %v5353 = vpop.f32.mrf.mxu0
        %v5354 = vadd.f32 %v5265, %v5353
        %v5355 = vpop.f32.mrf.mxu0
        %v5356 = vadd.f32 %v5267, %v5355
        %5357 = vmatmul.bf16.gmra.mxu0 %v4882
        %v5358 = vpop.f32.mrf.mxu0
        %v5359 = vadd.f32 %v5270, %v5358
        %v5360 = vpop.f32.mrf.mxu0
        %v5361 = vadd.f32 %v5272, %v5360
        %5362 = vmatmul.bf16.gmra.mxu0 %v4885
        %v5363 = vpop.f32.mrf.mxu0
        %v5364 = vadd.f32 %v5275, %v5363
        %v5365 = vpop.f32.mrf.mxu0
        %v5366 = vadd.f32 %v5277, %v5365
        %5367 = vmatmul.bf16.gmra.mxu0 %v4888
        %v5368 = vpop.f32.mrf.mxu0
        %v5369 = vadd.f32 %v5280, %v5368
        %v5370 = vpop.f32.mrf.mxu0
        %v5371 = vadd.f32 %v5282, %v5370
        %5372 = vmatmul.bf16.gmra.mxu0 %v4891
        %v5373 = vpop.f32.mrf.mxu0
        %v5374 = vadd.f32 %v5285, %v5373
        %v5375 = vpop.f32.mrf.mxu0
        %v5376 = vadd.f32 %v5287, %v5375
        %5377 = vmatmul.bf16.gmra.mxu0 %v4894
        %v5378 = vpop.f32.mrf.mxu0
        %v5379 = vadd.f32 %v5290, %v5378
        %v5380 = vpop.f32.mrf.mxu0
        %v5381 = vadd.f32 %v5292, %v5380
        %5382 = vmatmul.bf16.gmra.mxu0 %v4897
        %v5383 = vpop.f32.mrf.mxu0
        %v5384 = vadd.f32 %v5295, %v5383
        %v5385 = vpop.f32.mrf.mxu0
        %v5386 = vadd.f32 %v5297, %v5385
        %5387 = vmatmul.bf16.gmra.mxu0 %v4900
        %v5388 = vpop.f32.mrf.mxu0
        %v5389 = vadd.f32 %v5300, %v5388
        %v5390 = vpop.f32.mrf.mxu0
        %v5391 = vadd.f32 %v5302, %v5390
        %5392 = vdwg.mxu0
        %v5393 = vadd.f32 %v4901, %v5314
        %v5394 = vadd.f32 %v4902, %v5316
        %v5395 = vadd.f32 %v4903, %v5319
        %v5396 = vadd.f32 %v4904, %v5321
        %v5397 = vadd.f32 %v4905, %v5324
        %v5398 = vadd.f32 %v4906, %v5326
        %v5399 = vadd.f32 %v4907, %v5329
        %v5400 = vadd.f32 %v4908, %v5331
        %v5401 = vadd.f32 %v4909, %v5334
        %v5402 = vadd.f32 %v4910, %v5336
        %v5403 = vadd.f32 %v4911, %v5339
        %v5404 = vadd.f32 %v4912, %v5341
        %v5405 = vadd.f32 %v4913, %v5344
        %v5406 = vadd.f32 %v4914, %v5346
        %v5407 = vadd.f32 %v4915, %v5349
        %v5408 = vadd.f32 %v4916, %v5351
        %v5409 = vadd.f32 %v4917, %v5354
        %v5410 = vadd.f32 %v4918, %v5356
        %v5411 = vadd.f32 %v4919, %v5359
        %v5412 = vadd.f32 %v4920, %v5361
        %v5413 = vadd.f32 %v4921, %v5364
        %v5414 = vadd.f32 %v4922, %v5366
        %v5415 = vadd.f32 %v4923, %v5369
        %v5416 = vadd.f32 %v4924, %v5371
        %v5417 = vadd.f32 %v4925, %v5374
        %v5418 = vadd.f32 %v4926, %v5376
        %v5419 = vadd.f32 %v4927, %v5379
        %v5420 = vadd.f32 %v4928, %v5381
        %v5421 = vadd.f32 %v4929, %v5384
        %v5422 = vadd.f32 %v4930, %v5386
        %v5423 = vadd.f32 %v4931, %v5389
        %v5424 = vadd.f32 %v4932, %v5391
        %5425 = vst [vmem:[#allocation5] sm:$0xff] %v5393
        %5426 = vst [vmem:[#allocation5 + $0x8] sm:$0xff] %v5394
        %5427 = vst [vmem:[#allocation5 + $0x10] sm:$0xff] %v5395
        %5428 = vst [vmem:[#allocation5 + $0x18] sm:$0xff] %v5396
        %5429 = vst [vmem:[#allocation5 + $0x20] sm:$0xff] %v5397
        %5430 = vst [vmem:[#allocation5 + $0x28] sm:$0xff] %v5398
        %5431 = vst [vmem:[#allocation5 + $0x30] sm:$0xff] %v5399
        %5432 = vst [vmem:[#allocation5 + $0x38] sm:$0xff] %v5400
        %5433 = vst [vmem:[#allocation5 + $0x40] sm:$0xff] %v5401
        %5434 = vst [vmem:[#allocation5 + $0x48] sm:$0xff] %v5402
        %5435 = vst [vmem:[#allocation5 + $0x50] sm:$0xff] %v5403
        %5436 = vst [vmem:[#allocation5 + $0x58] sm:$0xff] %v5404
        %5437 = vst [vmem:[#allocation5 + $0x60] sm:$0xff] %v5405
        %5438 = vst [vmem:[#allocation5 + $0x68] sm:$0xff] %v5406
        %5439 = vst [vmem:[#allocation5 + $0x70] sm:$0xff] %v5407
        %5440 = vst [vmem:[#allocation5 + $0x78] sm:$0xff] %v5408
        %5441 = vst [vmem:[#allocation5 + $0x80] sm:$0xff] %v5409
        %5442 = vst [vmem:[#allocation5 + $0x88] sm:$0xff] %v5410
        %5443 = vst [vmem:[#allocation5 + $0x90] sm:$0xff] %v5411
        %5444 = vst [vmem:[#allocation5 + $0x98] sm:$0xff] %v5412
        %5445 = vst [vmem:[#allocation5 + $0xa0] sm:$0xff] %v5413
        %5446 = vst [vmem:[#allocation5 + $0xa8] sm:$0xff] %v5414
        %5447 = vst [vmem:[#allocation5 + $0xb0] sm:$0xff] %v5415
        %5448 = vst [vmem:[#allocation5 + $0xb8] sm:$0xff] %v5416
        %5449 = vst [vmem:[#allocation5 + $0xc0] sm:$0xff] %v5417
        %5450 = vst [vmem:[#allocation5 + $0xc8] sm:$0xff] %v5418
        %5451 = vst [vmem:[#allocation5 + $0xd0] sm:$0xff] %v5419
        %5452 = vst [vmem:[#allocation5 + $0xd8] sm:$0xff] %v5420
        %5453 = vst [vmem:[#allocation5 + $0xe0] sm:$0xff] %v5421
        %5454 = vst [vmem:[#allocation5 + $0xe8] sm:$0xff] %v5422
        %5455 = vst [vmem:[#allocation5 + $0xf0] sm:$0xff] %v5423
        %5456 = vst [vmem:[#allocation5 + $0xf8] sm:$0xff] %v5424
        %v5457 = vld [vmem:[%s2430] sm:$0xff]
        %v5458 = vld [vmem:[%s2430 + $0x8] sm:$0xff]
        %v5459 = vld [vmem:[%s2430 + $0x10] sm:$0x3]
        %v5460 = vld [vmem:[%s2430 + $0x18] sm:$0xff]
        %v5461 = vld [vmem:[%s2430 + $0x20] sm:$0xff]
        %v5462 = vld [vmem:[%s2430 + $0x28] sm:$0x3]
        %v5463 = vld [vmem:[%s2430 + $0x30] sm:$0xff]
        %v5464 = vld [vmem:[%s2430 + $0x38] sm:$0xff]
        %v5465 = vld [vmem:[%s2430 + $0x40] sm:$0x3]
        %v5466 = vld [vmem:[%s2430 + $0x48] sm:$0xff]
        %v5467 = vld [vmem:[%s2430 + $0x50] sm:$0xff]
        %v5468 = vld [vmem:[%s2430 + $0x58] sm:$0x3]
        %v5469 = vld [vmem:[%s2430 + $0x60] sm:$0xff]
        %v5470 = vld [vmem:[%s2430 + $0x68] sm:$0xff]
        %v5471 = vld [vmem:[%s2430 + $0x70] sm:$0x3]
        %v5472 = vld [vmem:[%s2430 + $0x78] sm:$0xff]
        %v5473 = vld [vmem:[%s2430 + $0x80] sm:$0xff]
        %v5474 = vld [vmem:[%s2430 + $0x88] sm:$0x3]
        %v5475 = vld [vmem:[%s2430 + $0x90] sm:$0xff]
        %v5476 = vld [vmem:[%s2430 + $0x98] sm:$0xff]
        %v5477 = vld [vmem:[%s2430 + $0xa0] sm:$0x3]
        %v5478 = vld [vmem:[%s2430 + $0xa8] sm:$0xff]
        %v5479 = vld [vmem:[%s2430 + $0xb0] sm:$0xff]
        %v5480 = vld [vmem:[%s2430 + $0xb8] sm:$0x3]
        %v5481 = vld [vmem:[%s2430 + $0xc0] sm:$0xff]
        %v5482 = vld [vmem:[%s2430 + $0xc8] sm:$0xff]
        %v5483 = vld [vmem:[%s2430 + $0xd0] sm:$0x3]
        %v5484 = vld [vmem:[%s2430 + $0xd8] sm:$0xff]
        %v5485 = vld [vmem:[%s2430 + $0xe0] sm:$0xff]
        %v5486 = vld [vmem:[%s2430 + $0xe8] sm:$0x3]
        %v5487 = vld [vmem:[%s2430 + $0xf0] sm:$0xff]
        %v5488 = vld [vmem:[%s2430 + $0xf8] sm:$0xff]
        %v5489 = vld [vmem:[%s2430 + $0x100] sm:$0x3]
        %v5490 = vld [vmem:[%s2430 + $0x108] sm:$0xff]
        %v5491 = vld [vmem:[%s2430 + $0x110] sm:$0xff]
        %v5492 = vld [vmem:[%s2430 + $0x118] sm:$0x3]
        %v5493 = vld [vmem:[%s2430 + $0x120] sm:$0xff]
        %v5494 = vld [vmem:[%s2430 + $0x128] sm:$0xff]
        %v5495 = vld [vmem:[%s2430 + $0x130] sm:$0x3]
        %v5496 = vld [vmem:[%s2430 + $0x138] sm:$0xff]
        %v5497 = vld [vmem:[%s2430 + $0x140] sm:$0xff]
        %v5498 = vld [vmem:[%s2430 + $0x148] sm:$0x3]
        %v5499 = vld [vmem:[%s2430 + $0x150] sm:$0xff]
        %v5500 = vld [vmem:[%s2430 + $0x158] sm:$0xff]
        %v5501 = vld [vmem:[%s2430 + $0x160] sm:$0x3]
        %v5502 = vld [vmem:[%s2430 + $0x168] sm:$0xff]
        %v5503 = vld [vmem:[%s2430 + $0x170] sm:$0xff]
        %v5504 = vld [vmem:[%s2430 + $0x178] sm:$0x3]
        %v5553 = vrot.slane %v5457, 1
        %v5554 = vrot.slane %v5458, 1
        %v5555 = vsel %vm677, %v5553, %v5554
        %v5556 = vrot.slane %v5459, 1
        %v5557 = vsel %vm677, %v5554, %v5556
        %v5558 = vrot.slane %v5460, 1
        %v5559 = vrot.slane %v5461, 1
        %v5560 = vsel %vm677, %v5558, %v5559
        %v5561 = vrot.slane %v5462, 1
        %v5562 = vsel %vm677, %v5559, %v5561
        %v5563 = vrot.slane %v5463, 1
        %v5564 = vrot.slane %v5464, 1
        %v5565 = vsel %vm677, %v5563, %v5564
        %v5566 = vrot.slane %v5465, 1
        %v5567 = vsel %vm677, %v5564, %v5566
        %v5568 = vrot.slane %v5466, 1
        %v5569 = vrot.slane %v5467, 1
        %v5570 = vsel %vm677, %v5568, %v5569
        %v5571 = vrot.slane %v5468, 1
        %v5572 = vsel %vm677, %v5569, %v5571
        %v5573 = vrot.slane %v5469, 1
        %v5574 = vrot.slane %v5470, 1
        %v5575 = vsel %vm677, %v5573, %v5574
        %v5576 = vrot.slane %v5471, 1
        %v5577 = vsel %vm677, %v5574, %v5576
        %v5578 = vrot.slane %v5472, 1
        %v5579 = vrot.slane %v5473, 1
        %v5580 = vsel %vm677, %v5578, %v5579
        %v5581 = vrot.slane %v5474, 1
        %v5582 = vsel %vm677, %v5579, %v5581
        %v5583 = vrot.slane %v5475, 1
        %v5584 = vrot.slane %v5476, 1
        %v5585 = vsel %vm677, %v5583, %v5584
        %v5586 = vrot.slane %v5477, 1
        %v5587 = vsel %vm677, %v5584, %v5586
        %v5588 = vrot.slane %v5478, 1
        %v5589 = vrot.slane %v5479, 1
        %v5590 = vsel %vm677, %v5588, %v5589
        %v5591 = vrot.slane %v5480, 1
        %v5592 = vsel %vm677, %v5589, %v5591
        %v5593 = vrot.slane %v5481, 1
        %v5594 = vrot.slane %v5482, 1
        %v5595 = vsel %vm677, %v5593, %v5594
        %v5596 = vrot.slane %v5483, 1
        %v5597 = vsel %vm677, %v5594, %v5596
        %v5598 = vrot.slane %v5484, 1
        %v5599 = vrot.slane %v5485, 1
        %v5600 = vsel %vm677, %v5598, %v5599
        %v5601 = vrot.slane %v5486, 1
        %v5602 = vsel %vm677, %v5599, %v5601
        %v5603 = vrot.slane %v5487, 1
        %v5604 = vrot.slane %v5488, 1
        %v5605 = vsel %vm677, %v5603, %v5604
        %v5606 = vrot.slane %v5489, 1
        %v5607 = vsel %vm677, %v5604, %v5606
        %v5608 = vrot.slane %v5490, 1
        %v5609 = vrot.slane %v5491, 1
        %v5610 = vsel %vm677, %v5608, %v5609
        %v5611 = vrot.slane %v5492, 1
        %v5612 = vsel %vm677, %v5609, %v5611
        %v5613 = vrot.slane %v5493, 1
        %v5614 = vrot.slane %v5494, 1
        %v5615 = vsel %vm677, %v5613, %v5614
        %v5616 = vrot.slane %v5495, 1
        %v5617 = vsel %vm677, %v5614, %v5616
        %v5618 = vrot.slane %v5496, 1
        %v5619 = vrot.slane %v5497, 1
        %v5620 = vsel %vm677, %v5618, %v5619
        %v5621 = vrot.slane %v5498, 1
        %v5622 = vsel %vm677, %v5619, %v5621
        %v5623 = vrot.slane %v5499, 1
        %v5624 = vrot.slane %v5500, 1
        %v5625 = vsel %vm677, %v5623, %v5624
        %v5626 = vrot.slane %v5501, 1
        %v5627 = vsel %vm677, %v5624, %v5626
        %v5628 = vrot.slane %v5502, 1
        %v5629 = vrot.slane %v5503, 1
        %v5630 = vsel %vm677, %v5628, %v5629
        %v5631 = vrot.slane %v5504, 1
        %v5632 = vsel %vm677, %v5629, %v5631
        %v5665 = vrot.slane %v5457, 2
        %v5666 = vrot.slane %v5458, 2
        %v5667 = vsel %vm790, %v5665, %v5666
        %v5668 = vrot.slane %v5459, 2
        %v5669 = vsel %vm790, %v5666, %v5668
        %v5670 = vrot.slane %v5460, 2
        %v5671 = vrot.slane %v5461, 2
        %v5672 = vsel %vm790, %v5670, %v5671
        %v5673 = vrot.slane %v5462, 2
        %v5674 = vsel %vm790, %v5671, %v5673
        %v5675 = vrot.slane %v5463, 2
        %v5676 = vrot.slane %v5464, 2
        %v5677 = vsel %vm790, %v5675, %v5676
        %v5678 = vrot.slane %v5465, 2
        %v5679 = vsel %vm790, %v5676, %v5678
        %v5680 = vrot.slane %v5466, 2
        %v5681 = vrot.slane %v5467, 2
        %v5682 = vsel %vm790, %v5680, %v5681
        %v5683 = vrot.slane %v5468, 2
        %v5684 = vsel %vm790, %v5681, %v5683
        %v5685 = vrot.slane %v5469, 2
        %v5686 = vrot.slane %v5470, 2
        %v5687 = vsel %vm790, %v5685, %v5686
        %v5688 = vrot.slane %v5471, 2
        %v5689 = vsel %vm790, %v5686, %v5688
        %v5690 = vrot.slane %v5472, 2
        %v5691 = vrot.slane %v5473, 2
        %v5692 = vsel %vm790, %v5690, %v5691
        %v5693 = vrot.slane %v5474, 2
        %v5694 = vsel %vm790, %v5691, %v5693
        %v5695 = vrot.slane %v5475, 2
        %v5696 = vrot.slane %v5476, 2
        %v5697 = vsel %vm790, %v5695, %v5696
        %v5698 = vrot.slane %v5477, 2
        %v5699 = vsel %vm790, %v5696, %v5698
        %v5700 = vrot.slane %v5478, 2
        %v5701 = vrot.slane %v5479, 2
        %v5702 = vsel %vm790, %v5700, %v5701
        %v5703 = vrot.slane %v5480, 2
        %v5704 = vsel %vm790, %v5701, %v5703
        %v5705 = vrot.slane %v5481, 2
        %v5706 = vrot.slane %v5482, 2
        %v5707 = vsel %vm790, %v5705, %v5706
        %v5708 = vrot.slane %v5483, 2
        %v5709 = vsel %vm790, %v5706, %v5708
        %v5710 = vrot.slane %v5484, 2
        %v5711 = vrot.slane %v5485, 2
        %v5712 = vsel %vm790, %v5710, %v5711
        %v5713 = vrot.slane %v5486, 2
        %v5714 = vsel %vm790, %v5711, %v5713
        %v5715 = vrot.slane %v5487, 2
        %v5716 = vrot.slane %v5488, 2
        %v5717 = vsel %vm790, %v5715, %v5716
        %v5718 = vrot.slane %v5489, 2
        %v5719 = vsel %vm790, %v5716, %v5718
        %v5720 = vrot.slane %v5490, 2
        %v5721 = vrot.slane %v5491, 2
        %v5722 = vsel %vm790, %v5720, %v5721
        %v5723 = vrot.slane %v5492, 2
        %v5724 = vsel %vm790, %v5721, %v5723
        %v5725 = vrot.slane %v5493, 2
        %v5726 = vrot.slane %v5494, 2
        %v5727 = vsel %vm790, %v5725, %v5726
        %v5728 = vrot.slane %v5495, 2
        %v5729 = vsel %vm790, %v5726, %v5728
        %v5730 = vrot.slane %v5496, 2
        %v5731 = vrot.slane %v5497, 2
        %v5732 = vsel %vm790, %v5730, %v5731
        %v5733 = vrot.slane %v5498, 2
        %v5734 = vsel %vm790, %v5731, %v5733
        %v5735 = vrot.slane %v5499, 2
        %v5736 = vrot.slane %v5500, 2
        %v5737 = vsel %vm790, %v5735, %v5736
        %v5738 = vrot.slane %v5501, 2
        %v5739 = vsel %vm790, %v5736, %v5738
        %v5740 = vrot.slane %v5502, 2
        %v5741 = vrot.slane %v5503, 2
        %v5742 = vsel %vm790, %v5740, %v5741
        %v5743 = vrot.slane %v5504, 2
        %v5744 = vsel %vm790, %v5741, %v5743
        %v5777 = vpack.c.bf16 %v5458, %v5457
        %v5778 = vpack.c.bf16 %v5557, %v5555
        %v5779 = vpack.c.bf16 %v5669, %v5667
        %v5780 = vpack.c.bf16 %v5461, %v5460
        %v5781 = vpack.c.bf16 %v5562, %v5560
        %v5782 = vpack.c.bf16 %v5674, %v5672
        %v5783 = vpack.c.bf16 %v5464, %v5463
        %v5784 = vpack.c.bf16 %v5567, %v5565
        %v5785 = vpack.c.bf16 %v5679, %v5677
        %v5786 = vpack.c.bf16 %v5467, %v5466
        %v5787 = vpack.c.bf16 %v5572, %v5570
        %v5788 = vpack.c.bf16 %v5684, %v5682
        %v5789 = vpack.c.bf16 %v5470, %v5469
        %v5790 = vpack.c.bf16 %v5577, %v5575
        %v5791 = vpack.c.bf16 %v5689, %v5687
        %v5792 = vpack.c.bf16 %v5473, %v5472
        %v5793 = vpack.c.bf16 %v5582, %v5580
        %v5794 = vpack.c.bf16 %v5694, %v5692
        %v5795 = vpack.c.bf16 %v5476, %v5475
        %v5796 = vpack.c.bf16 %v5587, %v5585
        %v5797 = vpack.c.bf16 %v5699, %v5697
        %v5798 = vpack.c.bf16 %v5479, %v5478
        %v5799 = vpack.c.bf16 %v5592, %v5590
        %v5800 = vpack.c.bf16 %v5704, %v5702
        %v5801 = vpack.c.bf16 %v5482, %v5481
        %v5802 = vpack.c.bf16 %v5597, %v5595
        %v5803 = vpack.c.bf16 %v5709, %v5707
        %v5804 = vpack.c.bf16 %v5485, %v5484
        %v5805 = vpack.c.bf16 %v5602, %v5600
        %v5806 = vpack.c.bf16 %v5714, %v5712
        %v5807 = vpack.c.bf16 %v5488, %v5487
        %v5808 = vpack.c.bf16 %v5607, %v5605
        %v5809 = vpack.c.bf16 %v5719, %v5717
        %v5810 = vpack.c.bf16 %v5491, %v5490
        %v5811 = vpack.c.bf16 %v5612, %v5610
        %v5812 = vpack.c.bf16 %v5724, %v5722
        %v5813 = vpack.c.bf16 %v5494, %v5493
        %v5814 = vpack.c.bf16 %v5617, %v5615
        %v5815 = vpack.c.bf16 %v5729, %v5727
        %v5816 = vpack.c.bf16 %v5497, %v5496
        %v5817 = vpack.c.bf16 %v5622, %v5620
        %v5818 = vpack.c.bf16 %v5734, %v5732
        %v5819 = vpack.c.bf16 %v5500, %v5499
        %v5820 = vpack.c.bf16 %v5627, %v5625
        %v5821 = vpack.c.bf16 %v5739, %v5737
        %v5822 = vpack.c.bf16 %v5503, %v5502
        %v5823 = vpack.c.bf16 %v5632, %v5630
        %v5824 = vpack.c.bf16 %v5744, %v5742
        %v5825 = vld [vmem:[#allocation5] sm:$0xff]
        %v5826 = vld [vmem:[#allocation5 + $0x8] sm:$0xff]
        %v5827 = vld [vmem:[#allocation5 + $0x10] sm:$0xff]
        %v5828 = vld [vmem:[#allocation5 + $0x18] sm:$0xff]
        %v5829 = vld [vmem:[#allocation5 + $0x20] sm:$0xff]
        %v5830 = vld [vmem:[#allocation5 + $0x28] sm:$0xff]
        %v5831 = vld [vmem:[#allocation5 + $0x30] sm:$0xff]
        %v5832 = vld [vmem:[#allocation5 + $0x38] sm:$0xff]
        %v5833 = vld [vmem:[#allocation5 + $0x40] sm:$0xff]
        %v5834 = vld [vmem:[#allocation5 + $0x48] sm:$0xff]
        %v5835 = vld [vmem:[#allocation5 + $0x50] sm:$0xff]
        %v5836 = vld [vmem:[#allocation5 + $0x58] sm:$0xff]
        %v5837 = vld [vmem:[#allocation5 + $0x60] sm:$0xff]
        %v5838 = vld [vmem:[#allocation5 + $0x68] sm:$0xff]
        %v5839 = vld [vmem:[#allocation5 + $0x70] sm:$0xff]
        %v5840 = vld [vmem:[#allocation5 + $0x78] sm:$0xff]
        %v5841 = vld [vmem:[#allocation5 + $0x80] sm:$0xff]
        %v5842 = vld [vmem:[#allocation5 + $0x88] sm:$0xff]
        %v5843 = vld [vmem:[#allocation5 + $0x90] sm:$0xff]
        %v5844 = vld [vmem:[#allocation5 + $0x98] sm:$0xff]
        %v5845 = vld [vmem:[#allocation5 + $0xa0] sm:$0xff]
        %v5846 = vld [vmem:[#allocation5 + $0xa8] sm:$0xff]
        %v5847 = vld [vmem:[#allocation5 + $0xb0] sm:$0xff]
        %v5848 = vld [vmem:[#allocation5 + $0xb8] sm:$0xff]
        %v5849 = vld [vmem:[#allocation5 + $0xc0] sm:$0xff]
        %v5850 = vld [vmem:[#allocation5 + $0xc8] sm:$0xff]
        %v5851 = vld [vmem:[#allocation5 + $0xd0] sm:$0xff]
        %v5852 = vld [vmem:[#allocation5 + $0xd8] sm:$0xff]
        %v5853 = vld [vmem:[#allocation5 + $0xe0] sm:$0xff]
        %v5854 = vld [vmem:[#allocation5 + $0xe8] sm:$0xff]
        %v5855 = vld [vmem:[#allocation5 + $0xf0] sm:$0xff]
        %v5856 = vld [vmem:[#allocation5 + $0xf8] sm:$0xff]
        %s5857 = scalar_lea.vmem [#allocation12], 384
        %v5858 = vld [vmem:[%s5857] sm:$0xf]
        %v5859 = vld [vmem:[%s5857 + $0x4] sm:$0xf]
        %v5860 = vld [vmem:[%s5857 + $0x8] sm:$0xf]
        %v5861 = vld [vmem:[%s5857 + $0xc] sm:$0xf]
        %v5862 = vld [vmem:[%s5857 + $0x10] sm:$0xf]
        %v5863 = vld [vmem:[%s5857 + $0x14] sm:$0xf]
        %v5864 = vld [vmem:[%s5857 + $0x18] sm:$0xf]
        %v5865 = vld [vmem:[%s5857 + $0x1c] sm:$0xf]
        %v5866 = vld [vmem:[%s5857 + $0x20] sm:$0xf]
        %v5867 = vld [vmem:[%s5857 + $0x24] sm:$0xf]
        %v5868 = vld [vmem:[%s5857 + $0x28] sm:$0xf]
        %v5869 = vld [vmem:[%s5857 + $0x2c] sm:$0xf]
        %v5870 = vld [vmem:[%s5857 + $0x30] sm:$0xf]
        %v5871 = vld [vmem:[%s5857 + $0x34] sm:$0xf]
        %v5872 = vld [vmem:[%s5857 + $0x38] sm:$0xf]
        %v5873 = vld [vmem:[%s5857 + $0x3c] sm:$0xf]
        %v5874 = vld [vmem:[%s5857 + $0x40] sm:$0xf]
        %v5875 = vld [vmem:[%s5857 + $0x44] sm:$0xf]
        %v5876 = vld [vmem:[%s5857 + $0x48] sm:$0xf]
        %v5877 = vld [vmem:[%s5857 + $0x4c] sm:$0xf]
        %v5878 = vld [vmem:[%s5857 + $0x50] sm:$0xf]
        %v5879 = vld [vmem:[%s5857 + $0x54] sm:$0xf]
        %v5880 = vld [vmem:[%s5857 + $0x58] sm:$0xf]
        %v5881 = vld [vmem:[%s5857 + $0x5c] sm:$0xf]
        %v5882 = vld [vmem:[%s5857 + $0x60] sm:$0xf]
        %v5883 = vld [vmem:[%s5857 + $0x64] sm:$0xf]
        %v5884 = vld [vmem:[%s5857 + $0x68] sm:$0xf]
        %v5885 = vld [vmem:[%s5857 + $0x6c] sm:$0xf]
        %v5886 = vld [vmem:[%s5857 + $0x70] sm:$0xf]
        %v5887 = vld [vmem:[%s5857 + $0x74] sm:$0xf]
        %v5888 = vld [vmem:[%s5857 + $0x78] sm:$0xf]
        %v5889 = vld [vmem:[%s5857 + $0x7c] sm:$0xf]
        %v5890 = vld [vmem:[%s5857 + $0x80] sm:$0xf]
        %v5891 = vld [vmem:[%s5857 + $0x84] sm:$0xf]
        %v5892 = vld [vmem:[%s5857 + $0x88] sm:$0xf]
        %v5893 = vld [vmem:[%s5857 + $0x8c] sm:$0xf]
        %v5894 = vld [vmem:[%s5857 + $0x90] sm:$0xf]
        %v5895 = vld [vmem:[%s5857 + $0x94] sm:$0xf]
        %v5896 = vld [vmem:[%s5857 + $0x98] sm:$0xf]
        %v5897 = vld [vmem:[%s5857 + $0x9c] sm:$0xf]
        %v5898 = vld [vmem:[%s5857 + $0xa0] sm:$0xf]
        %v5899 = vld [vmem:[%s5857 + $0xa4] sm:$0xf]
        %v5900 = vld [vmem:[%s5857 + $0xa8] sm:$0xf]
        %v5901 = vld [vmem:[%s5857 + $0xac] sm:$0xf]
        %v5902 = vld [vmem:[%s5857 + $0xb0] sm:$0xf]
        %v5903 = vld [vmem:[%s5857 + $0xb4] sm:$0xf]
        %v5904 = vld [vmem:[%s5857 + $0xb8] sm:$0xf]
        %v5905 = vld [vmem:[%s5857 + $0xbc] sm:$0xf]
        %v5954 = vunpack.c.l.b16 %v5858
        %v5955 = vunpack.c.l.b16 %v5859
        %v5956 = vunpack.c.l.b16 %v5860
        %v5957 = vunpack.c.l.b16 %v5861
        %v5958 = vunpack.c.l.b16 %v5862
        %v5959 = vunpack.c.l.b16 %v5863
        %v5960 = vunpack.c.l.b16 %v5864
        %v5961 = vunpack.c.l.b16 %v5865
        %v5962 = vunpack.c.l.b16 %v5866
        %v5963 = vunpack.c.l.b16 %v5867
        %v5964 = vunpack.c.l.b16 %v5868
        %v5965 = vunpack.c.l.b16 %v5869
        %v5966 = vunpack.c.l.b16 %v5870
        %v5967 = vunpack.c.l.b16 %v5871
        %v5968 = vunpack.c.l.b16 %v5872
        %v5969 = vunpack.c.l.b16 %v5873
        %v5970 = vunpack.c.l.b16 %v5874
        %v5971 = vunpack.c.l.b16 %v5875
        %v5972 = vunpack.c.l.b16 %v5876
        %v5973 = vunpack.c.l.b16 %v5877
        %v5974 = vunpack.c.l.b16 %v5878
        %v5975 = vunpack.c.l.b16 %v5879
        %v5976 = vunpack.c.l.b16 %v5880
        %v5977 = vunpack.c.l.b16 %v5881
        %v5978 = vunpack.c.l.b16 %v5882
        %v5979 = vunpack.c.l.b16 %v5883
        %v5980 = vunpack.c.l.b16 %v5884
        %v5981 = vunpack.c.l.b16 %v5885
        %v5982 = vunpack.c.l.b16 %v5886
        %v5983 = vunpack.c.l.b16 %v5887
        %v5984 = vunpack.c.l.b16 %v5888
        %v5985 = vunpack.c.l.b16 %v5889
        %v5986 = vunpack.c.l.b16 %v5890
        %v5987 = vunpack.c.l.b16 %v5891
        %v5988 = vunpack.c.l.b16 %v5892
        %v5989 = vunpack.c.l.b16 %v5893
        %v5990 = vunpack.c.l.b16 %v5894
        %v5991 = vunpack.c.l.b16 %v5895
        %v5992 = vunpack.c.l.b16 %v5896
        %v5993 = vunpack.c.l.b16 %v5897
        %v5994 = vunpack.c.l.b16 %v5898
        %v5995 = vunpack.c.l.b16 %v5899
        %v5996 = vunpack.c.l.b16 %v5900
        %v5997 = vunpack.c.l.b16 %v5901
        %v5998 = vunpack.c.l.b16 %v5902
        %v5999 = vunpack.c.l.b16 %v5903
        %v6000 = vunpack.c.l.b16 %v5904
        %v6001 = vunpack.c.l.b16 %v5905
        %v6002 = vpack.c.b16 %v5955, %v5954
        %v6003 = vpack.c.b16 %v5957, %v5956
        %v6004 = vpack.c.b16 %v5959, %v5958
        %v6005 = vpack.c.b16 %v5961, %v5960
        %v6006 = vpack.c.b16 %v5963, %v5962
        %v6007 = vpack.c.b16 %v5965, %v5964
        %v6008 = vpack.c.b16 %v5967, %v5966
        %v6009 = vpack.c.b16 %v5969, %v5968
        %v6010 = vpack.c.b16 %v5971, %v5970
        %v6011 = vpack.c.b16 %v5973, %v5972
        %v6012 = vpack.c.b16 %v5975, %v5974
        %v6013 = vpack.c.b16 %v5977, %v5976
        %v6014 = vpack.c.b16 %v5979, %v5978
        %v6015 = vpack.c.b16 %v5981, %v5980
        %v6016 = vpack.c.b16 %v5983, %v5982
        %v6017 = vpack.c.b16 %v5985, %v5984
        %v6018 = vpack.c.b16 %v5987, %v5986
        %v6019 = vpack.c.b16 %v5989, %v5988
        %v6020 = vpack.c.b16 %v5991, %v5990
        %v6021 = vpack.c.b16 %v5993, %v5992
        %v6022 = vpack.c.b16 %v5995, %v5994
        %v6023 = vpack.c.b16 %v5997, %v5996
        %v6024 = vpack.c.b16 %v5999, %v5998
        %v6025 = vpack.c.b16 %v6001, %v6000
        %6050 = vmatpush.bf16.msra.mxu0 %v6009
        %6051 = vmatpush.bf16.msra.mxu0 %v6008
        %6052 = vmatpush.bf16.msra.mxu0 %v6007
        %6053 = vmatpush.bf16.msra.mxu0 %v6006
        %6054 = vmatpush.bf16.msra.mxu0 %v6005
        %6055 = vmatpush.bf16.msra.mxu0 %v6004
        %6056 = vmatpush.bf16.msra.mxu0 %v6003
        %6057 = vmatpush.bf16.msra.mxu0 %v6002
        %6058 = vmatmul.bf16.gmra.mxu0 %v5777
        %v6059 = vpop.f32.mrf.mxu0
        %v6060 = vadd.f32 0.0, %v6059
        %v6061 = vpop.f32.mrf.mxu0
        %v6062 = vadd.f32 0.0, %v6061
        %6063 = vmatmul.bf16.gmra.mxu0 %v5780
        %v6064 = vpop.f32.mrf.mxu0
        %v6065 = vadd.f32 0.0, %v6064
        %v6066 = vpop.f32.mrf.mxu0
        %v6067 = vadd.f32 0.0, %v6066
        %6068 = vmatmul.bf16.gmra.mxu0 %v5783
        %v6069 = vpop.f32.mrf.mxu0
        %v6070 = vadd.f32 0.0, %v6069
        %v6071 = vpop.f32.mrf.mxu0
        %v6072 = vadd.f32 0.0, %v6071
        %6073 = vmatmul.bf16.gmra.mxu0 %v5786
        %v6074 = vpop.f32.mrf.mxu0
        %v6075 = vadd.f32 0.0, %v6074
        %v6076 = vpop.f32.mrf.mxu0
        %v6077 = vadd.f32 0.0, %v6076
        %6078 = vmatmul.bf16.gmra.mxu0 %v5789
        %v6079 = vpop.f32.mrf.mxu0
        %v6080 = vadd.f32 0.0, %v6079
        %v6081 = vpop.f32.mrf.mxu0
        %v6082 = vadd.f32 0.0, %v6081
        %6083 = vmatmul.bf16.gmra.mxu0 %v5792
        %v6084 = vpop.f32.mrf.mxu0
        %v6085 = vadd.f32 0.0, %v6084
        %v6086 = vpop.f32.mrf.mxu0
        %v6087 = vadd.f32 0.0, %v6086
        %6088 = vmatmul.bf16.gmra.mxu0 %v5795
        %v6089 = vpop.f32.mrf.mxu0
        %v6090 = vadd.f32 0.0, %v6089
        %v6091 = vpop.f32.mrf.mxu0
        %v6092 = vadd.f32 0.0, %v6091
        %6093 = vmatmul.bf16.gmra.mxu0 %v5798
        %v6094 = vpop.f32.mrf.mxu0
        %v6095 = vadd.f32 0.0, %v6094
        %v6096 = vpop.f32.mrf.mxu0
        %v6097 = vadd.f32 0.0, %v6096
        %6098 = vmatmul.bf16.gmra.mxu0 %v5801
        %v6099 = vpop.f32.mrf.mxu0
        %v6100 = vadd.f32 0.0, %v6099
        %v6101 = vpop.f32.mrf.mxu0
        %v6102 = vadd.f32 0.0, %v6101
        %6103 = vmatmul.bf16.gmra.mxu0 %v5804
        %v6104 = vpop.f32.mrf.mxu0
        %v6105 = vadd.f32 0.0, %v6104
        %v6106 = vpop.f32.mrf.mxu0
        %v6107 = vadd.f32 0.0, %v6106
        %6108 = vmatmul.bf16.gmra.mxu0 %v5807
        %v6109 = vpop.f32.mrf.mxu0
        %v6110 = vadd.f32 0.0, %v6109
        %v6111 = vpop.f32.mrf.mxu0
        %v6112 = vadd.f32 0.0, %v6111
        %6113 = vmatmul.bf16.gmra.mxu0 %v5810
        %v6114 = vpop.f32.mrf.mxu0
        %v6115 = vadd.f32 0.0, %v6114
        %v6116 = vpop.f32.mrf.mxu0
        %v6117 = vadd.f32 0.0, %v6116
        %6118 = vmatmul.bf16.gmra.mxu0 %v5813
        %v6119 = vpop.f32.mrf.mxu0
        %v6120 = vadd.f32 0.0, %v6119
        %v6121 = vpop.f32.mrf.mxu0
        %v6122 = vadd.f32 0.0, %v6121
        %6123 = vmatmul.bf16.gmra.mxu0 %v5816
        %v6124 = vpop.f32.mrf.mxu0
        %v6125 = vadd.f32 0.0, %v6124
        %v6126 = vpop.f32.mrf.mxu0
        %v6127 = vadd.f32 0.0, %v6126
        %6128 = vmatmul.bf16.gmra.mxu0 %v5819
        %v6129 = vpop.f32.mrf.mxu0
        %v6130 = vadd.f32 0.0, %v6129
        %v6131 = vpop.f32.mrf.mxu0
        %v6132 = vadd.f32 0.0, %v6131
        %6133 = vmatmul.bf16.gmra.mxu0 %v5822
        %v6134 = vpop.f32.mrf.mxu0
        %v6135 = vadd.f32 0.0, %v6134
        %v6136 = vpop.f32.mrf.mxu0
        %v6137 = vadd.f32 0.0, %v6136
        %6138 = vdwg.mxu0
        %6139 = vmatpush.bf16.msra.mxu0 %v6017
        %6140 = vmatpush.bf16.msra.mxu0 %v6016
        %6141 = vmatpush.bf16.msra.mxu0 %v6015
        %6142 = vmatpush.bf16.msra.mxu0 %v6014
        %6143 = vmatpush.bf16.msra.mxu0 %v6013
        %6144 = vmatpush.bf16.msra.mxu0 %v6012
        %6145 = vmatpush.bf16.msra.mxu0 %v6011
        %6146 = vmatpush.bf16.msra.mxu0 %v6010
        %6147 = vmatmul.bf16.gmra.mxu0 %v5778
        %v6148 = vpop.f32.mrf.mxu0
        %v6149 = vadd.f32 %v6060, %v6148
        %v6150 = vpop.f32.mrf.mxu0
        %v6151 = vadd.f32 %v6062, %v6150
        %6152 = vmatmul.bf16.gmra.mxu0 %v5781
        %v6153 = vpop.f32.mrf.mxu0
        %v6154 = vadd.f32 %v6065, %v6153
        %v6155 = vpop.f32.mrf.mxu0
        %v6156 = vadd.f32 %v6067, %v6155
        %6157 = vmatmul.bf16.gmra.mxu0 %v5784
        %v6158 = vpop.f32.mrf.mxu0
        %v6159 = vadd.f32 %v6070, %v6158
        %v6160 = vpop.f32.mrf.mxu0
        %v6161 = vadd.f32 %v6072, %v6160
        %6162 = vmatmul.bf16.gmra.mxu0 %v5787
        %v6163 = vpop.f32.mrf.mxu0
        %v6164 = vadd.f32 %v6075, %v6163
        %v6165 = vpop.f32.mrf.mxu0
        %v6166 = vadd.f32 %v6077, %v6165
        %6167 = vmatmul.bf16.gmra.mxu0 %v5790
        %v6168 = vpop.f32.mrf.mxu0
        %v6169 = vadd.f32 %v6080, %v6168
        %v6170 = vpop.f32.mrf.mxu0
        %v6171 = vadd.f32 %v6082, %v6170
        %6172 = vmatmul.bf16.gmra.mxu0 %v5793
        %v6173 = vpop.f32.mrf.mxu0
        %v6174 = vadd.f32 %v6085, %v6173
        %v6175 = vpop.f32.mrf.mxu0
        %v6176 = vadd.f32 %v6087, %v6175
        %6177 = vmatmul.bf16.gmra.mxu0 %v5796
        %v6178 = vpop.f32.mrf.mxu0
        %v6179 = vadd.f32 %v6090, %v6178
        %v6180 = vpop.f32.mrf.mxu0
        %v6181 = vadd.f32 %v6092, %v6180
        %6182 = vmatmul.bf16.gmra.mxu0 %v5799
        %v6183 = vpop.f32.mrf.mxu0
        %v6184 = vadd.f32 %v6095, %v6183
        %v6185 = vpop.f32.mrf.mxu0
        %v6186 = vadd.f32 %v6097, %v6185
        %6187 = vmatmul.bf16.gmra.mxu0 %v5802
        %v6188 = vpop.f32.mrf.mxu0
        %v6189 = vadd.f32 %v6100, %v6188
        %v6190 = vpop.f32.mrf.mxu0
        %v6191 = vadd.f32 %v6102, %v6190
        %6192 = vmatmul.bf16.gmra.mxu0 %v5805
        %v6193 = vpop.f32.mrf.mxu0
        %v6194 = vadd.f32 %v6105, %v6193
        %v6195 = vpop.f32.mrf.mxu0
        %v6196 = vadd.f32 %v6107, %v6195
        %6197 = vmatmul.bf16.gmra.mxu0 %v5808
        %v6198 = vpop.f32.mrf.mxu0
        %v6199 = vadd.f32 %v6110, %v6198
        %v6200 = vpop.f32.mrf.mxu0
        %v6201 = vadd.f32 %v6112, %v6200
        %6202 = vmatmul.bf16.gmra.mxu0 %v5811
        %v6203 = vpop.f32.mrf.mxu0
        %v6204 = vadd.f32 %v6115, %v6203
        %v6205 = vpop.f32.mrf.mxu0
        %v6206 = vadd.f32 %v6117, %v6205
        %6207 = vmatmul.bf16.gmra.mxu0 %v5814
        %v6208 = vpop.f32.mrf.mxu0
        %v6209 = vadd.f32 %v6120, %v6208
        %v6210 = vpop.f32.mrf.mxu0
        %v6211 = vadd.f32 %v6122, %v6210
        %6212 = vmatmul.bf16.gmra.mxu0 %v5817
        %v6213 = vpop.f32.mrf.mxu0
        %v6214 = vadd.f32 %v6125, %v6213
        %v6215 = vpop.f32.mrf.mxu0
        %v6216 = vadd.f32 %v6127, %v6215
        %6217 = vmatmul.bf16.gmra.mxu0 %v5820
        %v6218 = vpop.f32.mrf.mxu0
        %v6219 = vadd.f32 %v6130, %v6218
        %v6220 = vpop.f32.mrf.mxu0
        %v6221 = vadd.f32 %v6132, %v6220
        %6222 = vmatmul.bf16.gmra.mxu0 %v5823
        %v6223 = vpop.f32.mrf.mxu0
        %v6224 = vadd.f32 %v6135, %v6223
        %v6225 = vpop.f32.mrf.mxu0
        %v6226 = vadd.f32 %v6137, %v6225
        %6227 = vdwg.mxu0
        %6228 = vmatpush.bf16.msra.mxu0 %v6025
        %6229 = vmatpush.bf16.msra.mxu0 %v6024
        %6230 = vmatpush.bf16.msra.mxu0 %v6023
        %6231 = vmatpush.bf16.msra.mxu0 %v6022
        %6232 = vmatpush.bf16.msra.mxu0 %v6021
        %6233 = vmatpush.bf16.msra.mxu0 %v6020
        %6234 = vmatpush.bf16.msra.mxu0 %v6019
        %6235 = vmatpush.bf16.msra.mxu0 %v6018
        %6236 = vmatmul.bf16.gmra.mxu0 %v5779
        %v6237 = vpop.f32.mrf.mxu0
        %v6238 = vadd.f32 %v6149, %v6237
        %v6239 = vpop.f32.mrf.mxu0
        %v6240 = vadd.f32 %v6151, %v6239
        %6241 = vmatmul.bf16.gmra.mxu0 %v5782
        %v6242 = vpop.f32.mrf.mxu0
        %v6243 = vadd.f32 %v6154, %v6242
        %v6244 = vpop.f32.mrf.mxu0
        %v6245 = vadd.f32 %v6156, %v6244
        %6246 = vmatmul.bf16.gmra.mxu0 %v5785
        %v6247 = vpop.f32.mrf.mxu0
        %v6248 = vadd.f32 %v6159, %v6247
        %v6249 = vpop.f32.mrf.mxu0
        %v6250 = vadd.f32 %v6161, %v6249
        %6251 = vmatmul.bf16.gmra.mxu0 %v5788
        %v6252 = vpop.f32.mrf.mxu0
        %v6253 = vadd.f32 %v6164, %v6252
        %v6254 = vpop.f32.mrf.mxu0
        %v6255 = vadd.f32 %v6166, %v6254
        %6256 = vmatmul.bf16.gmra.mxu0 %v5791
        %v6257 = vpop.f32.mrf.mxu0
        %v6258 = vadd.f32 %v6169, %v6257
        %v6259 = vpop.f32.mrf.mxu0
        %v6260 = vadd.f32 %v6171, %v6259
        %6261 = vmatmul.bf16.gmra.mxu0 %v5794
        %v6262 = vpop.f32.mrf.mxu0
        %v6263 = vadd.f32 %v6174, %v6262
        %v6264 = vpop.f32.mrf.mxu0
        %v6265 = vadd.f32 %v6176, %v6264
        %6266 = vmatmul.bf16.gmra.mxu0 %v5797
        %v6267 = vpop.f32.mrf.mxu0
        %v6268 = vadd.f32 %v6179, %v6267
        %v6269 = vpop.f32.mrf.mxu0
        %v6270 = vadd.f32 %v6181, %v6269
        %6271 = vmatmul.bf16.gmra.mxu0 %v5800
        %v6272 = vpop.f32.mrf.mxu0
        %v6273 = vadd.f32 %v6184, %v6272
        %v6274 = vpop.f32.mrf.mxu0
        %v6275 = vadd.f32 %v6186, %v6274
        %6276 = vmatmul.bf16.gmra.mxu0 %v5803
        %v6277 = vpop.f32.mrf.mxu0
        %v6278 = vadd.f32 %v6189, %v6277
        %v6279 = vpop.f32.mrf.mxu0
        %v6280 = vadd.f32 %v6191, %v6279
        %6281 = vmatmul.bf16.gmra.mxu0 %v5806
        %v6282 = vpop.f32.mrf.mxu0
        %v6283 = vadd.f32 %v6194, %v6282
        %v6284 = vpop.f32.mrf.mxu0
        %v6285 = vadd.f32 %v6196, %v6284
        %6286 = vmatmul.bf16.gmra.mxu0 %v5809
        %v6287 = vpop.f32.mrf.mxu0
        %v6288 = vadd.f32 %v6199, %v6287
        %v6289 = vpop.f32.mrf.mxu0
        %v6290 = vadd.f32 %v6201, %v6289
        %6291 = vmatmul.bf16.gmra.mxu0 %v5812
        %v6292 = vpop.f32.mrf.mxu0
        %v6293 = vadd.f32 %v6204, %v6292
        %v6294 = vpop.f32.mrf.mxu0
        %v6295 = vadd.f32 %v6206, %v6294
        %6296 = vmatmul.bf16.gmra.mxu0 %v5815
        %v6297 = vpop.f32.mrf.mxu0
        %v6298 = vadd.f32 %v6209, %v6297
        %v6299 = vpop.f32.mrf.mxu0
        %v6300 = vadd.f32 %v6211, %v6299
        %6301 = vmatmul.bf16.gmra.mxu0 %v5818
        %v6302 = vpop.f32.mrf.mxu0
        %v6303 = vadd.f32 %v6214, %v6302
        %v6304 = vpop.f32.mrf.mxu0
        %v6305 = vadd.f32 %v6216, %v6304
        %6306 = vmatmul.bf16.gmra.mxu0 %v5821
        %v6307 = vpop.f32.mrf.mxu0
        %v6308 = vadd.f32 %v6219, %v6307
        %v6309 = vpop.f32.mrf.mxu0
        %v6310 = vadd.f32 %v6221, %v6309
        %6311 = vmatmul.bf16.gmra.mxu0 %v5824
        %v6312 = vpop.f32.mrf.mxu0
        %v6313 = vadd.f32 %v6224, %v6312
        %v6314 = vpop.f32.mrf.mxu0
        %v6315 = vadd.f32 %v6226, %v6314
        %6316 = vdwg.mxu0
        %v6317 = vadd.f32 %v5825, %v6238
        %v6318 = vadd.f32 %v5826, %v6240
        %v6319 = vadd.f32 %v5827, %v6243
        %v6320 = vadd.f32 %v5828, %v6245
        %v6321 = vadd.f32 %v5829, %v6248
        %v6322 = vadd.f32 %v5830, %v6250
        %v6323 = vadd.f32 %v5831, %v6253
        %v6324 = vadd.f32 %v5832, %v6255
        %v6325 = vadd.f32 %v5833, %v6258
        %v6326 = vadd.f32 %v5834, %v6260
        %v6327 = vadd.f32 %v5835, %v6263
        %v6328 = vadd.f32 %v5836, %v6265
        %v6329 = vadd.f32 %v5837, %v6268
        %v6330 = vadd.f32 %v5838, %v6270
        %v6331 = vadd.f32 %v5839, %v6273
        %v6332 = vadd.f32 %v5840, %v6275
        %v6333 = vadd.f32 %v5841, %v6278
        %v6334 = vadd.f32 %v5842, %v6280
        %v6335 = vadd.f32 %v5843, %v6283
        %v6336 = vadd.f32 %v5844, %v6285
        %v6337 = vadd.f32 %v5845, %v6288
        %v6338 = vadd.f32 %v5846, %v6290
        %v6339 = vadd.f32 %v5847, %v6293
        %v6340 = vadd.f32 %v5848, %v6295
        %v6341 = vadd.f32 %v5849, %v6298
        %v6342 = vadd.f32 %v5850, %v6300
        %v6343 = vadd.f32 %v5851, %v6303
        %v6344 = vadd.f32 %v5852, %v6305
        %v6345 = vadd.f32 %v5853, %v6308
        %v6346 = vadd.f32 %v5854, %v6310
        %v6347 = vadd.f32 %v5855, %v6313
        %v6348 = vadd.f32 %v5856, %v6315
        %6349 = vst [vmem:[#allocation5] sm:$0xff] %v6317
        %6350 = vst [vmem:[#allocation5 + $0x8] sm:$0xff] %v6318
        %6351 = vst [vmem:[#allocation5 + $0x10] sm:$0xff] %v6319
        %6352 = vst [vmem:[#allocation5 + $0x18] sm:$0xff] %v6320
        %6353 = vst [vmem:[#allocation5 + $0x20] sm:$0xff] %v6321
        %6354 = vst [vmem:[#allocation5 + $0x28] sm:$0xff] %v6322
        %6355 = vst [vmem:[#allocation5 + $0x30] sm:$0xff] %v6323
        %6356 = vst [vmem:[#allocation5 + $0x38] sm:$0xff] %v6324
        %6357 = vst [vmem:[#allocation5 + $0x40] sm:$0xff] %v6325
        %6358 = vst [vmem:[#allocation5 + $0x48] sm:$0xff] %v6326
        %6359 = vst [vmem:[#allocation5 + $0x50] sm:$0xff] %v6327
        %6360 = vst [vmem:[#allocation5 + $0x58] sm:$0xff] %v6328
        %6361 = vst [vmem:[#allocation5 + $0x60] sm:$0xff] %v6329
        %6362 = vst [vmem:[#allocation5 + $0x68] sm:$0xff] %v6330
        %6363 = vst [vmem:[#allocation5 + $0x70] sm:$0xff] %v6331
        %6364 = vst [vmem:[#allocation5 + $0x78] sm:$0xff] %v6332
        %6365 = vst [vmem:[#allocation5 + $0x80] sm:$0xff] %v6333
        %6366 = vst [vmem:[#allocation5 + $0x88] sm:$0xff] %v6334
        %6367 = vst [vmem:[#allocation5 + $0x90] sm:$0xff] %v6335
        %6368 = vst [vmem:[#allocation5 + $0x98] sm:$0xff] %v6336
        %6369 = vst [vmem:[#allocation5 + $0xa0] sm:$0xff] %v6337
        %6370 = vst [vmem:[#allocation5 + $0xa8] sm:$0xff] %v6338
        %6371 = vst [vmem:[#allocation5 + $0xb0] sm:$0xff] %v6339
        %6372 = vst [vmem:[#allocation5 + $0xb8] sm:$0xff] %v6340
        %6373 = vst [vmem:[#allocation5 + $0xc0] sm:$0xff] %v6341
        %6374 = vst [vmem:[#allocation5 + $0xc8] sm:$0xff] %v6342
        %6375 = vst [vmem:[#allocation5 + $0xd0] sm:$0xff] %v6343
        %6376 = vst [vmem:[#allocation5 + $0xd8] sm:$0xff] %v6344
        %6377 = vst [vmem:[#allocation5 + $0xe0] sm:$0xff] %v6345
        %6378 = vst [vmem:[#allocation5 + $0xe8] sm:$0xff] %v6346
        %6379 = vst [vmem:[#allocation5 + $0xf0] sm:$0xff] %v6347
        %6380 = vst [vmem:[#allocation5 + $0xf8] sm:$0xff] %v6348
        %v6381 = vld [vmem:[#allocation5] sm:$0xff]
        %v6382 = vld [vmem:[#allocation5 + $0x8] sm:$0xff]
        %v6383 = vld [vmem:[#allocation5 + $0x10] sm:$0xff]
        %v6384 = vld [vmem:[#allocation5 + $0x18] sm:$0xff]
        %v6385 = vld [vmem:[#allocation5 + $0x20] sm:$0xff]
        %v6386 = vld [vmem:[#allocation5 + $0x28] sm:$0xff]
        %v6387 = vld [vmem:[#allocation5 + $0x30] sm:$0xff]
        %v6388 = vld [vmem:[#allocation5 + $0x38] sm:$0xff]
        %v6389 = vld [vmem:[#allocation5 + $0x40] sm:$0xff]
        %v6390 = vld [vmem:[#allocation5 + $0x48] sm:$0xff]
        %v6391 = vld [vmem:[#allocation5 + $0x50] sm:$0xff]
        %v6392 = vld [vmem:[#allocation5 + $0x58] sm:$0xff]
        %v6393 = vld [vmem:[#allocation5 + $0x60] sm:$0xff]
        %v6394 = vld [vmem:[#allocation5 + $0x68] sm:$0xff]
        %v6395 = vld [vmem:[#allocation5 + $0x70] sm:$0xff]
        %v6396 = vld [vmem:[#allocation5 + $0x78] sm:$0xff]
        %v6397 = vld [vmem:[#allocation5 + $0x80] sm:$0xff]
        %v6398 = vld [vmem:[#allocation5 + $0x88] sm:$0xff]
        %v6399 = vld [vmem:[#allocation5 + $0x90] sm:$0xff]
        %v6400 = vld [vmem:[#allocation5 + $0x98] sm:$0xff]
        %v6401 = vld [vmem:[#allocation5 + $0xa0] sm:$0xff]
        %v6402 = vld [vmem:[#allocation5 + $0xa8] sm:$0xff]
        %v6403 = vld [vmem:[#allocation5 + $0xb0] sm:$0xff]
        %v6404 = vld [vmem:[#allocation5 + $0xb8] sm:$0xff]
        %v6405 = vld [vmem:[#allocation5 + $0xc0] sm:$0xff]
        %v6406 = vld [vmem:[#allocation5 + $0xc8] sm:$0xff]
        %v6407 = vld [vmem:[#allocation5 + $0xd0] sm:$0xff]
        %v6408 = vld [vmem:[#allocation5 + $0xd8] sm:$0xff]
        %v6409 = vld [vmem:[#allocation5 + $0xe0] sm:$0xff]
        %v6410 = vld [vmem:[#allocation5 + $0xe8] sm:$0xff]
        %v6411 = vld [vmem:[#allocation5 + $0xf0] sm:$0xff]
        %v6412 = vld [vmem:[#allocation5 + $0xf8] sm:$0xff]
        %v6413 = vld [vmem:[%s8] sm:$0x1]
        %v6415 = vperm.slane %v6413, 0
        %v6417 = vmul.f32 %v6381, %v6415
        %v6418 = vmul.f32 %v6382, %v6415
        %v6419 = vmul.f32 %v6383, %v6415
        %v6420 = vmul.f32 %v6384, %v6415
        %v6421 = vmul.f32 %v6385, %v6415
        %v6422 = vmul.f32 %v6386, %v6415
        %v6423 = vmul.f32 %v6387, %v6415
        %v6424 = vmul.f32 %v6388, %v6415
        %v6425 = vmul.f32 %v6389, %v6415
        %v6426 = vmul.f32 %v6390, %v6415
        %v6427 = vmul.f32 %v6391, %v6415
        %v6428 = vmul.f32 %v6392, %v6415
        %v6429 = vmul.f32 %v6393, %v6415
        %v6430 = vmul.f32 %v6394, %v6415
        %v6431 = vmul.f32 %v6395, %v6415
        %v6432 = vmul.f32 %v6396, %v6415
        %v6433 = vmul.f32 %v6397, %v6415
        %v6434 = vmul.f32 %v6398, %v6415
        %v6435 = vmul.f32 %v6399, %v6415
        %v6436 = vmul.f32 %v6400, %v6415
        %v6437 = vmul.f32 %v6401, %v6415
        %v6438 = vmul.f32 %v6402, %v6415
        %v6439 = vmul.f32 %v6403, %v6415
        %v6440 = vmul.f32 %v6404, %v6415
        %v6441 = vmul.f32 %v6405, %v6415
        %v6442 = vmul.f32 %v6406, %v6415
        %v6443 = vmul.f32 %v6407, %v6415
        %v6444 = vmul.f32 %v6408, %v6415
        %v6445 = vmul.f32 %v6409, %v6415
        %v6446 = vmul.f32 %v6410, %v6415
        %v6447 = vmul.f32 %v6411, %v6415
        %v6448 = vmul.f32 %v6412, %v6415
        %v6449 = vld [vmem:[%s9] sm:$0x1]
        %v6451 = vperm.slane %v6449, 0
        %v6453 = vadd.f32 %v6417, %v6451
        %v6454 = vadd.f32 %v6418, %v6451
        %v6455 = vadd.f32 %v6419, %v6451
        %v6456 = vadd.f32 %v6420, %v6451
        %v6457 = vadd.f32 %v6421, %v6451
        %v6458 = vadd.f32 %v6422, %v6451
        %v6459 = vadd.f32 %v6423, %v6451
        %v6460 = vadd.f32 %v6424, %v6451
        %v6461 = vadd.f32 %v6425, %v6451
        %v6462 = vadd.f32 %v6426, %v6451
        %v6463 = vadd.f32 %v6427, %v6451
        %v6464 = vadd.f32 %v6428, %v6451
        %v6465 = vadd.f32 %v6429, %v6451
        %v6466 = vadd.f32 %v6430, %v6451
        %v6467 = vadd.f32 %v6431, %v6451
        %v6468 = vadd.f32 %v6432, %v6451
        %v6469 = vadd.f32 %v6433, %v6451
        %v6470 = vadd.f32 %v6434, %v6451
        %v6471 = vadd.f32 %v6435, %v6451
        %v6472 = vadd.f32 %v6436, %v6451
        %v6473 = vadd.f32 %v6437, %v6451
        %v6474 = vadd.f32 %v6438, %v6451
        %v6475 = vadd.f32 %v6439, %v6451
        %v6476 = vadd.f32 %v6440, %v6451
        %v6477 = vadd.f32 %v6441, %v6451
        %v6478 = vadd.f32 %v6442, %v6451
        %v6479 = vadd.f32 %v6443, %v6451
        %v6480 = vadd.f32 %v6444, %v6451
        %v6481 = vadd.f32 %v6445, %v6451
        %v6482 = vadd.f32 %v6446, %v6451
        %v6483 = vadd.f32 %v6447, %v6451
        %v6484 = vadd.f32 %v6448, %v6451
        %6485 = vst [vmem:[#allocation5] sm:$0xff] %v6453
        %6486 = vst [vmem:[#allocation5 + $0x8] sm:$0xff] %v6454
        %6487 = vst [vmem:[#allocation5 + $0x10] sm:$0xff] %v6455
        %6488 = vst [vmem:[#allocation5 + $0x18] sm:$0xff] %v6456
        %6489 = vst [vmem:[#allocation5 + $0x20] sm:$0xff] %v6457
        %6490 = vst [vmem:[#allocation5 + $0x28] sm:$0xff] %v6458
        %6491 = vst [vmem:[#allocation5 + $0x30] sm:$0xff] %v6459
        %6492 = vst [vmem:[#allocation5 + $0x38] sm:$0xff] %v6460
        %6493 = vst [vmem:[#allocation5 + $0x40] sm:$0xff] %v6461
        %6494 = vst [vmem:[#allocation5 + $0x48] sm:$0xff] %v6462
        %6495 = vst [vmem:[#allocation5 + $0x50] sm:$0xff] %v6463
        %6496 = vst [vmem:[#allocation5 + $0x58] sm:$0xff] %v6464
        %6497 = vst [vmem:[#allocation5 + $0x60] sm:$0xff] %v6465
        %6498 = vst [vmem:[#allocation5 + $0x68] sm:$0xff] %v6466
        %6499 = vst [vmem:[#allocation5 + $0x70] sm:$0xff] %v6467
        %6500 = vst [vmem:[#allocation5 + $0x78] sm:$0xff] %v6468
        %6501 = vst [vmem:[#allocation5 + $0x80] sm:$0xff] %v6469
        %6502 = vst [vmem:[#allocation5 + $0x88] sm:$0xff] %v6470
        %6503 = vst [vmem:[#allocation5 + $0x90] sm:$0xff] %v6471
        %6504 = vst [vmem:[#allocation5 + $0x98] sm:$0xff] %v6472
        %6505 = vst [vmem:[#allocation5 + $0xa0] sm:$0xff] %v6473
        %6506 = vst [vmem:[#allocation5 + $0xa8] sm:$0xff] %v6474
        %6507 = vst [vmem:[#allocation5 + $0xb0] sm:$0xff] %v6475
        %6508 = vst [vmem:[#allocation5 + $0xb8] sm:$0xff] %v6476
        %6509 = vst [vmem:[#allocation5 + $0xc0] sm:$0xff] %v6477
        %6510 = vst [vmem:[#allocation5 + $0xc8] sm:$0xff] %v6478
        %6511 = vst [vmem:[#allocation5 + $0xd0] sm:$0xff] %v6479
        %6512 = vst [vmem:[#allocation5 + $0xd8] sm:$0xff] %v6480
        %6513 = vst [vmem:[#allocation5 + $0xe0] sm:$0xff] %v6481
        %6514 = vst [vmem:[#allocation5 + $0xe8] sm:$0xff] %v6482
        %6515 = vst [vmem:[#allocation5 + $0xf0] sm:$0xff] %v6483
        %6516 = vst [vmem:[#allocation5 + $0xf8] sm:$0xff] %v6484
        %6517 = vst [vmem:[#allocation4] sm:$0xff] 0.0
        %6518 = vst [vmem:[#allocation4 + $0x8] sm:$0xff] 0.0
        %6519 = vst [vmem:[#allocation4 + $0x10] sm:$0xff] 0.0
        %6520 = vst [vmem:[#allocation4 + $0x18] sm:$0xff] 0.0
        %6521 = vst [vmem:[#allocation4 + $0x20] sm:$0xff] 0.0
        %6522 = vst [vmem:[#allocation4 + $0x28] sm:$0xff] 0.0
        %6523 = vst [vmem:[#allocation4 + $0x30] sm:$0xff] 0.0
        %6524 = vst [vmem:[#allocation4 + $0x38] sm:$0xff] 0.0
        %6525 = vst [vmem:[#allocation4 + $0x40] sm:$0xff] 0.0
        %6526 = vst [vmem:[#allocation4 + $0x48] sm:$0xff] 0.0
        %6527 = vst [vmem:[#allocation4 + $0x50] sm:$0xff] 0.0
        %6528 = vst [vmem:[#allocation4 + $0x58] sm:$0xff] 0.0
        %6529 = vst [vmem:[#allocation4 + $0x60] sm:$0xff] 0.0
        %6530 = vst [vmem:[#allocation4 + $0x68] sm:$0xff] 0.0
        %6531 = vst [vmem:[#allocation4 + $0x70] sm:$0xff] 0.0
        %6532 = vst [vmem:[#allocation4 + $0x78] sm:$0xff] 0.0
        %6533 = vst [vmem:[#allocation4 + $0x80] sm:$0xff] 0.0
        %6534 = vst [vmem:[#allocation4 + $0x88] sm:$0xff] 0.0
        %6535 = vst [vmem:[#allocation4 + $0x90] sm:$0xff] 0.0
        %6536 = vst [vmem:[#allocation4 + $0x98] sm:$0xff] 0.0
        %6537 = vst [vmem:[#allocation4 + $0xa0] sm:$0xff] 0.0
        %6538 = vst [vmem:[#allocation4 + $0xa8] sm:$0xff] 0.0
        %6539 = vst [vmem:[#allocation4 + $0xb0] sm:$0xff] 0.0
        %6540 = vst [vmem:[#allocation4 + $0xb8] sm:$0xff] 0.0
        %6541 = vst [vmem:[#allocation4 + $0xc0] sm:$0xff] 0.0
        %6542 = vst [vmem:[#allocation4 + $0xc8] sm:$0xff] 0.0
        %6543 = vst [vmem:[#allocation4 + $0xd0] sm:$0xff] 0.0
        %6544 = vst [vmem:[#allocation4 + $0xd8] sm:$0xff] 0.0
        %6545 = vst [vmem:[#allocation4 + $0xe0] sm:$0xff] 0.0
        %6546 = vst [vmem:[#allocation4 + $0xe8] sm:$0xff] 0.0
        %6547 = vst [vmem:[#allocation4 + $0xf0] sm:$0xff] 0.0
        %6548 = vst [vmem:[#allocation4 + $0xf8] sm:$0xff] 0.0
        %v6549 = vld [vmem:[#allocation3] sm:$0xff]
        %v6550 = vld [vmem:[#allocation3 + $0x8] sm:$0xff]
        %v6551 = vld [vmem:[#allocation3 + $0x10] sm:$0x3]
        %v6552 = vld [vmem:[#allocation3 + $0x18] sm:$0xff]
        %v6553 = vld [vmem:[#allocation3 + $0x20] sm:$0xff]
        %v6554 = vld [vmem:[#allocation3 + $0x28] sm:$0x3]
        %v6555 = vld [vmem:[#allocation3 + $0x30] sm:$0xff]
        %v6556 = vld [vmem:[#allocation3 + $0x38] sm:$0xff]
        %v6557 = vld [vmem:[#allocation3 + $0x40] sm:$0x3]
        %v6558 = vld [vmem:[#allocation3 + $0x48] sm:$0xff]
        %v6559 = vld [vmem:[#allocation3 + $0x50] sm:$0xff]
        %v6560 = vld [vmem:[#allocation3 + $0x58] sm:$0x3]
        %v6561 = vld [vmem:[#allocation3 + $0x60] sm:$0xff]
        %v6562 = vld [vmem:[#allocation3 + $0x68] sm:$0xff]
        %v6563 = vld [vmem:[#allocation3 + $0x70] sm:$0x3]
        %v6564 = vld [vmem:[#allocation3 + $0x78] sm:$0xff]
        %v6565 = vld [vmem:[#allocation3 + $0x80] sm:$0xff]
        %v6566 = vld [vmem:[#allocation3 + $0x88] sm:$0x3]
        %v6567 = vld [vmem:[#allocation3 + $0x90] sm:$0xff]
        %v6568 = vld [vmem:[#allocation3 + $0x98] sm:$0xff]
        %v6569 = vld [vmem:[#allocation3 + $0xa0] sm:$0x3]
        %v6570 = vld [vmem:[#allocation3 + $0xa8] sm:$0xff]
        %v6571 = vld [vmem:[#allocation3 + $0xb0] sm:$0xff]
        %v6572 = vld [vmem:[#allocation3 + $0xb8] sm:$0x3]
        %v6573 = vld [vmem:[#allocation3 + $0xc0] sm:$0xff]
        %v6574 = vld [vmem:[#allocation3 + $0xc8] sm:$0xff]
        %v6575 = vld [vmem:[#allocation3 + $0xd0] sm:$0x3]
        %v6576 = vld [vmem:[#allocation3 + $0xd8] sm:$0xff]
        %v6577 = vld [vmem:[#allocation3 + $0xe0] sm:$0xff]
        %v6578 = vld [vmem:[#allocation3 + $0xe8] sm:$0x3]
        %v6579 = vld [vmem:[#allocation3 + $0xf0] sm:$0xff]
        %v6580 = vld [vmem:[#allocation3 + $0xf8] sm:$0xff]
        %v6581 = vld [vmem:[#allocation3 + $0x100] sm:$0x3]
        %v6582 = vld [vmem:[#allocation3 + $0x108] sm:$0xff]
        %v6583 = vld [vmem:[#allocation3 + $0x110] sm:$0xff]
        %v6584 = vld [vmem:[#allocation3 + $0x118] sm:$0x3]
        %v6585 = vld [vmem:[#allocation3 + $0x120] sm:$0xff]
        %v6586 = vld [vmem:[#allocation3 + $0x128] sm:$0xff]
        %v6587 = vld [vmem:[#allocation3 + $0x130] sm:$0x3]
        %v6588 = vld [vmem:[#allocation3 + $0x138] sm:$0xff]
        %v6589 = vld [vmem:[#allocation3 + $0x140] sm:$0xff]
        %v6590 = vld [vmem:[#allocation3 + $0x148] sm:$0x3]
        %v6591 = vld [vmem:[#allocation3 + $0x150] sm:$0xff]
        %v6592 = vld [vmem:[#allocation3 + $0x158] sm:$0xff]
        %v6593 = vld [vmem:[#allocation3 + $0x160] sm:$0x3]
        %v6594 = vld [vmem:[#allocation3 + $0x168] sm:$0xff]
        %v6595 = vld [vmem:[#allocation3 + $0x170] sm:$0xff]
        %v6596 = vld [vmem:[#allocation3 + $0x178] sm:$0x3]
        %v6645 = vrot.slane %v6549, 1
        %v6646 = vrot.slane %v6550, 1
        %v6647 = vsel %vm677, %v6645, %v6646
        %v6648 = vrot.slane %v6551, 1
        %v6649 = vsel %vm677, %v6646, %v6648
        %v6650 = vrot.slane %v6552, 1
        %v6651 = vrot.slane %v6553, 1
        %v6652 = vsel %vm677, %v6650, %v6651
        %v6653 = vrot.slane %v6554, 1
        %v6654 = vsel %vm677, %v6651, %v6653
        %v6655 = vrot.slane %v6555, 1
        %v6656 = vrot.slane %v6556, 1
        %v6657 = vsel %vm677, %v6655, %v6656
        %v6658 = vrot.slane %v6557, 1
        %v6659 = vsel %vm677, %v6656, %v6658
        %v6660 = vrot.slane %v6558, 1
        %v6661 = vrot.slane %v6559, 1
        %v6662 = vsel %vm677, %v6660, %v6661
        %v6663 = vrot.slane %v6560, 1
        %v6664 = vsel %vm677, %v6661, %v6663
        %v6665 = vrot.slane %v6561, 1
        %v6666 = vrot.slane %v6562, 1
        %v6667 = vsel %vm677, %v6665, %v6666
        %v6668 = vrot.slane %v6563, 1
        %v6669 = vsel %vm677, %v6666, %v6668
        %v6670 = vrot.slane %v6564, 1
        %v6671 = vrot.slane %v6565, 1
        %v6672 = vsel %vm677, %v6670, %v6671
        %v6673 = vrot.slane %v6566, 1
        %v6674 = vsel %vm677, %v6671, %v6673
        %v6675 = vrot.slane %v6567, 1
        %v6676 = vrot.slane %v6568, 1
        %v6677 = vsel %vm677, %v6675, %v6676
        %v6678 = vrot.slane %v6569, 1
        %v6679 = vsel %vm677, %v6676, %v6678
        %v6680 = vrot.slane %v6570, 1
        %v6681 = vrot.slane %v6571, 1
        %v6682 = vsel %vm677, %v6680, %v6681
        %v6683 = vrot.slane %v6572, 1
        %v6684 = vsel %vm677, %v6681, %v6683
        %v6685 = vrot.slane %v6573, 1
        %v6686 = vrot.slane %v6574, 1
        %v6687 = vsel %vm677, %v6685, %v6686
        %v6688 = vrot.slane %v6575, 1
        %v6689 = vsel %vm677, %v6686, %v6688
        %v6690 = vrot.slane %v6576, 1
        %v6691 = vrot.slane %v6577, 1
        %v6692 = vsel %vm677, %v6690, %v6691
        %v6693 = vrot.slane %v6578, 1
        %v6694 = vsel %vm677, %v6691, %v6693
        %v6695 = vrot.slane %v6579, 1
        %v6696 = vrot.slane %v6580, 1
        %v6697 = vsel %vm677, %v6695, %v6696
        %v6698 = vrot.slane %v6581, 1
        %v6699 = vsel %vm677, %v6696, %v6698
        %v6700 = vrot.slane %v6582, 1
        %v6701 = vrot.slane %v6583, 1
        %v6702 = vsel %vm677, %v6700, %v6701
        %v6703 = vrot.slane %v6584, 1
        %v6704 = vsel %vm677, %v6701, %v6703
        %v6705 = vrot.slane %v6585, 1
        %v6706 = vrot.slane %v6586, 1
        %v6707 = vsel %vm677, %v6705, %v6706
        %v6708 = vrot.slane %v6587, 1
        %v6709 = vsel %vm677, %v6706, %v6708
        %v6710 = vrot.slane %v6588, 1
        %v6711 = vrot.slane %v6589, 1
        %v6712 = vsel %vm677, %v6710, %v6711
        %v6713 = vrot.slane %v6590, 1
        %v6714 = vsel %vm677, %v6711, %v6713
        %v6715 = vrot.slane %v6591, 1
        %v6716 = vrot.slane %v6592, 1
        %v6717 = vsel %vm677, %v6715, %v6716
        %v6718 = vrot.slane %v6593, 1
        %v6719 = vsel %vm677, %v6716, %v6718
        %v6720 = vrot.slane %v6594, 1
        %v6721 = vrot.slane %v6595, 1
        %v6722 = vsel %vm677, %v6720, %v6721
        %v6723 = vrot.slane %v6596, 1
        %v6724 = vsel %vm677, %v6721, %v6723
        %v6757 = vrot.slane %v6549, 2
        %v6758 = vrot.slane %v6550, 2
        %v6759 = vsel %vm790, %v6757, %v6758
        %v6760 = vrot.slane %v6551, 2
        %v6761 = vsel %vm790, %v6758, %v6760
        %v6762 = vrot.slane %v6552, 2
        %v6763 = vrot.slane %v6553, 2
        %v6764 = vsel %vm790, %v6762, %v6763
        %v6765 = vrot.slane %v6554, 2
        %v6766 = vsel %vm790, %v6763, %v6765
        %v6767 = vrot.slane %v6555, 2
        %v6768 = vrot.slane %v6556, 2
        %v6769 = vsel %vm790, %v6767, %v6768
        %v6770 = vrot.slane %v6557, 2
        %v6771 = vsel %vm790, %v6768, %v6770
        %v6772 = vrot.slane %v6558, 2
        %v6773 = vrot.slane %v6559, 2
        %v6774 = vsel %vm790, %v6772, %v6773
        %v6775 = vrot.slane %v6560, 2
        %v6776 = vsel %vm790, %v6773, %v6775
        %v6777 = vrot.slane %v6561, 2
        %v6778 = vrot.slane %v6562, 2
        %v6779 = vsel %vm790, %v6777, %v6778
        %v6780 = vrot.slane %v6563, 2
        %v6781 = vsel %vm790, %v6778, %v6780
        %v6782 = vrot.slane %v6564, 2
        %v6783 = vrot.slane %v6565, 2
        %v6784 = vsel %vm790, %v6782, %v6783
        %v6785 = vrot.slane %v6566, 2
        %v6786 = vsel %vm790, %v6783, %v6785
        %v6787 = vrot.slane %v6567, 2
        %v6788 = vrot.slane %v6568, 2
        %v6789 = vsel %vm790, %v6787, %v6788
        %v6790 = vrot.slane %v6569, 2
        %v6791 = vsel %vm790, %v6788, %v6790
        %v6792 = vrot.slane %v6570, 2
        %v6793 = vrot.slane %v6571, 2
        %v6794 = vsel %vm790, %v6792, %v6793
        %v6795 = vrot.slane %v6572, 2
        %v6796 = vsel %vm790, %v6793, %v6795
        %v6797 = vrot.slane %v6573, 2
        %v6798 = vrot.slane %v6574, 2
        %v6799 = vsel %vm790, %v6797, %v6798
        %v6800 = vrot.slane %v6575, 2
        %v6801 = vsel %vm790, %v6798, %v6800
        %v6802 = vrot.slane %v6576, 2
        %v6803 = vrot.slane %v6577, 2
        %v6804 = vsel %vm790, %v6802, %v6803
        %v6805 = vrot.slane %v6578, 2
        %v6806 = vsel %vm790, %v6803, %v6805
        %v6807 = vrot.slane %v6579, 2
        %v6808 = vrot.slane %v6580, 2
        %v6809 = vsel %vm790, %v6807, %v6808
        %v6810 = vrot.slane %v6581, 2
        %v6811 = vsel %vm790, %v6808, %v6810
        %v6812 = vrot.slane %v6582, 2
        %v6813 = vrot.slane %v6583, 2
        %v6814 = vsel %vm790, %v6812, %v6813
        %v6815 = vrot.slane %v6584, 2
        %v6816 = vsel %vm790, %v6813, %v6815
        %v6817 = vrot.slane %v6585, 2
        %v6818 = vrot.slane %v6586, 2
        %v6819 = vsel %vm790, %v6817, %v6818
        %v6820 = vrot.slane %v6587, 2
        %v6821 = vsel %vm790, %v6818, %v6820
        %v6822 = vrot.slane %v6588, 2
        %v6823 = vrot.slane %v6589, 2
        %v6824 = vsel %vm790, %v6822, %v6823
        %v6825 = vrot.slane %v6590, 2
        %v6826 = vsel %vm790, %v6823, %v6825
        %v6827 = vrot.slane %v6591, 2
        %v6828 = vrot.slane %v6592, 2
        %v6829 = vsel %vm790, %v6827, %v6828
        %v6830 = vrot.slane %v6593, 2
        %v6831 = vsel %vm790, %v6828, %v6830
        %v6832 = vrot.slane %v6594, 2
        %v6833 = vrot.slane %v6595, 2
        %v6834 = vsel %vm790, %v6832, %v6833
        %v6835 = vrot.slane %v6596, 2
        %v6836 = vsel %vm790, %v6833, %v6835
        %v6869 = vpack.c.bf16 %v6550, %v6549
        %v6870 = vpack.c.bf16 %v6649, %v6647
        %v6871 = vpack.c.bf16 %v6761, %v6759
        %v6872 = vpack.c.bf16 %v6553, %v6552
        %v6873 = vpack.c.bf16 %v6654, %v6652
        %v6874 = vpack.c.bf16 %v6766, %v6764
        %v6875 = vpack.c.bf16 %v6556, %v6555
        %v6876 = vpack.c.bf16 %v6659, %v6657
        %v6877 = vpack.c.bf16 %v6771, %v6769
        %v6878 = vpack.c.bf16 %v6559, %v6558
        %v6879 = vpack.c.bf16 %v6664, %v6662
        %v6880 = vpack.c.bf16 %v6776, %v6774
        %v6881 = vpack.c.bf16 %v6562, %v6561
        %v6882 = vpack.c.bf16 %v6669, %v6667
        %v6883 = vpack.c.bf16 %v6781, %v6779
        %v6884 = vpack.c.bf16 %v6565, %v6564
        %v6885 = vpack.c.bf16 %v6674, %v6672
        %v6886 = vpack.c.bf16 %v6786, %v6784
        %v6887 = vpack.c.bf16 %v6568, %v6567
        %v6888 = vpack.c.bf16 %v6679, %v6677
        %v6889 = vpack.c.bf16 %v6791, %v6789
        %v6890 = vpack.c.bf16 %v6571, %v6570
        %v6891 = vpack.c.bf16 %v6684, %v6682
        %v6892 = vpack.c.bf16 %v6796, %v6794
        %v6893 = vpack.c.bf16 %v6574, %v6573
        %v6894 = vpack.c.bf16 %v6689, %v6687
        %v6895 = vpack.c.bf16 %v6801, %v6799
        %v6896 = vpack.c.bf16 %v6577, %v6576
        %v6897 = vpack.c.bf16 %v6694, %v6692
        %v6898 = vpack.c.bf16 %v6806, %v6804
        %v6899 = vpack.c.bf16 %v6580, %v6579
        %v6900 = vpack.c.bf16 %v6699, %v6697
        %v6901 = vpack.c.bf16 %v6811, %v6809
        %v6902 = vpack.c.bf16 %v6583, %v6582
        %v6903 = vpack.c.bf16 %v6704, %v6702
        %v6904 = vpack.c.bf16 %v6816, %v6814
        %v6905 = vpack.c.bf16 %v6586, %v6585
        %v6906 = vpack.c.bf16 %v6709, %v6707
        %v6907 = vpack.c.bf16 %v6821, %v6819
        %v6908 = vpack.c.bf16 %v6589, %v6588
        %v6909 = vpack.c.bf16 %v6714, %v6712
        %v6910 = vpack.c.bf16 %v6826, %v6824
        %v6911 = vpack.c.bf16 %v6592, %v6591
        %v6912 = vpack.c.bf16 %v6719, %v6717
        %v6913 = vpack.c.bf16 %v6831, %v6829
        %v6914 = vpack.c.bf16 %v6595, %v6594
        %v6915 = vpack.c.bf16 %v6724, %v6722
        %v6916 = vpack.c.bf16 %v6836, %v6834
        %v6917 = vld [vmem:[#allocation4] sm:$0xff]
        %v6918 = vld [vmem:[#allocation4 + $0x8] sm:$0xff]
        %v6919 = vld [vmem:[#allocation4 + $0x10] sm:$0xff]
        %v6920 = vld [vmem:[#allocation4 + $0x18] sm:$0xff]
        %v6921 = vld [vmem:[#allocation4 + $0x20] sm:$0xff]
        %v6922 = vld [vmem:[#allocation4 + $0x28] sm:$0xff]
        %v6923 = vld [vmem:[#allocation4 + $0x30] sm:$0xff]
        %v6924 = vld [vmem:[#allocation4 + $0x38] sm:$0xff]
        %v6925 = vld [vmem:[#allocation4 + $0x40] sm:$0xff]
        %v6926 = vld [vmem:[#allocation4 + $0x48] sm:$0xff]
        %v6927 = vld [vmem:[#allocation4 + $0x50] sm:$0xff]
        %v6928 = vld [vmem:[#allocation4 + $0x58] sm:$0xff]
        %v6929 = vld [vmem:[#allocation4 + $0x60] sm:$0xff]
        %v6930 = vld [vmem:[#allocation4 + $0x68] sm:$0xff]
        %v6931 = vld [vmem:[#allocation4 + $0x70] sm:$0xff]
        %v6932 = vld [vmem:[#allocation4 + $0x78] sm:$0xff]
        %v6933 = vld [vmem:[#allocation4 + $0x80] sm:$0xff]
        %v6934 = vld [vmem:[#allocation4 + $0x88] sm:$0xff]
        %v6935 = vld [vmem:[#allocation4 + $0x90] sm:$0xff]
        %v6936 = vld [vmem:[#allocation4 + $0x98] sm:$0xff]
        %v6937 = vld [vmem:[#allocation4 + $0xa0] sm:$0xff]
        %v6938 = vld [vmem:[#allocation4 + $0xa8] sm:$0xff]
        %v6939 = vld [vmem:[#allocation4 + $0xb0] sm:$0xff]
        %v6940 = vld [vmem:[#allocation4 + $0xb8] sm:$0xff]
        %v6941 = vld [vmem:[#allocation4 + $0xc0] sm:$0xff]
        %v6942 = vld [vmem:[#allocation4 + $0xc8] sm:$0xff]
        %v6943 = vld [vmem:[#allocation4 + $0xd0] sm:$0xff]
        %v6944 = vld [vmem:[#allocation4 + $0xd8] sm:$0xff]
        %v6945 = vld [vmem:[#allocation4 + $0xe0] sm:$0xff]
        %v6946 = vld [vmem:[#allocation4 + $0xe8] sm:$0xff]
        %v6947 = vld [vmem:[#allocation4 + $0xf0] sm:$0xff]
        %v6948 = vld [vmem:[#allocation4 + $0xf8] sm:$0xff]
        %v6949 = vld [vmem:[#allocation11] sm:$0xf]
        %v6950 = vld [vmem:[#allocation11 + $0x4] sm:$0xf]
        %v6951 = vld [vmem:[#allocation11 + $0x8] sm:$0xf]
        %v6952 = vld [vmem:[#allocation11 + $0xc] sm:$0xf]
        %v6953 = vld [vmem:[#allocation11 + $0x10] sm:$0xf]
        %v6954 = vld [vmem:[#allocation11 + $0x14] sm:$0xf]
        %v6955 = vld [vmem:[#allocation11 + $0x18] sm:$0xf]
        %v6956 = vld [vmem:[#allocation11 + $0x1c] sm:$0xf]
        %v6957 = vld [vmem:[#allocation11 + $0x20] sm:$0xf]
        %v6958 = vld [vmem:[#allocation11 + $0x24] sm:$0xf]
        %v6959 = vld [vmem:[#allocation11 + $0x28] sm:$0xf]
        %v6960 = vld [vmem:[#allocation11 + $0x2c] sm:$0xf]
        %v6961 = vld [vmem:[#allocation11 + $0x30] sm:$0xf]
        %v6962 = vld [vmem:[#allocation11 + $0x34] sm:$0xf]
        %v6963 = vld [vmem:[#allocation11 + $0x38] sm:$0xf]
        %v6964 = vld [vmem:[#allocation11 + $0x3c] sm:$0xf]
        %v6965 = vld [vmem:[#allocation11 + $0x40] sm:$0xf]
        %v6966 = vld [vmem:[#allocation11 + $0x44] sm:$0xf]
        %v6967 = vld [vmem:[#allocation11 + $0x48] sm:$0xf]
        %v6968 = vld [vmem:[#allocation11 + $0x4c] sm:$0xf]
        %v6969 = vld [vmem:[#allocation11 + $0x50] sm:$0xf]
        %v6970 = vld [vmem:[#allocation11 + $0x54] sm:$0xf]
        %v6971 = vld [vmem:[#allocation11 + $0x58] sm:$0xf]
        %v6972 = vld [vmem:[#allocation11 + $0x5c] sm:$0xf]
        %v6973 = vld [vmem:[#allocation11 + $0x60] sm:$0xf]
        %v6974 = vld [vmem:[#allocation11 + $0x64] sm:$0xf]
        %v6975 = vld [vmem:[#allocation11 + $0x68] sm:$0xf]
        %v6976 = vld [vmem:[#allocation11 + $0x6c] sm:$0xf]
        %v6977 = vld [vmem:[#allocation11 + $0x70] sm:$0xf]
        %v6978 = vld [vmem:[#allocation11 + $0x74] sm:$0xf]
        %v6979 = vld [vmem:[#allocation11 + $0x78] sm:$0xf]
        %v6980 = vld [vmem:[#allocation11 + $0x7c] sm:$0xf]
        %v6981 = vld [vmem:[#allocation11 + $0x80] sm:$0xf]
        %v6982 = vld [vmem:[#allocation11 + $0x84] sm:$0xf]
        %v6983 = vld [vmem:[#allocation11 + $0x88] sm:$0xf]
        %v6984 = vld [vmem:[#allocation11 + $0x8c] sm:$0xf]
        %v6985 = vld [vmem:[#allocation11 + $0x90] sm:$0xf]
        %v6986 = vld [vmem:[#allocation11 + $0x94] sm:$0xf]
        %v6987 = vld [vmem:[#allocation11 + $0x98] sm:$0xf]
        %v6988 = vld [vmem:[#allocation11 + $0x9c] sm:$0xf]
        %v6989 = vld [vmem:[#allocation11 + $0xa0] sm:$0xf]
        %v6990 = vld [vmem:[#allocation11 + $0xa4] sm:$0xf]
        %v6991 = vld [vmem:[#allocation11 + $0xa8] sm:$0xf]
        %v6992 = vld [vmem:[#allocation11 + $0xac] sm:$0xf]
        %v6993 = vld [vmem:[#allocation11 + $0xb0] sm:$0xf]
        %v6994 = vld [vmem:[#allocation11 + $0xb4] sm:$0xf]
        %v6995 = vld [vmem:[#allocation11 + $0xb8] sm:$0xf]
        %v6996 = vld [vmem:[#allocation11 + $0xbc] sm:$0xf]
        %v7045 = vunpack.c.l.b16 %v6949
        %v7046 = vunpack.c.l.b16 %v6950
        %v7047 = vunpack.c.l.b16 %v6951
        %v7048 = vunpack.c.l.b16 %v6952
        %v7049 = vunpack.c.l.b16 %v6953
        %v7050 = vunpack.c.l.b16 %v6954
        %v7051 = vunpack.c.l.b16 %v6955
        %v7052 = vunpack.c.l.b16 %v6956
        %v7053 = vunpack.c.l.b16 %v6957
        %v7054 = vunpack.c.l.b16 %v6958
        %v7055 = vunpack.c.l.b16 %v6959
        %v7056 = vunpack.c.l.b16 %v6960
        %v7057 = vunpack.c.l.b16 %v6961
        %v7058 = vunpack.c.l.b16 %v6962
        %v7059 = vunpack.c.l.b16 %v6963
        %v7060 = vunpack.c.l.b16 %v6964
        %v7061 = vunpack.c.l.b16 %v6965
        %v7062 = vunpack.c.l.b16 %v6966
        %v7063 = vunpack.c.l.b16 %v6967
        %v7064 = vunpack.c.l.b16 %v6968
        %v7065 = vunpack.c.l.b16 %v6969
        %v7066 = vunpack.c.l.b16 %v6970
        %v7067 = vunpack.c.l.b16 %v6971
        %v7068 = vunpack.c.l.b16 %v6972
        %v7069 = vunpack.c.l.b16 %v6973
        %v7070 = vunpack.c.l.b16 %v6974
        %v7071 = vunpack.c.l.b16 %v6975
        %v7072 = vunpack.c.l.b16 %v6976
        %v7073 = vunpack.c.l.b16 %v6977
        %v7074 = vunpack.c.l.b16 %v6978
        %v7075 = vunpack.c.l.b16 %v6979
        %v7076 = vunpack.c.l.b16 %v6980
        %v7077 = vunpack.c.l.b16 %v6981
        %v7078 = vunpack.c.l.b16 %v6982
        %v7079 = vunpack.c.l.b16 %v6983
        %v7080 = vunpack.c.l.b16 %v6984
        %v7081 = vunpack.c.l.b16 %v6985
        %v7082 = vunpack.c.l.b16 %v6986
        %v7083 = vunpack.c.l.b16 %v6987
        %v7084 = vunpack.c.l.b16 %v6988
        %v7085 = vunpack.c.l.b16 %v6989
        %v7086 = vunpack.c.l.b16 %v6990
        %v7087 = vunpack.c.l.b16 %v6991
        %v7088 = vunpack.c.l.b16 %v6992
        %v7089 = vunpack.c.l.b16 %v6993
        %v7090 = vunpack.c.l.b16 %v6994
        %v7091 = vunpack.c.l.b16 %v6995
        %v7092 = vunpack.c.l.b16 %v6996
        %v7093 = vpack.c.b16 %v7046, %v7045
        %v7094 = vpack.c.b16 %v7048, %v7047
        %v7095 = vpack.c.b16 %v7050, %v7049
        %v7096 = vpack.c.b16 %v7052, %v7051
        %v7097 = vpack.c.b16 %v7054, %v7053
        %v7098 = vpack.c.b16 %v7056, %v7055
        %v7099 = vpack.c.b16 %v7058, %v7057
        %v7100 = vpack.c.b16 %v7060, %v7059
        %v7101 = vpack.c.b16 %v7062, %v7061
        %v7102 = vpack.c.b16 %v7064, %v7063
        %v7103 = vpack.c.b16 %v7066, %v7065
        %v7104 = vpack.c.b16 %v7068, %v7067
        %v7105 = vpack.c.b16 %v7070, %v7069
        %v7106 = vpack.c.b16 %v7072, %v7071
        %v7107 = vpack.c.b16 %v7074, %v7073
        %v7108 = vpack.c.b16 %v7076, %v7075
        %v7109 = vpack.c.b16 %v7078, %v7077
        %v7110 = vpack.c.b16 %v7080, %v7079
        %v7111 = vpack.c.b16 %v7082, %v7081
        %v7112 = vpack.c.b16 %v7084, %v7083
        %v7113 = vpack.c.b16 %v7086, %v7085
        %v7114 = vpack.c.b16 %v7088, %v7087
        %v7115 = vpack.c.b16 %v7090, %v7089
        %v7116 = vpack.c.b16 %v7092, %v7091
        %7141 = vmatpush.bf16.msra.mxu0 %v7100
        %7142 = vmatpush.bf16.msra.mxu0 %v7099
        %7143 = vmatpush.bf16.msra.mxu0 %v7098
        %7144 = vmatpush.bf16.msra.mxu0 %v7097
        %7145 = vmatpush.bf16.msra.mxu0 %v7096
        %7146 = vmatpush.bf16.msra.mxu0 %v7095
        %7147 = vmatpush.bf16.msra.mxu0 %v7094
        %7148 = vmatpush.bf16.msra.mxu0 %v7093
        %7149 = vmatmul.bf16.gmra.mxu0 %v6869
        %v7150 = vpop.f32.mrf.mxu0
        %v7151 = vadd.f32 0.0, %v7150
        %v7152 = vpop.f32.mrf.mxu0
        %v7153 = vadd.f32 0.0, %v7152
        %7154 = vmatmul.bf16.gmra.mxu0 %v6872
        %v7155 = vpop.f32.mrf.mxu0
        %v7156 = vadd.f32 0.0, %v7155
        %v7157 = vpop.f32.mrf.mxu0
        %v7158 = vadd.f32 0.0, %v7157
        %7159 = vmatmul.bf16.gmra.mxu0 %v6875
        %v7160 = vpop.f32.mrf.mxu0
        %v7161 = vadd.f32 0.0, %v7160
        %v7162 = vpop.f32.mrf.mxu0
        %v7163 = vadd.f32 0.0, %v7162
        %7164 = vmatmul.bf16.gmra.mxu0 %v6878
        %v7165 = vpop.f32.mrf.mxu0
        %v7166 = vadd.f32 0.0, %v7165
        %v7167 = vpop.f32.mrf.mxu0
        %v7168 = vadd.f32 0.0, %v7167
        %7169 = vmatmul.bf16.gmra.mxu0 %v6881
        %v7170 = vpop.f32.mrf.mxu0
        %v7171 = vadd.f32 0.0, %v7170
        %v7172 = vpop.f32.mrf.mxu0
        %v7173 = vadd.f32 0.0, %v7172
        %7174 = vmatmul.bf16.gmra.mxu0 %v6884
        %v7175 = vpop.f32.mrf.mxu0
        %v7176 = vadd.f32 0.0, %v7175
        %v7177 = vpop.f32.mrf.mxu0
        %v7178 = vadd.f32 0.0, %v7177
        %7179 = vmatmul.bf16.gmra.mxu0 %v6887
        %v7180 = vpop.f32.mrf.mxu0
        %v7181 = vadd.f32 0.0, %v7180
        %v7182 = vpop.f32.mrf.mxu0
        %v7183 = vadd.f32 0.0, %v7182
        %7184 = vmatmul.bf16.gmra.mxu0 %v6890
        %v7185 = vpop.f32.mrf.mxu0
        %v7186 = vadd.f32 0.0, %v7185
        %v7187 = vpop.f32.mrf.mxu0
        %v7188 = vadd.f32 0.0, %v7187
        %7189 = vmatmul.bf16.gmra.mxu0 %v6893
        %v7190 = vpop.f32.mrf.mxu0
        %v7191 = vadd.f32 0.0, %v7190
        %v7192 = vpop.f32.mrf.mxu0
        %v7193 = vadd.f32 0.0, %v7192
        %7194 = vmatmul.bf16.gmra.mxu0 %v6896
        %v7195 = vpop.f32.mrf.mxu0
        %v7196 = vadd.f32 0.0, %v7195
        %v7197 = vpop.f32.mrf.mxu0
        %v7198 = vadd.f32 0.0, %v7197
        %7199 = vmatmul.bf16.gmra.mxu0 %v6899
        %v7200 = vpop.f32.mrf.mxu0
        %v7201 = vadd.f32 0.0, %v7200
        %v7202 = vpop.f32.mrf.mxu0
        %v7203 = vadd.f32 0.0, %v7202
        %7204 = vmatmul.bf16.gmra.mxu0 %v6902
        %v7205 = vpop.f32.mrf.mxu0
        %v7206 = vadd.f32 0.0, %v7205
        %v7207 = vpop.f32.mrf.mxu0
        %v7208 = vadd.f32 0.0, %v7207
        %7209 = vmatmul.bf16.gmra.mxu0 %v6905
        %v7210 = vpop.f32.mrf.mxu0
        %v7211 = vadd.f32 0.0, %v7210
        %v7212 = vpop.f32.mrf.mxu0
        %v7213 = vadd.f32 0.0, %v7212
        %7214 = vmatmul.bf16.gmra.mxu0 %v6908
        %v7215 = vpop.f32.mrf.mxu0
        %v7216 = vadd.f32 0.0, %v7215
        %v7217 = vpop.f32.mrf.mxu0
        %v7218 = vadd.f32 0.0, %v7217
        %7219 = vmatmul.bf16.gmra.mxu0 %v6911
        %v7220 = vpop.f32.mrf.mxu0
        %v7221 = vadd.f32 0.0, %v7220
        %v7222 = vpop.f32.mrf.mxu0
        %v7223 = vadd.f32 0.0, %v7222
        %7224 = vmatmul.bf16.gmra.mxu0 %v6914
        %v7225 = vpop.f32.mrf.mxu0
        %v7226 = vadd.f32 0.0, %v7225
        %v7227 = vpop.f32.mrf.mxu0
        %v7228 = vadd.f32 0.0, %v7227
        %7229 = vdwg.mxu0
        %7230 = vmatpush.bf16.msra.mxu0 %v7108
        %7231 = vmatpush.bf16.msra.mxu0 %v7107
        %7232 = vmatpush.bf16.msra.mxu0 %v7106
        %7233 = vmatpush.bf16.msra.mxu0 %v7105
        %7234 = vmatpush.bf16.msra.mxu0 %v7104
        %7235 = vmatpush.bf16.msra.mxu0 %v7103
        %7236 = vmatpush.bf16.msra.mxu0 %v7102
        %7237 = vmatpush.bf16.msra.mxu0 %v7101
        %7238 = vmatmul.bf16.gmra.mxu0 %v6870
        %v7239 = vpop.f32.mrf.mxu0
        %v7240 = vadd.f32 %v7151, %v7239
        %v7241 = vpop.f32.mrf.mxu0
        %v7242 = vadd.f32 %v7153, %v7241
        %7243 = vmatmul.bf16.gmra.mxu0 %v6873
        %v7244 = vpop.f32.mrf.mxu0
        %v7245 = vadd.f32 %v7156, %v7244
        %v7246 = vpop.f32.mrf.mxu0
        %v7247 = vadd.f32 %v7158, %v7246
        %7248 = vmatmul.bf16.gmra.mxu0 %v6876
        %v7249 = vpop.f32.mrf.mxu0
        %v7250 = vadd.f32 %v7161, %v7249
        %v7251 = vpop.f32.mrf.mxu0
        %v7252 = vadd.f32 %v7163, %v7251
        %7253 = vmatmul.bf16.gmra.mxu0 %v6879
        %v7254 = vpop.f32.mrf.mxu0
        %v7255 = vadd.f32 %v7166, %v7254
        %v7256 = vpop.f32.mrf.mxu0
        %v7257 = vadd.f32 %v7168, %v7256
        %7258 = vmatmul.bf16.gmra.mxu0 %v6882
        %v7259 = vpop.f32.mrf.mxu0
        %v7260 = vadd.f32 %v7171, %v7259
        %v7261 = vpop.f32.mrf.mxu0
        %v7262 = vadd.f32 %v7173, %v7261
        %7263 = vmatmul.bf16.gmra.mxu0 %v6885
        %v7264 = vpop.f32.mrf.mxu0
        %v7265 = vadd.f32 %v7176, %v7264
        %v7266 = vpop.f32.mrf.mxu0
        %v7267 = vadd.f32 %v7178, %v7266
        %7268 = vmatmul.bf16.gmra.mxu0 %v6888
        %v7269 = vpop.f32.mrf.mxu0
        %v7270 = vadd.f32 %v7181, %v7269
        %v7271 = vpop.f32.mrf.mxu0
        %v7272 = vadd.f32 %v7183, %v7271
        %7273 = vmatmul.bf16.gmra.mxu0 %v6891
        %v7274 = vpop.f32.mrf.mxu0
        %v7275 = vadd.f32 %v7186, %v7274
        %v7276 = vpop.f32.mrf.mxu0
        %v7277 = vadd.f32 %v7188, %v7276
        %7278 = vmatmul.bf16.gmra.mxu0 %v6894
        %v7279 = vpop.f32.mrf.mxu0
        %v7280 = vadd.f32 %v7191, %v7279
        %v7281 = vpop.f32.mrf.mxu0
        %v7282 = vadd.f32 %v7193, %v7281
        %7283 = vmatmul.bf16.gmra.mxu0 %v6897
        %v7284 = vpop.f32.mrf.mxu0
        %v7285 = vadd.f32 %v7196, %v7284
        %v7286 = vpop.f32.mrf.mxu0
        %v7287 = vadd.f32 %v7198, %v7286
        %7288 = vmatmul.bf16.gmra.mxu0 %v6900
        %v7289 = vpop.f32.mrf.mxu0
        %v7290 = vadd.f32 %v7201, %v7289
        %v7291 = vpop.f32.mrf.mxu0
        %v7292 = vadd.f32 %v7203, %v7291
        %7293 = vmatmul.bf16.gmra.mxu0 %v6903
        %v7294 = vpop.f32.mrf.mxu0
        %v7295 = vadd.f32 %v7206, %v7294
        %v7296 = vpop.f32.mrf.mxu0
        %v7297 = vadd.f32 %v7208, %v7296
        %7298 = vmatmul.bf16.gmra.mxu0 %v6906
        %v7299 = vpop.f32.mrf.mxu0
        %v7300 = vadd.f32 %v7211, %v7299
        %v7301 = vpop.f32.mrf.mxu0
        %v7302 = vadd.f32 %v7213, %v7301
        %7303 = vmatmul.bf16.gmra.mxu0 %v6909
        %v7304 = vpop.f32.mrf.mxu0
        %v7305 = vadd.f32 %v7216, %v7304
        %v7306 = vpop.f32.mrf.mxu0
        %v7307 = vadd.f32 %v7218, %v7306
        %7308 = vmatmul.bf16.gmra.mxu0 %v6912
        %v7309 = vpop.f32.mrf.mxu0
        %v7310 = vadd.f32 %v7221, %v7309
        %v7311 = vpop.f32.mrf.mxu0
        %v7312 = vadd.f32 %v7223, %v7311
        %7313 = vmatmul.bf16.gmra.mxu0 %v6915
        %v7314 = vpop.f32.mrf.mxu0
        %v7315 = vadd.f32 %v7226, %v7314
        %v7316 = vpop.f32.mrf.mxu0
        %v7317 = vadd.f32 %v7228, %v7316
        %7318 = vdwg.mxu0
        %7319 = vmatpush.bf16.msra.mxu0 %v7116
        %7320 = vmatpush.bf16.msra.mxu0 %v7115
        %7321 = vmatpush.bf16.msra.mxu0 %v7114
        %7322 = vmatpush.bf16.msra.mxu0 %v7113
        %7323 = vmatpush.bf16.msra.mxu0 %v7112
        %7324 = vmatpush.bf16.msra.mxu0 %v7111
        %7325 = vmatpush.bf16.msra.mxu0 %v7110
        %7326 = vmatpush.bf16.msra.mxu0 %v7109
        %7327 = vmatmul.bf16.gmra.mxu0 %v6871
        %v7328 = vpop.f32.mrf.mxu0
        %v7329 = vadd.f32 %v7240, %v7328
        %v7330 = vpop.f32.mrf.mxu0
        %v7331 = vadd.f32 %v7242, %v7330
        %7332 = vmatmul.bf16.gmra.mxu0 %v6874
        %v7333 = vpop.f32.mrf.mxu0
        %v7334 = vadd.f32 %v7245, %v7333
        %v7335 = vpop.f32.mrf.mxu0
        %v7336 = vadd.f32 %v7247, %v7335
        %7337 = vmatmul.bf16.gmra.mxu0 %v6877
        %v7338 = vpop.f32.mrf.mxu0
        %v7339 = vadd.f32 %v7250, %v7338
        %v7340 = vpop.f32.mrf.mxu0
        %v7341 = vadd.f32 %v7252, %v7340
        %7342 = vmatmul.bf16.gmra.mxu0 %v6880
        %v7343 = vpop.f32.mrf.mxu0
        %v7344 = vadd.f32 %v7255, %v7343
        %v7345 = vpop.f32.mrf.mxu0
        %v7346 = vadd.f32 %v7257, %v7345
        %7347 = vmatmul.bf16.gmra.mxu0 %v6883
        %v7348 = vpop.f32.mrf.mxu0
        %v7349 = vadd.f32 %v7260, %v7348
        %v7350 = vpop.f32.mrf.mxu0
        %v7351 = vadd.f32 %v7262, %v7350
        %7352 = vmatmul.bf16.gmra.mxu0 %v6886
        %v7353 = vpop.f32.mrf.mxu0
        %v7354 = vadd.f32 %v7265, %v7353
        %v7355 = vpop.f32.mrf.mxu0
        %v7356 = vadd.f32 %v7267, %v7355
        %7357 = vmatmul.bf16.gmra.mxu0 %v6889
        %v7358 = vpop.f32.mrf.mxu0
        %v7359 = vadd.f32 %v7270, %v7358
        %v7360 = vpop.f32.mrf.mxu0
        %v7361 = vadd.f32 %v7272, %v7360
        %7362 = vmatmul.bf16.gmra.mxu0 %v6892
        %v7363 = vpop.f32.mrf.mxu0
        %v7364 = vadd.f32 %v7275, %v7363
        %v7365 = vpop.f32.mrf.mxu0
        %v7366 = vadd.f32 %v7277, %v7365
        %7367 = vmatmul.bf16.gmra.mxu0 %v6895
        %v7368 = vpop.f32.mrf.mxu0
        %v7369 = vadd.f32 %v7280, %v7368
        %v7370 = vpop.f32.mrf.mxu0
        %v7371 = vadd.f32 %v7282, %v7370
        %7372 = vmatmul.bf16.gmra.mxu0 %v6898
        %v7373 = vpop.f32.mrf.mxu0
        %v7374 = vadd.f32 %v7285, %v7373
        %v7375 = vpop.f32.mrf.mxu0
        %v7376 = vadd.f32 %v7287, %v7375
        %7377 = vmatmul.bf16.gmra.mxu0 %v6901
        %v7378 = vpop.f32.mrf.mxu0
        %v7379 = vadd.f32 %v7290, %v7378
        %v7380 = vpop.f32.mrf.mxu0
        %v7381 = vadd.f32 %v7292, %v7380
        %7382 = vmatmul.bf16.gmra.mxu0 %v6904
        %v7383 = vpop.f32.mrf.mxu0
        %v7384 = vadd.f32 %v7295, %v7383
        %v7385 = vpop.f32.mrf.mxu0
        %v7386 = vadd.f32 %v7297, %v7385
        %7387 = vmatmul.bf16.gmra.mxu0 %v6907
        %v7388 = vpop.f32.mrf.mxu0
        %v7389 = vadd.f32 %v7300, %v7388
        %v7390 = vpop.f32.mrf.mxu0
        %v7391 = vadd.f32 %v7302, %v7390
        %7392 = vmatmul.bf16.gmra.mxu0 %v6910
        %v7393 = vpop.f32.mrf.mxu0
        %v7394 = vadd.f32 %v7305, %v7393
        %v7395 = vpop.f32.mrf.mxu0
        %v7396 = vadd.f32 %v7307, %v7395
        %7397 = vmatmul.bf16.gmra.mxu0 %v6913
        %v7398 = vpop.f32.mrf.mxu0
        %v7399 = vadd.f32 %v7310, %v7398
        %v7400 = vpop.f32.mrf.mxu0
        %v7401 = vadd.f32 %v7312, %v7400
        %7402 = vmatmul.bf16.gmra.mxu0 %v6916
        %v7403 = vpop.f32.mrf.mxu0
        %v7404 = vadd.f32 %v7315, %v7403
        %v7405 = vpop.f32.mrf.mxu0
        %v7406 = vadd.f32 %v7317, %v7405
        %7407 = vdwg.mxu0
        %v7408 = vadd.f32 %v6917, %v7329
        %v7409 = vadd.f32 %v6918, %v7331
        %v7410 = vadd.f32 %v6919, %v7334
        %v7411 = vadd.f32 %v6920, %v7336
        %v7412 = vadd.f32 %v6921, %v7339
        %v7413 = vadd.f32 %v6922, %v7341
        %v7414 = vadd.f32 %v6923, %v7344
        %v7415 = vadd.f32 %v6924, %v7346
        %v7416 = vadd.f32 %v6925, %v7349
        %v7417 = vadd.f32 %v6926, %v7351
        %v7418 = vadd.f32 %v6927, %v7354
        %v7419 = vadd.f32 %v6928, %v7356
        %v7420 = vadd.f32 %v6929, %v7359
        %v7421 = vadd.f32 %v6930, %v7361
        %v7422 = vadd.f32 %v6931, %v7364
        %v7423 = vadd.f32 %v6932, %v7366
        %v7424 = vadd.f32 %v6933, %v7369
        %v7425 = vadd.f32 %v6934, %v7371
        %v7426 = vadd.f32 %v6935, %v7374
        %v7427 = vadd.f32 %v6936, %v7376
        %v7428 = vadd.f32 %v6937, %v7379
        %v7429 = vadd.f32 %v6938, %v7381
        %v7430 = vadd.f32 %v6939, %v7384
        %v7431 = vadd.f32 %v6940, %v7386
        %v7432 = vadd.f32 %v6941, %v7389
        %v7433 = vadd.f32 %v6942, %v7391
        %v7434 = vadd.f32 %v6943, %v7394
        %v7435 = vadd.f32 %v6944, %v7396
        %v7436 = vadd.f32 %v6945, %v7399
        %v7437 = vadd.f32 %v6946, %v7401
        %v7438 = vadd.f32 %v6947, %v7404
        %v7439 = vadd.f32 %v6948, %v7406
        %7440 = vst [vmem:[#allocation4] sm:$0xff] %v7408
        %7441 = vst [vmem:[#allocation4 + $0x8] sm:$0xff] %v7409
        %7442 = vst [vmem:[#allocation4 + $0x10] sm:$0xff] %v7410
        %7443 = vst [vmem:[#allocation4 + $0x18] sm:$0xff] %v7411
        %7444 = vst [vmem:[#allocation4 + $0x20] sm:$0xff] %v7412
        %7445 = vst [vmem:[#allocation4 + $0x28] sm:$0xff] %v7413
        %7446 = vst [vmem:[#allocation4 + $0x30] sm:$0xff] %v7414
        %7447 = vst [vmem:[#allocation4 + $0x38] sm:$0xff] %v7415
        %7448 = vst [vmem:[#allocation4 + $0x40] sm:$0xff] %v7416
        %7449 = vst [vmem:[#allocation4 + $0x48] sm:$0xff] %v7417
        %7450 = vst [vmem:[#allocation4 + $0x50] sm:$0xff] %v7418
        %7451 = vst [vmem:[#allocation4 + $0x58] sm:$0xff] %v7419
        %7452 = vst [vmem:[#allocation4 + $0x60] sm:$0xff] %v7420
        %7453 = vst [vmem:[#allocation4 + $0x68] sm:$0xff] %v7421
        %7454 = vst [vmem:[#allocation4 + $0x70] sm:$0xff] %v7422
        %7455 = vst [vmem:[#allocation4 + $0x78] sm:$0xff] %v7423
        %7456 = vst [vmem:[#allocation4 + $0x80] sm:$0xff] %v7424
        %7457 = vst [vmem:[#allocation4 + $0x88] sm:$0xff] %v7425
        %7458 = vst [vmem:[#allocation4 + $0x90] sm:$0xff] %v7426
        %7459 = vst [vmem:[#allocation4 + $0x98] sm:$0xff] %v7427
        %7460 = vst [vmem:[#allocation4 + $0xa0] sm:$0xff] %v7428
        %7461 = vst [vmem:[#allocation4 + $0xa8] sm:$0xff] %v7429
        %7462 = vst [vmem:[#allocation4 + $0xb0] sm:$0xff] %v7430
        %7463 = vst [vmem:[#allocation4 + $0xb8] sm:$0xff] %v7431
        %7464 = vst [vmem:[#allocation4 + $0xc0] sm:$0xff] %v7432
        %7465 = vst [vmem:[#allocation4 + $0xc8] sm:$0xff] %v7433
        %7466 = vst [vmem:[#allocation4 + $0xd0] sm:$0xff] %v7434
        %7467 = vst [vmem:[#allocation4 + $0xd8] sm:$0xff] %v7435
        %7468 = vst [vmem:[#allocation4 + $0xe0] sm:$0xff] %v7436
        %7469 = vst [vmem:[#allocation4 + $0xe8] sm:$0xff] %v7437
        %7470 = vst [vmem:[#allocation4 + $0xf0] sm:$0xff] %v7438
        %7471 = vst [vmem:[#allocation4 + $0xf8] sm:$0xff] %v7439
        %v7472 = vld [vmem:[%s3545] sm:$0xff]
        %v7473 = vld [vmem:[%s3545 + $0x8] sm:$0xff]
        %v7474 = vld [vmem:[%s3545 + $0x10] sm:$0x3]
        %v7475 = vld [vmem:[%s3545 + $0x18] sm:$0xff]
        %v7476 = vld [vmem:[%s3545 + $0x20] sm:$0xff]
        %v7477 = vld [vmem:[%s3545 + $0x28] sm:$0x3]
        %v7478 = vld [vmem:[%s3545 + $0x30] sm:$0xff]
        %v7479 = vld [vmem:[%s3545 + $0x38] sm:$0xff]
        %v7480 = vld [vmem:[%s3545 + $0x40] sm:$0x3]
        %v7481 = vld [vmem:[%s3545 + $0x48] sm:$0xff]
        %v7482 = vld [vmem:[%s3545 + $0x50] sm:$0xff]
        %v7483 = vld [vmem:[%s3545 + $0x58] sm:$0x3]
        %v7484 = vld [vmem:[%s3545 + $0x60] sm:$0xff]
        %v7485 = vld [vmem:[%s3545 + $0x68] sm:$0xff]
        %v7486 = vld [vmem:[%s3545 + $0x70] sm:$0x3]
        %v7487 = vld [vmem:[%s3545 + $0x78] sm:$0xff]
        %v7488 = vld [vmem:[%s3545 + $0x80] sm:$0xff]
        %v7489 = vld [vmem:[%s3545 + $0x88] sm:$0x3]
        %v7490 = vld [vmem:[%s3545 + $0x90] sm:$0xff]
        %v7491 = vld [vmem:[%s3545 + $0x98] sm:$0xff]
        %v7492 = vld [vmem:[%s3545 + $0xa0] sm:$0x3]
        %v7493 = vld [vmem:[%s3545 + $0xa8] sm:$0xff]
        %v7494 = vld [vmem:[%s3545 + $0xb0] sm:$0xff]
        %v7495 = vld [vmem:[%s3545 + $0xb8] sm:$0x3]
        %v7496 = vld [vmem:[%s3545 + $0xc0] sm:$0xff]
        %v7497 = vld [vmem:[%s3545 + $0xc8] sm:$0xff]
        %v7498 = vld [vmem:[%s3545 + $0xd0] sm:$0x3]
        %v7499 = vld [vmem:[%s3545 + $0xd8] sm:$0xff]
        %v7500 = vld [vmem:[%s3545 + $0xe0] sm:$0xff]
        %v7501 = vld [vmem:[%s3545 + $0xe8] sm:$0x3]
        %v7502 = vld [vmem:[%s3545 + $0xf0] sm:$0xff]
        %v7503 = vld [vmem:[%s3545 + $0xf8] sm:$0xff]
        %v7504 = vld [vmem:[%s3545 + $0x100] sm:$0x3]
        %v7505 = vld [vmem:[%s3545 + $0x108] sm:$0xff]
        %v7506 = vld [vmem:[%s3545 + $0x110] sm:$0xff]
        %v7507 = vld [vmem:[%s3545 + $0x118] sm:$0x3]
        %v7508 = vld [vmem:[%s3545 + $0x120] sm:$0xff]
        %v7509 = vld [vmem:[%s3545 + $0x128] sm:$0xff]
        %v7510 = vld [vmem:[%s3545 + $0x130] sm:$0x3]
        %v7511 = vld [vmem:[%s3545 + $0x138] sm:$0xff]
        %v7512 = vld [vmem:[%s3545 + $0x140] sm:$0xff]
        %v7513 = vld [vmem:[%s3545 + $0x148] sm:$0x3]
        %v7514 = vld [vmem:[%s3545 + $0x150] sm:$0xff]
        %v7515 = vld [vmem:[%s3545 + $0x158] sm:$0xff]
        %v7516 = vld [vmem:[%s3545 + $0x160] sm:$0x3]
        %v7517 = vld [vmem:[%s3545 + $0x168] sm:$0xff]
        %v7518 = vld [vmem:[%s3545 + $0x170] sm:$0xff]
        %v7519 = vld [vmem:[%s3545 + $0x178] sm:$0x3]
        %v7568 = vrot.slane %v7472, 1
        %v7569 = vrot.slane %v7473, 1
        %v7570 = vsel %vm677, %v7568, %v7569
        %v7571 = vrot.slane %v7474, 1
        %v7572 = vsel %vm677, %v7569, %v7571
        %v7573 = vrot.slane %v7475, 1
        %v7574 = vrot.slane %v7476, 1
        %v7575 = vsel %vm677, %v7573, %v7574
        %v7576 = vrot.slane %v7477, 1
        %v7577 = vsel %vm677, %v7574, %v7576
        %v7578 = vrot.slane %v7478, 1
        %v7579 = vrot.slane %v7479, 1
        %v7580 = vsel %vm677, %v7578, %v7579
        %v7581 = vrot.slane %v7480, 1
        %v7582 = vsel %vm677, %v7579, %v7581
        %v7583 = vrot.slane %v7481, 1
        %v7584 = vrot.slane %v7482, 1
        %v7585 = vsel %vm677, %v7583, %v7584
        %v7586 = vrot.slane %v7483, 1
        %v7587 = vsel %vm677, %v7584, %v7586
        %v7588 = vrot.slane %v7484, 1
        %v7589 = vrot.slane %v7485, 1
        %v7590 = vsel %vm677, %v7588, %v7589
        %v7591 = vrot.slane %v7486, 1
        %v7592 = vsel %vm677, %v7589, %v7591
        %v7593 = vrot.slane %v7487, 1
        %v7594 = vrot.slane %v7488, 1
        %v7595 = vsel %vm677, %v7593, %v7594
        %v7596 = vrot.slane %v7489, 1
        %v7597 = vsel %vm677, %v7594, %v7596
        %v7598 = vrot.slane %v7490, 1
        %v7599 = vrot.slane %v7491, 1
        %v7600 = vsel %vm677, %v7598, %v7599
        %v7601 = vrot.slane %v7492, 1
        %v7602 = vsel %vm677, %v7599, %v7601
        %v7603 = vrot.slane %v7493, 1
        %v7604 = vrot.slane %v7494, 1
        %v7605 = vsel %vm677, %v7603, %v7604
        %v7606 = vrot.slane %v7495, 1
        %v7607 = vsel %vm677, %v7604, %v7606
        %v7608 = vrot.slane %v7496, 1
        %v7609 = vrot.slane %v7497, 1
        %v7610 = vsel %vm677, %v7608, %v7609
        %v7611 = vrot.slane %v7498, 1
        %v7612 = vsel %vm677, %v7609, %v7611
        %v7613 = vrot.slane %v7499, 1
        %v7614 = vrot.slane %v7500, 1
        %v7615 = vsel %vm677, %v7613, %v7614
        %v7616 = vrot.slane %v7501, 1
        %v7617 = vsel %vm677, %v7614, %v7616
        %v7618 = vrot.slane %v7502, 1
        %v7619 = vrot.slane %v7503, 1
        %v7620 = vsel %vm677, %v7618, %v7619
        %v7621 = vrot.slane %v7504, 1
        %v7622 = vsel %vm677, %v7619, %v7621
        %v7623 = vrot.slane %v7505, 1
        %v7624 = vrot.slane %v7506, 1
        %v7625 = vsel %vm677, %v7623, %v7624
        %v7626 = vrot.slane %v7507, 1
        %v7627 = vsel %vm677, %v7624, %v7626
        %v7628 = vrot.slane %v7508, 1
        %v7629 = vrot.slane %v7509, 1
        %v7630 = vsel %vm677, %v7628, %v7629
        %v7631 = vrot.slane %v7510, 1
        %v7632 = vsel %vm677, %v7629, %v7631
        %v7633 = vrot.slane %v7511, 1
        %v7634 = vrot.slane %v7512, 1
        %v7635 = vsel %vm677, %v7633, %v7634
        %v7636 = vrot.slane %v7513, 1
        %v7637 = vsel %vm677, %v7634, %v7636
        %v7638 = vrot.slane %v7514, 1
        %v7639 = vrot.slane %v7515, 1
        %v7640 = vsel %vm677, %v7638, %v7639
        %v7641 = vrot.slane %v7516, 1
        %v7642 = vsel %vm677, %v7639, %v7641
        %v7643 = vrot.slane %v7517, 1
        %v7644 = vrot.slane %v7518, 1
        %v7645 = vsel %vm677, %v7643, %v7644
        %v7646 = vrot.slane %v7519, 1
        %v7647 = vsel %vm677, %v7644, %v7646
        %v7680 = vrot.slane %v7472, 2
        %v7681 = vrot.slane %v7473, 2
        %v7682 = vsel %vm790, %v7680, %v7681
        %v7683 = vrot.slane %v7474, 2
        %v7684 = vsel %vm790, %v7681, %v7683
        %v7685 = vrot.slane %v7475, 2
        %v7686 = vrot.slane %v7476, 2
        %v7687 = vsel %vm790, %v7685, %v7686
        %v7688 = vrot.slane %v7477, 2
        %v7689 = vsel %vm790, %v7686, %v7688
        %v7690 = vrot.slane %v7478, 2
        %v7691 = vrot.slane %v7479, 2
        %v7692 = vsel %vm790, %v7690, %v7691
        %v7693 = vrot.slane %v7480, 2
        %v7694 = vsel %vm790, %v7691, %v7693
        %v7695 = vrot.slane %v7481, 2
        %v7696 = vrot.slane %v7482, 2
        %v7697 = vsel %vm790, %v7695, %v7696
        %v7698 = vrot.slane %v7483, 2
        %v7699 = vsel %vm790, %v7696, %v7698
        %v7700 = vrot.slane %v7484, 2
        %v7701 = vrot.slane %v7485, 2
        %v7702 = vsel %vm790, %v7700, %v7701
        %v7703 = vrot.slane %v7486, 2
        %v7704 = vsel %vm790, %v7701, %v7703
        %v7705 = vrot.slane %v7487, 2
        %v7706 = vrot.slane %v7488, 2
        %v7707 = vsel %vm790, %v7705, %v7706
        %v7708 = vrot.slane %v7489, 2
        %v7709 = vsel %vm790, %v7706, %v7708
        %v7710 = vrot.slane %v7490, 2
        %v7711 = vrot.slane %v7491, 2
        %v7712 = vsel %vm790, %v7710, %v7711
        %v7713 = vrot.slane %v7492, 2
        %v7714 = vsel %vm790, %v7711, %v7713
        %v7715 = vrot.slane %v7493, 2
        %v7716 = vrot.slane %v7494, 2
        %v7717 = vsel %vm790, %v7715, %v7716
        %v7718 = vrot.slane %v7495, 2
        %v7719 = vsel %vm790, %v7716, %v7718
        %v7720 = vrot.slane %v7496, 2
        %v7721 = vrot.slane %v7497, 2
        %v7722 = vsel %vm790, %v7720, %v7721
        %v7723 = vrot.slane %v7498, 2
        %v7724 = vsel %vm790, %v7721, %v7723
        %v7725 = vrot.slane %v7499, 2
        %v7726 = vrot.slane %v7500, 2
        %v7727 = vsel %vm790, %v7725, %v7726
        %v7728 = vrot.slane %v7501, 2
        %v7729 = vsel %vm790, %v7726, %v7728
        %v7730 = vrot.slane %v7502, 2
        %v7731 = vrot.slane %v7503, 2
        %v7732 = vsel %vm790, %v7730, %v7731
        %v7733 = vrot.slane %v7504, 2
        %v7734 = vsel %vm790, %v7731, %v7733
        %v7735 = vrot.slane %v7505, 2
        %v7736 = vrot.slane %v7506, 2
        %v7737 = vsel %vm790, %v7735, %v7736
        %v7738 = vrot.slane %v7507, 2
        %v7739 = vsel %vm790, %v7736, %v7738
        %v7740 = vrot.slane %v7508, 2
        %v7741 = vrot.slane %v7509, 2
        %v7742 = vsel %vm790, %v7740, %v7741
        %v7743 = vrot.slane %v7510, 2
        %v7744 = vsel %vm790, %v7741, %v7743
        %v7745 = vrot.slane %v7511, 2
        %v7746 = vrot.slane %v7512, 2
        %v7747 = vsel %vm790, %v7745, %v7746
        %v7748 = vrot.slane %v7513, 2
        %v7749 = vsel %vm790, %v7746, %v7748
        %v7750 = vrot.slane %v7514, 2
        %v7751 = vrot.slane %v7515, 2
        %v7752 = vsel %vm790, %v7750, %v7751
        %v7753 = vrot.slane %v7516, 2
        %v7754 = vsel %vm790, %v7751, %v7753
        %v7755 = vrot.slane %v7517, 2
        %v7756 = vrot.slane %v7518, 2
        %v7757 = vsel %vm790, %v7755, %v7756
        %v7758 = vrot.slane %v7519, 2
        %v7759 = vsel %vm790, %v7756, %v7758
        %v7792 = vpack.c.bf16 %v7473, %v7472
        %v7793 = vpack.c.bf16 %v7572, %v7570
        %v7794 = vpack.c.bf16 %v7684, %v7682
        %v7795 = vpack.c.bf16 %v7476, %v7475
        %v7796 = vpack.c.bf16 %v7577, %v7575
        %v7797 = vpack.c.bf16 %v7689, %v7687
        %v7798 = vpack.c.bf16 %v7479, %v7478
        %v7799 = vpack.c.bf16 %v7582, %v7580
        %v7800 = vpack.c.bf16 %v7694, %v7692
        %v7801 = vpack.c.bf16 %v7482, %v7481
        %v7802 = vpack.c.bf16 %v7587, %v7585
        %v7803 = vpack.c.bf16 %v7699, %v7697
        %v7804 = vpack.c.bf16 %v7485, %v7484
        %v7805 = vpack.c.bf16 %v7592, %v7590
        %v7806 = vpack.c.bf16 %v7704, %v7702
        %v7807 = vpack.c.bf16 %v7488, %v7487
        %v7808 = vpack.c.bf16 %v7597, %v7595
        %v7809 = vpack.c.bf16 %v7709, %v7707
        %v7810 = vpack.c.bf16 %v7491, %v7490
        %v7811 = vpack.c.bf16 %v7602, %v7600
        %v7812 = vpack.c.bf16 %v7714, %v7712
        %v7813 = vpack.c.bf16 %v7494, %v7493
        %v7814 = vpack.c.bf16 %v7607, %v7605
        %v7815 = vpack.c.bf16 %v7719, %v7717
        %v7816 = vpack.c.bf16 %v7497, %v7496
        %v7817 = vpack.c.bf16 %v7612, %v7610
        %v7818 = vpack.c.bf16 %v7724, %v7722
        %v7819 = vpack.c.bf16 %v7500, %v7499
        %v7820 = vpack.c.bf16 %v7617, %v7615
        %v7821 = vpack.c.bf16 %v7729, %v7727
        %v7822 = vpack.c.bf16 %v7503, %v7502
        %v7823 = vpack.c.bf16 %v7622, %v7620
        %v7824 = vpack.c.bf16 %v7734, %v7732
        %v7825 = vpack.c.bf16 %v7506, %v7505
        %v7826 = vpack.c.bf16 %v7627, %v7625
        %v7827 = vpack.c.bf16 %v7739, %v7737
        %v7828 = vpack.c.bf16 %v7509, %v7508
        %v7829 = vpack.c.bf16 %v7632, %v7630
        %v7830 = vpack.c.bf16 %v7744, %v7742
        %v7831 = vpack.c.bf16 %v7512, %v7511
        %v7832 = vpack.c.bf16 %v7637, %v7635
        %v7833 = vpack.c.bf16 %v7749, %v7747
        %v7834 = vpack.c.bf16 %v7515, %v7514
        %v7835 = vpack.c.bf16 %v7642, %v7640
        %v7836 = vpack.c.bf16 %v7754, %v7752
        %v7837 = vpack.c.bf16 %v7518, %v7517
        %v7838 = vpack.c.bf16 %v7647, %v7645
        %v7839 = vpack.c.bf16 %v7759, %v7757
        %v7840 = vld [vmem:[#allocation4] sm:$0xff]
        %v7841 = vld [vmem:[#allocation4 + $0x8] sm:$0xff]
        %v7842 = vld [vmem:[#allocation4 + $0x10] sm:$0xff]
        %v7843 = vld [vmem:[#allocation4 + $0x18] sm:$0xff]
        %v7844 = vld [vmem:[#allocation4 + $0x20] sm:$0xff]
        %v7845 = vld [vmem:[#allocation4 + $0x28] sm:$0xff]
        %v7846 = vld [vmem:[#allocation4 + $0x30] sm:$0xff]
        %v7847 = vld [vmem:[#allocation4 + $0x38] sm:$0xff]
        %v7848 = vld [vmem:[#allocation4 + $0x40] sm:$0xff]
        %v7849 = vld [vmem:[#allocation4 + $0x48] sm:$0xff]
        %v7850 = vld [vmem:[#allocation4 + $0x50] sm:$0xff]
        %v7851 = vld [vmem:[#allocation4 + $0x58] sm:$0xff]
        %v7852 = vld [vmem:[#allocation4 + $0x60] sm:$0xff]
        %v7853 = vld [vmem:[#allocation4 + $0x68] sm:$0xff]
        %v7854 = vld [vmem:[#allocation4 + $0x70] sm:$0xff]
        %v7855 = vld [vmem:[#allocation4 + $0x78] sm:$0xff]
        %v7856 = vld [vmem:[#allocation4 + $0x80] sm:$0xff]
        %v7857 = vld [vmem:[#allocation4 + $0x88] sm:$0xff]
        %v7858 = vld [vmem:[#allocation4 + $0x90] sm:$0xff]
        %v7859 = vld [vmem:[#allocation4 + $0x98] sm:$0xff]
        %v7860 = vld [vmem:[#allocation4 + $0xa0] sm:$0xff]
        %v7861 = vld [vmem:[#allocation4 + $0xa8] sm:$0xff]
        %v7862 = vld [vmem:[#allocation4 + $0xb0] sm:$0xff]
        %v7863 = vld [vmem:[#allocation4 + $0xb8] sm:$0xff]
        %v7864 = vld [vmem:[#allocation4 + $0xc0] sm:$0xff]
        %v7865 = vld [vmem:[#allocation4 + $0xc8] sm:$0xff]
        %v7866 = vld [vmem:[#allocation4 + $0xd0] sm:$0xff]
        %v7867 = vld [vmem:[#allocation4 + $0xd8] sm:$0xff]
        %v7868 = vld [vmem:[#allocation4 + $0xe0] sm:$0xff]
        %v7869 = vld [vmem:[#allocation4 + $0xe8] sm:$0xff]
        %v7870 = vld [vmem:[#allocation4 + $0xf0] sm:$0xff]
        %v7871 = vld [vmem:[#allocation4 + $0xf8] sm:$0xff]
        %s7872 = scalar_lea.vmem [#allocation11], 192
        %v7873 = vld [vmem:[%s7872] sm:$0xf]
        %v7874 = vld [vmem:[%s7872 + $0x4] sm:$0xf]
        %v7875 = vld [vmem:[%s7872 + $0x8] sm:$0xf]
        %v7876 = vld [vmem:[%s7872 + $0xc] sm:$0xf]
        %v7877 = vld [vmem:[%s7872 + $0x10] sm:$0xf]
        %v7878 = vld [vmem:[%s7872 + $0x14] sm:$0xf]
        %v7879 = vld [vmem:[%s7872 + $0x18] sm:$0xf]
        %v7880 = vld [vmem:[%s7872 + $0x1c] sm:$0xf]
        %v7881 = vld [vmem:[%s7872 + $0x20] sm:$0xf]
        %v7882 = vld [vmem:[%s7872 + $0x24] sm:$0xf]
        %v7883 = vld [vmem:[%s7872 + $0x28] sm:$0xf]
        %v7884 = vld [vmem:[%s7872 + $0x2c] sm:$0xf]
        %v7885 = vld [vmem:[%s7872 + $0x30] sm:$0xf]
        %v7886 = vld [vmem:[%s7872 + $0x34] sm:$0xf]
        %v7887 = vld [vmem:[%s7872 + $0x38] sm:$0xf]
        %v7888 = vld [vmem:[%s7872 + $0x3c] sm:$0xf]
        %v7889 = vld [vmem:[%s7872 + $0x40] sm:$0xf]
        %v7890 = vld [vmem:[%s7872 + $0x44] sm:$0xf]
        %v7891 = vld [vmem:[%s7872 + $0x48] sm:$0xf]
        %v7892 = vld [vmem:[%s7872 + $0x4c] sm:$0xf]
        %v7893 = vld [vmem:[%s7872 + $0x50] sm:$0xf]
        %v7894 = vld [vmem:[%s7872 + $0x54] sm:$0xf]
        %v7895 = vld [vmem:[%s7872 + $0x58] sm:$0xf]
        %v7896 = vld [vmem:[%s7872 + $0x5c] sm:$0xf]
        %v7897 = vld [vmem:[%s7872 + $0x60] sm:$0xf]
        %v7898 = vld [vmem:[%s7872 + $0x64] sm:$0xf]
        %v7899 = vld [vmem:[%s7872 + $0x68] sm:$0xf]
        %v7900 = vld [vmem:[%s7872 + $0x6c] sm:$0xf]
        %v7901 = vld [vmem:[%s7872 + $0x70] sm:$0xf]
        %v7902 = vld [vmem:[%s7872 + $0x74] sm:$0xf]
        %v7903 = vld [vmem:[%s7872 + $0x78] sm:$0xf]
        %v7904 = vld [vmem:[%s7872 + $0x7c] sm:$0xf]
        %v7905 = vld [vmem:[%s7872 + $0x80] sm:$0xf]
        %v7906 = vld [vmem:[%s7872 + $0x84] sm:$0xf]
        %v7907 = vld [vmem:[%s7872 + $0x88] sm:$0xf]
        %v7908 = vld [vmem:[%s7872 + $0x8c] sm:$0xf]
        %v7909 = vld [vmem:[%s7872 + $0x90] sm:$0xf]
        %v7910 = vld [vmem:[%s7872 + $0x94] sm:$0xf]
        %v7911 = vld [vmem:[%s7872 + $0x98] sm:$0xf]
        %v7912 = vld [vmem:[%s7872 + $0x9c] sm:$0xf]
        %v7913 = vld [vmem:[%s7872 + $0xa0] sm:$0xf]
        %v7914 = vld [vmem:[%s7872 + $0xa4] sm:$0xf]
        %v7915 = vld [vmem:[%s7872 + $0xa8] sm:$0xf]
        %v7916 = vld [vmem:[%s7872 + $0xac] sm:$0xf]
        %v7917 = vld [vmem:[%s7872 + $0xb0] sm:$0xf]
        %v7918 = vld [vmem:[%s7872 + $0xb4] sm:$0xf]
        %v7919 = vld [vmem:[%s7872 + $0xb8] sm:$0xf]
        %v7920 = vld [vmem:[%s7872 + $0xbc] sm:$0xf]
        %v7969 = vunpack.c.l.b16 %v7873
        %v7970 = vunpack.c.l.b16 %v7874
        %v7971 = vunpack.c.l.b16 %v7875
        %v7972 = vunpack.c.l.b16 %v7876
        %v7973 = vunpack.c.l.b16 %v7877
        %v7974 = vunpack.c.l.b16 %v7878
        %v7975 = vunpack.c.l.b16 %v7879
        %v7976 = vunpack.c.l.b16 %v7880
        %v7977 = vunpack.c.l.b16 %v7881
        %v7978 = vunpack.c.l.b16 %v7882
        %v7979 = vunpack.c.l.b16 %v7883
        %v7980 = vunpack.c.l.b16 %v7884
        %v7981 = vunpack.c.l.b16 %v7885
        %v7982 = vunpack.c.l.b16 %v7886
        %v7983 = vunpack.c.l.b16 %v7887
        %v7984 = vunpack.c.l.b16 %v7888
        %v7985 = vunpack.c.l.b16 %v7889
        %v7986 = vunpack.c.l.b16 %v7890
        %v7987 = vunpack.c.l.b16 %v7891
        %v7988 = vunpack.c.l.b16 %v7892
        %v7989 = vunpack.c.l.b16 %v7893
        %v7990 = vunpack.c.l.b16 %v7894
        %v7991 = vunpack.c.l.b16 %v7895
        %v7992 = vunpack.c.l.b16 %v7896
        %v7993 = vunpack.c.l.b16 %v7897
        %v7994 = vunpack.c.l.b16 %v7898
        %v7995 = vunpack.c.l.b16 %v7899
        %v7996 = vunpack.c.l.b16 %v7900
        %v7997 = vunpack.c.l.b16 %v7901
        %v7998 = vunpack.c.l.b16 %v7902
        %v7999 = vunpack.c.l.b16 %v7903
        %v8000 = vunpack.c.l.b16 %v7904
        %v8001 = vunpack.c.l.b16 %v7905
        %v8002 = vunpack.c.l.b16 %v7906
        %v8003 = vunpack.c.l.b16 %v7907
        %v8004 = vunpack.c.l.b16 %v7908
        %v8005 = vunpack.c.l.b16 %v7909
        %v8006 = vunpack.c.l.b16 %v7910
        %v8007 = vunpack.c.l.b16 %v7911
        %v8008 = vunpack.c.l.b16 %v7912
        %v8009 = vunpack.c.l.b16 %v7913
        %v8010 = vunpack.c.l.b16 %v7914
        %v8011 = vunpack.c.l.b16 %v7915
        %v8012 = vunpack.c.l.b16 %v7916
        %v8013 = vunpack.c.l.b16 %v7917
        %v8014 = vunpack.c.l.b16 %v7918
        %v8015 = vunpack.c.l.b16 %v7919
        %v8016 = vunpack.c.l.b16 %v7920
        %v8017 = vpack.c.b16 %v7970, %v7969
        %v8018 = vpack.c.b16 %v7972, %v7971
        %v8019 = vpack.c.b16 %v7974, %v7973
        %v8020 = vpack.c.b16 %v7976, %v7975
        %v8021 = vpack.c.b16 %v7978, %v7977
        %v8022 = vpack.c.b16 %v7980, %v7979
        %v8023 = vpack.c.b16 %v7982, %v7981
        %v8024 = vpack.c.b16 %v7984, %v7983
        %v8025 = vpack.c.b16 %v7986, %v7985
        %v8026 = vpack.c.b16 %v7988, %v7987
        %v8027 = vpack.c.b16 %v7990, %v7989
        %v8028 = vpack.c.b16 %v7992, %v7991
        %v8029 = vpack.c.b16 %v7994, %v7993
        %v8030 = vpack.c.b16 %v7996, %v7995
        %v8031 = vpack.c.b16 %v7998, %v7997
        %v8032 = vpack.c.b16 %v8000, %v7999
        %v8033 = vpack.c.b16 %v8002, %v8001
        %v8034 = vpack.c.b16 %v8004, %v8003
        %v8035 = vpack.c.b16 %v8006, %v8005
        %v8036 = vpack.c.b16 %v8008, %v8007
        %v8037 = vpack.c.b16 %v8010, %v8009
        %v8038 = vpack.c.b16 %v8012, %v8011
        %v8039 = vpack.c.b16 %v8014, %v8013
        %v8040 = vpack.c.b16 %v8016, %v8015
        %8065 = vmatpush.bf16.msra.mxu0 %v8024
        %8066 = vmatpush.bf16.msra.mxu0 %v8023
        %8067 = vmatpush.bf16.msra.mxu0 %v8022
        %8068 = vmatpush.bf16.msra.mxu0 %v8021
        %8069 = vmatpush.bf16.msra.mxu0 %v8020
        %8070 = vmatpush.bf16.msra.mxu0 %v8019
        %8071 = vmatpush.bf16.msra.mxu0 %v8018
        %8072 = vmatpush.bf16.msra.mxu0 %v8017
        %8073 = vmatmul.bf16.gmra.mxu0 %v7792
        %v8074 = vpop.f32.mrf.mxu0
        %v8075 = vadd.f32 0.0, %v8074
        %v8076 = vpop.f32.mrf.mxu0
        %v8077 = vadd.f32 0.0, %v8076
        %8078 = vmatmul.bf16.gmra.mxu0 %v7795
        %v8079 = vpop.f32.mrf.mxu0
        %v8080 = vadd.f32 0.0, %v8079
        %v8081 = vpop.f32.mrf.mxu0
        %v8082 = vadd.f32 0.0, %v8081
        %8083 = vmatmul.bf16.gmra.mxu0 %v7798
        %v8084 = vpop.f32.mrf.mxu0
        %v8085 = vadd.f32 0.0, %v8084
        %v8086 = vpop.f32.mrf.mxu0
        %v8087 = vadd.f32 0.0, %v8086
        %8088 = vmatmul.bf16.gmra.mxu0 %v7801
        %v8089 = vpop.f32.mrf.mxu0
        %v8090 = vadd.f32 0.0, %v8089
        %v8091 = vpop.f32.mrf.mxu0
        %v8092 = vadd.f32 0.0, %v8091
        %8093 = vmatmul.bf16.gmra.mxu0 %v7804
        %v8094 = vpop.f32.mrf.mxu0
        %v8095 = vadd.f32 0.0, %v8094
        %v8096 = vpop.f32.mrf.mxu0
        %v8097 = vadd.f32 0.0, %v8096
        %8098 = vmatmul.bf16.gmra.mxu0 %v7807
        %v8099 = vpop.f32.mrf.mxu0
        %v8100 = vadd.f32 0.0, %v8099
        %v8101 = vpop.f32.mrf.mxu0
        %v8102 = vadd.f32 0.0, %v8101
        %8103 = vmatmul.bf16.gmra.mxu0 %v7810
        %v8104 = vpop.f32.mrf.mxu0
        %v8105 = vadd.f32 0.0, %v8104
        %v8106 = vpop.f32.mrf.mxu0
        %v8107 = vadd.f32 0.0, %v8106
        %8108 = vmatmul.bf16.gmra.mxu0 %v7813
        %v8109 = vpop.f32.mrf.mxu0
        %v8110 = vadd.f32 0.0, %v8109
        %v8111 = vpop.f32.mrf.mxu0
        %v8112 = vadd.f32 0.0, %v8111
        %8113 = vmatmul.bf16.gmra.mxu0 %v7816
        %v8114 = vpop.f32.mrf.mxu0
        %v8115 = vadd.f32 0.0, %v8114
        %v8116 = vpop.f32.mrf.mxu0
        %v8117 = vadd.f32 0.0, %v8116
        %8118 = vmatmul.bf16.gmra.mxu0 %v7819
        %v8119 = vpop.f32.mrf.mxu0
        %v8120 = vadd.f32 0.0, %v8119
        %v8121 = vpop.f32.mrf.mxu0
        %v8122 = vadd.f32 0.0, %v8121
        %8123 = vmatmul.bf16.gmra.mxu0 %v7822
        %v8124 = vpop.f32.mrf.mxu0
        %v8125 = vadd.f32 0.0, %v8124
        %v8126 = vpop.f32.mrf.mxu0
        %v8127 = vadd.f32 0.0, %v8126
        %8128 = vmatmul.bf16.gmra.mxu0 %v7825
        %v8129 = vpop.f32.mrf.mxu0
        %v8130 = vadd.f32 0.0, %v8129
        %v8131 = vpop.f32.mrf.mxu0
        %v8132 = vadd.f32 0.0, %v8131
        %8133 = vmatmul.bf16.gmra.mxu0 %v7828
        %v8134 = vpop.f32.mrf.mxu0
        %v8135 = vadd.f32 0.0, %v8134
        %v8136 = vpop.f32.mrf.mxu0
        %v8137 = vadd.f32 0.0, %v8136
        %8138 = vmatmul.bf16.gmra.mxu0 %v7831
        %v8139 = vpop.f32.mrf.mxu0
        %v8140 = vadd.f32 0.0, %v8139
        %v8141 = vpop.f32.mrf.mxu0
        %v8142 = vadd.f32 0.0, %v8141
        %8143 = vmatmul.bf16.gmra.mxu0 %v7834
        %v8144 = vpop.f32.mrf.mxu0
        %v8145 = vadd.f32 0.0, %v8144
        %v8146 = vpop.f32.mrf.mxu0
        %v8147 = vadd.f32 0.0, %v8146
        %8148 = vmatmul.bf16.gmra.mxu0 %v7837
        %v8149 = vpop.f32.mrf.mxu0
        %v8150 = vadd.f32 0.0, %v8149
        %v8151 = vpop.f32.mrf.mxu0
        %v8152 = vadd.f32 0.0, %v8151
        %8153 = vdwg.mxu0
        %8154 = vmatpush.bf16.msra.mxu0 %v8032
        %8155 = vmatpush.bf16.msra.mxu0 %v8031
        %8156 = vmatpush.bf16.msra.mxu0 %v8030
        %8157 = vmatpush.bf16.msra.mxu0 %v8029
        %8158 = vmatpush.bf16.msra.mxu0 %v8028
        %8159 = vmatpush.bf16.msra.mxu0 %v8027
        %8160 = vmatpush.bf16.msra.mxu0 %v8026
        %8161 = vmatpush.bf16.msra.mxu0 %v8025
        %8162 = vmatmul.bf16.gmra.mxu0 %v7793
        %v8163 = vpop.f32.mrf.mxu0
        %v8164 = vadd.f32 %v8075, %v8163
        %v8165 = vpop.f32.mrf.mxu0
        %v8166 = vadd.f32 %v8077, %v8165
        %8167 = vmatmul.bf16.gmra.mxu0 %v7796
        %v8168 = vpop.f32.mrf.mxu0
        %v8169 = vadd.f32 %v8080, %v8168
        %v8170 = vpop.f32.mrf.mxu0
        %v8171 = vadd.f32 %v8082, %v8170
        %8172 = vmatmul.bf16.gmra.mxu0 %v7799
        %v8173 = vpop.f32.mrf.mxu0
        %v8174 = vadd.f32 %v8085, %v8173
        %v8175 = vpop.f32.mrf.mxu0
        %v8176 = vadd.f32 %v8087, %v8175
        %8177 = vmatmul.bf16.gmra.mxu0 %v7802
        %v8178 = vpop.f32.mrf.mxu0
        %v8179 = vadd.f32 %v8090, %v8178
        %v8180 = vpop.f32.mrf.mxu0
        %v8181 = vadd.f32 %v8092, %v8180
        %8182 = vmatmul.bf16.gmra.mxu0 %v7805
        %v8183 = vpop.f32.mrf.mxu0
        %v8184 = vadd.f32 %v8095, %v8183
        %v8185 = vpop.f32.mrf.mxu0
        %v8186 = vadd.f32 %v8097, %v8185
        %8187 = vmatmul.bf16.gmra.mxu0 %v7808
        %v8188 = vpop.f32.mrf.mxu0
        %v8189 = vadd.f32 %v8100, %v8188
        %v8190 = vpop.f32.mrf.mxu0
        %v8191 = vadd.f32 %v8102, %v8190
        %8192 = vmatmul.bf16.gmra.mxu0 %v7811
        %v8193 = vpop.f32.mrf.mxu0
        %v8194 = vadd.f32 %v8105, %v8193
        %v8195 = vpop.f32.mrf.mxu0
        %v8196 = vadd.f32 %v8107, %v8195
        %8197 = vmatmul.bf16.gmra.mxu0 %v7814
        %v8198 = vpop.f32.mrf.mxu0
        %v8199 = vadd.f32 %v8110, %v8198
        %v8200 = vpop.f32.mrf.mxu0
        %v8201 = vadd.f32 %v8112, %v8200
        %8202 = vmatmul.bf16.gmra.mxu0 %v7817
        %v8203 = vpop.f32.mrf.mxu0
        %v8204 = vadd.f32 %v8115, %v8203
        %v8205 = vpop.f32.mrf.mxu0
        %v8206 = vadd.f32 %v8117, %v8205
        %8207 = vmatmul.bf16.gmra.mxu0 %v7820
        %v8208 = vpop.f32.mrf.mxu0
        %v8209 = vadd.f32 %v8120, %v8208
        %v8210 = vpop.f32.mrf.mxu0
        %v8211 = vadd.f32 %v8122, %v8210
        %8212 = vmatmul.bf16.gmra.mxu0 %v7823
        %v8213 = vpop.f32.mrf.mxu0
        %v8214 = vadd.f32 %v8125, %v8213
        %v8215 = vpop.f32.mrf.mxu0
        %v8216 = vadd.f32 %v8127, %v8215
        %8217 = vmatmul.bf16.gmra.mxu0 %v7826
        %v8218 = vpop.f32.mrf.mxu0
        %v8219 = vadd.f32 %v8130, %v8218
        %v8220 = vpop.f32.mrf.mxu0
        %v8221 = vadd.f32 %v8132, %v8220
        %8222 = vmatmul.bf16.gmra.mxu0 %v7829
        %v8223 = vpop.f32.mrf.mxu0
        %v8224 = vadd.f32 %v8135, %v8223
        %v8225 = vpop.f32.mrf.mxu0
        %v8226 = vadd.f32 %v8137, %v8225
        %8227 = vmatmul.bf16.gmra.mxu0 %v7832
        %v8228 = vpop.f32.mrf.mxu0
        %v8229 = vadd.f32 %v8140, %v8228
        %v8230 = vpop.f32.mrf.mxu0
        %v8231 = vadd.f32 %v8142, %v8230
        %8232 = vmatmul.bf16.gmra.mxu0 %v7835
        %v8233 = vpop.f32.mrf.mxu0
        %v8234 = vadd.f32 %v8145, %v8233
        %v8235 = vpop.f32.mrf.mxu0
        %v8236 = vadd.f32 %v8147, %v8235
        %8237 = vmatmul.bf16.gmra.mxu0 %v7838
        %v8238 = vpop.f32.mrf.mxu0
        %v8239 = vadd.f32 %v8150, %v8238
        %v8240 = vpop.f32.mrf.mxu0
        %v8241 = vadd.f32 %v8152, %v8240
        %8242 = vdwg.mxu0
        %8243 = vmatpush.bf16.msra.mxu0 %v8040
        %8244 = vmatpush.bf16.msra.mxu0 %v8039
        %8245 = vmatpush.bf16.msra.mxu0 %v8038
        %8246 = vmatpush.bf16.msra.mxu0 %v8037
        %8247 = vmatpush.bf16.msra.mxu0 %v8036
        %8248 = vmatpush.bf16.msra.mxu0 %v8035
        %8249 = vmatpush.bf16.msra.mxu0 %v8034
        %8250 = vmatpush.bf16.msra.mxu0 %v8033
        %8251 = vmatmul.bf16.gmra.mxu0 %v7794
        %v8252 = vpop.f32.mrf.mxu0
        %v8253 = vadd.f32 %v8164, %v8252
        %v8254 = vpop.f32.mrf.mxu0
        %v8255 = vadd.f32 %v8166, %v8254
        %8256 = vmatmul.bf16.gmra.mxu0 %v7797
        %v8257 = vpop.f32.mrf.mxu0
        %v8258 = vadd.f32 %v8169, %v8257
        %v8259 = vpop.f32.mrf.mxu0
        %v8260 = vadd.f32 %v8171, %v8259
        %8261 = vmatmul.bf16.gmra.mxu0 %v7800
        %v8262 = vpop.f32.mrf.mxu0
        %v8263 = vadd.f32 %v8174, %v8262
        %v8264 = vpop.f32.mrf.mxu0
        %v8265 = vadd.f32 %v8176, %v8264
        %8266 = vmatmul.bf16.gmra.mxu0 %v7803
        %v8267 = vpop.f32.mrf.mxu0
        %v8268 = vadd.f32 %v8179, %v8267
        %v8269 = vpop.f32.mrf.mxu0
        %v8270 = vadd.f32 %v8181, %v8269
        %8271 = vmatmul.bf16.gmra.mxu0 %v7806
        %v8272 = vpop.f32.mrf.mxu0
        %v8273 = vadd.f32 %v8184, %v8272
        %v8274 = vpop.f32.mrf.mxu0
        %v8275 = vadd.f32 %v8186, %v8274
        %8276 = vmatmul.bf16.gmra.mxu0 %v7809
        %v8277 = vpop.f32.mrf.mxu0
        %v8278 = vadd.f32 %v8189, %v8277
        %v8279 = vpop.f32.mrf.mxu0
        %v8280 = vadd.f32 %v8191, %v8279
        %8281 = vmatmul.bf16.gmra.mxu0 %v7812
        %v8282 = vpop.f32.mrf.mxu0
        %v8283 = vadd.f32 %v8194, %v8282
        %v8284 = vpop.f32.mrf.mxu0
        %v8285 = vadd.f32 %v8196, %v8284
        %8286 = vmatmul.bf16.gmra.mxu0 %v7815
        %v8287 = vpop.f32.mrf.mxu0
        %v8288 = vadd.f32 %v8199, %v8287
        %v8289 = vpop.f32.mrf.mxu0
        %v8290 = vadd.f32 %v8201, %v8289
        %8291 = vmatmul.bf16.gmra.mxu0 %v7818
        %v8292 = vpop.f32.mrf.mxu0
        %v8293 = vadd.f32 %v8204, %v8292
        %v8294 = vpop.f32.mrf.mxu0
        %v8295 = vadd.f32 %v8206, %v8294
        %8296 = vmatmul.bf16.gmra.mxu0 %v7821
        %v8297 = vpop.f32.mrf.mxu0
        %v8298 = vadd.f32 %v8209, %v8297
        %v8299 = vpop.f32.mrf.mxu0
        %v8300 = vadd.f32 %v8211, %v8299
        %8301 = vmatmul.bf16.gmra.mxu0 %v7824
        %v8302 = vpop.f32.mrf.mxu0
        %v8303 = vadd.f32 %v8214, %v8302
        %v8304 = vpop.f32.mrf.mxu0
        %v8305 = vadd.f32 %v8216, %v8304
        %8306 = vmatmul.bf16.gmra.mxu0 %v7827
        %v8307 = vpop.f32.mrf.mxu0
        %v8308 = vadd.f32 %v8219, %v8307
        %v8309 = vpop.f32.mrf.mxu0
        %v8310 = vadd.f32 %v8221, %v8309
        %8311 = vmatmul.bf16.gmra.mxu0 %v7830
        %v8312 = vpop.f32.mrf.mxu0
        %v8313 = vadd.f32 %v8224, %v8312
        %v8314 = vpop.f32.mrf.mxu0
        %v8315 = vadd.f32 %v8226, %v8314
        %8316 = vmatmul.bf16.gmra.mxu0 %v7833
        %v8317 = vpop.f32.mrf.mxu0
        %v8318 = vadd.f32 %v8229, %v8317
        %v8319 = vpop.f32.mrf.mxu0
        %v8320 = vadd.f32 %v8231, %v8319
        %8321 = vmatmul.bf16.gmra.mxu0 %v7836
        %v8322 = vpop.f32.mrf.mxu0
        %v8323 = vadd.f32 %v8234, %v8322
        %v8324 = vpop.f32.mrf.mxu0
        %v8325 = vadd.f32 %v8236, %v8324
        %8326 = vmatmul.bf16.gmra.mxu0 %v7839
        %v8327 = vpop.f32.mrf.mxu0
        %v8328 = vadd.f32 %v8239, %v8327
        %v8329 = vpop.f32.mrf.mxu0
        %v8330 = vadd.f32 %v8241, %v8329
        %8331 = vdwg.mxu0
        %v8332 = vadd.f32 %v7840, %v8253
        %v8333 = vadd.f32 %v7841, %v8255
        %v8334 = vadd.f32 %v7842, %v8258
        %v8335 = vadd.f32 %v7843, %v8260
        %v8336 = vadd.f32 %v7844, %v8263
        %v8337 = vadd.f32 %v7845, %v8265
        %v8338 = vadd.f32 %v7846, %v8268
        %v8339 = vadd.f32 %v7847, %v8270
        %v8340 = vadd.f32 %v7848, %v8273
        %v8341 = vadd.f32 %v7849, %v8275
        %v8342 = vadd.f32 %v7850, %v8278
        %v8343 = vadd.f32 %v7851, %v8280
        %v8344 = vadd.f32 %v7852, %v8283
        %v8345 = vadd.f32 %v7853, %v8285
        %v8346 = vadd.f32 %v7854, %v8288
        %v8347 = vadd.f32 %v7855, %v8290
        %v8348 = vadd.f32 %v7856, %v8293
        %v8349 = vadd.f32 %v7857, %v8295
        %v8350 = vadd.f32 %v7858, %v8298
        %v8351 = vadd.f32 %v7859, %v8300
        %v8352 = vadd.f32 %v7860, %v8303
        %v8353 = vadd.f32 %v7861, %v8305
        %v8354 = vadd.f32 %v7862, %v8308
        %v8355 = vadd.f32 %v7863, %v8310
        %v8356 = vadd.f32 %v7864, %v8313
        %v8357 = vadd.f32 %v7865, %v8315
        %v8358 = vadd.f32 %v7866, %v8318
        %v8359 = vadd.f32 %v7867, %v8320
        %v8360 = vadd.f32 %v7868, %v8323
        %v8361 = vadd.f32 %v7869, %v8325
        %v8362 = vadd.f32 %v7870, %v8328
        %v8363 = vadd.f32 %v7871, %v8330
        %8364 = vst [vmem:[#allocation4] sm:$0xff] %v8332
        %8365 = vst [vmem:[#allocation4 + $0x8] sm:$0xff] %v8333
        %8366 = vst [vmem:[#allocation4 + $0x10] sm:$0xff] %v8334
        %8367 = vst [vmem:[#allocation4 + $0x18] sm:$0xff] %v8335
        %8368 = vst [vmem:[#allocation4 + $0x20] sm:$0xff] %v8336
        %8369 = vst [vmem:[#allocation4 + $0x28] sm:$0xff] %v8337
        %8370 = vst [vmem:[#allocation4 + $0x30] sm:$0xff] %v8338
        %8371 = vst [vmem:[#allocation4 + $0x38] sm:$0xff] %v8339
        %8372 = vst [vmem:[#allocation4 + $0x40] sm:$0xff] %v8340
        %8373 = vst [vmem:[#allocation4 + $0x48] sm:$0xff] %v8341
        %8374 = vst [vmem:[#allocation4 + $0x50] sm:$0xff] %v8342
        %8375 = vst [vmem:[#allocation4 + $0x58] sm:$0xff] %v8343
        %8376 = vst [vmem:[#allocation4 + $0x60] sm:$0xff] %v8344
        %8377 = vst [vmem:[#allocation4 + $0x68] sm:$0xff] %v8345
        %8378 = vst [vmem:[#allocation4 + $0x70] sm:$0xff] %v8346
        %8379 = vst [vmem:[#allocation4 + $0x78] sm:$0xff] %v8347
        %8380 = vst [vmem:[#allocation4 + $0x80] sm:$0xff] %v8348
        %8381 = vst [vmem:[#allocation4 + $0x88] sm:$0xff] %v8349
        %8382 = vst [vmem:[#allocation4 + $0x90] sm:$0xff] %v8350
        %8383 = vst [vmem:[#allocation4 + $0x98] sm:$0xff] %v8351
        %8384 = vst [vmem:[#allocation4 + $0xa0] sm:$0xff] %v8352
        %8385 = vst [vmem:[#allocation4 + $0xa8] sm:$0xff] %v8353
        %8386 = vst [vmem:[#allocation4 + $0xb0] sm:$0xff] %v8354
        %8387 = vst [vmem:[#allocation4 + $0xb8] sm:$0xff] %v8355
        %8388 = vst [vmem:[#allocation4 + $0xc0] sm:$0xff] %v8356
        %8389 = vst [vmem:[#allocation4 + $0xc8] sm:$0xff] %v8357
        %8390 = vst [vmem:[#allocation4 + $0xd0] sm:$0xff] %v8358
        %8391 = vst [vmem:[#allocation4 + $0xd8] sm:$0xff] %v8359
        %8392 = vst [vmem:[#allocation4 + $0xe0] sm:$0xff] %v8360
        %8393 = vst [vmem:[#allocation4 + $0xe8] sm:$0xff] %v8361
        %8394 = vst [vmem:[#allocation4 + $0xf0] sm:$0xff] %v8362
        %8395 = vst [vmem:[#allocation4 + $0xf8] sm:$0xff] %v8363
        %s8396 = scalar_lea.vmem [#allocation3], 48
        %v8397 = vld [vmem:[%s8396] sm:$0xff]
        %v8398 = vld [vmem:[%s8396 + $0x8] sm:$0xff]
        %v8399 = vld [vmem:[%s8396 + $0x10] sm:$0x3]
        %v8400 = vld [vmem:[%s8396 + $0x18] sm:$0xff]
        %v8401 = vld [vmem:[%s8396 + $0x20] sm:$0xff]
        %v8402 = vld [vmem:[%s8396 + $0x28] sm:$0x3]
        %v8403 = vld [vmem:[%s8396 + $0x30] sm:$0xff]
        %v8404 = vld [vmem:[%s8396 + $0x38] sm:$0xff]
        %v8405 = vld [vmem:[%s8396 + $0x40] sm:$0x3]
        %v8406 = vld [vmem:[%s8396 + $0x48] sm:$0xff]
        %v8407 = vld [vmem:[%s8396 + $0x50] sm:$0xff]
        %v8408 = vld [vmem:[%s8396 + $0x58] sm:$0x3]
        %v8409 = vld [vmem:[%s8396 + $0x60] sm:$0xff]
        %v8410 = vld [vmem:[%s8396 + $0x68] sm:$0xff]
        %v8411 = vld [vmem:[%s8396 + $0x70] sm:$0x3]
        %v8412 = vld [vmem:[%s8396 + $0x78] sm:$0xff]
        %v8413 = vld [vmem:[%s8396 + $0x80] sm:$0xff]
        %v8414 = vld [vmem:[%s8396 + $0x88] sm:$0x3]
        %v8415 = vld [vmem:[%s8396 + $0x90] sm:$0xff]
        %v8416 = vld [vmem:[%s8396 + $0x98] sm:$0xff]
        %v8417 = vld [vmem:[%s8396 + $0xa0] sm:$0x3]
        %v8418 = vld [vmem:[%s8396 + $0xa8] sm:$0xff]
        %v8419 = vld [vmem:[%s8396 + $0xb0] sm:$0xff]
        %v8420 = vld [vmem:[%s8396 + $0xb8] sm:$0x3]
        %v8421 = vld [vmem:[%s8396 + $0xc0] sm:$0xff]
        %v8422 = vld [vmem:[%s8396 + $0xc8] sm:$0xff]
        %v8423 = vld [vmem:[%s8396 + $0xd0] sm:$0x3]
        %v8424 = vld [vmem:[%s8396 + $0xd8] sm:$0xff]
        %v8425 = vld [vmem:[%s8396 + $0xe0] sm:$0xff]
        %v8426 = vld [vmem:[%s8396 + $0xe8] sm:$0x3]
        %v8427 = vld [vmem:[%s8396 + $0xf0] sm:$0xff]
        %v8428 = vld [vmem:[%s8396 + $0xf8] sm:$0xff]
        %v8429 = vld [vmem:[%s8396 + $0x100] sm:$0x3]
        %v8430 = vld [vmem:[%s8396 + $0x108] sm:$0xff]
        %v8431 = vld [vmem:[%s8396 + $0x110] sm:$0xff]
        %v8432 = vld [vmem:[%s8396 + $0x118] sm:$0x3]
        %v8433 = vld [vmem:[%s8396 + $0x120] sm:$0xff]
        %v8434 = vld [vmem:[%s8396 + $0x128] sm:$0xff]
        %v8435 = vld [vmem:[%s8396 + $0x130] sm:$0x3]
        %v8436 = vld [vmem:[%s8396 + $0x138] sm:$0xff]
        %v8437 = vld [vmem:[%s8396 + $0x140] sm:$0xff]
        %v8438 = vld [vmem:[%s8396 + $0x148] sm:$0x3]
        %v8439 = vld [vmem:[%s8396 + $0x150] sm:$0xff]
        %v8440 = vld [vmem:[%s8396 + $0x158] sm:$0xff]
        %v8441 = vld [vmem:[%s8396 + $0x160] sm:$0x3]
        %v8442 = vld [vmem:[%s8396 + $0x168] sm:$0xff]
        %v8443 = vld [vmem:[%s8396 + $0x170] sm:$0xff]
        %v8444 = vld [vmem:[%s8396 + $0x178] sm:$0x3]
        %v8493 = vrot.slane %v8397, 1
        %v8494 = vrot.slane %v8398, 1
        %v8495 = vsel %vm677, %v8493, %v8494
        %v8496 = vrot.slane %v8399, 1
        %v8497 = vsel %vm677, %v8494, %v8496
        %v8498 = vrot.slane %v8400, 1
        %v8499 = vrot.slane %v8401, 1
        %v8500 = vsel %vm677, %v8498, %v8499
        %v8501 = vrot.slane %v8402, 1
        %v8502 = vsel %vm677, %v8499, %v8501
        %v8503 = vrot.slane %v8403, 1
        %v8504 = vrot.slane %v8404, 1
        %v8505 = vsel %vm677, %v8503, %v8504
        %v8506 = vrot.slane %v8405, 1
        %v8507 = vsel %vm677, %v8504, %v8506
        %v8508 = vrot.slane %v8406, 1
        %v8509 = vrot.slane %v8407, 1
        %v8510 = vsel %vm677, %v8508, %v8509
        %v8511 = vrot.slane %v8408, 1
        %v8512 = vsel %vm677, %v8509, %v8511
        %v8513 = vrot.slane %v8409, 1
        %v8514 = vrot.slane %v8410, 1
        %v8515 = vsel %vm677, %v8513, %v8514
        %v8516 = vrot.slane %v8411, 1
        %v8517 = vsel %vm677, %v8514, %v8516
        %v8518 = vrot.slane %v8412, 1
        %v8519 = vrot.slane %v8413, 1
        %v8520 = vsel %vm677, %v8518, %v8519
        %v8521 = vrot.slane %v8414, 1
        %v8522 = vsel %vm677, %v8519, %v8521
        %v8523 = vrot.slane %v8415, 1
        %v8524 = vrot.slane %v8416, 1
        %v8525 = vsel %vm677, %v8523, %v8524
        %v8526 = vrot.slane %v8417, 1
        %v8527 = vsel %vm677, %v8524, %v8526
        %v8528 = vrot.slane %v8418, 1
        %v8529 = vrot.slane %v8419, 1
        %v8530 = vsel %vm677, %v8528, %v8529
        %v8531 = vrot.slane %v8420, 1
        %v8532 = vsel %vm677, %v8529, %v8531
        %v8533 = vrot.slane %v8421, 1
        %v8534 = vrot.slane %v8422, 1
        %v8535 = vsel %vm677, %v8533, %v8534
        %v8536 = vrot.slane %v8423, 1
        %v8537 = vsel %vm677, %v8534, %v8536
        %v8538 = vrot.slane %v8424, 1
        %v8539 = vrot.slane %v8425, 1
        %v8540 = vsel %vm677, %v8538, %v8539
        %v8541 = vrot.slane %v8426, 1
        %v8542 = vsel %vm677, %v8539, %v8541
        %v8543 = vrot.slane %v8427, 1
        %v8544 = vrot.slane %v8428, 1
        %v8545 = vsel %vm677, %v8543, %v8544
        %v8546 = vrot.slane %v8429, 1
        %v8547 = vsel %vm677, %v8544, %v8546
        %v8548 = vrot.slane %v8430, 1
        %v8549 = vrot.slane %v8431, 1
        %v8550 = vsel %vm677, %v8548, %v8549
        %v8551 = vrot.slane %v8432, 1
        %v8552 = vsel %vm677, %v8549, %v8551
        %v8553 = vrot.slane %v8433, 1
        %v8554 = vrot.slane %v8434, 1
        %v8555 = vsel %vm677, %v8553, %v8554
        %v8556 = vrot.slane %v8435, 1
        %v8557 = vsel %vm677, %v8554, %v8556
        %v8558 = vrot.slane %v8436, 1
        %v8559 = vrot.slane %v8437, 1
        %v8560 = vsel %vm677, %v8558, %v8559
        %v8561 = vrot.slane %v8438, 1
        %v8562 = vsel %vm677, %v8559, %v8561
        %v8563 = vrot.slane %v8439, 1
        %v8564 = vrot.slane %v8440, 1
        %v8565 = vsel %vm677, %v8563, %v8564
        %v8566 = vrot.slane %v8441, 1
        %v8567 = vsel %vm677, %v8564, %v8566
        %v8568 = vrot.slane %v8442, 1
        %v8569 = vrot.slane %v8443, 1
        %v8570 = vsel %vm677, %v8568, %v8569
        %v8571 = vrot.slane %v8444, 1
        %v8572 = vsel %vm677, %v8569, %v8571
        %v8605 = vrot.slane %v8397, 2
        %v8606 = vrot.slane %v8398, 2
        %v8607 = vsel %vm790, %v8605, %v8606
        %v8608 = vrot.slane %v8399, 2
        %v8609 = vsel %vm790, %v8606, %v8608
        %v8610 = vrot.slane %v8400, 2
        %v8611 = vrot.slane %v8401, 2
        %v8612 = vsel %vm790, %v8610, %v8611
        %v8613 = vrot.slane %v8402, 2
        %v8614 = vsel %vm790, %v8611, %v8613
        %v8615 = vrot.slane %v8403, 2
        %v8616 = vrot.slane %v8404, 2
        %v8617 = vsel %vm790, %v8615, %v8616
        %v8618 = vrot.slane %v8405, 2
        %v8619 = vsel %vm790, %v8616, %v8618
        %v8620 = vrot.slane %v8406, 2
        %v8621 = vrot.slane %v8407, 2
        %v8622 = vsel %vm790, %v8620, %v8621
        %v8623 = vrot.slane %v8408, 2
        %v8624 = vsel %vm790, %v8621, %v8623
        %v8625 = vrot.slane %v8409, 2
        %v8626 = vrot.slane %v8410, 2
        %v8627 = vsel %vm790, %v8625, %v8626
        %v8628 = vrot.slane %v8411, 2
        %v8629 = vsel %vm790, %v8626, %v8628
        %v8630 = vrot.slane %v8412, 2
        %v8631 = vrot.slane %v8413, 2
        %v8632 = vsel %vm790, %v8630, %v8631
        %v8633 = vrot.slane %v8414, 2
        %v8634 = vsel %vm790, %v8631, %v8633
        %v8635 = vrot.slane %v8415, 2
        %v8636 = vrot.slane %v8416, 2
        %v8637 = vsel %vm790, %v8635, %v8636
        %v8638 = vrot.slane %v8417, 2
        %v8639 = vsel %vm790, %v8636, %v8638
        %v8640 = vrot.slane %v8418, 2
        %v8641 = vrot.slane %v8419, 2
        %v8642 = vsel %vm790, %v8640, %v8641
        %v8643 = vrot.slane %v8420, 2
        %v8644 = vsel %vm790, %v8641, %v8643
        %v8645 = vrot.slane %v8421, 2
        %v8646 = vrot.slane %v8422, 2
        %v8647 = vsel %vm790, %v8645, %v8646
        %v8648 = vrot.slane %v8423, 2
        %v8649 = vsel %vm790, %v8646, %v8648
        %v8650 = vrot.slane %v8424, 2
        %v8651 = vrot.slane %v8425, 2
        %v8652 = vsel %vm790, %v8650, %v8651
        %v8653 = vrot.slane %v8426, 2
        %v8654 = vsel %vm790, %v8651, %v8653
        %v8655 = vrot.slane %v8427, 2
        %v8656 = vrot.slane %v8428, 2
        %v8657 = vsel %vm790, %v8655, %v8656
        %v8658 = vrot.slane %v8429, 2
        %v8659 = vsel %vm790, %v8656, %v8658
        %v8660 = vrot.slane %v8430, 2
        %v8661 = vrot.slane %v8431, 2
        %v8662 = vsel %vm790, %v8660, %v8661
        %v8663 = vrot.slane %v8432, 2
        %v8664 = vsel %vm790, %v8661, %v8663
        %v8665 = vrot.slane %v8433, 2
        %v8666 = vrot.slane %v8434, 2
        %v8667 = vsel %vm790, %v8665, %v8666
        %v8668 = vrot.slane %v8435, 2
        %v8669 = vsel %vm790, %v8666, %v8668
        %v8670 = vrot.slane %v8436, 2
        %v8671 = vrot.slane %v8437, 2
        %v8672 = vsel %vm790, %v8670, %v8671
        %v8673 = vrot.slane %v8438, 2
        %v8674 = vsel %vm790, %v8671, %v8673
        %v8675 = vrot.slane %v8439, 2
        %v8676 = vrot.slane %v8440, 2
        %v8677 = vsel %vm790, %v8675, %v8676
        %v8678 = vrot.slane %v8441, 2
        %v8679 = vsel %vm790, %v8676, %v8678
        %v8680 = vrot.slane %v8442, 2
        %v8681 = vrot.slane %v8443, 2
        %v8682 = vsel %vm790, %v8680, %v8681
        %v8683 = vrot.slane %v8444, 2
        %v8684 = vsel %vm790, %v8681, %v8683
        %v8717 = vpack.c.bf16 %v8398, %v8397
        %v8718 = vpack.c.bf16 %v8497, %v8495
        %v8719 = vpack.c.bf16 %v8609, %v8607
        %v8720 = vpack.c.bf16 %v8401, %v8400
        %v8721 = vpack.c.bf16 %v8502, %v8500
        %v8722 = vpack.c.bf16 %v8614, %v8612
        %v8723 = vpack.c.bf16 %v8404, %v8403
        %v8724 = vpack.c.bf16 %v8507, %v8505
        %v8725 = vpack.c.bf16 %v8619, %v8617
        %v8726 = vpack.c.bf16 %v8407, %v8406
        %v8727 = vpack.c.bf16 %v8512, %v8510
        %v8728 = vpack.c.bf16 %v8624, %v8622
        %v8729 = vpack.c.bf16 %v8410, %v8409
        %v8730 = vpack.c.bf16 %v8517, %v8515
        %v8731 = vpack.c.bf16 %v8629, %v8627
        %v8732 = vpack.c.bf16 %v8413, %v8412
        %v8733 = vpack.c.bf16 %v8522, %v8520
        %v8734 = vpack.c.bf16 %v8634, %v8632
        %v8735 = vpack.c.bf16 %v8416, %v8415
        %v8736 = vpack.c.bf16 %v8527, %v8525
        %v8737 = vpack.c.bf16 %v8639, %v8637
        %v8738 = vpack.c.bf16 %v8419, %v8418
        %v8739 = vpack.c.bf16 %v8532, %v8530
        %v8740 = vpack.c.bf16 %v8644, %v8642
        %v8741 = vpack.c.bf16 %v8422, %v8421
        %v8742 = vpack.c.bf16 %v8537, %v8535
        %v8743 = vpack.c.bf16 %v8649, %v8647
        %v8744 = vpack.c.bf16 %v8425, %v8424
        %v8745 = vpack.c.bf16 %v8542, %v8540
        %v8746 = vpack.c.bf16 %v8654, %v8652
        %v8747 = vpack.c.bf16 %v8428, %v8427
        %v8748 = vpack.c.bf16 %v8547, %v8545
        %v8749 = vpack.c.bf16 %v8659, %v8657
        %v8750 = vpack.c.bf16 %v8431, %v8430
        %v8751 = vpack.c.bf16 %v8552, %v8550
        %v8752 = vpack.c.bf16 %v8664, %v8662
        %v8753 = vpack.c.bf16 %v8434, %v8433
        %v8754 = vpack.c.bf16 %v8557, %v8555
        %v8755 = vpack.c.bf16 %v8669, %v8667
        %v8756 = vpack.c.bf16 %v8437, %v8436
        %v8757 = vpack.c.bf16 %v8562, %v8560
        %v8758 = vpack.c.bf16 %v8674, %v8672
        %v8759 = vpack.c.bf16 %v8440, %v8439
        %v8760 = vpack.c.bf16 %v8567, %v8565
        %v8761 = vpack.c.bf16 %v8679, %v8677
        %v8762 = vpack.c.bf16 %v8443, %v8442
        %v8763 = vpack.c.bf16 %v8572, %v8570
        %v8764 = vpack.c.bf16 %v8684, %v8682
        %v8765 = vld [vmem:[#allocation4] sm:$0xff]
        %v8766 = vld [vmem:[#allocation4 + $0x8] sm:$0xff]
        %v8767 = vld [vmem:[#allocation4 + $0x10] sm:$0xff]
        %v8768 = vld [vmem:[#allocation4 + $0x18] sm:$0xff]
        %v8769 = vld [vmem:[#allocation4 + $0x20] sm:$0xff]
        %v8770 = vld [vmem:[#allocation4 + $0x28] sm:$0xff]
        %v8771 = vld [vmem:[#allocation4 + $0x30] sm:$0xff]
        %v8772 = vld [vmem:[#allocation4 + $0x38] sm:$0xff]
        %v8773 = vld [vmem:[#allocation4 + $0x40] sm:$0xff]
        %v8774 = vld [vmem:[#allocation4 + $0x48] sm:$0xff]
        %v8775 = vld [vmem:[#allocation4 + $0x50] sm:$0xff]
        %v8776 = vld [vmem:[#allocation4 + $0x58] sm:$0xff]
        %v8777 = vld [vmem:[#allocation4 + $0x60] sm:$0xff]
        %v8778 = vld [vmem:[#allocation4 + $0x68] sm:$0xff]
        %v8779 = vld [vmem:[#allocation4 + $0x70] sm:$0xff]
        %v8780 = vld [vmem:[#allocation4 + $0x78] sm:$0xff]
        %v8781 = vld [vmem:[#allocation4 + $0x80] sm:$0xff]
        %v8782 = vld [vmem:[#allocation4 + $0x88] sm:$0xff]
        %v8783 = vld [vmem:[#allocation4 + $0x90] sm:$0xff]
        %v8784 = vld [vmem:[#allocation4 + $0x98] sm:$0xff]
        %v8785 = vld [vmem:[#allocation4 + $0xa0] sm:$0xff]
        %v8786 = vld [vmem:[#allocation4 + $0xa8] sm:$0xff]
        %v8787 = vld [vmem:[#allocation4 + $0xb0] sm:$0xff]
        %v8788 = vld [vmem:[#allocation4 + $0xb8] sm:$0xff]
        %v8789 = vld [vmem:[#allocation4 + $0xc0] sm:$0xff]
        %v8790 = vld [vmem:[#allocation4 + $0xc8] sm:$0xff]
        %v8791 = vld [vmem:[#allocation4 + $0xd0] sm:$0xff]
        %v8792 = vld [vmem:[#allocation4 + $0xd8] sm:$0xff]
        %v8793 = vld [vmem:[#allocation4 + $0xe0] sm:$0xff]
        %v8794 = vld [vmem:[#allocation4 + $0xe8] sm:$0xff]
        %v8795 = vld [vmem:[#allocation4 + $0xf0] sm:$0xff]
        %v8796 = vld [vmem:[#allocation4 + $0xf8] sm:$0xff]
        %s8797 = scalar_lea.vmem [#allocation11], 384
        %v8798 = vld [vmem:[%s8797] sm:$0xf]
        %v8799 = vld [vmem:[%s8797 + $0x4] sm:$0xf]
        %v8800 = vld [vmem:[%s8797 + $0x8] sm:$0xf]
        %v8801 = vld [vmem:[%s8797 + $0xc] sm:$0xf]
        %v8802 = vld [vmem:[%s8797 + $0x10] sm:$0xf]
        %v8803 = vld [vmem:[%s8797 + $0x14] sm:$0xf]
        %v8804 = vld [vmem:[%s8797 + $0x18] sm:$0xf]
        %v8805 = vld [vmem:[%s8797 + $0x1c] sm:$0xf]
        %v8806 = vld [vmem:[%s8797 + $0x20] sm:$0xf]
        %v8807 = vld [vmem:[%s8797 + $0x24] sm:$0xf]
        %v8808 = vld [vmem:[%s8797 + $0x28] sm:$0xf]
        %v8809 = vld [vmem:[%s8797 + $0x2c] sm:$0xf]
        %v8810 = vld [vmem:[%s8797 + $0x30] sm:$0xf]
        %v8811 = vld [vmem:[%s8797 + $0x34] sm:$0xf]
        %v8812 = vld [vmem:[%s8797 + $0x38] sm:$0xf]
        %v8813 = vld [vmem:[%s8797 + $0x3c] sm:$0xf]
        %v8814 = vld [vmem:[%s8797 + $0x40] sm:$0xf]
        %v8815 = vld [vmem:[%s8797 + $0x44] sm:$0xf]
        %v8816 = vld [vmem:[%s8797 + $0x48] sm:$0xf]
        %v8817 = vld [vmem:[%s8797 + $0x4c] sm:$0xf]
        %v8818 = vld [vmem:[%s8797 + $0x50] sm:$0xf]
        %v8819 = vld [vmem:[%s8797 + $0x54] sm:$0xf]
        %v8820 = vld [vmem:[%s8797 + $0x58] sm:$0xf]
        %v8821 = vld [vmem:[%s8797 + $0x5c] sm:$0xf]
        %v8822 = vld [vmem:[%s8797 + $0x60] sm:$0xf]
        %v8823 = vld [vmem:[%s8797 + $0x64] sm:$0xf]
        %v8824 = vld [vmem:[%s8797 + $0x68] sm:$0xf]
        %v8825 = vld [vmem:[%s8797 + $0x6c] sm:$0xf]
        %v8826 = vld [vmem:[%s8797 + $0x70] sm:$0xf]
        %v8827 = vld [vmem:[%s8797 + $0x74] sm:$0xf]
        %v8828 = vld [vmem:[%s8797 + $0x78] sm:$0xf]
        %v8829 = vld [vmem:[%s8797 + $0x7c] sm:$0xf]
        %v8830 = vld [vmem:[%s8797 + $0x80] sm:$0xf]
        %v8831 = vld [vmem:[%s8797 + $0x84] sm:$0xf]
        %v8832 = vld [vmem:[%s8797 + $0x88] sm:$0xf]
        %v8833 = vld [vmem:[%s8797 + $0x8c] sm:$0xf]
        %v8834 = vld [vmem:[%s8797 + $0x90] sm:$0xf]
        %v8835 = vld [vmem:[%s8797 + $0x94] sm:$0xf]
        %v8836 = vld [vmem:[%s8797 + $0x98] sm:$0xf]
        %v8837 = vld [vmem:[%s8797 + $0x9c] sm:$0xf]
        %v8838 = vld [vmem:[%s8797 + $0xa0] sm:$0xf]
        %v8839 = vld [vmem:[%s8797 + $0xa4] sm:$0xf]
        %v8840 = vld [vmem:[%s8797 + $0xa8] sm:$0xf]
        %v8841 = vld [vmem:[%s8797 + $0xac] sm:$0xf]
        %v8842 = vld [vmem:[%s8797 + $0xb0] sm:$0xf]
        %v8843 = vld [vmem:[%s8797 + $0xb4] sm:$0xf]
        %v8844 = vld [vmem:[%s8797 + $0xb8] sm:$0xf]
        %v8845 = vld [vmem:[%s8797 + $0xbc] sm:$0xf]
        %v8894 = vunpack.c.l.b16 %v8798
        %v8895 = vunpack.c.l.b16 %v8799
        %v8896 = vunpack.c.l.b16 %v8800
        %v8897 = vunpack.c.l.b16 %v8801
        %v8898 = vunpack.c.l.b16 %v8802
        %v8899 = vunpack.c.l.b16 %v8803
        %v8900 = vunpack.c.l.b16 %v8804
        %v8901 = vunpack.c.l.b16 %v8805
        %v8902 = vunpack.c.l.b16 %v8806
        %v8903 = vunpack.c.l.b16 %v8807
        %v8904 = vunpack.c.l.b16 %v8808
        %v8905 = vunpack.c.l.b16 %v8809
        %v8906 = vunpack.c.l.b16 %v8810
        %v8907 = vunpack.c.l.b16 %v8811
        %v8908 = vunpack.c.l.b16 %v8812
        %v8909 = vunpack.c.l.b16 %v8813
        %v8910 = vunpack.c.l.b16 %v8814
        %v8911 = vunpack.c.l.b16 %v8815
        %v8912 = vunpack.c.l.b16 %v8816
        %v8913 = vunpack.c.l.b16 %v8817
        %v8914 = vunpack.c.l.b16 %v8818
        %v8915 = vunpack.c.l.b16 %v8819
        %v8916 = vunpack.c.l.b16 %v8820
        %v8917 = vunpack.c.l.b16 %v8821
        %v8918 = vunpack.c.l.b16 %v8822
        %v8919 = vunpack.c.l.b16 %v8823
        %v8920 = vunpack.c.l.b16 %v8824
        %v8921 = vunpack.c.l.b16 %v8825
        %v8922 = vunpack.c.l.b16 %v8826
        %v8923 = vunpack.c.l.b16 %v8827
        %v8924 = vunpack.c.l.b16 %v8828
        %v8925 = vunpack.c.l.b16 %v8829
        %v8926 = vunpack.c.l.b16 %v8830
        %v8927 = vunpack.c.l.b16 %v8831
        %v8928 = vunpack.c.l.b16 %v8832
        %v8929 = vunpack.c.l.b16 %v8833
        %v8930 = vunpack.c.l.b16 %v8834
        %v8931 = vunpack.c.l.b16 %v8835
        %v8932 = vunpack.c.l.b16 %v8836
        %v8933 = vunpack.c.l.b16 %v8837
        %v8934 = vunpack.c.l.b16 %v8838
        %v8935 = vunpack.c.l.b16 %v8839
        %v8936 = vunpack.c.l.b16 %v8840
        %v8937 = vunpack.c.l.b16 %v8841
        %v8938 = vunpack.c.l.b16 %v8842
        %v8939 = vunpack.c.l.b16 %v8843
        %v8940 = vunpack.c.l.b16 %v8844
        %v8941 = vunpack.c.l.b16 %v8845
        %v8942 = vpack.c.b16 %v8895, %v8894
        %v8943 = vpack.c.b16 %v8897, %v8896
        %v8944 = vpack.c.b16 %v8899, %v8898
        %v8945 = vpack.c.b16 %v8901, %v8900
        %v8946 = vpack.c.b16 %v8903, %v8902
        %v8947 = vpack.c.b16 %v8905, %v8904
        %v8948 = vpack.c.b16 %v8907, %v8906
        %v8949 = vpack.c.b16 %v8909, %v8908
        %v8950 = vpack.c.b16 %v8911, %v8910
        %v8951 = vpack.c.b16 %v8913, %v8912
        %v8952 = vpack.c.b16 %v8915, %v8914
        %v8953 = vpack.c.b16 %v8917, %v8916
        %v8954 = vpack.c.b16 %v8919, %v8918
        %v8955 = vpack.c.b16 %v8921, %v8920
        %v8956 = vpack.c.b16 %v8923, %v8922
        %v8957 = vpack.c.b16 %v8925, %v8924
        %v8958 = vpack.c.b16 %v8927, %v8926
        %v8959 = vpack.c.b16 %v8929, %v8928
        %v8960 = vpack.c.b16 %v8931, %v8930
        %v8961 = vpack.c.b16 %v8933, %v8932
        %v8962 = vpack.c.b16 %v8935, %v8934
        %v8963 = vpack.c.b16 %v8937, %v8936
        %v8964 = vpack.c.b16 %v8939, %v8938
        %v8965 = vpack.c.b16 %v8941, %v8940
        %8990 = vmatpush.bf16.msra.mxu0 %v8949
        %8991 = vmatpush.bf16.msra.mxu0 %v8948
        %8992 = vmatpush.bf16.msra.mxu0 %v8947
        %8993 = vmatpush.bf16.msra.mxu0 %v8946
        %8994 = vmatpush.bf16.msra.mxu0 %v8945
        %8995 = vmatpush.bf16.msra.mxu0 %v8944
        %8996 = vmatpush.bf16.msra.mxu0 %v8943
        %8997 = vmatpush.bf16.msra.mxu0 %v8942
        %8998 = vmatmul.bf16.gmra.mxu0 %v8717
        %v8999 = vpop.f32.mrf.mxu0
        %v9000 = vadd.f32 0.0, %v8999
        %v9001 = vpop.f32.mrf.mxu0
        %v9002 = vadd.f32 0.0, %v9001
        %9003 = vmatmul.bf16.gmra.mxu0 %v8720
        %v9004 = vpop.f32.mrf.mxu0
        %v9005 = vadd.f32 0.0, %v9004
        %v9006 = vpop.f32.mrf.mxu0
        %v9007 = vadd.f32 0.0, %v9006
        %9008 = vmatmul.bf16.gmra.mxu0 %v8723
        %v9009 = vpop.f32.mrf.mxu0
        %v9010 = vadd.f32 0.0, %v9009
        %v9011 = vpop.f32.mrf.mxu0
        %v9012 = vadd.f32 0.0, %v9011
        %9013 = vmatmul.bf16.gmra.mxu0 %v8726
        %v9014 = vpop.f32.mrf.mxu0
        %v9015 = vadd.f32 0.0, %v9014
        %v9016 = vpop.f32.mrf.mxu0
        %v9017 = vadd.f32 0.0, %v9016
        %9018 = vmatmul.bf16.gmra.mxu0 %v8729
        %v9019 = vpop.f32.mrf.mxu0
        %v9020 = vadd.f32 0.0, %v9019
        %v9021 = vpop.f32.mrf.mxu0
        %v9022 = vadd.f32 0.0, %v9021
        %9023 = vmatmul.bf16.gmra.mxu0 %v8732
        %v9024 = vpop.f32.mrf.mxu0
        %v9025 = vadd.f32 0.0, %v9024
        %v9026 = vpop.f32.mrf.mxu0
        %v9027 = vadd.f32 0.0, %v9026
        %9028 = vmatmul.bf16.gmra.mxu0 %v8735
        %v9029 = vpop.f32.mrf.mxu0
        %v9030 = vadd.f32 0.0, %v9029
        %v9031 = vpop.f32.mrf.mxu0
        %v9032 = vadd.f32 0.0, %v9031
        %9033 = vmatmul.bf16.gmra.mxu0 %v8738
        %v9034 = vpop.f32.mrf.mxu0
        %v9035 = vadd.f32 0.0, %v9034
        %v9036 = vpop.f32.mrf.mxu0
        %v9037 = vadd.f32 0.0, %v9036
        %9038 = vmatmul.bf16.gmra.mxu0 %v8741
        %v9039 = vpop.f32.mrf.mxu0
        %v9040 = vadd.f32 0.0, %v9039
        %v9041 = vpop.f32.mrf.mxu0
        %v9042 = vadd.f32 0.0, %v9041
        %9043 = vmatmul.bf16.gmra.mxu0 %v8744
        %v9044 = vpop.f32.mrf.mxu0
        %v9045 = vadd.f32 0.0, %v9044
        %v9046 = vpop.f32.mrf.mxu0
        %v9047 = vadd.f32 0.0, %v9046
        %9048 = vmatmul.bf16.gmra.mxu0 %v8747
        %v9049 = vpop.f32.mrf.mxu0
        %v9050 = vadd.f32 0.0, %v9049
        %v9051 = vpop.f32.mrf.mxu0
        %v9052 = vadd.f32 0.0, %v9051
        %9053 = vmatmul.bf16.gmra.mxu0 %v8750
        %v9054 = vpop.f32.mrf.mxu0
        %v9055 = vadd.f32 0.0, %v9054
        %v9056 = vpop.f32.mrf.mxu0
        %v9057 = vadd.f32 0.0, %v9056
        %9058 = vmatmul.bf16.gmra.mxu0 %v8753
        %v9059 = vpop.f32.mrf.mxu0
        %v9060 = vadd.f32 0.0, %v9059
        %v9061 = vpop.f32.mrf.mxu0
        %v9062 = vadd.f32 0.0, %v9061
        %9063 = vmatmul.bf16.gmra.mxu0 %v8756
        %v9064 = vpop.f32.mrf.mxu0
        %v9065 = vadd.f32 0.0, %v9064
        %v9066 = vpop.f32.mrf.mxu0
        %v9067 = vadd.f32 0.0, %v9066
        %9068 = vmatmul.bf16.gmra.mxu0 %v8759
        %v9069 = vpop.f32.mrf.mxu0
        %v9070 = vadd.f32 0.0, %v9069
        %v9071 = vpop.f32.mrf.mxu0
        %v9072 = vadd.f32 0.0, %v9071
        %9073 = vmatmul.bf16.gmra.mxu0 %v8762
        %v9074 = vpop.f32.mrf.mxu0
        %v9075 = vadd.f32 0.0, %v9074
        %v9076 = vpop.f32.mrf.mxu0
        %v9077 = vadd.f32 0.0, %v9076
        %9078 = vdwg.mxu0
        %9079 = vmatpush.bf16.msra.mxu0 %v8957
        %9080 = vmatpush.bf16.msra.mxu0 %v8956
        %9081 = vmatpush.bf16.msra.mxu0 %v8955
        %9082 = vmatpush.bf16.msra.mxu0 %v8954
        %9083 = vmatpush.bf16.msra.mxu0 %v8953
        %9084 = vmatpush.bf16.msra.mxu0 %v8952
        %9085 = vmatpush.bf16.msra.mxu0 %v8951
        %9086 = vmatpush.bf16.msra.mxu0 %v8950
        %9087 = vmatmul.bf16.gmra.mxu0 %v8718
        %v9088 = vpop.f32.mrf.mxu0
        %v9089 = vadd.f32 %v9000, %v9088
        %v9090 = vpop.f32.mrf.mxu0
        %v9091 = vadd.f32 %v9002, %v9090
        %9092 = vmatmul.bf16.gmra.mxu0 %v8721
        %v9093 = vpop.f32.mrf.mxu0
        %v9094 = vadd.f32 %v9005, %v9093
        %v9095 = vpop.f32.mrf.mxu0
        %v9096 = vadd.f32 %v9007, %v9095
        %9097 = vmatmul.bf16.gmra.mxu0 %v8724
        %v9098 = vpop.f32.mrf.mxu0
        %v9099 = vadd.f32 %v9010, %v9098
        %v9100 = vpop.f32.mrf.mxu0
        %v9101 = vadd.f32 %v9012, %v9100
        %9102 = vmatmul.bf16.gmra.mxu0 %v8727
        %v9103 = vpop.f32.mrf.mxu0
        %v9104 = vadd.f32 %v9015, %v9103
        %v9105 = vpop.f32.mrf.mxu0
        %v9106 = vadd.f32 %v9017, %v9105
        %9107 = vmatmul.bf16.gmra.mxu0 %v8730
        %v9108 = vpop.f32.mrf.mxu0
        %v9109 = vadd.f32 %v9020, %v9108
        %v9110 = vpop.f32.mrf.mxu0
        %v9111 = vadd.f32 %v9022, %v9110
        %9112 = vmatmul.bf16.gmra.mxu0 %v8733
        %v9113 = vpop.f32.mrf.mxu0
        %v9114 = vadd.f32 %v9025, %v9113
        %v9115 = vpop.f32.mrf.mxu0
        %v9116 = vadd.f32 %v9027, %v9115
        %9117 = vmatmul.bf16.gmra.mxu0 %v8736
        %v9118 = vpop.f32.mrf.mxu0
        %v9119 = vadd.f32 %v9030, %v9118
        %v9120 = vpop.f32.mrf.mxu0
        %v9121 = vadd.f32 %v9032, %v9120
        %9122 = vmatmul.bf16.gmra.mxu0 %v8739
        %v9123 = vpop.f32.mrf.mxu0
        %v9124 = vadd.f32 %v9035, %v9123
        %v9125 = vpop.f32.mrf.mxu0
        %v9126 = vadd.f32 %v9037, %v9125
        %9127 = vmatmul.bf16.gmra.mxu0 %v8742
        %v9128 = vpop.f32.mrf.mxu0
        %v9129 = vadd.f32 %v9040, %v9128
        %v9130 = vpop.f32.mrf.mxu0
        %v9131 = vadd.f32 %v9042, %v9130
        %9132 = vmatmul.bf16.gmra.mxu0 %v8745
        %v9133 = vpop.f32.mrf.mxu0
        %v9134 = vadd.f32 %v9045, %v9133
        %v9135 = vpop.f32.mrf.mxu0
        %v9136 = vadd.f32 %v9047, %v9135
        %9137 = vmatmul.bf16.gmra.mxu0 %v8748
        %v9138 = vpop.f32.mrf.mxu0
        %v9139 = vadd.f32 %v9050, %v9138
        %v9140 = vpop.f32.mrf.mxu0
        %v9141 = vadd.f32 %v9052, %v9140
        %9142 = vmatmul.bf16.gmra.mxu0 %v8751
        %v9143 = vpop.f32.mrf.mxu0
        %v9144 = vadd.f32 %v9055, %v9143
        %v9145 = vpop.f32.mrf.mxu0
        %v9146 = vadd.f32 %v9057, %v9145
        %9147 = vmatmul.bf16.gmra.mxu0 %v8754
        %v9148 = vpop.f32.mrf.mxu0
        %v9149 = vadd.f32 %v9060, %v9148
        %v9150 = vpop.f32.mrf.mxu0
        %v9151 = vadd.f32 %v9062, %v9150
        %9152 = vmatmul.bf16.gmra.mxu0 %v8757
        %v9153 = vpop.f32.mrf.mxu0
        %v9154 = vadd.f32 %v9065, %v9153
        %v9155 = vpop.f32.mrf.mxu0
        %v9156 = vadd.f32 %v9067, %v9155
        %9157 = vmatmul.bf16.gmra.mxu0 %v8760
        %v9158 = vpop.f32.mrf.mxu0
        %v9159 = vadd.f32 %v9070, %v9158
        %v9160 = vpop.f32.mrf.mxu0
        %v9161 = vadd.f32 %v9072, %v9160
        %9162 = vmatmul.bf16.gmra.mxu0 %v8763
        %v9163 = vpop.f32.mrf.mxu0
        %v9164 = vadd.f32 %v9075, %v9163
        %v9165 = vpop.f32.mrf.mxu0
        %v9166 = vadd.f32 %v9077, %v9165
        %9167 = vdwg.mxu0
        %9168 = vmatpush.bf16.msra.mxu0 %v8965
        %9169 = vmatpush.bf16.msra.mxu0 %v8964
        %9170 = vmatpush.bf16.msra.mxu0 %v8963
        %9171 = vmatpush.bf16.msra.mxu0 %v8962
        %9172 = vmatpush.bf16.msra.mxu0 %v8961
        %9173 = vmatpush.bf16.msra.mxu0 %v8960
        %9174 = vmatpush.bf16.msra.mxu0 %v8959
        %9175 = vmatpush.bf16.msra.mxu0 %v8958
        %9176 = vmatmul.bf16.gmra.mxu0 %v8719
        %v9177 = vpop.f32.mrf.mxu0
        %v9178 = vadd.f32 %v9089, %v9177
        %v9179 = vpop.f32.mrf.mxu0
        %v9180 = vadd.f32 %v9091, %v9179
        %9181 = vmatmul.bf16.gmra.mxu0 %v8722
        %v9182 = vpop.f32.mrf.mxu0
        %v9183 = vadd.f32 %v9094, %v9182
        %v9184 = vpop.f32.mrf.mxu0
        %v9185 = vadd.f32 %v9096, %v9184
        %9186 = vmatmul.bf16.gmra.mxu0 %v8725
        %v9187 = vpop.f32.mrf.mxu0
        %v9188 = vadd.f32 %v9099, %v9187
        %v9189 = vpop.f32.mrf.mxu0
        %v9190 = vadd.f32 %v9101, %v9189
        %9191 = vmatmul.bf16.gmra.mxu0 %v8728
        %v9192 = vpop.f32.mrf.mxu0
        %v9193 = vadd.f32 %v9104, %v9192
        %v9194 = vpop.f32.mrf.mxu0
        %v9195 = vadd.f32 %v9106, %v9194
        %9196 = vmatmul.bf16.gmra.mxu0 %v8731
        %v9197 = vpop.f32.mrf.mxu0
        %v9198 = vadd.f32 %v9109, %v9197
        %v9199 = vpop.f32.mrf.mxu0
        %v9200 = vadd.f32 %v9111, %v9199
        %9201 = vmatmul.bf16.gmra.mxu0 %v8734
        %v9202 = vpop.f32.mrf.mxu0
        %v9203 = vadd.f32 %v9114, %v9202
        %v9204 = vpop.f32.mrf.mxu0
        %v9205 = vadd.f32 %v9116, %v9204
        %9206 = vmatmul.bf16.gmra.mxu0 %v8737
        %v9207 = vpop.f32.mrf.mxu0
        %v9208 = vadd.f32 %v9119, %v9207
        %v9209 = vpop.f32.mrf.mxu0
        %v9210 = vadd.f32 %v9121, %v9209
        %9211 = vmatmul.bf16.gmra.mxu0 %v8740
        %v9212 = vpop.f32.mrf.mxu0
        %v9213 = vadd.f32 %v9124, %v9212
        %v9214 = vpop.f32.mrf.mxu0
        %v9215 = vadd.f32 %v9126, %v9214
        %9216 = vmatmul.bf16.gmra.mxu0 %v8743
        %v9217 = vpop.f32.mrf.mxu0
        %v9218 = vadd.f32 %v9129, %v9217
        %v9219 = vpop.f32.mrf.mxu0
        %v9220 = vadd.f32 %v9131, %v9219
        %9221 = vmatmul.bf16.gmra.mxu0 %v8746
        %v9222 = vpop.f32.mrf.mxu0
        %v9223 = vadd.f32 %v9134, %v9222
        %v9224 = vpop.f32.mrf.mxu0
        %v9225 = vadd.f32 %v9136, %v9224
        %9226 = vmatmul.bf16.gmra.mxu0 %v8749
        %v9227 = vpop.f32.mrf.mxu0
        %v9228 = vadd.f32 %v9139, %v9227
        %v9229 = vpop.f32.mrf.mxu0
        %v9230 = vadd.f32 %v9141, %v9229
        %9231 = vmatmul.bf16.gmra.mxu0 %v8752
        %v9232 = vpop.f32.mrf.mxu0
        %v9233 = vadd.f32 %v9144, %v9232
        %v9234 = vpop.f32.mrf.mxu0
        %v9235 = vadd.f32 %v9146, %v9234
        %9236 = vmatmul.bf16.gmra.mxu0 %v8755
        %v9237 = vpop.f32.mrf.mxu0
        %v9238 = vadd.f32 %v9149, %v9237
        %v9239 = vpop.f32.mrf.mxu0
        %v9240 = vadd.f32 %v9151, %v9239
        %9241 = vmatmul.bf16.gmra.mxu0 %v8758
        %v9242 = vpop.f32.mrf.mxu0
        %v9243 = vadd.f32 %v9154, %v9242
        %v9244 = vpop.f32.mrf.mxu0
        %v9245 = vadd.f32 %v9156, %v9244
        %9246 = vmatmul.bf16.gmra.mxu0 %v8761
        %v9247 = vpop.f32.mrf.mxu0
        %v9248 = vadd.f32 %v9159, %v9247
        %v9249 = vpop.f32.mrf.mxu0
        %v9250 = vadd.f32 %v9161, %v9249
        %9251 = vmatmul.bf16.gmra.mxu0 %v8764
        %v9252 = vpop.f32.mrf.mxu0
        %v9253 = vadd.f32 %v9164, %v9252
        %v9254 = vpop.f32.mrf.mxu0
        %v9255 = vadd.f32 %v9166, %v9254
        %9256 = vdwg.mxu0
        %v9257 = vadd.f32 %v8765, %v9178
        %v9258 = vadd.f32 %v8766, %v9180
        %v9259 = vadd.f32 %v8767, %v9183
        %v9260 = vadd.f32 %v8768, %v9185
        %v9261 = vadd.f32 %v8769, %v9188
        %v9262 = vadd.f32 %v8770, %v9190
        %v9263 = vadd.f32 %v8771, %v9193
        %v9264 = vadd.f32 %v8772, %v9195
        %v9265 = vadd.f32 %v8773, %v9198
        %v9266 = vadd.f32 %v8774, %v9200
        %v9267 = vadd.f32 %v8775, %v9203
        %v9268 = vadd.f32 %v8776, %v9205
        %v9269 = vadd.f32 %v8777, %v9208
        %v9270 = vadd.f32 %v8778, %v9210
        %v9271 = vadd.f32 %v8779, %v9213
        %v9272 = vadd.f32 %v8780, %v9215
        %v9273 = vadd.f32 %v8781, %v9218
        %v9274 = vadd.f32 %v8782, %v9220
        %v9275 = vadd.f32 %v8783, %v9223
        %v9276 = vadd.f32 %v8784, %v9225
        %v9277 = vadd.f32 %v8785, %v9228
        %v9278 = vadd.f32 %v8786, %v9230
        %v9279 = vadd.f32 %v8787, %v9233
        %v9280 = vadd.f32 %v8788, %v9235
        %v9281 = vadd.f32 %v8789, %v9238
        %v9282 = vadd.f32 %v8790, %v9240
        %v9283 = vadd.f32 %v8791, %v9243
        %v9284 = vadd.f32 %v8792, %v9245
        %v9285 = vadd.f32 %v8793, %v9248
        %v9286 = vadd.f32 %v8794, %v9250
        %v9287 = vadd.f32 %v8795, %v9253
        %v9288 = vadd.f32 %v8796, %v9255
        %9289 = vst [vmem:[#allocation4] sm:$0xff] %v9257
        %9290 = vst [vmem:[#allocation4 + $0x8] sm:$0xff] %v9258
        %9291 = vst [vmem:[#allocation4 + $0x10] sm:$0xff] %v9259
        %9292 = vst [vmem:[#allocation4 + $0x18] sm:$0xff] %v9260
        %9293 = vst [vmem:[#allocation4 + $0x20] sm:$0xff] %v9261
        %9294 = vst [vmem:[#allocation4 + $0x28] sm:$0xff] %v9262
        %9295 = vst [vmem:[#allocation4 + $0x30] sm:$0xff] %v9263
        %9296 = vst [vmem:[#allocation4 + $0x38] sm:$0xff] %v9264
        %9297 = vst [vmem:[#allocation4 + $0x40] sm:$0xff] %v9265
        %9298 = vst [vmem:[#allocation4 + $0x48] sm:$0xff] %v9266
        %9299 = vst [vmem:[#allocation4 + $0x50] sm:$0xff] %v9267
        %9300 = vst [vmem:[#allocation4 + $0x58] sm:$0xff] %v9268
        %9301 = vst [vmem:[#allocation4 + $0x60] sm:$0xff] %v9269
        %9302 = vst [vmem:[#allocation4 + $0x68] sm:$0xff] %v9270
        %9303 = vst [vmem:[#allocation4 + $0x70] sm:$0xff] %v9271
        %9304 = vst [vmem:[#allocation4 + $0x78] sm:$0xff] %v9272
        %9305 = vst [vmem:[#allocation4 + $0x80] sm:$0xff] %v9273
        %9306 = vst [vmem:[#allocation4 + $0x88] sm:$0xff] %v9274
        %9307 = vst [vmem:[#allocation4 + $0x90] sm:$0xff] %v9275
        %9308 = vst [vmem:[#allocation4 + $0x98] sm:$0xff] %v9276
        %9309 = vst [vmem:[#allocation4 + $0xa0] sm:$0xff] %v9277
        %9310 = vst [vmem:[#allocation4 + $0xa8] sm:$0xff] %v9278
        %9311 = vst [vmem:[#allocation4 + $0xb0] sm:$0xff] %v9279
        %9312 = vst [vmem:[#allocation4 + $0xb8] sm:$0xff] %v9280
        %9313 = vst [vmem:[#allocation4 + $0xc0] sm:$0xff] %v9281
        %9314 = vst [vmem:[#allocation4 + $0xc8] sm:$0xff] %v9282
        %9315 = vst [vmem:[#allocation4 + $0xd0] sm:$0xff] %v9283
        %9316 = vst [vmem:[#allocation4 + $0xd8] sm:$0xff] %v9284
        %9317 = vst [vmem:[#allocation4 + $0xe0] sm:$0xff] %v9285
        %9318 = vst [vmem:[#allocation4 + $0xe8] sm:$0xff] %v9286
        %9319 = vst [vmem:[#allocation4 + $0xf0] sm:$0xff] %v9287
        %9320 = vst [vmem:[#allocation4 + $0xf8] sm:$0xff] %v9288
        %v9321 = vld [vmem:[#allocation4] sm:$0xff]
        %v9322 = vld [vmem:[#allocation4 + $0x8] sm:$0xff]
        %v9323 = vld [vmem:[#allocation4 + $0x10] sm:$0xff]
        %v9324 = vld [vmem:[#allocation4 + $0x18] sm:$0xff]
        %v9325 = vld [vmem:[#allocation4 + $0x20] sm:$0xff]
        %v9326 = vld [vmem:[#allocation4 + $0x28] sm:$0xff]
        %v9327 = vld [vmem:[#allocation4 + $0x30] sm:$0xff]
        %v9328 = vld [vmem:[#allocation4 + $0x38] sm:$0xff]
        %v9329 = vld [vmem:[#allocation4 + $0x40] sm:$0xff]
        %v9330 = vld [vmem:[#allocation4 + $0x48] sm:$0xff]
        %v9331 = vld [vmem:[#allocation4 + $0x50] sm:$0xff]
        %v9332 = vld [vmem:[#allocation4 + $0x58] sm:$0xff]
        %v9333 = vld [vmem:[#allocation4 + $0x60] sm:$0xff]
        %v9334 = vld [vmem:[#allocation4 + $0x68] sm:$0xff]
        %v9335 = vld [vmem:[#allocation4 + $0x70] sm:$0xff]
        %v9336 = vld [vmem:[#allocation4 + $0x78] sm:$0xff]
        %v9337 = vld [vmem:[#allocation4 + $0x80] sm:$0xff]
        %v9338 = vld [vmem:[#allocation4 + $0x88] sm:$0xff]
        %v9339 = vld [vmem:[#allocation4 + $0x90] sm:$0xff]
        %v9340 = vld [vmem:[#allocation4 + $0x98] sm:$0xff]
        %v9341 = vld [vmem:[#allocation4 + $0xa0] sm:$0xff]
        %v9342 = vld [vmem:[#allocation4 + $0xa8] sm:$0xff]
        %v9343 = vld [vmem:[#allocation4 + $0xb0] sm:$0xff]
        %v9344 = vld [vmem:[#allocation4 + $0xb8] sm:$0xff]
        %v9345 = vld [vmem:[#allocation4 + $0xc0] sm:$0xff]
        %v9346 = vld [vmem:[#allocation4 + $0xc8] sm:$0xff]
        %v9347 = vld [vmem:[#allocation4 + $0xd0] sm:$0xff]
        %v9348 = vld [vmem:[#allocation4 + $0xd8] sm:$0xff]
        %v9349 = vld [vmem:[#allocation4 + $0xe0] sm:$0xff]
        %v9350 = vld [vmem:[#allocation4 + $0xe8] sm:$0xff]
        %v9351 = vld [vmem:[#allocation4 + $0xf0] sm:$0xff]
        %v9352 = vld [vmem:[#allocation4 + $0xf8] sm:$0xff]
        %v9353 = vld [vmem:[%s5] sm:$0x1]
        %v9355 = vperm.slane %v9353, 0
        %v9357 = vmul.f32 %v9321, %v9355
        %v9358 = vmul.f32 %v9322, %v9355
        %v9359 = vmul.f32 %v9323, %v9355
        %v9360 = vmul.f32 %v9324, %v9355
        %v9361 = vmul.f32 %v9325, %v9355
        %v9362 = vmul.f32 %v9326, %v9355
        %v9363 = vmul.f32 %v9327, %v9355
        %v9364 = vmul.f32 %v9328, %v9355
        %v9365 = vmul.f32 %v9329, %v9355
        %v9366 = vmul.f32 %v9330, %v9355
        %v9367 = vmul.f32 %v9331, %v9355
        %v9368 = vmul.f32 %v9332, %v9355
        %v9369 = vmul.f32 %v9333, %v9355
        %v9370 = vmul.f32 %v9334, %v9355
        %v9371 = vmul.f32 %v9335, %v9355
        %v9372 = vmul.f32 %v9336, %v9355
        %v9373 = vmul.f32 %v9337, %v9355
        %v9374 = vmul.f32 %v9338, %v9355
        %v9375 = vmul.f32 %v9339, %v9355
        %v9376 = vmul.f32 %v9340, %v9355
        %v9377 = vmul.f32 %v9341, %v9355
        %v9378 = vmul.f32 %v9342, %v9355
        %v9379 = vmul.f32 %v9343, %v9355
        %v9380 = vmul.f32 %v9344, %v9355
        %v9381 = vmul.f32 %v9345, %v9355
        %v9382 = vmul.f32 %v9346, %v9355
        %v9383 = vmul.f32 %v9347, %v9355
        %v9384 = vmul.f32 %v9348, %v9355
        %v9385 = vmul.f32 %v9349, %v9355
        %v9386 = vmul.f32 %v9350, %v9355
        %v9387 = vmul.f32 %v9351, %v9355
        %v9388 = vmul.f32 %v9352, %v9355
        %v9389 = vld [vmem:[%s6] sm:$0x1]
        %v9391 = vperm.slane %v9389, 0
        %v9393 = vadd.f32 %v9357, %v9391
        %v9394 = vadd.f32 %v9358, %v9391
        %v9395 = vadd.f32 %v9359, %v9391
        %v9396 = vadd.f32 %v9360, %v9391
        %v9397 = vadd.f32 %v9361, %v9391
        %v9398 = vadd.f32 %v9362, %v9391
        %v9399 = vadd.f32 %v9363, %v9391
        %v9400 = vadd.f32 %v9364, %v9391
        %v9401 = vadd.f32 %v9365, %v9391
        %v9402 = vadd.f32 %v9366, %v9391
        %v9403 = vadd.f32 %v9367, %v9391
        %v9404 = vadd.f32 %v9368, %v9391
        %v9405 = vadd.f32 %v9369, %v9391
        %v9406 = vadd.f32 %v9370, %v9391
        %v9407 = vadd.f32 %v9371, %v9391
        %v9408 = vadd.f32 %v9372, %v9391
        %v9409 = vadd.f32 %v9373, %v9391
        %v9410 = vadd.f32 %v9374, %v9391
        %v9411 = vadd.f32 %v9375, %v9391
        %v9412 = vadd.f32 %v9376, %v9391
        %v9413 = vadd.f32 %v9377, %v9391
        %v9414 = vadd.f32 %v9378, %v9391
        %v9415 = vadd.f32 %v9379, %v9391
        %v9416 = vadd.f32 %v9380, %v9391
        %v9417 = vadd.f32 %v9381, %v9391
        %v9418 = vadd.f32 %v9382, %v9391
        %v9419 = vadd.f32 %v9383, %v9391
        %v9420 = vadd.f32 %v9384, %v9391
        %v9421 = vadd.f32 %v9385, %v9391
        %v9422 = vadd.f32 %v9386, %v9391
        %v9423 = vadd.f32 %v9387, %v9391
        %v9424 = vadd.f32 %v9388, %v9391
        %v9425 = vld [vmem:[#allocation5] sm:$0xff]
        %v9426 = vld [vmem:[#allocation5 + $0x8] sm:$0xff]
        %v9427 = vld [vmem:[#allocation5 + $0x10] sm:$0xff]
        %v9428 = vld [vmem:[#allocation5 + $0x18] sm:$0xff]
        %v9429 = vld [vmem:[#allocation5 + $0x20] sm:$0xff]
        %v9430 = vld [vmem:[#allocation5 + $0x28] sm:$0xff]
        %v9431 = vld [vmem:[#allocation5 + $0x30] sm:$0xff]
        %v9432 = vld [vmem:[#allocation5 + $0x38] sm:$0xff]
        %v9433 = vld [vmem:[#allocation5 + $0x40] sm:$0xff]
        %v9434 = vld [vmem:[#allocation5 + $0x48] sm:$0xff]
        %v9435 = vld [vmem:[#allocation5 + $0x50] sm:$0xff]
        %v9436 = vld [vmem:[#allocation5 + $0x58] sm:$0xff]
        %v9437 = vld [vmem:[#allocation5 + $0x60] sm:$0xff]
        %v9438 = vld [vmem:[#allocation5 + $0x68] sm:$0xff]
        %v9439 = vld [vmem:[#allocation5 + $0x70] sm:$0xff]
        %v9440 = vld [vmem:[#allocation5 + $0x78] sm:$0xff]
        %v9441 = vld [vmem:[#allocation5 + $0x80] sm:$0xff]
        %v9442 = vld [vmem:[#allocation5 + $0x88] sm:$0xff]
        %v9443 = vld [vmem:[#allocation5 + $0x90] sm:$0xff]
        %v9444 = vld [vmem:[#allocation5 + $0x98] sm:$0xff]
        %v9445 = vld [vmem:[#allocation5 + $0xa0] sm:$0xff]
        %v9446 = vld [vmem:[#allocation5 + $0xa8] sm:$0xff]
        %v9447 = vld [vmem:[#allocation5 + $0xb0] sm:$0xff]
        %v9448 = vld [vmem:[#allocation5 + $0xb8] sm:$0xff]
        %v9449 = vld [vmem:[#allocation5 + $0xc0] sm:$0xff]
        %v9450 = vld [vmem:[#allocation5 + $0xc8] sm:$0xff]
        %v9451 = vld [vmem:[#allocation5 + $0xd0] sm:$0xff]
        %v9452 = vld [vmem:[#allocation5 + $0xd8] sm:$0xff]
        %v9453 = vld [vmem:[#allocation5 + $0xe0] sm:$0xff]
        %v9454 = vld [vmem:[#allocation5 + $0xe8] sm:$0xff]
        %v9455 = vld [vmem:[#allocation5 + $0xf0] sm:$0xff]
        %v9456 = vld [vmem:[#allocation5 + $0xf8] sm:$0xff]
        %v9457 = vadd.f32 %v9393, %v9425
        %v9458 = vadd.f32 %v9394, %v9426
        %v9459 = vadd.f32 %v9395, %v9427
        %v9460 = vadd.f32 %v9396, %v9428
        %v9461 = vadd.f32 %v9397, %v9429
        %v9462 = vadd.f32 %v9398, %v9430
        %v9463 = vadd.f32 %v9399, %v9431
        %v9464 = vadd.f32 %v9400, %v9432
        %v9465 = vadd.f32 %v9401, %v9433
        %v9466 = vadd.f32 %v9402, %v9434
        %v9467 = vadd.f32 %v9403, %v9435
        %v9468 = vadd.f32 %v9404, %v9436
        %v9469 = vadd.f32 %v9405, %v9437
        %v9470 = vadd.f32 %v9406, %v9438
        %v9471 = vadd.f32 %v9407, %v9439
        %v9472 = vadd.f32 %v9408, %v9440
        %v9473 = vadd.f32 %v9409, %v9441
        %v9474 = vadd.f32 %v9410, %v9442
        %v9475 = vadd.f32 %v9411, %v9443
        %v9476 = vadd.f32 %v9412, %v9444
        %v9477 = vadd.f32 %v9413, %v9445
        %v9478 = vadd.f32 %v9414, %v9446
        %v9479 = vadd.f32 %v9415, %v9447
        %v9480 = vadd.f32 %v9416, %v9448
        %v9481 = vadd.f32 %v9417, %v9449
        %v9482 = vadd.f32 %v9418, %v9450
        %v9483 = vadd.f32 %v9419, %v9451
        %v9484 = vadd.f32 %v9420, %v9452
        %v9485 = vadd.f32 %v9421, %v9453
        %v9486 = vadd.f32 %v9422, %v9454
        %v9487 = vadd.f32 %v9423, %v9455
        %v9488 = vadd.f32 %v9424, %v9456
        %v9489 = vmax.f32 %v9457, 0.0
        %v9490 = vmax.f32 %v9458, 0.0
        %v9491 = vmax.f32 %v9459, 0.0
        %v9492 = vmax.f32 %v9460, 0.0
        %v9493 = vmax.f32 %v9461, 0.0
        %v9494 = vmax.f32 %v9462, 0.0
        %v9495 = vmax.f32 %v9463, 0.0
        %v9496 = vmax.f32 %v9464, 0.0
        %v9497 = vmax.f32 %v9465, 0.0
        %v9498 = vmax.f32 %v9466, 0.0
        %v9499 = vmax.f32 %v9467, 0.0
        %v9500 = vmax.f32 %v9468, 0.0
        %v9501 = vmax.f32 %v9469, 0.0
        %v9502 = vmax.f32 %v9470, 0.0
        %v9503 = vmax.f32 %v9471, 0.0
        %v9504 = vmax.f32 %v9472, 0.0
        %v9505 = vmax.f32 %v9473, 0.0
        %v9506 = vmax.f32 %v9474, 0.0
        %v9507 = vmax.f32 %v9475, 0.0
        %v9508 = vmax.f32 %v9476, 0.0
        %v9509 = vmax.f32 %v9477, 0.0
        %v9510 = vmax.f32 %v9478, 0.0
        %v9511 = vmax.f32 %v9479, 0.0
        %v9512 = vmax.f32 %v9480, 0.0
        %v9513 = vmax.f32 %v9481, 0.0
        %v9514 = vmax.f32 %v9482, 0.0
        %v9515 = vmax.f32 %v9483, 0.0
        %v9516 = vmax.f32 %v9484, 0.0
        %v9517 = vmax.f32 %v9485, 0.0
        %v9518 = vmax.f32 %v9486, 0.0
        %v9519 = vmax.f32 %v9487, 0.0
        %v9520 = vmax.f32 %v9488, 0.0
        %9521 = vst [vmem:[%s429] sm:$0xff] %v9489
        %9522 = vst [vmem:[%s429 + $0x8] sm:$0xff] %v9490
        %9523 = vst [vmem:[%s429 + $0x10] sm:$0xff] %v9491
        %9524 = vst [vmem:[%s429 + $0x18] sm:$0xff] %v9492
        %9525 = vst [vmem:[%s429 + $0x20] sm:$0xff] %v9493
        %9526 = vst [vmem:[%s429 + $0x28] sm:$0xff] %v9494
        %9527 = vst [vmem:[%s429 + $0x30] sm:$0xff] %v9495
        %9528 = vst [vmem:[%s429 + $0x38] sm:$0xff] %v9496
        %9529 = vst [vmem:[%s429 + $0x40] sm:$0xff] %v9497
        %9530 = vst [vmem:[%s429 + $0x48] sm:$0xff] %v9498
        %9531 = vst [vmem:[%s429 + $0x50] sm:$0xff] %v9499
        %9532 = vst [vmem:[%s429 + $0x58] sm:$0xff] %v9500
        %9533 = vst [vmem:[%s429 + $0x60] sm:$0xff] %v9501
        %9534 = vst [vmem:[%s429 + $0x68] sm:$0xff] %v9502
        %9535 = vst [vmem:[%s429 + $0x70] sm:$0xff] %v9503
        %9536 = vst [vmem:[%s429 + $0x78] sm:$0xff] %v9504
        %9537 = vst [vmem:[%s429 + $0x80] sm:$0xff] %v9505
        %9538 = vst [vmem:[%s429 + $0x88] sm:$0xff] %v9506
        %9539 = vst [vmem:[%s429 + $0x90] sm:$0xff] %v9507
        %9540 = vst [vmem:[%s429 + $0x98] sm:$0xff] %v9508
        %9541 = vst [vmem:[%s429 + $0xa0] sm:$0xff] %v9509
        %9542 = vst [vmem:[%s429 + $0xa8] sm:$0xff] %v9510
        %9543 = vst [vmem:[%s429 + $0xb0] sm:$0xff] %v9511
        %9544 = vst [vmem:[%s429 + $0xb8] sm:$0xff] %v9512
        %9545 = vst [vmem:[%s429 + $0xc0] sm:$0xff] %v9513
        %9546 = vst [vmem:[%s429 + $0xc8] sm:$0xff] %v9514
        %9547 = vst [vmem:[%s429 + $0xd0] sm:$0xff] %v9515
        %9548 = vst [vmem:[%s429 + $0xd8] sm:$0xff] %v9516
        %9549 = vst [vmem:[%s429 + $0xe0] sm:$0xff] %v9517
        %9550 = vst [vmem:[%s429 + $0xe8] sm:$0xff] %v9518
        %9551 = vst [vmem:[%s429 + $0xf0] sm:$0xff] %v9519
        %9552 = vst [vmem:[%s429 + $0xf8] sm:$0xff] %v9520
        %s9553 = sand.u32 %s252, 1
        %s9554 = scalar_lea.sflag [#allocation8], %s9553
        %s9555 = sand.u32 %s252, 1
        %s9556 = smul.addr %s9555, 256
        %s9557 = scalar_lea.vmem [#allocation14], %s9556
        // Predicated region
        $region77: #{tpu_custom_call.1} parent=59 // pred_check
          %p9558 = pneg %p262
        $region78: #{tpu_custom_call.1} parent=59 // pred_check_branch
          %9560 = sbr.rel (%p9558) target = $region80
        $region79: #{tpu_custom_call.1} parent=59 // pred_region
          %9562 = vsyncadd %s9554, 0
          %s9563 = smul.addr %s29, 32
          %s9564 = smul.addr %s9563, 8
          %s9565 = scalar_lea.hbm %s10, %s9564
          %s9566 = sshll.u32 %s9557, 4
          %s9567 = int_to_ptr.vmem [resolvable:$true] %s9566
          %s9568 = sshll.u32 %s9565, 4
          %s9569 = int_to_ptr.hbm [resolvable:$true] %s9568
          %9574 = dma.vmem_to_hbm [thread:$0]  %s9567, 4096, %s9569, %s9554, 128, 128, 8
        $region80: #{tpu_custom_call.1} parent=59 // pred_fallthru
          _
      $region60: #{tpu_custom_call.1} parent=5 // pred_fallthru
        _
      %p9575 = scmp.le.s32.totalorder 2, %s24
      // Predicated region
      $region81: #{tpu_custom_call.1} parent=5 // pred_check
        %p9576 = pneg %p9575
      $region82: #{tpu_custom_call.1} parent=5 // pred_check_branch
        %9578 = sbr.rel (%p9576) target = $region84
      $region83: #{tpu_custom_call.1} parent=5 // pred_region
        %s9579 = ssub.s32 %s24, 2
        // Predicated region
        $region85: #{tpu_custom_call.1} parent=83 // pred_check
          %p9580 = pneg %p268
        $region86: #{tpu_custom_call.1} parent=83 // pred_check_branch
          %9582 = sbr.rel (%p9580) target = $region88
        $region87: #{tpu_custom_call.1} parent=83 // pred_region
          %s9583 = sand.u32 %s253, 1
          %s9584 = scalar_lea.sflag [#allocation8], %s9583
          %s9585 = sand.u32 %s253, 1
          %s9586 = smul.addr %s9585, 256
          %s9587 = scalar_lea.vmem [#allocation14], %s9586
          %9589 = dma.done %s9584, 4096
        $region88: #{tpu_custom_call.1} parent=83 // pred_fallthru
          _
      $region84: #{tpu_custom_call.1} parent=5 // pred_fallthru
        _
    $region6: #{tpu_custom_call.1} parent=1 // loop_footer
      %s28 = sadd.s32 1, %s24
    $region7: #{tpu_custom_call.1} parent=1 // loop_footer_branch
      %23 = sbr.rel target = $region3
    $region8: #{tpu_custom_call.1} parent=1 // loop_exit
      _
    %9590 = vsyncpa [#allocation7], 1
    %s9591 = scalar_lea.sflag [#allocation7], 1
    %9592 = vsyncpa %s9591, 1
    %9593 = vsyncpa [#allocation10], 1
    %9594 = vsyncpa [#allocation13], 1
    %9595 = vsyncpa [#allocation8], 1
    %s9596 = scalar_lea.sflag [#allocation8], 1
    %9597 = vsyncpa %s9596, 1

</llo_original>
